<compile_context>
chip_gen: v7x
topology: tpu7x:2x2x1
jax: 0.10.0
libtpu: 0.0.40
codegen_flags: <defaults>
</compile_context>

<pallas_src>
import functools
import math

import jax
import jax.numpy as jnp
from jax.experimental import pallas as pl
from jax.experimental.pallas import tpu as pltpu


_EPS = 1e-5
_MATMUL_DTYPE = jnp.bfloat16          # MXU-native operands; accumulation in f32.
_MAX_R_TILE = 1024                    # hard cap on the lane-dim tile
_VMEM_BUDGET = 12 * 1024 * 1024       # per-step resident-block target (all chips)
_VMEM_LIMIT = 32 * 1024 * 1024        # explicit scoped-VMEM limit (<= physical)

# ConvTranspose2d(k=4, s=2, p=1) output-parity decomposition:
#   output row 2*i + py reads padded-input rows {py, py+1} (offsets 0..2) with
#   kernel taps ky = {3,1} (py=0) / {2,0} (py=1); identically along columns.
_OFFS = ((0, 1), (1, 2))   # padded-input offsets per (parity, tap)
_KIDX = ((3, 1), (2, 0))   # matching kernel-tap indices per (parity, tap)

# window index (oy*3 + ox) consumed by tap (a, b) of output phase (py, px)
_S2_TAP2WIN = tuple(
    tuple(_OFFS[py][a] * 3 + _OFFS[px][b] for a in range(2) for b in range(2))
    for py in range(2) for px in range(2))
_L1_TAP2WIN = ((0,),)      # layer 1: single "phase", single tap


# ---------------------------------------------------------------------------
# Pallas kernels
# ---------------------------------------------------------------------------

def _phase_mm_kernel(tap2win, act, xs_ref, w_ref, o_ref):
    """out[ph] = act( sum_t  W[ph, t] @ windows[tap2win[ph][t]] ).

    xs_ref: [n_windows, Ci, rt]   (bf16)
    w_ref : [n_phase, n_tap, Co, Ci] (bf16)
    o_ref : [n_phase, Co, rt]     (f32)
    All phases/taps are unrolled inside one grid step (back-to-back MXU pushes).
    """
    for ph, taps in enumerate(tap2win):
        acc = None
        for t, win in enumerate(taps):
            part = jnp.dot(w_ref[ph, t], xs_ref[win],
                           preferred_element_type=jnp.float32)
            acc = part if acc is None else acc + part
        if act == "tanh":
            acc = jnp.tanh(acc)
        o_ref[ph] = acc.astype(o_ref.dtype)


def _bn_relu_kernel(y_ref, scale_ref, shift_ref, o_ref):
    """Pure elementwise epilogue: y*scale + shift, ReLU, cast to bf16."""
    y = y_ref[...]                              # [G, C, rt] f32
    s = scale_ref[...][None, :, :]              # [1, C, 1]
    b = shift_ref[...][None, :, :]
    o_ref[...] = jnp.maximum(y * s + b, 0.0).astype(o_ref.dtype)


# ---------------------------------------------------------------------------
# Tiling helpers
# ---------------------------------------------------------------------------

def _r_tiling(r, col_bytes):
    """Pad lane dim up to a multiple of 128; largest 128-multiple tile that
    divides it and fits the VMEM budget (col_bytes = resident bytes/column)."""
    rp = max(128, -(-r // 128) * 128)
    cap = (_VMEM_BUDGET // max(col_bytes, 1)) // 128 * 128
    cap = max(128, min(_MAX_R_TILE, cap))
    rt, t = 128, 128
    while t <= min(rp, cap):
        if rp % t == 0:
            rt = t
        t += 128
    return rp, rt


def _lane_pad(a, rp):
    r = a.shape[-1]
    if r == rp:
        return a
    return jnp.pad(a, [(0, 0)] * (a.ndim - 1) + [(0, rp - r)])


# ---------------------------------------------------------------------------
# pallas_call wrappers
# ---------------------------------------------------------------------------

def _phase_matmul(xs, w, tap2win, act, rt):
    """xs [Wn,Ci,Rp] bf16, w [P,T,Co,Ci] bf16 -> y [P,Co,Rp] f32."""
    wn, ci, rp = xs.shape
    p, nt, co, _ = w.shape
    kernel = functools.partial(_phase_mm_kernel, tap2win, act)
    n_dots = sum(len(ts) for ts in tap2win)
    cost = pl.CostEstimate(
        flops=int(2 * n_dots * co * ci * rp),
        transcendentals=int(p * co * rp) if act == "tanh" else 0,
        bytes_accessed=int(xs.size * xs.dtype.itemsize
                           + w.size * w.dtype.itemsize + p * co * rp * 4))
    return pl.pallas_call(
        kernel,
        out_shape=jax.ShapeDtypeStruct((p, co, rp), jnp.float32),
        grid=(rp // rt,),
        in_specs=[pl.BlockSpec((wn, ci, rt), lambda r: (0, 0, r)),
                  pl.BlockSpec((p, nt, co, ci), lambda r: (0, 0, 0, 0))],
        out_specs=pl.BlockSpec((p, co, rt), lambda r: (0, 0, r)),
        compiler_params=pltpu.CompilerParams(
            dimension_semantics=("parallel",),
            vmem_limit_bytes=_VMEM_LIMIT),
        cost_estimate=cost,
    )(xs, w)


def _bn_relu(y, scale, shift):
    """y [G,C,Rp] f32, scale/shift [C] -> bf16 [G,C,Rp]."""
    g, c, rp = y.shape
    _, rt = _r_tiling(rp, 2 * g * c * 6)
    cost = pl.CostEstimate(
        flops=int(3 * g * c * rp), transcendentals=0,
        bytes_accessed=int(g * c * rp * 4 + g * c * rp * 2 + 2 * c * 4))
    return pl.pallas_call(
        _bn_relu_kernel,
        out_shape=jax.ShapeDtypeStruct((g, c, rp), _MATMUL_DTYPE),
        grid=(rp // rt,),
        in_specs=[pl.BlockSpec((g, c, rt), lambda r: (0, 0, r)),
                  pl.BlockSpec((c, 1), lambda r: (0, 0)),
                  pl.BlockSpec((c, 1), lambda r: (0, 0))],
        out_specs=pl.BlockSpec((g, c, rt), lambda r: (0, 0, r)),
        compiler_params=pltpu.CompilerParams(
            dimension_semantics=("parallel",),
            vmem_limit_bytes=_VMEM_LIMIT),
        cost_estimate=cost,
    )(y, scale.reshape(c, 1), shift.reshape(c, 1))


# ---------------------------------------------------------------------------
# XLA glue (window gather + phase interleave) and BN statistics
# ---------------------------------------------------------------------------

def _window_matrices(x):
    """x [Ci, N, H, W] -> 9 shifted padded windows [9, Ci, N*H*W].

    TODO(synk): fuse this gather into the matmul kernel (pl.ANY refs +
    pltpu.make_async_copy) to cut the ~9x glue HBM traffic to ~1x.
    """
    ci, n, h, w = x.shape
    xp = jnp.pad(x, ((0, 0), (0, 0), (1, 1), (1, 1)))
    wins = [xp[:, :, oy:oy + h, ox:ox + w] for oy in range(3) for ox in range(3)]
    return jnp.stack(wins, axis=0).reshape(9, ci, n * h * w)


def _interleave_phases(yph, n, h, w):
    """Per-parity results [4, Co, N*H*W] -> CNHW [Co, N, 2H, 2W].

    TODO(synk): keep a phase-major inter-layer layout (or strided output DMA)
    to remove this full-tensor transpose.
    """
    co = yph.shape[1]
    y = yph.reshape(2, 2, co, n, h, w)          # [py, px, Co, N, H, W]
    y = y.transpose(2, 3, 4, 0, 5, 1)           # [Co, N, H, py, W, px]
    return y.reshape(co, n, 2 * h, 2 * w)


def _bn_scale_shift(s, ss, count, gamma, beta):
    """Fold training-mode batch stats (biased var, eps=1e-5) + affine into
    per-channel scale/shift. Zero-padded lane columns contribute 0 to s/ss,
    so `count` is always the true element count."""
    mean = s / count
    var = jnp.maximum(ss / count - jnp.square(mean), 0.0)
    scale = gamma * jax.lax.rsqrt(var + _EPS)
    shift = beta - mean * scale
    return scale, shift


# ---------------------------------------------------------------------------
# Layer wrappers (activations CNHW, bf16 between layers)
# ---------------------------------------------------------------------------

def _convt_s2(x, w_prep, act):
    """ConvTranspose2d(k=4, s=2, p=1, bias=False) via 4-phase grouped matmul."""
    ci, n, h, w = x.shape
    p, _, co, _ = w_prep.shape
    r = n * h * w
    rp, rt = _r_tiling(r, 2 * (9 * ci * 2 + p * co * 4))
    xs = _lane_pad(_window_matrices(x), rp).astype(_MATMUL_DTYPE)
    y = _phase_matmul(xs, w_prep, _S2_TAP2WIN, act, rt)     # [4, Co, Rp] f32
    return y, r, (n, h, w)


def convt_s2_bn_relu(x, lp):
    y, r, (n, h, w) = _convt_s2(x, lp["w"], None)
    s = jnp.sum(y, axis=(0, 2))                              # per-channel sum
    ss = jnp.sum(jnp.square(y), axis=(0, 2))                 # per-channel ssq
    scale, shift = _bn_scale_shift(s, ss, 4.0 * r, lp["gamma"], lp["beta"])
    yn = _bn_relu(y, scale, shift)                           # [4, Co, Rp] bf16
    return _interleave_phases(yn[..., :r], n, h, w)          # [Co, N, 2H, 2W]


def convt_s2_tanh(x, lp):
    y, r, (n, h, w) = _convt_s2(x, lp["w"], "tanh")          # [4, nc, Rp] f32
    return _interleave_phases(y[..., :r], n, h, w)           # [nc, N, 2H, 2W]


def convt_in1x1_bn_relu(z2, lp):
    """Layer 1: ConvTranspose2d(nz, Co, k1, 1, 0) on a 1x1 input + BN + ReLU.
    Collapsed to one tall matmul [Co*k1*k1, nz] @ [nz, N]."""
    w = lp["w"]                                  # [1, 1, Co*k1*k1, nz] bf16
    gamma, beta = lp["gamma"], lp["beta"]
    co = gamma.shape[0]
    m = w.shape[2]
    k1k1 = m // co
    k1 = int(round(math.sqrt(k1k1)))
    nz, n = z2.shape
    rp, rt = _r_tiling(n, 2 * (nz * 2 + m * 4))
    zs = _lane_pad(z2, rp)[None].astype(_MATMUL_DTYPE)       # [1, nz, Rp]
    y = _phase_matmul(zs, w, _L1_TAP2WIN, None, rt)          # [1, M, Rp] f32
    y3 = y.reshape(co, k1k1, rp)
    s = jnp.sum(y3, axis=(1, 2))
    ss = jnp.sum(jnp.square(y3), axis=(1, 2))
    scale, shift = _bn_scale_shift(s, ss, float(n * k1k1), gamma, beta)
    yn = _bn_relu(y, jnp.repeat(scale, k1k1), jnp.repeat(shift, k1k1))
    yn = yn[0, :, :n].reshape(co, k1, k1, n)
    return jnp.transpose(yn, (0, 3, 1, 2))                   # [Co, N, k1, k1]


# ---------------------------------------------------------------------------
# Generator: parameters + forward
# ---------------------------------------------------------------------------

def init_generator_params(key, nz, ngf, nc, image_size):
    k1 = image_size // 16
    keys = jax.random.split(key, 13)
    std = 0.02  # DCGAN-style deterministic init

    def w(k, shape):
        return std * jax.random.normal(k, shape, jnp.float32)

    return {
        # ConvTranspose2d weights: [C_in, C_out, kH, kW], bias=False
        "w1": w(keys[0], (nz,      ngf * 8, k1, k1)),
        "w2": w(keys[1], (ngf * 8, ngf * 4, 4, 4)),
        "w3": w(keys[2], (ngf * 4, ngf * 2, 4, 4)),
        "w4": w(keys[3], (ngf * 2, ngf,     4, 4)),
        "w5": w(keys[4], (ngf,     nc,      4, 4)),
        # BatchNorm2d affine params
        "g1": 1.0 + 0.1 * jax.random.normal(keys[5],  (ngf * 8,), jnp.float32),
        "b1": 0.1 * jax.random.normal(keys[6],  (ngf * 8,), jnp.float32),
        "g2": 1.0 + 0.1 * jax.random.normal(keys[7],  (ngf * 4,), jnp.float32),
        "b2": 0.1 * jax.random.normal(keys[8],  (ngf * 4,), jnp.float32),
        "g3": 1.0 + 0.1 * jax.random.normal(keys[9],  (ngf * 2,), jnp.float32),
        "b3": 0.1 * jax.random.normal(keys[10], (ngf * 2,), jnp.float32),
        "g4": 1.0 + 0.1 * jax.random.normal(keys[11], (ngf,), jnp.float32),
        "b4": 0.1 * jax.random.normal(keys[12], (ngf,), jnp.float32),
    }


def _prep_s2_weight(w):
    """PyTorch ConvTranspose2d weight [Ci, Co, 4, 4] -> [4(phase), 4(tap), Co, Ci]."""
    mats = []
    for py in range(2):
        for px in range(2):
            taps = [w[:, :, _KIDX[py][a], _KIDX[px][b]].T       # [Co, Ci]
                    for a in range(2) for b in range(2)]
            mats.append(jnp.stack(taps, axis=0))                # [4, Co, Ci]
    return jnp.stack(mats, axis=0).astype(_MATMUL_DTYPE)        # [4, 4, Co, Ci]


def prepare_generator_params(params):
    """One-time weight re-layout + bf16 casts (kept out of the forward graph)."""
    w1 = params["w1"]
    nz, co1, k1, _ = w1.shape
    w1m = jnp.transpose(w1, (1, 2, 3, 0)).reshape(co1 * k1 * k1, nz)
    return {
        "l1": {"w": w1m[None, None].astype(_MATMUL_DTYPE),
               "gamma": params["g1"], "beta": params["b1"]},
        "l2": {"w": _prep_s2_weight(params["w2"]),
               "gamma": params["g2"], "beta": params["b2"]},
        "l3": {"w": _prep_s2_weight(params["w3"]),
               "gamma": params["g3"], "beta": params["b3"]},
        "l4": {"w": _prep_s2_weight(params["w4"]),
               "gamma": params["g4"], "beta": params["b4"]},
        "l5": {"w": _prep_s2_weight(params["w5"])},
    }


def generator_forward(prepared, x):
    """x: [N, nz, 1, 1] NCHW latent -> [N, nc, image_size, image_size] f32."""
    n = x.shape[0]
    z2 = jnp.transpose(x.reshape(n, -1), (1, 0))                 # [nz, N] (tiny)
    h = convt_in1x1_bn_relu(z2, prepared["l1"])                  # [8*ngf, N, k1, k1]
    h = convt_s2_bn_relu(h, prepared["l2"])
    h = convt_s2_bn_relu(h, prepared["l3"])
    h = convt_s2_bn_relu(h, prepared["l4"])
    y = convt_s2_tanh(h, prepared["l5"])                         # [nc, N, S, S]
    return jnp.transpose(y, (1, 0, 2, 3))


# ---------------------------------------------------------------------------
# Main
# ---------------------------------------------------------------------------

if __name__ == "__main__":
    # Small config consistent with the module: nz=8, ngf=8, nc=3, image_size=32
    nz, ngf, nc, image_size = 8, 8, 3, 32
    batch = 2

    key = jax.random.PRNGKey(0)
    k_params, k_input = jax.random.split(key)
    params = init_generator_params(k_params, nz, ngf, nc, image_size)
    prepared = prepare_generator_params(params)
    z = jax.random.normal(k_input, (batch, nz, 1, 1), jnp.float32)

    out = jax.jit(generator_forward)(prepared, z)
    out = jax.block_until_ready(out)

    assert out.shape == (batch, nc, image_size, image_size), out.shape
    assert bool(jnp.all(jnp.isfinite(out)))
    assert bool(jnp.all(jnp.abs(out) <= 1.0 + 1e-6))  # tanh range
    print("KERNEL_OK")
</pallas_src>

<mosaic_0001>
module attributes {stable_mosaic.version = 11 : i64} {
  func.func @_phase_mm_kernel(%arg0: i32, %arg1: memref<1x8x128xbf16, #tpu.memory_space<vmem>>, %arg2: memref<1x1x256x8xbf16, #tpu.memory_space<vmem>>, %arg3: memref<1x256x128xf32, #tpu.memory_space<vmem>>) attributes {dimension_semantics = [#tpu.dimension_semantics<parallel>], iteration_bounds = array<i64: 1>, scalar_prefetch = 0 : i64, scratch_operands = 0 : i64, tpu.core_type = #tpu.core_type<tc>, window_params = [{transform_indices = @transform_0, window_bounds = array<i64: 1, 8, 128>}, {pipeline_mode = #tpu.pipeline_mode<synchronous>, transform_indices = @transform_1, window_bounds = array<i64: 1, 1, 256, 8>}, {transform_indices = @transform_2, window_bounds = array<i64: 1, 256, 128>}]} {
    %c0 = arith.constant 0 : index
    %c0_0 = arith.constant 0 : index
    %c0_1 = arith.constant 0 : index
    %c0_2 = arith.constant 0 : index
    %0 = vector.load %arg2[%c0, %c0_0, %c0_1, %c0_2] : memref<1x1x256x8xbf16, #tpu.memory_space<vmem>>, vector<1x1x256x8xbf16>
    %1 = vector.shape_cast %0 : vector<1x1x256x8xbf16> to vector<256x8xbf16>
    %c0_3 = arith.constant 0 : index
    %c0_4 = arith.constant 0 : index
    %c0_5 = arith.constant 0 : index
    %2 = vector.load %arg1[%c0_3, %c0_4, %c0_5] : memref<1x8x128xbf16, #tpu.memory_space<vmem>>, vector<1x8x128xbf16>
    %3 = vector.shape_cast %2 : vector<1x8x128xbf16> to vector<8x128xbf16>
    %cst = arith.constant dense<0.000000e+00> : vector<256x128xf32>
    %4 = tpu.matmul %1, %3, %cst {dimension_numbers = #tpu.dot_dimension_numbers<[1], [0], [0], [1], [0, 0, 1, 1], [], []>} : vector<256x8xbf16>, vector<8x128xbf16>, vector<256x128xf32> -> vector<256x128xf32>
    %c0_6 = arith.constant 0 : index
    %c0_7 = arith.constant 0 : index
    %c0_8 = arith.constant 0 : index
    %5 = vector.load %arg3[%c0_6, %c0_7, %c0_8] : memref<1x256x128xf32, #tpu.memory_space<vmem>>, vector<1x256x128xf32>
    %6 = vector.shape_cast %5 : vector<1x256x128xf32> to vector<256x128xf32>
    %7 = vector.shape_cast %4 : vector<256x128xf32> to vector<1x256x128xf32>
    tpu.vector_store %arg3[%c0_6, %c0_7, %c0_8], %7 {strides = array<i32>} : memref<1x256x128xf32, #tpu.memory_space<vmem>>, vector<1x256x128xf32>,
    return
  }
  func.func @transform_0(%arg0: i32) -> (i32, i32, i32) {
    %c0_i32 = arith.constant 0 : i32
    %c0_i32_0 = arith.constant 0 : i32
    %c0_i32_1 = arith.constant 0 : i32
    return %c0_i32, %c0_i32_0, %arg0 : i32, i32, i32
  }
  func.func @transform_1(%arg0: i32) -> (i32, i32, i32, i32) {
    %c0_i32 = arith.constant 0 : i32
    %c0_i32_0 = arith.constant 0 : i32
    %c0_i32_1 = arith.constant 0 : i32
    %c0_i32_2 = arith.constant 0 : i32
    %c0_i32_3 = arith.constant 0 : i32
    return %c0_i32, %c0_i32_0, %c0_i32_1, %c0_i32_2 : i32, i32, i32, i32
  }
  func.func @transform_2(%arg0: i32) -> (i32, i32, i32) {
    %c0_i32 = arith.constant 0 : i32
    %c0_i32_0 = arith.constant 0 : i32
    %c0_i32_1 = arith.constant 0 : i32
    return %c0_i32, %c0_i32_0, %arg0 : i32, i32, i32
  }
}

module attributes {stable_mosaic.version = 11 : i64} {
  func.func @_bn_relu_kernel(%arg0: i32, %arg1: memref<1x256x128xf32, #tpu.memory_space<vmem>>, %arg2: memref<256x1xf32, #tpu.memory_space<vmem>>, %arg3: memref<256x1xf32, #tpu.memory_space<vmem>>, %arg4: memref<1x256x128xbf16, #tpu.memory_space<vmem>>) attributes {dimension_semantics = [#tpu.dimension_semantics<parallel>], iteration_bounds = array<i64: 1>, scalar_prefetch = 0 : i64, scratch_operands = 0 : i64, tpu.core_type = #tpu.core_type<tc>, window_params = [{transform_indices = @transform_0, window_bounds = array<i64: 1, 256, 128>}, {pipeline_mode = #tpu.pipeline_mode<synchronous>, transform_indices = @transform_1, window_bounds = array<i64: 256, 1>}, {pipeline_mode = #tpu.pipeline_mode<synchronous>, transform_indices = @transform_2, window_bounds = array<i64: 256, 1>}, {transform_indices = @transform_3, window_bounds = array<i64: 1, 256, 128>}]} {
    %c0 = arith.constant 0 : index
    %c0_0 = arith.constant 0 : index
    %c0_1 = arith.constant 0 : index
    %0 = vector.load %arg1[%c0, %c0_0, %c0_1] : memref<1x256x128xf32, #tpu.memory_space<vmem>>, vector<1x256x128xf32>
    %c0_2 = arith.constant 0 : index
    %c0_3 = arith.constant 0 : index
    %1 = vector.load %arg2[%c0_2, %c0_3] : memref<256x1xf32, #tpu.memory_space<vmem>>, vector<256x1xf32>
    %2 = vector.shape_cast %1 : vector<256x1xf32> to vector<1x256x1xf32>
    %c0_4 = arith.constant 0 : index
    %c0_5 = arith.constant 0 : index
    %3 = vector.load %arg3[%c0_4, %c0_5] : memref<256x1xf32, #tpu.memory_space<vmem>>, vector<256x1xf32>
    %4 = vector.shape_cast %3 : vector<256x1xf32> to vector<1x256x1xf32>
    %5 = vector.broadcast %2 : vector<1x256x1xf32> to vector<1x256x128xf32>
    %6 = arith.mulf %0, %5 : vector<1x256x128xf32>
    %7 = vector.broadcast %4 : vector<1x256x1xf32> to vector<1x256x128xf32>
    %8 = arith.addf %6, %7 : vector<1x256x128xf32>
    %cst = arith.constant 0.000000e+00 : f32
    %9 = vector.broadcast %cst : f32 to vector<1x256x128xf32>
    %10 = arith.maximumf %8, %9 : vector<1x256x128xf32>
    %11 = arith.truncf %10 : vector<1x256x128xf32> to vector<1x256x128xbf16>
    %c0_6 = arith.constant 0 : index
    %c0_7 = arith.constant 0 : index
    %c0_8 = arith.constant 0 : index
    %12 = vector.load %arg4[%c0_6, %c0_7, %c0_8] : memref<1x256x128xbf16, #tpu.memory_space<vmem>>, vector<1x256x128xbf16>
    tpu.vector_store %arg4[%c0_6, %c0_7, %c0_8], %11 {strides = array<i32>} : memref<1x256x128xbf16, #tpu.memory_space<vmem>>, vector<1x256x128xbf16>,
    return
  }
  func.func @transform_0(%arg0: i32) -> (i32, i32, i32) {
    %c0_i32 = arith.constant 0 : i32
    %c0_i32_0 = arith.constant 0 : i32
    %c0_i32_1 = arith.constant 0 : i32
    return %c0_i32, %c0_i32_0, %arg0 : i32, i32, i32
  }
  func.func @transform_1(%arg0: i32) -> (i32, i32) {
    %c0_i32 = arith.constant 0 : i32
    %c0_i32_0 = arith.constant 0 : i32
    %c0_i32_1 = arith.constant 0 : i32
    return %c0_i32, %c0_i32_0 : i32, i32
  }
  func.func @transform_2(%arg0: i32) -> (i32, i32) {
    %c0_i32 = arith.constant 0 : i32
    %c0_i32_0 = arith.constant 0 : i32
    %c0_i32_1 = arith.constant 0 : i32
    return %c0_i32, %c0_i32_0 : i32, i32
  }
  func.func @transform_3(%arg0: i32) -> (i32, i32, i32) {
    %c0_i32 = arith.constant 0 : i32
    %c0_i32_0 = arith.constant 0 : i32
    %c0_i32_1 = arith.constant 0 : i32
    return %c0_i32, %c0_i32_0, %arg0 : i32, i32, i32
  }
}

module attributes {stable_mosaic.version = 11 : i64} {
  func.func @_phase_mm_kernel(%arg0: i32, %arg1: memref<9x64x128xbf16, #tpu.memory_space<vmem>>, %arg2: memref<4x4x32x64xbf16, #tpu.memory_space<vmem>>, %arg3: memref<4x32x128xf32, #tpu.memory_space<vmem>>) attributes {dimension_semantics = [#tpu.dimension_semantics<parallel>], iteration_bounds = array<i64: 1>, scalar_prefetch = 0 : i64, scratch_operands = 0 : i64, tpu.core_type = #tpu.core_type<tc>, window_params = [{transform_indices = @transform_0, window_bounds = array<i64: 9, 64, 128>}, {pipeline_mode = #tpu.pipeline_mode<synchronous>, transform_indices = @transform_1, window_bounds = array<i64: 4, 4, 32, 64>}, {transform_indices = @transform_2, window_bounds = array<i64: 4, 32, 128>}]} {
    %c0 = arith.constant 0 : index
    %c0_0 = arith.constant 0 : index
    %c0_1 = arith.constant 0 : index
    %c0_2 = arith.constant 0 : index
    %0 = vector.load %arg2[%c0, %c0_0, %c0_1, %c0_2] : memref<4x4x32x64xbf16, #tpu.memory_space<vmem>>, vector<1x1x32x64xbf16>
    %1 = vector.shape_cast %0 : vector<1x1x32x64xbf16> to vector<32x64xbf16>
    %c0_3 = arith.constant 0 : index
    %c0_4 = arith.constant 0 : index
    %c0_5 = arith.constant 0 : index
    %2 = vector.load %arg1[%c0_3, %c0_4, %c0_5] : memref<9x64x128xbf16, #tpu.memory_space<vmem>>, vector<1x64x128xbf16>
    %3 = vector.shape_cast %2 : vector<1x64x128xbf16> to vector<64x128xbf16>
    %cst = arith.constant dense<0.000000e+00> : vector<32x128xf32>
    %4 = tpu.matmul %1, %3, %cst {dimension_numbers = #tpu.dot_dimension_numbers<[1], [0], [0], [1], [0, 0, 1, 1], [], []>} : vector<32x64xbf16>, vector<64x128xbf16>, vector<32x128xf32> -> vector<32x128xf32>
    %c0_6 = arith.constant 0 : index
    %c1 = arith.constant 1 : index
    %c0_7 = arith.constant 0 : index
    %c0_8 = arith.constant 0 : index
    %5 = vector.load %arg2[%c0_6, %c1, %c0_7, %c0_8] : memref<4x4x32x64xbf16, #tpu.memory_space<vmem>>, vector<1x1x32x64xbf16>
    %6 = vector.shape_cast %5 : vector<1x1x32x64xbf16> to vector<32x64xbf16>
    %c1_9 = arith.constant 1 : index
    %c0_10 = arith.constant 0 : index
    %c0_11 = arith.constant 0 : index
    %7 = vector.load %arg1[%c1_9, %c0_10, %c0_11] : memref<9x64x128xbf16, #tpu.memory_space<vmem>>, vector<1x64x128xbf16>
    %8 = vector.shape_cast %7 : vector<1x64x128xbf16> to vector<64x128xbf16>
    %cst_12 = arith.constant dense<0.000000e+00> : vector<32x128xf32>
    %9 = tpu.matmul %6, %8, %cst_12 {dimension_numbers = #tpu.dot_dimension_numbers<[1], [0], [0], [1], [0, 0, 1, 1], [], []>} : vector<32x64xbf16>, vector<64x128xbf16>, vector<32x128xf32> -> vector<32x128xf32>
    %10 = arith.addf %4, %9 : vector<32x128xf32>
    %c0_13 = arith.constant 0 : index
    %c2 = arith.constant 2 : index
    %c0_14 = arith.constant 0 : index
    %c0_15 = arith.constant 0 : index
    %11 = vector.load %arg2[%c0_13, %c2, %c0_14, %c0_15] : memref<4x4x32x64xbf16, #tpu.memory_space<vmem>>, vector<1x1x32x64xbf16>
    %12 = vector.shape_cast %11 : vector<1x1x32x64xbf16> to vector<32x64xbf16>
    %c3 = arith.constant 3 : index
    %c0_16 = arith.constant 0 : index
    %c0_17 = arith.constant 0 : index
    %13 = vector.load %arg1[%c3, %c0_16, %c0_17] : memref<9x64x128xbf16, #tpu.memory_space<vmem>>, vector<1x64x128xbf16>
    %14 = vector.shape_cast %13 : vector<1x64x128xbf16> to vector<64x128xbf16>
    %cst_18 = arith.constant dense<0.000000e+00> : vector<32x128xf32>
    %15 = tpu.matmul %12, %14, %cst_18 {dimension_numbers = #tpu.dot_dimension_numbers<[1], [0], [0], [1], [0, 0, 1, 1], [], []>} : vector<32x64xbf16>, vector<64x128xbf16>, vector<32x128xf32> -> vector<32x128xf32>
    %16 = arith.addf %10, %15 : vector<32x128xf32>
    %c0_19 = arith.constant 0 : index
    %c3_20 = arith.constant 3 : index
    %c0_21 = arith.constant 0 : index
    %c0_22 = arith.constant 0 : index
    %17 = vector.load %arg2[%c0_19, %c3_20, %c0_21, %c0_22] : memref<4x4x32x64xbf16, #tpu.memory_space<vmem>>, vector<1x1x32x64xbf16>
    %18 = vector.shape_cast %17 : vector<1x1x32x64xbf16> to vector<32x64xbf16>
    %c4 = arith.constant 4 : index
    %c0_23 = arith.constant 0 : index
    %c0_24 = arith.constant 0 : index
    %19 = vector.load %arg1[%c4, %c0_23, %c0_24] : memref<9x64x128xbf16, #tpu.memory_space<vmem>>, vector<1x64x128xbf16>
    %20 = vector.shape_cast %19 : vector<1x64x128xbf16> to vector<64x128xbf16>
    %cst_25 = arith.constant dense<0.000000e+00> : vector<32x128xf32>
    %21 = tpu.matmul %18, %20, %cst_25 {dimension_numbers = #tpu.dot_dimension_numbers<[1], [0], [0], [1], [0, 0, 1, 1], [], []>} : vector<32x64xbf16>, vector<64x128xbf16>, vector<32x128xf32> -> vector<32x128xf32>
    %22 = arith.addf %16, %21 : vector<32x128xf32>
    %c0_26 = arith.constant 0 : index
    %c0_27 = arith.constant 0 : index
    %c0_28 = arith.constant 0 : index
    %23 = vector.load %arg3[%c0_26, %c0_27, %c0_28] : memref<4x32x128xf32, #tpu.memory_space<vmem>>, vector<1x32x128xf32>
    %24 = vector.shape_cast %23 : vector<1x32x128xf32> to vector<32x128xf32>
    %25 = vector.shape_cast %22 : vector<32x128xf32> to vector<1x32x128xf32>
    tpu.vector_store %arg3[%c0_26, %c0_27, %c0_28], %25 {strides = array<i32>} : memref<4x32x128xf32, #tpu.memory_space<vmem>>, vector<1x32x128xf32>,
    %c1_29 = arith.constant 1 : index
    %c0_30 = arith.constant 0 : index
    %c0_31 = arith.constant 0 : index
    %c0_32 = arith.constant 0 : index
    %26 = vector.load %arg2[%c1_29, %c0_30, %c0_31, %c0_32] : memref<4x4x32x64xbf16, #tpu.memory_space<vmem>>, vector<1x1x32x64xbf16>
    %27 = vector.shape_cast %26 : vector<1x1x32x64xbf16> to vector<32x64xbf16>
    %c1_33 = arith.constant 1 : index
    %c0_34 = arith.constant 0 : index
    %c0_35 = arith.constant 0 : index
    %28 = vector.load %arg1[%c1_33, %c0_34, %c0_35] : memref<9x64x128xbf16, #tpu.memory_space<vmem>>, vector<1x64x128xbf16>
    %29 = vector.shape_cast %28 : vector<1x64x128xbf16> to vector<64x128xbf16>
    %cst_36 = arith.constant dense<0.000000e+00> : vector<32x128xf32>
    %30 = tpu.matmul %27, %29, %cst_36 {dimension_numbers = #tpu.dot_dimension_numbers<[1], [0], [0], [1], [0, 0, 1, 1], [], []>} : vector<32x64xbf16>, vector<64x128xbf16>, vector<32x128xf32> -> vector<32x128xf32>
    %c1_37 = arith.constant 1 : index
    %c1_38 = arith.constant 1 : index
    %c0_39 = arith.constant 0 : index
    %c0_40 = arith.constant 0 : index
    %31 = vector.load %arg2[%c1_37, %c1_38, %c0_39, %c0_40] : memref<4x4x32x64xbf16, #tpu.memory_space<vmem>>, vector<1x1x32x64xbf16>
    %32 = vector.shape_cast %31 : vector<1x1x32x64xbf16> to vector<32x64xbf16>
    %c2_41 = arith.constant 2 : index
    %c0_42 = arith.constant 0 : index
    %c0_43 = arith.constant 0 : index
    %33 = vector.load %arg1[%c2_41, %c0_42, %c0_43] : memref<9x64x128xbf16, #tpu.memory_space<vmem>>, vector<1x64x128xbf16>
    %34 = vector.shape_cast %33 : vector<1x64x128xbf16> to vector<64x128xbf16>
    %cst_44 = arith.constant dense<0.000000e+00> : vector<32x128xf32>
    %35 = tpu.matmul %32, %34, %cst_44 {dimension_numbers = #tpu.dot_dimension_numbers<[1], [0], [0], [1], [0, 0, 1, 1], [], []>} : vector<32x64xbf16>, vector<64x128xbf16>, vector<32x128xf32> -> vector<32x128xf32>
    %36 = arith.addf %30, %35 : vector<32x128xf32>
    %c1_45 = arith.constant 1 : index
    %c2_46 = arith.constant 2 : index
    %c0_47 = arith.constant 0 : index
    %c0_48 = arith.constant 0 : index
    %37 = vector.load %arg2[%c1_45, %c2_46, %c0_47, %c0_48] : memref<4x4x32x64xbf16, #tpu.memory_space<vmem>>, vector<1x1x32x64xbf16>
    %38 = vector.shape_cast %37 : vector<1x1x32x64xbf16> to vector<32x64xbf16>
    %c4_49 = arith.constant 4 : index
    %c0_50 = arith.constant 0 : index
    %c0_51 = arith.constant 0 : index
    %39 = vector.load %arg1[%c4_49, %c0_50, %c0_51] : memref<9x64x128xbf16, #tpu.memory_space<vmem>>, vector<1x64x128xbf16>
    %40 = vector.shape_cast %39 : vector<1x64x128xbf16> to vector<64x128xbf16>
    %cst_52 = arith.constant dense<0.000000e+00> : vector<32x128xf32>
    %41 = tpu.matmul %38, %40, %cst_52 {dimension_numbers = #tpu.dot_dimension_numbers<[1], [0], [0], [1], [0, 0, 1, 1], [], []>} : vector<32x64xbf16>, vector<64x128xbf16>, vector<32x128xf32> -> vector<32x128xf32>
    %42 = arith.addf %36, %41 : vector<32x128xf32>
    %c1_53 = arith.constant 1 : index
    %c3_54 = arith.constant 3 : index
    %c0_55 = arith.constant 0 : index
    %c0_56 = arith.constant 0 : index
    %43 = vector.load %arg2[%c1_53, %c3_54, %c0_55, %c0_56] : memref<4x4x32x64xbf16, #tpu.memory_space<vmem>>, vector<1x1x32x64xbf16>
    %44 = vector.shape_cast %43 : vector<1x1x32x64xbf16> to vector<32x64xbf16>
    %c5 = arith.constant 5 : index
    %c0_57 = arith.constant 0 : index
    %c0_58 = arith.constant 0 : index
    %45 = vector.load %arg1[%c5, %c0_57, %c0_58] : memref<9x64x128xbf16, #tpu.memory_space<vmem>>, vector<1x64x128xbf16>
    %46 = vector.shape_cast %45 : vector<1x64x128xbf16> to vector<64x128xbf16>
    %cst_59 = arith.constant dense<0.000000e+00> : vector<32x128xf32>
    %47 = tpu.matmul %44, %46, %cst_59 {dimension_numbers = #tpu.dot_dimension_numbers<[1], [0], [0], [1], [0, 0, 1, 1], [], []>} : vector<32x64xbf16>, vector<64x128xbf16>, vector<32x128xf32> -> vector<32x128xf32>
    %48 = arith.addf %42, %47 : vector<32x128xf32>
    %c1_60 = arith.constant 1 : index
    %c0_61 = arith.constant 0 : index
    %c0_62 = arith.constant 0 : index
    %49 = vector.load %arg3[%c1_60, %c0_61, %c0_62] : memref<4x32x128xf32, #tpu.memory_space<vmem>>, vector<1x32x128xf32>
    %50 = vector.shape_cast %49 : vector<1x32x128xf32> to vector<32x128xf32>
    %51 = vector.shape_cast %48 : vector<32x128xf32> to vector<1x32x128xf32>
    tpu.vector_store %arg3[%c1_60, %c0_61, %c0_62], %51 {strides = array<i32>} : memref<4x32x128xf32, #tpu.memory_space<vmem>>, vector<1x32x128xf32>,
    %c2_63 = arith.constant 2 : index
    %c0_64 = arith.constant 0 : index
    %c0_65 = arith.constant 0 : index
    %c0_66 = arith.constant 0 : index
    %52 = vector.load %arg2[%c2_63, %c0_64, %c0_65, %c0_66] : memref<4x4x32x64xbf16, #tpu.memory_space<vmem>>, vector<1x1x32x64xbf16>
    %53 = vector.shape_cast %52 : vector<1x1x32x64xbf16> to vector<32x64xbf16>
    %c3_67 = arith.constant 3 : index
    %c0_68 = arith.constant 0 : index
    %c0_69 = arith.constant 0 : index
    %54 = vector.load %arg1[%c3_67, %c0_68, %c0_69] : memref<9x64x128xbf16, #tpu.memory_space<vmem>>, vector<1x64x128xbf16>
    %55 = vector.shape_cast %54 : vector<1x64x128xbf16> to vector<64x128xbf16>
    %cst_70 = arith.constant dense<0.000000e+00> : vector<32x128xf32>
    %56 = tpu.matmul %53, %55, %cst_70 {dimension_numbers = #tpu.dot_dimension_numbers<[1], [0], [0], [1], [0, 0, 1, 1], [], []>} : vector<32x64xbf16>, vector<64x128xbf16>, vector<32x128xf32> -> vector<32x128xf32>
    %c2_71 = arith.constant 2 : index
    %c1_72 = arith.constant 1 : index
    %c0_73 = arith.constant 0 : index
    %c0_74 = arith.constant 0 : index
    %57 = vector.load %arg2[%c2_71, %c1_72, %c0_73, %c0_74] : memref<4x4x32x64xbf16, #tpu.memory_space<vmem>>, vector<1x1x32x64xbf16>
    %58 = vector.shape_cast %57 : vector<1x1x32x64xbf16> to vector<32x64xbf16>
    %c4_75 = arith.constant 4 : index
    %c0_76 = arith.constant 0 : index
    %c0_77 = arith.constant 0 : index
    %59 = vector.load %arg1[%c4_75, %c0_76, %c0_77] : memref<9x64x128xbf16, #tpu.memory_space<vmem>>, vector<1x64x128xbf16>
    %60 = vector.shape_cast %59 : vector<1x64x128xbf16> to vector<64x128xbf16>
    %cst_78 = arith.constant dense<0.000000e+00> : vector<32x128xf32>
    %61 = tpu.matmul %58, %60, %cst_78 {dimension_numbers = #tpu.dot_dimension_numbers<[1], [0], [0], [1], [0, 0, 1, 1], [], []>} : vector<32x64xbf16>, vector<64x128xbf16>, vector<32x128xf32> -> vector<32x128xf32>
    %62 = arith.addf %56, %61 : vector<32x128xf32>
    %c2_79 = arith.constant 2 : index
    %c2_80 = arith.constant 2 : index
    %c0_81 = arith.constant 0 : index
    %c0_82 = arith.constant 0 : index
    %63 = vector.load %arg2[%c2_79, %c2_80, %c0_81, %c0_82] : memref<4x4x32x64xbf16, #tpu.memory_space<vmem>>, vector<1x1x32x64xbf16>
    %64 = vector.shape_cast %63 : vector<1x1x32x64xbf16> to vector<32x64xbf16>
    %c6 = arith.constant 6 : index
    %c0_83 = arith.constant 0 : index
    %c0_84 = arith.constant 0 : index
    %65 = vector.load %arg1[%c6, %c0_83, %c0_84] : memref<9x64x128xbf16, #tpu.memory_space<vmem>>, vector<1x64x128xbf16>
    %66 = vector.shape_cast %65 : vector<1x64x128xbf16> to vector<64x128xbf16>
    %cst_85 = arith.constant dense<0.000000e+00> : vector<32x128xf32>
    %67 = tpu.matmul %64, %66, %cst_85 {dimension_numbers = #tpu.dot_dimension_numbers<[1], [0], [0], [1], [0, 0, 1, 1], [], []>} : vector<32x64xbf16>, vector<64x128xbf16>, vector<32x128xf32> -> vector<32x128xf32>
    %68 = arith.addf %62, %67 : vector<32x128xf32>
    %c2_86 = arith.constant 2 : index
    %c3_87 = arith.constant 3 : index
    %c0_88 = arith.constant 0 : index
    %c0_89 = arith.constant 0 : index
    %69 = vector.load %arg2[%c2_86, %c3_87, %c0_88, %c0_89] : memref<4x4x32x64xbf16, #tpu.memory_space<vmem>>, vector<1x1x32x64xbf16>
    %70 = vector.shape_cast %69 : vector<1x1x32x64xbf16> to vector<32x64xbf16>
    %c7 = arith.constant 7 : index
    %c0_90 = arith.constant 0 : index
    %c0_91 = arith.constant 0 : index
    %71 = vector.load %arg1[%c7, %c0_90, %c0_91] : memref<9x64x128xbf16, #tpu.memory_space<vmem>>, vector<1x64x128xbf16>
    %72 = vector.shape_cast %71 : vector<1x64x128xbf16> to vector<64x128xbf16>
    %cst_92 = arith.constant dense<0.000000e+00> : vector<32x128xf32>
    %73 = tpu.matmul %70, %72, %cst_92 {dimension_numbers = #tpu.dot_dimension_numbers<[1], [0], [0], [1], [0, 0, 1, 1], [], []>} : vector<32x64xbf16>, vector<64x128xbf16>, vector<32x128xf32> -> vector<32x128xf32>
    %74 = arith.addf %68, %73 : vector<32x128xf32>
    %c2_93 = arith.constant 2 : index
    %c0_94 = arith.constant 0 : index
    %c0_95 = arith.constant 0 : index
    %75 = vector.load %arg3[%c2_93, %c0_94, %c0_95] : memref<4x32x128xf32, #tpu.memory_space<vmem>>, vector<1x32x128xf32>
    %76 = vector.shape_cast %75 : vector<1x32x128xf32> to vector<32x128xf32>
    %77 = vector.shape_cast %74 : vector<32x128xf32> to vector<1x32x128xf32>
    tpu.vector_store %arg3[%c2_93, %c0_94, %c0_95], %77 {strides = array<i32>} : memref<4x32x128xf32, #tpu.memory_space<vmem>>, vector<1x32x128xf32>,
    %c3_96 = arith.constant 3 : index
    %c0_97 = arith.constant 0 : index
    %c0_98 = arith.constant 0 : index
    %c0_99 = arith.constant 0 : index
    %78 = vector.load %arg2[%c3_96, %c0_97, %c0_98, %c0_99] : memref<4x4x32x64xbf16, #tpu.memory_space<vmem>>, vector<1x1x32x64xbf16>
    %79 = vector.shape_cast %78 : vector<1x1x32x64xbf16> to vector<32x64xbf16>
    %c4_100 = arith.constant 4 : index
    %c0_101 = arith.constant 0 : index
    %c0_102 = arith.constant 0 : index
    %80 = vector.load %arg1[%c4_100, %c0_101, %c0_102] : memref<9x64x128xbf16, #tpu.memory_space<vmem>>, vector<1x64x128xbf16>
    %81 = vector.shape_cast %80 : vector<1x64x128xbf16> to vector<64x128xbf16>
    %cst_103 = arith.constant dense<0.000000e+00> : vector<32x128xf32>
    %82 = tpu.matmul %79, %81, %cst_103 {dimension_numbers = #tpu.dot_dimension_numbers<[1], [0], [0], [1], [0, 0, 1, 1], [], []>} : vector<32x64xbf16>, vector<64x128xbf16>, vector<32x128xf32> -> vector<32x128xf32>
    %c3_104 = arith.constant 3 : index
    %c1_105 = arith.constant 1 : index
    %c0_106 = arith.constant 0 : index
    %c0_107 = arith.constant 0 : index
    %83 = vector.load %arg2[%c3_104, %c1_105, %c0_106, %c0_107] : memref<4x4x32x64xbf16, #tpu.memory_space<vmem>>, vector<1x1x32x64xbf16>
    %84 = vector.shape_cast %83 : vector<1x1x32x64xbf16> to vector<32x64xbf16>
    %c5_108 = arith.constant 5 : index
    %c0_109 = arith.constant 0 : index
    %c0_110 = arith.constant 0 : index
    %85 = vector.load %arg1[%c5_108, %c0_109, %c0_110] : memref<9x64x128xbf16, #tpu.memory_space<vmem>>, vector<1x64x128xbf16>
    %86 = vector.shape_cast %85 : vector<1x64x128xbf16> to vector<64x128xbf16>
    %cst_111 = arith.constant dense<0.000000e+00> : vector<32x128xf32>
    %87 = tpu.matmul %84, %86, %cst_111 {dimension_numbers = #tpu.dot_dimension_numbers<[1], [0], [0], [1], [0, 0, 1, 1], [], []>} : vector<32x64xbf16>, vector<64x128xbf16>, vector<32x128xf32> -> vector<32x128xf32>
    %88 = arith.addf %82, %87 : vector<32x128xf32>
    %c3_112 = arith.constant 3 : index
    %c2_113 = arith.constant 2 : index
    %c0_114 = arith.constant 0 : index
    %c0_115 = arith.constant 0 : index
    %89 = vector.load %arg2[%c3_112, %c2_113, %c0_114, %c0_115] : memref<4x4x32x64xbf16, #tpu.memory_space<vmem>>, vector<1x1x32x64xbf16>
    %90 = vector.shape_cast %89 : vector<1x1x32x64xbf16> to vector<32x64xbf16>
    %c7_116 = arith.constant 7 : index
    %c0_117 = arith.constant 0 : index
    %c0_118 = arith.constant 0 : index
    %91 = vector.load %arg1[%c7_116, %c0_117, %c0_118] : memref<9x64x128xbf16, #tpu.memory_space<vmem>>, vector<1x64x128xbf16>
    %92 = vector.shape_cast %91 : vector<1x64x128xbf16> to vector<64x128xbf16>
    %cst_119 = arith.constant dense<0.000000e+00> : vector<32x128xf32>
    %93 = tpu.matmul %90, %92, %cst_119 {dimension_numbers = #tpu.dot_dimension_numbers<[1], [0], [0], [1], [0, 0, 1, 1], [], []>} : vector<32x64xbf16>, vector<64x128xbf16>, vector<32x128xf32> -> vector<32x128xf32>
    %94 = arith.addf %88, %93 : vector<32x128xf32>
    %c3_120 = arith.constant 3 : index
    %c3_121 = arith.constant 3 : index
    %c0_122 = arith.constant 0 : index
    %c0_123 = arith.constant 0 : index
    %95 = vector.load %arg2[%c3_120, %c3_121, %c0_122, %c0_123] : memref<4x4x32x64xbf16, #tpu.memory_space<vmem>>, vector<1x1x32x64xbf16>
    %96 = vector.shape_cast %95 : vector<1x1x32x64xbf16> to vector<32x64xbf16>
    %c8 = arith.constant 8 : index
    %c0_124 = arith.constant 0 : index
    %c0_125 = arith.constant 0 : index
    %97 = vector.load %arg1[%c8, %c0_124, %c0_125] : memref<9x64x128xbf16, #tpu.memory_space<vmem>>, vector<1x64x128xbf16>
    %98 = vector.shape_cast %97 : vector<1x64x128xbf16> to vector<64x128xbf16>
    %cst_126 = arith.constant dense<0.000000e+00> : vector<32x128xf32>
    %99 = tpu.matmul %96, %98, %cst_126 {dimension_numbers = #tpu.dot_dimension_numbers<[1], [0], [0], [1], [0, 0, 1, 1], [], []>} : vector<32x64xbf16>, vector<64x128xbf16>, vector<32x128xf32> -> vector<32x128xf32>
    %100 = arith.addf %94, %99 : vector<32x128xf32>
    %c3_127 = arith.constant 3 : index
    %c0_128 = arith.constant 0 : index
    %c0_129 = arith.constant 0 : index
    %101 = vector.load %arg3[%c3_127, %c0_128, %c0_129] : memref<4x32x128xf32, #tpu.memory_space<vmem>>, vector<1x32x128xf32>
    %102 = vector.shape_cast %101 : vector<1x32x128xf32> to vector<32x128xf32>
    %103 = vector.shape_cast %100 : vector<32x128xf32> to vector<1x32x128xf32>
    tpu.vector_store %arg3[%c3_127, %c0_128, %c0_129], %103 {strides = array<i32>} : memref<4x32x128xf32, #tpu.memory_space<vmem>>, vector<1x32x128xf32>,
    return
  }
  func.func @transform_0(%arg0: i32) -> (i32, i32, i32) {
    %c0_i32 = arith.constant 0 : i32
    %c0_i32_0 = arith.constant 0 : i32
    %c0_i32_1 = arith.constant 0 : i32
    return %c0_i32, %c0_i32_0, %arg0 : i32, i32, i32
  }
  func.func @transform_1(%arg0: i32) -> (i32, i32, i32, i32) {
    %c0_i32 = arith.constant 0 : i32
    %c0_i32_0 = arith.constant 0 : i32
    %c0_i32_1 = arith.constant 0 : i32
    %c0_i32_2 = arith.constant 0 : i32
    %c0_i32_3 = arith.constant 0 : i32
    return %c0_i32, %c0_i32_0, %c0_i32_1, %c0_i32_2 : i32, i32, i32, i32
  }
  func.func @transform_2(%arg0: i32) -> (i32, i32, i32) {
    %c0_i32 = arith.constant 0 : i32
    %c0_i32_0 = arith.constant 0 : i32
    %c0_i32_1 = arith.constant 0 : i32
    return %c0_i32, %c0_i32_0, %arg0 : i32, i32, i32
  }
}

module attributes {stable_mosaic.version = 11 : i64} {
  func.func @_bn_relu_kernel(%arg0: i32, %arg1: memref<4x32x128xf32, #tpu.memory_space<vmem>>, %arg2: memref<32x1xf32, #tpu.memory_space<vmem>>, %arg3: memref<32x1xf32, #tpu.memory_space<vmem>>, %arg4: memref<4x32x128xbf16, #tpu.memory_space<vmem>>) attributes {dimension_semantics = [#tpu.dimension_semantics<parallel>], iteration_bounds = array<i64: 1>, scalar_prefetch = 0 : i64, scratch_operands = 0 : i64, tpu.core_type = #tpu.core_type<tc>, window_params = [{transform_indices = @transform_0, window_bounds = array<i64: 4, 32, 128>}, {pipeline_mode = #tpu.pipeline_mode<synchronous>, transform_indices = @transform_1, window_bounds = array<i64: 32, 1>}, {pipeline_mode = #tpu.pipeline_mode<synchronous>, transform_indices = @transform_2, window_bounds = array<i64: 32, 1>}, {transform_indices = @transform_3, window_bounds = array<i64: 4, 32, 128>}]} {
    %c0 = arith.constant 0 : index
    %c0_0 = arith.constant 0 : index
    %c0_1 = arith.constant 0 : index
    %0 = vector.load %arg1[%c0, %c0_0, %c0_1] : memref<4x32x128xf32, #tpu.memory_space<vmem>>, vector<4x32x128xf32>
    %c0_2 = arith.constant 0 : index
    %c0_3 = arith.constant 0 : index
    %1 = vector.load %arg2[%c0_2, %c0_3] : memref<32x1xf32, #tpu.memory_space<vmem>>, vector<32x1xf32>
    %2 = vector.shape_cast %1 : vector<32x1xf32> to vector<1x32x1xf32>
    %c0_4 = arith.constant 0 : index
    %c0_5 = arith.constant 0 : index
    %3 = vector.load %arg3[%c0_4, %c0_5] : memref<32x1xf32, #tpu.memory_space<vmem>>, vector<32x1xf32>
    %4 = vector.shape_cast %3 : vector<32x1xf32> to vector<1x32x1xf32>
    %5 = vector.broadcast %2 : vector<1x32x1xf32> to vector<4x32x128xf32>
    %6 = arith.mulf %0, %5 : vector<4x32x128xf32>
    %7 = vector.broadcast %4 : vector<1x32x1xf32> to vector<4x32x128xf32>
    %8 = arith.addf %6, %7 : vector<4x32x128xf32>
    %cst = arith.constant 0.000000e+00 : f32
    %9 = vector.broadcast %cst : f32 to vector<4x32x128xf32>
    %10 = arith.maximumf %8, %9 : vector<4x32x128xf32>
    %11 = arith.truncf %10 : vector<4x32x128xf32> to vector<4x32x128xbf16>
    %c0_6 = arith.constant 0 : index
    %c0_7 = arith.constant 0 : index
    %c0_8 = arith.constant 0 : index
    %12 = vector.load %arg4[%c0_6, %c0_7, %c0_8] : memref<4x32x128xbf16, #tpu.memory_space<vmem>>, vector<4x32x128xbf16>
    tpu.vector_store %arg4[%c0_6, %c0_7, %c0_8], %11 {strides = array<i32>} : memref<4x32x128xbf16, #tpu.memory_space<vmem>>, vector<4x32x128xbf16>,
    return
  }
  func.func @transform_0(%arg0: i32) -> (i32, i32, i32) {
    %c0_i32 = arith.constant 0 : i32
    %c0_i32_0 = arith.constant 0 : i32
    %c0_i32_1 = arith.constant 0 : i32
    return %c0_i32, %c0_i32_0, %arg0 : i32, i32, i32
  }
  func.func @transform_1(%arg0: i32) -> (i32, i32) {
    %c0_i32 = arith.constant 0 : i32
    %c0_i32_0 = arith.constant 0 : i32
    %c0_i32_1 = arith.constant 0 : i32
    return %c0_i32, %c0_i32_0 : i32, i32
  }
  func.func @transform_2(%arg0: i32) -> (i32, i32) {
    %c0_i32 = arith.constant 0 : i32
    %c0_i32_0 = arith.constant 0 : i32
    %c0_i32_1 = arith.constant 0 : i32
    return %c0_i32, %c0_i32_0 : i32, i32
  }
  func.func @transform_3(%arg0: i32) -> (i32, i32, i32) {
    %c0_i32 = arith.constant 0 : i32
    %c0_i32_0 = arith.constant 0 : i32
    %c0_i32_1 = arith.constant 0 : i32
    return %c0_i32, %c0_i32_0, %arg0 : i32, i32, i32
  }
}

module attributes {stable_mosaic.version = 11 : i64} {
  func.func @_phase_mm_kernel(%arg0: i32, %arg1: memref<9x32x128xbf16, #tpu.memory_space<vmem>>, %arg2: memref<4x4x16x32xbf16, #tpu.memory_space<vmem>>, %arg3: memref<4x16x128xf32, #tpu.memory_space<vmem>>) attributes {dimension_semantics = [#tpu.dimension_semantics<parallel>], iteration_bounds = array<i64: 1>, scalar_prefetch = 0 : i64, scratch_operands = 0 : i64, tpu.core_type = #tpu.core_type<tc>, window_params = [{transform_indices = @transform_0, window_bounds = array<i64: 9, 32, 128>}, {pipeline_mode = #tpu.pipeline_mode<synchronous>, transform_indices = @transform_1, window_bounds = array<i64: 4, 4, 16, 32>}, {transform_indices = @transform_2, window_bounds = array<i64: 4, 16, 128>}]} {
    %c0 = arith.constant 0 : index
    %c0_0 = arith.constant 0 : index
    %c0_1 = arith.constant 0 : index
    %c0_2 = arith.constant 0 : index
    %0 = vector.load %arg2[%c0, %c0_0, %c0_1, %c0_2] : memref<4x4x16x32xbf16, #tpu.memory_space<vmem>>, vector<1x1x16x32xbf16>
    %1 = vector.shape_cast %0 : vector<1x1x16x32xbf16> to vector<16x32xbf16>
    %c0_3 = arith.constant 0 : index
    %c0_4 = arith.constant 0 : index
    %c0_5 = arith.constant 0 : index
    %2 = vector.load %arg1[%c0_3, %c0_4, %c0_5] : memref<9x32x128xbf16, #tpu.memory_space<vmem>>, vector<1x32x128xbf16>
    %3 = vector.shape_cast %2 : vector<1x32x128xbf16> to vector<32x128xbf16>
    %cst = arith.constant dense<0.000000e+00> : vector<16x128xf32>
    %4 = tpu.matmul %1, %3, %cst {dimension_numbers = #tpu.dot_dimension_numbers<[1], [0], [0], [1], [0, 0, 1, 1], [], []>} : vector<16x32xbf16>, vector<32x128xbf16>, vector<16x128xf32> -> vector<16x128xf32>
    %c0_6 = arith.constant 0 : index
    %c1 = arith.constant 1 : index
    %c0_7 = arith.constant 0 : index
    %c0_8 = arith.constant 0 : index
    %5 = vector.load %arg2[%c0_6, %c1, %c0_7, %c0_8] : memref<4x4x16x32xbf16, #tpu.memory_space<vmem>>, vector<1x1x16x32xbf16>
    %6 = vector.shape_cast %5 : vector<1x1x16x32xbf16> to vector<16x32xbf16>
    %c1_9 = arith.constant 1 : index
    %c0_10 = arith.constant 0 : index
    %c0_11 = arith.constant 0 : index
    %7 = vector.load %arg1[%c1_9, %c0_10, %c0_11] : memref<9x32x128xbf16, #tpu.memory_space<vmem>>, vector<1x32x128xbf16>
    %8 = vector.shape_cast %7 : vector<1x32x128xbf16> to vector<32x128xbf16>
    %cst_12 = arith.constant dense<0.000000e+00> : vector<16x128xf32>
    %9 = tpu.matmul %6, %8, %cst_12 {dimension_numbers = #tpu.dot_dimension_numbers<[1], [0], [0], [1], [0, 0, 1, 1], [], []>} : vector<16x32xbf16>, vector<32x128xbf16>, vector<16x128xf32> -> vector<16x128xf32>
    %10 = arith.addf %4, %9 : vector<16x128xf32>
    %c0_13 = arith.constant 0 : index
    %c2 = arith.constant 2 : index
    %c0_14 = arith.constant 0 : index
    %c0_15 = arith.constant 0 : index
    %11 = vector.load %arg2[%c0_13, %c2, %c0_14, %c0_15] : memref<4x4x16x32xbf16, #tpu.memory_space<vmem>>, vector<1x1x16x32xbf16>
    %12 = vector.shape_cast %11 : vector<1x1x16x32xbf16> to vector<16x32xbf16>
    %c3 = arith.constant 3 : index
    %c0_16 = arith.constant 0 : index
    %c0_17 = arith.constant 0 : index
    %13 = vector.load %arg1[%c3, %c0_16, %c0_17] : memref<9x32x128xbf16, #tpu.memory_space<vmem>>, vector<1x32x128xbf16>
    %14 = vector.shape_cast %13 : vector<1x32x128xbf16> to vector<32x128xbf16>
    %cst_18 = arith.constant dense<0.000000e+00> : vector<16x128xf32>
    %15 = tpu.matmul %12, %14, %cst_18 {dimension_numbers = #tpu.dot_dimension_numbers<[1], [0], [0], [1], [0, 0, 1, 1], [], []>} : vector<16x32xbf16>, vector<32x128xbf16>, vector<16x128xf32> -> vector<16x128xf32>
    %16 = arith.addf %10, %15 : vector<16x128xf32>
    %c0_19 = arith.constant 0 : index
    %c3_20 = arith.constant 3 : index
    %c0_21 = arith.constant 0 : index
    %c0_22 = arith.constant 0 : index
    %17 = vector.load %arg2[%c0_19, %c3_20, %c0_21, %c0_22] : memref<4x4x16x32xbf16, #tpu.memory_space<vmem>>, vector<1x1x16x32xbf16>
    %18 = vector.shape_cast %17 : vector<1x1x16x32xbf16> to vector<16x32xbf16>
    %c4 = arith.constant 4 : index
    %c0_23 = arith.constant 0 : index
    %c0_24 = arith.constant 0 : index
    %19 = vector.load %arg1[%c4, %c0_23, %c0_24] : memref<9x32x128xbf16, #tpu.memory_space<vmem>>, vector<1x32x128xbf16>
    %20 = vector.shape_cast %19 : vector<1x32x128xbf16> to vector<32x128xbf16>
    %cst_25 = arith.constant dense<0.000000e+00> : vector<16x128xf32>
    %21 = tpu.matmul %18, %20, %cst_25 {dimension_numbers = #tpu.dot_dimension_numbers<[1], [0], [0], [1], [0, 0, 1, 1], [], []>} : vector<16x32xbf16>, vector<32x128xbf16>, vector<16x128xf32> -> vector<16x128xf32>
    %22 = arith.addf %16, %21 : vector<16x128xf32>
    %c0_26 = arith.constant 0 : index
    %c0_27 = arith.constant 0 : index
    %c0_28 = arith.constant 0 : index
    %23 = vector.load %arg3[%c0_26, %c0_27, %c0_28] : memref<4x16x128xf32, #tpu.memory_space<vmem>>, vector<1x16x128xf32>
    %24 = vector.shape_cast %23 : vector<1x16x128xf32> to vector<16x128xf32>
    %25 = vector.shape_cast %22 : vector<16x128xf32> to vector<1x16x128xf32>
    tpu.vector_store %arg3[%c0_26, %c0_27, %c0_28], %25 {strides = array<i32>} : memref<4x16x128xf32, #tpu.memory_space<vmem>>, vector<1x16x128xf32>,
    %c1_29 = arith.constant 1 : index
    %c0_30 = arith.constant 0 : index
    %c0_31 = arith.constant 0 : index
    %c0_32 = arith.constant 0 : index
    %26 = vector.load %arg2[%c1_29, %c0_30, %c0_31, %c0_32] : memref<4x4x16x32xbf16, #tpu.memory_space<vmem>>, vector<1x1x16x32xbf16>
    %27 = vector.shape_cast %26 : vector<1x1x16x32xbf16> to vector<16x32xbf16>
    %c1_33 = arith.constant 1 : index
    %c0_34 = arith.constant 0 : index
    %c0_35 = arith.constant 0 : index
    %28 = vector.load %arg1[%c1_33, %c0_34, %c0_35] : memref<9x32x128xbf16, #tpu.memory_space<vmem>>, vector<1x32x128xbf16>
    %29 = vector.shape_cast %28 : vector<1x32x128xbf16> to vector<32x128xbf16>
    %cst_36 = arith.constant dense<0.000000e+00> : vector<16x128xf32>
    %30 = tpu.matmul %27, %29, %cst_36 {dimension_numbers = #tpu.dot_dimension_numbers<[1], [0], [0], [1], [0, 0, 1, 1], [], []>} : vector<16x32xbf16>, vector<32x128xbf16>, vector<16x128xf32> -> vector<16x128xf32>
    %c1_37 = arith.constant 1 : index
    %c1_38 = arith.constant 1 : index
    %c0_39 = arith.constant 0 : index
    %c0_40 = arith.constant 0 : index
    %31 = vector.load %arg2[%c1_37, %c1_38, %c0_39, %c0_40] : memref<4x4x16x32xbf16, #tpu.memory_space<vmem>>, vector<1x1x16x32xbf16>
    %32 = vector.shape_cast %31 : vector<1x1x16x32xbf16> to vector<16x32xbf16>
    %c2_41 = arith.constant 2 : index
    %c0_42 = arith.constant 0 : index
    %c0_43 = arith.constant 0 : index
    %33 = vector.load %arg1[%c2_41, %c0_42, %c0_43] : memref<9x32x128xbf16, #tpu.memory_space<vmem>>, vector<1x32x128xbf16>
    %34 = vector.shape_cast %33 : vector<1x32x128xbf16> to vector<32x128xbf16>
    %cst_44 = arith.constant dense<0.000000e+00> : vector<16x128xf32>
    %35 = tpu.matmul %32, %34, %cst_44 {dimension_numbers = #tpu.dot_dimension_numbers<[1], [0], [0], [1], [0, 0, 1, 1], [], []>} : vector<16x32xbf16>, vector<32x128xbf16>, vector<16x128xf32> -> vector<16x128xf32>
    %36 = arith.addf %30, %35 : vector<16x128xf32>
    %c1_45 = arith.constant 1 : index
    %c2_46 = arith.constant 2 : index
    %c0_47 = arith.constant 0 : index
    %c0_48 = arith.constant 0 : index
    %37 = vector.load %arg2[%c1_45, %c2_46, %c0_47, %c0_48] : memref<4x4x16x32xbf16, #tpu.memory_space<vmem>>, vector<1x1x16x32xbf16>
    %38 = vector.shape_cast %37 : vector<1x1x16x32xbf16> to vector<16x32xbf16>
    %c4_49 = arith.constant 4 : index
    %c0_50 = arith.constant 0 : index
    %c0_51 = arith.constant 0 : index
    %39 = vector.load %arg1[%c4_49, %c0_50, %c0_51] : memref<9x32x128xbf16, #tpu.memory_space<vmem>>, vector<1x32x128xbf16>
    %40 = vector.shape_cast %39 : vector<1x32x128xbf16> to vector<32x128xbf16>
    %cst_52 = arith.constant dense<0.000000e+00> : vector<16x128xf32>
    %41 = tpu.matmul %38, %40, %cst_52 {dimension_numbers = #tpu.dot_dimension_numbers<[1], [0], [0], [1], [0, 0, 1, 1], [], []>} : vector<16x32xbf16>, vector<32x128xbf16>, vector<16x128xf32> -> vector<16x128xf32>
    %42 = arith.addf %36, %41 : vector<16x128xf32>
    %c1_53 = arith.constant 1 : index
    %c3_54 = arith.constant 3 : index
    %c0_55 = arith.constant 0 : index
    %c0_56 = arith.constant 0 : index
    %43 = vector.load %arg2[%c1_53, %c3_54, %c0_55, %c0_56] : memref<4x4x16x32xbf16, #tpu.memory_space<vmem>>, vector<1x1x16x32xbf16>
    %44 = vector.shape_cast %43 : vector<1x1x16x32xbf16> to vector<16x32xbf16>
    %c5 = arith.constant 5 : index
    %c0_57 = arith.constant 0 : index
    %c0_58 = arith.constant 0 : index
    %45 = vector.load %arg1[%c5, %c0_57, %c0_58] : memref<9x32x128xbf16, #tpu.memory_space<vmem>>, vector<1x32x128xbf16>
    %46 = vector.shape_cast %45 : vector<1x32x128xbf16> to vector<32x128xbf16>
    %cst_59 = arith.constant dense<0.000000e+00> : vector<16x128xf32>
    %47 = tpu.matmul %44, %46, %cst_59 {dimension_numbers = #tpu.dot_dimension_numbers<[1], [0], [0], [1], [0, 0, 1, 1], [], []>} : vector<16x32xbf16>, vector<32x128xbf16>, vector<16x128xf32> -> vector<16x128xf32>
    %48 = arith.addf %42, %47 : vector<16x128xf32>
    %c1_60 = arith.constant 1 : index
    %c0_61 = arith.constant 0 : index
    %c0_62 = arith.constant 0 : index
    %49 = vector.load %arg3[%c1_60, %c0_61, %c0_62] : memref<4x16x128xf32, #tpu.memory_space<vmem>>, vector<1x16x128xf32>
    %50 = vector.shape_cast %49 : vector<1x16x128xf32> to vector<16x128xf32>
    %51 = vector.shape_cast %48 : vector<16x128xf32> to vector<1x16x128xf32>
    tpu.vector_store %arg3[%c1_60, %c0_61, %c0_62], %51 {strides = array<i32>} : memref<4x16x128xf32, #tpu.memory_space<vmem>>, vector<1x16x128xf32>,
    %c2_63 = arith.constant 2 : index
    %c0_64 = arith.constant 0 : index
    %c0_65 = arith.constant 0 : index
    %c0_66 = arith.constant 0 : index
    %52 = vector.load %arg2[%c2_63, %c0_64, %c0_65, %c0_66] : memref<4x4x16x32xbf16, #tpu.memory_space<vmem>>, vector<1x1x16x32xbf16>
    %53 = vector.shape_cast %52 : vector<1x1x16x32xbf16> to vector<16x32xbf16>
    %c3_67 = arith.constant 3 : index
    %c0_68 = arith.constant 0 : index
    %c0_69 = arith.constant 0 : index
    %54 = vector.load %arg1[%c3_67, %c0_68, %c0_69] : memref<9x32x128xbf16, #tpu.memory_space<vmem>>, vector<1x32x128xbf16>
    %55 = vector.shape_cast %54 : vector<1x32x128xbf16> to vector<32x128xbf16>
    %cst_70 = arith.constant dense<0.000000e+00> : vector<16x128xf32>
    %56 = tpu.matmul %53, %55, %cst_70 {dimension_numbers = #tpu.dot_dimension_numbers<[1], [0], [0], [1], [0, 0, 1, 1], [], []>} : vector<16x32xbf16>, vector<32x128xbf16>, vector<16x128xf32> -> vector<16x128xf32>
    %c2_71 = arith.constant 2 : index
    %c1_72 = arith.constant 1 : index
    %c0_73 = arith.constant 0 : index
    %c0_74 = arith.constant 0 : index
    %57 = vector.load %arg2[%c2_71, %c1_72, %c0_73, %c0_74] : memref<4x4x16x32xbf16, #tpu.memory_space<vmem>>, vector<1x1x16x32xbf16>
    %58 = vector.shape_cast %57 : vector<1x1x16x32xbf16> to vector<16x32xbf16>
    %c4_75 = arith.constant 4 : index
    %c0_76 = arith.constant 0 : index
    %c0_77 = arith.constant 0 : index
    %59 = vector.load %arg1[%c4_75, %c0_76, %c0_77] : memref<9x32x128xbf16, #tpu.memory_space<vmem>>, vector<1x32x128xbf16>
    %60 = vector.shape_cast %59 : vector<1x32x128xbf16> to vector<32x128xbf16>
    %cst_78 = arith.constant dense<0.000000e+00> : vector<16x128xf32>
    %61 = tpu.matmul %58, %60, %cst_78 {dimension_numbers = #tpu.dot_dimension_numbers<[1], [0], [0], [1], [0, 0, 1, 1], [], []>} : vector<16x32xbf16>, vector<32x128xbf16>, vector<16x128xf32> -> vector<16x128xf32>
    %62 = arith.addf %56, %61 : vector<16x128xf32>
    %c2_79 = arith.constant 2 : index
    %c2_80 = arith.constant 2 : index
    %c0_81 = arith.constant 0 : index
    %c0_82 = arith.constant 0 : index
    %63 = vector.load %arg2[%c2_79, %c2_80, %c0_81, %c0_82] : memref<4x4x16x32xbf16, #tpu.memory_space<vmem>>, vector<1x1x16x32xbf16>
    %64 = vector.shape_cast %63 : vector<1x1x16x32xbf16> to vector<16x32xbf16>
    %c6 = arith.constant 6 : index
    %c0_83 = arith.constant 0 : index
    %c0_84 = arith.constant 0 : index
    %65 = vector.load %arg1[%c6, %c0_83, %c0_84] : memref<9x32x128xbf16, #tpu.memory_space<vmem>>, vector<1x32x128xbf16>
    %66 = vector.shape_cast %65 : vector<1x32x128xbf16> to vector<32x128xbf16>
    %cst_85 = arith.constant dense<0.000000e+00> : vector<16x128xf32>
    %67 = tpu.matmul %64, %66, %cst_85 {dimension_numbers = #tpu.dot_dimension_numbers<[1], [0], [0], [1], [0, 0, 1, 1], [], []>} : vector<16x32xbf16>, vector<32x128xbf16>, vector<16x128xf32> -> vector<16x128xf32>
    %68 = arith.addf %62, %67 : vector<16x128xf32>
    %c2_86 = arith.constant 2 : index
    %c3_87 = arith.constant 3 : index
    %c0_88 = arith.constant 0 : index
    %c0_89 = arith.constant 0 : index
    %69 = vector.load %arg2[%c2_86, %c3_87, %c0_88, %c0_89] : memref<4x4x16x32xbf16, #tpu.memory_space<vmem>>, vector<1x1x16x32xbf16>
    %70 = vector.shape_cast %69 : vector<1x1x16x32xbf16> to vector<16x32xbf16>
    %c7 = arith.constant 7 : index
    %c0_90 = arith.constant 0 : index
    %c0_91 = arith.constant 0 : index
    %71 = vector.load %arg1[%c7, %c0_90, %c0_91] : memref<9x32x128xbf16, #tpu.memory_space<vmem>>, vector<1x32x128xbf16>
    %72 = vector.shape_cast %71 : vector<1x32x128xbf16> to vector<32x128xbf16>
    %cst_92 = arith.constant dense<0.000000e+00> : vector<16x128xf32>
    %73 = tpu.matmul %70, %72, %cst_92 {dimension_numbers = #tpu.dot_dimension_numbers<[1], [0], [0], [1], [0, 0, 1, 1], [], []>} : vector<16x32xbf16>, vector<32x128xbf16>, vector<16x128xf32> -> vector<16x128xf32>
    %74 = arith.addf %68, %73 : vector<16x128xf32>
    %c2_93 = arith.constant 2 : index
    %c0_94 = arith.constant 0 : index
    %c0_95 = arith.constant 0 : index
    %75 = vector.load %arg3[%c2_93, %c0_94, %c0_95] : memref<4x16x128xf32, #tpu.memory_space<vmem>>, vector<1x16x128xf32>
    %76 = vector.shape_cast %75 : vector<1x16x128xf32> to vector<16x128xf32>
    %77 = vector.shape_cast %74 : vector<16x128xf32> to vector<1x16x128xf32>
    tpu.vector_store %arg3[%c2_93, %c0_94, %c0_95], %77 {strides = array<i32>} : memref<4x16x128xf32, #tpu.memory_space<vmem>>, vector<1x16x128xf32>,
    %c3_96 = arith.constant 3 : index
    %c0_97 = arith.constant 0 : index
    %c0_98 = arith.constant 0 : index
    %c0_99 = arith.constant 0 : index
    %78 = vector.load %arg2[%c3_96, %c0_97, %c0_98, %c0_99] : memref<4x4x16x32xbf16, #tpu.memory_space<vmem>>, vector<1x1x16x32xbf16>
    %79 = vector.shape_cast %78 : vector<1x1x16x32xbf16> to vector<16x32xbf16>
    %c4_100 = arith.constant 4 : index
    %c0_101 = arith.constant 0 : index
    %c0_102 = arith.constant 0 : index
    %80 = vector.load %arg1[%c4_100, %c0_101, %c0_102] : memref<9x32x128xbf16, #tpu.memory_space<vmem>>, vector<1x32x128xbf16>
    %81 = vector.shape_cast %80 : vector<1x32x128xbf16> to vector<32x128xbf16>
    %cst_103 = arith.constant dense<0.000000e+00> : vector<16x128xf32>
    %82 = tpu.matmul %79, %81, %cst_103 {dimension_numbers = #tpu.dot_dimension_numbers<[1], [0], [0], [1], [0, 0, 1, 1], [], []>} : vector<16x32xbf16>, vector<32x128xbf16>, vector<16x128xf32> -> vector<16x128xf32>
    %c3_104 = arith.constant 3 : index
    %c1_105 = arith.constant 1 : index
    %c0_106 = arith.constant 0 : index
    %c0_107 = arith.constant 0 : index
    %83 = vector.load %arg2[%c3_104, %c1_105, %c0_106, %c0_107] : memref<4x4x16x32xbf16, #tpu.memory_space<vmem>>, vector<1x1x16x32xbf16>
    %84 = vector.shape_cast %83 : vector<1x1x16x32xbf16> to vector<16x32xbf16>
    %c5_108 = arith.constant 5 : index
    %c0_109 = arith.constant 0 : index
    %c0_110 = arith.constant 0 : index
    %85 = vector.load %arg1[%c5_108, %c0_109, %c0_110] : memref<9x32x128xbf16, #tpu.memory_space<vmem>>, vector<1x32x128xbf16>
    %86 = vector.shape_cast %85 : vector<1x32x128xbf16> to vector<32x128xbf16>
    %cst_111 = arith.constant dense<0.000000e+00> : vector<16x128xf32>
    %87 = tpu.matmul %84, %86, %cst_111 {dimension_numbers = #tpu.dot_dimension_numbers<[1], [0], [0], [1], [0, 0, 1, 1], [], []>} : vector<16x32xbf16>, vector<32x128xbf16>, vector<16x128xf32> -> vector<16x128xf32>
    %88 = arith.addf %82, %87 : vector<16x128xf32>
    %c3_112 = arith.constant 3 : index
    %c2_113 = arith.constant 2 : index
    %c0_114 = arith.constant 0 : index
    %c0_115 = arith.constant 0 : index
    %89 = vector.load %arg2[%c3_112, %c2_113, %c0_114, %c0_115] : memref<4x4x16x32xbf16, #tpu.memory_space<vmem>>, vector<1x1x16x32xbf16>
    %90 = vector.shape_cast %89 : vector<1x1x16x32xbf16> to vector<16x32xbf16>
    %c7_116 = arith.constant 7 : index
    %c0_117 = arith.constant 0 : index
    %c0_118 = arith.constant 0 : index
    %91 = vector.load %arg1[%c7_116, %c0_117, %c0_118] : memref<9x32x128xbf16, #tpu.memory_space<vmem>>, vector<1x32x128xbf16>
    %92 = vector.shape_cast %91 : vector<1x32x128xbf16> to vector<32x128xbf16>
    %cst_119 = arith.constant dense<0.000000e+00> : vector<16x128xf32>
    %93 = tpu.matmul %90, %92, %cst_119 {dimension_numbers = #tpu.dot_dimension_numbers<[1], [0], [0], [1], [0, 0, 1, 1], [], []>} : vector<16x32xbf16>, vector<32x128xbf16>, vector<16x128xf32> -> vector<16x128xf32>
    %94 = arith.addf %88, %93 : vector<16x128xf32>
    %c3_120 = arith.constant 3 : index
    %c3_121 = arith.constant 3 : index
    %c0_122 = arith.constant 0 : index
    %c0_123 = arith.constant 0 : index
    %95 = vector.load %arg2[%c3_120, %c3_121, %c0_122, %c0_123] : memref<4x4x16x32xbf16, #tpu.memory_space<vmem>>, vector<1x1x16x32xbf16>
    %96 = vector.shape_cast %95 : vector<1x1x16x32xbf16> to vector<16x32xbf16>
    %c8 = arith.constant 8 : index
    %c0_124 = arith.constant 0 : index
    %c0_125 = arith.constant 0 : index
    %97 = vector.load %arg1[%c8, %c0_124, %c0_125] : memref<9x32x128xbf16, #tpu.memory_space<vmem>>, vector<1x32x128xbf16>
    %98 = vector.shape_cast %97 : vector<1x32x128xbf16> to vector<32x128xbf16>
    %cst_126 = arith.constant dense<0.000000e+00> : vector<16x128xf32>
    %99 = tpu.matmul %96, %98, %cst_126 {dimension_numbers = #tpu.dot_dimension_numbers<[1], [0], [0], [1], [0, 0, 1, 1], [], []>} : vector<16x32xbf16>, vector<32x128xbf16>, vector<16x128xf32> -> vector<16x128xf32>
    %100 = arith.addf %94, %99 : vector<16x128xf32>
    %c3_127 = arith.constant 3 : index
    %c0_128 = arith.constant 0 : index
    %c0_129 = arith.constant 0 : index
    %101 = vector.load %arg3[%c3_127, %c0_128, %c0_129] : memref<4x16x128xf32, #tpu.memory_space<vmem>>, vector<1x16x128xf32>
    %102 = vector.shape_cast %101 : vector<1x16x128xf32> to vector<16x128xf32>
    %103 = vector.shape_cast %100 : vector<16x128xf32> to vector<1x16x128xf32>
    tpu.vector_store %arg3[%c3_127, %c0_128, %c0_129], %103 {strides = array<i32>} : memref<4x16x128xf32, #tpu.memory_space<vmem>>, vector<1x16x128xf32>,
    return
  }
  func.func @transform_0(%arg0: i32) -> (i32, i32, i32) {
    %c0_i32 = arith.constant 0 : i32
    %c0_i32_0 = arith.constant 0 : i32
    %c0_i32_1 = arith.constant 0 : i32
    return %c0_i32, %c0_i32_0, %arg0 : i32, i32, i32
  }
  func.func @transform_1(%arg0: i32) -> (i32, i32, i32, i32) {
    %c0_i32 = arith.constant 0 : i32
    %c0_i32_0 = arith.constant 0 : i32
    %c0_i32_1 = arith.constant 0 : i32
    %c0_i32_2 = arith.constant 0 : i32
    %c0_i32_3 = arith.constant 0 : i32
    return %c0_i32, %c0_i32_0, %c0_i32_1, %c0_i32_2 : i32, i32, i32, i32
  }
  func.func @transform_2(%arg0: i32) -> (i32, i32, i32) {
    %c0_i32 = arith.constant 0 : i32
    %c0_i32_0 = arith.constant 0 : i32
    %c0_i32_1 = arith.constant 0 : i32
    return %c0_i32, %c0_i32_0, %arg0 : i32, i32, i32
  }
}

module attributes {stable_mosaic.version = 11 : i64} {
  func.func @_bn_relu_kernel(%arg0: i32, %arg1: memref<4x16x128xf32, #tpu.memory_space<vmem>>, %arg2: memref<16x1xf32, #tpu.memory_space<vmem>>, %arg3: memref<16x1xf32, #tpu.memory_space<vmem>>, %arg4: memref<4x16x128xbf16, #tpu.memory_space<vmem>>) attributes {dimension_semantics = [#tpu.dimension_semantics<parallel>], iteration_bounds = array<i64: 1>, scalar_prefetch = 0 : i64, scratch_operands = 0 : i64, tpu.core_type = #tpu.core_type<tc>, window_params = [{transform_indices = @transform_0, window_bounds = array<i64: 4, 16, 128>}, {pipeline_mode = #tpu.pipeline_mode<synchronous>, transform_indices = @transform_1, window_bounds = array<i64: 16, 1>}, {pipeline_mode = #tpu.pipeline_mode<synchronous>, transform_indices = @transform_2, window_bounds = array<i64: 16, 1>}, {transform_indices = @transform_3, window_bounds = array<i64: 4, 16, 128>}]} {
    %c0 = arith.constant 0 : index
    %c0_0 = arith.constant 0 : index
    %c0_1 = arith.constant 0 : index
    %0 = vector.load %arg1[%c0, %c0_0, %c0_1] : memref<4x16x128xf32, #tpu.memory_space<vmem>>, vector<4x16x128xf32>
    %c0_2 = arith.constant 0 : index
    %c0_3 = arith.constant 0 : index
    %1 = vector.load %arg2[%c0_2, %c0_3] : memref<16x1xf32, #tpu.memory_space<vmem>>, vector<16x1xf32>
    %2 = vector.shape_cast %1 : vector<16x1xf32> to vector<1x16x1xf32>
    %c0_4 = arith.constant 0 : index
    %c0_5 = arith.constant 0 : index
    %3 = vector.load %arg3[%c0_4, %c0_5] : memref<16x1xf32, #tpu.memory_space<vmem>>, vector<16x1xf32>
    %4 = vector.shape_cast %3 : vector<16x1xf32> to vector<1x16x1xf32>
    %5 = vector.broadcast %2 : vector<1x16x1xf32> to vector<4x16x128xf32>
    %6 = arith.mulf %0, %5 : vector<4x16x128xf32>
    %7 = vector.broadcast %4 : vector<1x16x1xf32> to vector<4x16x128xf32>
    %8 = arith.addf %6, %7 : vector<4x16x128xf32>
    %cst = arith.constant 0.000000e+00 : f32
    %9 = vector.broadcast %cst : f32 to vector<4x16x128xf32>
    %10 = arith.maximumf %8, %9 : vector<4x16x128xf32>
    %11 = arith.truncf %10 : vector<4x16x128xf32> to vector<4x16x128xbf16>
    %c0_6 = arith.constant 0 : index
    %c0_7 = arith.constant 0 : index
    %c0_8 = arith.constant 0 : index
    %12 = vector.load %arg4[%c0_6, %c0_7, %c0_8] : memref<4x16x128xbf16, #tpu.memory_space<vmem>>, vector<4x16x128xbf16>
    tpu.vector_store %arg4[%c0_6, %c0_7, %c0_8], %11 {strides = array<i32>} : memref<4x16x128xbf16, #tpu.memory_space<vmem>>, vector<4x16x128xbf16>,
    return
  }
  func.func @transform_0(%arg0: i32) -> (i32, i32, i32) {
    %c0_i32 = arith.constant 0 : i32
    %c0_i32_0 = arith.constant 0 : i32
    %c0_i32_1 = arith.constant 0 : i32
    return %c0_i32, %c0_i32_0, %arg0 : i32, i32, i32
  }
  func.func @transform_1(%arg0: i32) -> (i32, i32) {
    %c0_i32 = arith.constant 0 : i32
    %c0_i32_0 = arith.constant 0 : i32
    %c0_i32_1 = arith.constant 0 : i32
    return %c0_i32, %c0_i32_0 : i32, i32
  }
  func.func @transform_2(%arg0: i32) -> (i32, i32) {
    %c0_i32 = arith.constant 0 : i32
    %c0_i32_0 = arith.constant 0 : i32
    %c0_i32_1 = arith.constant 0 : i32
    return %c0_i32, %c0_i32_0 : i32, i32
  }
  func.func @transform_3(%arg0: i32) -> (i32, i32, i32) {
    %c0_i32 = arith.constant 0 : i32
    %c0_i32_0 = arith.constant 0 : i32
    %c0_i32_1 = arith.constant 0 : i32
    return %c0_i32, %c0_i32_0, %arg0 : i32, i32, i32
  }
}

module attributes {stable_mosaic.version = 11 : i64} {
  func.func @_phase_mm_kernel(%arg0: i32, %arg1: memref<9x16x128xbf16, #tpu.memory_space<vmem>>, %arg2: memref<4x4x8x16xbf16, #tpu.memory_space<vmem>>, %arg3: memref<4x8x128xf32, #tpu.memory_space<vmem>>) attributes {dimension_semantics = [#tpu.dimension_semantics<parallel>], iteration_bounds = array<i64: 1>, scalar_prefetch = 0 : i64, scratch_operands = 0 : i64, tpu.core_type = #tpu.core_type<tc>, window_params = [{transform_indices = @transform_0, window_bounds = array<i64: 9, 16, 128>}, {pipeline_mode = #tpu.pipeline_mode<synchronous>, transform_indices = @transform_1, window_bounds = array<i64: 4, 4, 8, 16>}, {transform_indices = @transform_2, window_bounds = array<i64: 4, 8, 128>}]} {
    %c0 = arith.constant 0 : index
    %c0_0 = arith.constant 0 : index
    %c0_1 = arith.constant 0 : index
    %c0_2 = arith.constant 0 : index
    %0 = vector.load %arg2[%c0, %c0_0, %c0_1, %c0_2] : memref<4x4x8x16xbf16, #tpu.memory_space<vmem>>, vector<1x1x8x16xbf16>
    %1 = vector.shape_cast %0 : vector<1x1x8x16xbf16> to vector<8x16xbf16>
    %c0_3 = arith.constant 0 : index
    %c0_4 = arith.constant 0 : index
    %c0_5 = arith.constant 0 : index
    %2 = vector.load %arg1[%c0_3, %c0_4, %c0_5] : memref<9x16x128xbf16, #tpu.memory_space<vmem>>, vector<1x16x128xbf16>
    %3 = vector.shape_cast %2 : vector<1x16x128xbf16> to vector<16x128xbf16>
    %cst = arith.constant dense<0.000000e+00> : vector<8x128xf32>
    %4 = tpu.matmul %1, %3, %cst {dimension_numbers = #tpu.dot_dimension_numbers<[1], [0], [0], [1], [0, 0, 1, 1], [], []>} : vector<8x16xbf16>, vector<16x128xbf16>, vector<8x128xf32> -> vector<8x128xf32>
    %c0_6 = arith.constant 0 : index
    %c1 = arith.constant 1 : index
    %c0_7 = arith.constant 0 : index
    %c0_8 = arith.constant 0 : index
    %5 = vector.load %arg2[%c0_6, %c1, %c0_7, %c0_8] : memref<4x4x8x16xbf16, #tpu.memory_space<vmem>>, vector<1x1x8x16xbf16>
    %6 = vector.shape_cast %5 : vector<1x1x8x16xbf16> to vector<8x16xbf16>
    %c1_9 = arith.constant 1 : index
    %c0_10 = arith.constant 0 : index
    %c0_11 = arith.constant 0 : index
    %7 = vector.load %arg1[%c1_9, %c0_10, %c0_11] : memref<9x16x128xbf16, #tpu.memory_space<vmem>>, vector<1x16x128xbf16>
    %8 = vector.shape_cast %7 : vector<1x16x128xbf16> to vector<16x128xbf16>
    %cst_12 = arith.constant dense<0.000000e+00> : vector<8x128xf32>
    %9 = tpu.matmul %6, %8, %cst_12 {dimension_numbers = #tpu.dot_dimension_numbers<[1], [0], [0], [1], [0, 0, 1, 1], [], []>} : vector<8x16xbf16>, vector<16x128xbf16>, vector<8x128xf32> -> vector<8x128xf32>
    %10 = arith.addf %4, %9 : vector<8x128xf32>
    %c0_13 = arith.constant 0 : index
    %c2 = arith.constant 2 : index
    %c0_14 = arith.constant 0 : index
    %c0_15 = arith.constant 0 : index
    %11 = vector.load %arg2[%c0_13, %c2, %c0_14, %c0_15] : memref<4x4x8x16xbf16, #tpu.memory_space<vmem>>, vector<1x1x8x16xbf16>
    %12 = vector.shape_cast %11 : vector<1x1x8x16xbf16> to vector<8x16xbf16>
    %c3 = arith.constant 3 : index
    %c0_16 = arith.constant 0 : index
    %c0_17 = arith.constant 0 : index
    %13 = vector.load %arg1[%c3, %c0_16, %c0_17] : memref<9x16x128xbf16, #tpu.memory_space<vmem>>, vector<1x16x128xbf16>
    %14 = vector.shape_cast %13 : vector<1x16x128xbf16> to vector<16x128xbf16>
    %cst_18 = arith.constant dense<0.000000e+00> : vector<8x128xf32>
    %15 = tpu.matmul %12, %14, %cst_18 {dimension_numbers = #tpu.dot_dimension_numbers<[1], [0], [0], [1], [0, 0, 1, 1], [], []>} : vector<8x16xbf16>, vector<16x128xbf16>, vector<8x128xf32> -> vector<8x128xf32>
    %16 = arith.addf %10, %15 : vector<8x128xf32>
    %c0_19 = arith.constant 0 : index
    %c3_20 = arith.constant 3 : index
    %c0_21 = arith.constant 0 : index
    %c0_22 = arith.constant 0 : index
    %17 = vector.load %arg2[%c0_19, %c3_20, %c0_21, %c0_22] : memref<4x4x8x16xbf16, #tpu.memory_space<vmem>>, vector<1x1x8x16xbf16>
    %18 = vector.shape_cast %17 : vector<1x1x8x16xbf16> to vector<8x16xbf16>
    %c4 = arith.constant 4 : index
    %c0_23 = arith.constant 0 : index
    %c0_24 = arith.constant 0 : index
    %19 = vector.load %arg1[%c4, %c0_23, %c0_24] : memref<9x16x128xbf16, #tpu.memory_space<vmem>>, vector<1x16x128xbf16>
    %20 = vector.shape_cast %19 : vector<1x16x128xbf16> to vector<16x128xbf16>
    %cst_25 = arith.constant dense<0.000000e+00> : vector<8x128xf32>
    %21 = tpu.matmul %18, %20, %cst_25 {dimension_numbers = #tpu.dot_dimension_numbers<[1], [0], [0], [1], [0, 0, 1, 1], [], []>} : vector<8x16xbf16>, vector<16x128xbf16>, vector<8x128xf32> -> vector<8x128xf32>
    %22 = arith.addf %16, %21 : vector<8x128xf32>
    %c0_26 = arith.constant 0 : index
    %c0_27 = arith.constant 0 : index
    %c0_28 = arith.constant 0 : index
    %23 = vector.load %arg3[%c0_26, %c0_27, %c0_28] : memref<4x8x128xf32, #tpu.memory_space<vmem>>, vector<1x8x128xf32>
    %24 = vector.shape_cast %23 : vector<1x8x128xf32> to vector<8x128xf32>
    %25 = vector.shape_cast %22 : vector<8x128xf32> to vector<1x8x128xf32>
    tpu.vector_store %arg3[%c0_26, %c0_27, %c0_28], %25 {strides = array<i32>} : memref<4x8x128xf32, #tpu.memory_space<vmem>>, vector<1x8x128xf32>,
    %c1_29 = arith.constant 1 : index
    %c0_30 = arith.constant 0 : index
    %c0_31 = arith.constant 0 : index
    %c0_32 = arith.constant 0 : index
    %26 = vector.load %arg2[%c1_29, %c0_30, %c0_31, %c0_32] : memref<4x4x8x16xbf16, #tpu.memory_space<vmem>>, vector<1x1x8x16xbf16>
    %27 = vector.shape_cast %26 : vector<1x1x8x16xbf16> to vector<8x16xbf16>
    %c1_33 = arith.constant 1 : index
    %c0_34 = arith.constant 0 : index
    %c0_35 = arith.constant 0 : index
    %28 = vector.load %arg1[%c1_33, %c0_34, %c0_35] : memref<9x16x128xbf16, #tpu.memory_space<vmem>>, vector<1x16x128xbf16>
    %29 = vector.shape_cast %28 : vector<1x16x128xbf16> to vector<16x128xbf16>
    %cst_36 = arith.constant dense<0.000000e+00> : vector<8x128xf32>
    %30 = tpu.matmul %27, %29, %cst_36 {dimension_numbers = #tpu.dot_dimension_numbers<[1], [0], [0], [1], [0, 0, 1, 1], [], []>} : vector<8x16xbf16>, vector<16x128xbf16>, vector<8x128xf32> -> vector<8x128xf32>
    %c1_37 = arith.constant 1 : index
    %c1_38 = arith.constant 1 : index
    %c0_39 = arith.constant 0 : index
    %c0_40 = arith.constant 0 : index
    %31 = vector.load %arg2[%c1_37, %c1_38, %c0_39, %c0_40] : memref<4x4x8x16xbf16, #tpu.memory_space<vmem>>, vector<1x1x8x16xbf16>
    %32 = vector.shape_cast %31 : vector<1x1x8x16xbf16> to vector<8x16xbf16>
    %c2_41 = arith.constant 2 : index
    %c0_42 = arith.constant 0 : index
    %c0_43 = arith.constant 0 : index
    %33 = vector.load %arg1[%c2_41, %c0_42, %c0_43] : memref<9x16x128xbf16, #tpu.memory_space<vmem>>, vector<1x16x128xbf16>
    %34 = vector.shape_cast %33 : vector<1x16x128xbf16> to vector<16x128xbf16>
    %cst_44 = arith.constant dense<0.000000e+00> : vector<8x128xf32>
    %35 = tpu.matmul %32, %34, %cst_44 {dimension_numbers = #tpu.dot_dimension_numbers<[1], [0], [0], [1], [0, 0, 1, 1], [], []>} : vector<8x16xbf16>, vector<16x128xbf16>, vector<8x128xf32> -> vector<8x128xf32>
    %36 = arith.addf %30, %35 : vector<8x128xf32>
    %c1_45 = arith.constant 1 : index
    %c2_46 = arith.constant 2 : index
    %c0_47 = arith.constant 0 : index
    %c0_48 = arith.constant 0 : index
    %37 = vector.load %arg2[%c1_45, %c2_46, %c0_47, %c0_48] : memref<4x4x8x16xbf16, #tpu.memory_space<vmem>>, vector<1x1x8x16xbf16>
    %38 = vector.shape_cast %37 : vector<1x1x8x16xbf16> to vector<8x16xbf16>
    %c4_49 = arith.constant 4 : index
    %c0_50 = arith.constant 0 : index
    %c0_51 = arith.constant 0 : index
    %39 = vector.load %arg1[%c4_49, %c0_50, %c0_51] : memref<9x16x128xbf16, #tpu.memory_space<vmem>>, vector<1x16x128xbf16>
    %40 = vector.shape_cast %39 : vector<1x16x128xbf16> to vector<16x128xbf16>
    %cst_52 = arith.constant dense<0.000000e+00> : vector<8x128xf32>
    %41 = tpu.matmul %38, %40, %cst_52 {dimension_numbers = #tpu.dot_dimension_numbers<[1], [0], [0], [1], [0, 0, 1, 1], [], []>} : vector<8x16xbf16>, vector<16x128xbf16>, vector<8x128xf32> -> vector<8x128xf32>
    %42 = arith.addf %36, %41 : vector<8x128xf32>
    %c1_53 = arith.constant 1 : index
    %c3_54 = arith.constant 3 : index
    %c0_55 = arith.constant 0 : index
    %c0_56 = arith.constant 0 : index
    %43 = vector.load %arg2[%c1_53, %c3_54, %c0_55, %c0_56] : memref<4x4x8x16xbf16, #tpu.memory_space<vmem>>, vector<1x1x8x16xbf16>
    %44 = vector.shape_cast %43 : vector<1x1x8x16xbf16> to vector<8x16xbf16>
    %c5 = arith.constant 5 : index
    %c0_57 = arith.constant 0 : index
    %c0_58 = arith.constant 0 : index
    %45 = vector.load %arg1[%c5, %c0_57, %c0_58] : memref<9x16x128xbf16, #tpu.memory_space<vmem>>, vector<1x16x128xbf16>
    %46 = vector.shape_cast %45 : vector<1x16x128xbf16> to vector<16x128xbf16>
    %cst_59 = arith.constant dense<0.000000e+00> : vector<8x128xf32>
    %47 = tpu.matmul %44, %46, %cst_59 {dimension_numbers = #tpu.dot_dimension_numbers<[1], [0], [0], [1], [0, 0, 1, 1], [], []>} : vector<8x16xbf16>, vector<16x128xbf16>, vector<8x128xf32> -> vector<8x128xf32>
    %48 = arith.addf %42, %47 : vector<8x128xf32>
    %c1_60 = arith.constant 1 : index
    %c0_61 = arith.constant 0 : index
    %c0_62 = arith.constant 0 : index
    %49 = vector.load %arg3[%c1_60, %c0_61, %c0_62] : memref<4x8x128xf32, #tpu.memory_space<vmem>>, vector<1x8x128xf32>
    %50 = vector.shape_cast %49 : vector<1x8x128xf32> to vector<8x128xf32>
    %51 = vector.shape_cast %48 : vector<8x128xf32> to vector<1x8x128xf32>
    tpu.vector_store %arg3[%c1_60, %c0_61, %c0_62], %51 {strides = array<i32>} : memref<4x8x128xf32, #tpu.memory_space<vmem>>, vector<1x8x128xf32>,
    %c2_63 = arith.constant 2 : index
    %c0_64 = arith.constant 0 : index
    %c0_65 = arith.constant 0 : index
    %c0_66 = arith.constant 0 : index
    %52 = vector.load %arg2[%c2_63, %c0_64, %c0_65, %c0_66] : memref<4x4x8x16xbf16, #tpu.memory_space<vmem>>, vector<1x1x8x16xbf16>
    %53 = vector.shape_cast %52 : vector<1x1x8x16xbf16> to vector<8x16xbf16>
    %c3_67 = arith.constant 3 : index
    %c0_68 = arith.constant 0 : index
    %c0_69 = arith.constant 0 : index
    %54 = vector.load %arg1[%c3_67, %c0_68, %c0_69] : memref<9x16x128xbf16, #tpu.memory_space<vmem>>, vector<1x16x128xbf16>
    %55 = vector.shape_cast %54 : vector<1x16x128xbf16> to vector<16x128xbf16>
    %cst_70 = arith.constant dense<0.000000e+00> : vector<8x128xf32>
    %56 = tpu.matmul %53, %55, %cst_70 {dimension_numbers = #tpu.dot_dimension_numbers<[1], [0], [0], [1], [0, 0, 1, 1], [], []>} : vector<8x16xbf16>, vector<16x128xbf16>, vector<8x128xf32> -> vector<8x128xf32>
    %c2_71 = arith.constant 2 : index
    %c1_72 = arith.constant 1 : index
    %c0_73 = arith.constant 0 : index
    %c0_74 = arith.constant 0 : index
    %57 = vector.load %arg2[%c2_71, %c1_72, %c0_73, %c0_74] : memref<4x4x8x16xbf16, #tpu.memory_space<vmem>>, vector<1x1x8x16xbf16>
    %58 = vector.shape_cast %57 : vector<1x1x8x16xbf16> to vector<8x16xbf16>
    %c4_75 = arith.constant 4 : index
    %c0_76 = arith.constant 0 : index
    %c0_77 = arith.constant 0 : index
    %59 = vector.load %arg1[%c4_75, %c0_76, %c0_77] : memref<9x16x128xbf16, #tpu.memory_space<vmem>>, vector<1x16x128xbf16>
    %60 = vector.shape_cast %59 : vector<1x16x128xbf16> to vector<16x128xbf16>
    %cst_78 = arith.constant dense<0.000000e+00> : vector<8x128xf32>
    %61 = tpu.matmul %58, %60, %cst_78 {dimension_numbers = #tpu.dot_dimension_numbers<[1], [0], [0], [1], [0, 0, 1, 1], [], []>} : vector<8x16xbf16>, vector<16x128xbf16>, vector<8x128xf32> -> vector<8x128xf32>
    %62 = arith.addf %56, %61 : vector<8x128xf32>
    %c2_79 = arith.constant 2 : index
    %c2_80 = arith.constant 2 : index
    %c0_81 = arith.constant 0 : index
    %c0_82 = arith.constant 0 : index
    %63 = vector.load %arg2[%c2_79, %c2_80, %c0_81, %c0_82] : memref<4x4x8x16xbf16, #tpu.memory_space<vmem>>, vector<1x1x8x16xbf16>
    %64 = vector.shape_cast %63 : vector<1x1x8x16xbf16> to vector<8x16xbf16>
    %c6 = arith.constant 6 : index
    %c0_83 = arith.constant 0 : index
    %c0_84 = arith.constant 0 : index
    %65 = vector.load %arg1[%c6, %c0_83, %c0_84] : memref<9x16x128xbf16, #tpu.memory_space<vmem>>, vector<1x16x128xbf16>
    %66 = vector.shape_cast %65 : vector<1x16x128xbf16> to vector<16x128xbf16>
    %cst_85 = arith.constant dense<0.000000e+00> : vector<8x128xf32>
    %67 = tpu.matmul %64, %66, %cst_85 {dimension_numbers = #tpu.dot_dimension_numbers<[1], [0], [0], [1], [0, 0, 1, 1], [], []>} : vector<8x16xbf16>, vector<16x128xbf16>, vector<8x128xf32> -> vector<8x128xf32>
    %68 = arith.addf %62, %67 : vector<8x128xf32>
    %c2_86 = arith.constant 2 : index
    %c3_87 = arith.constant 3 : index
    %c0_88 = arith.constant 0 : index
    %c0_89 = arith.constant 0 : index
    %69 = vector.load %arg2[%c2_86, %c3_87, %c0_88, %c0_89] : memref<4x4x8x16xbf16, #tpu.memory_space<vmem>>, vector<1x1x8x16xbf16>
    %70 = vector.shape_cast %69 : vector<1x1x8x16xbf16> to vector<8x16xbf16>
    %c7 = arith.constant 7 : index
    %c0_90 = arith.constant 0 : index
    %c0_91 = arith.constant 0 : index
    %71 = vector.load %arg1[%c7, %c0_90, %c0_91] : memref<9x16x128xbf16, #tpu.memory_space<vmem>>, vector<1x16x128xbf16>
    %72 = vector.shape_cast %71 : vector<1x16x128xbf16> to vector<16x128xbf16>
    %cst_92 = arith.constant dense<0.000000e+00> : vector<8x128xf32>
    %73 = tpu.matmul %70, %72, %cst_92 {dimension_numbers = #tpu.dot_dimension_numbers<[1], [0], [0], [1], [0, 0, 1, 1], [], []>} : vector<8x16xbf16>, vector<16x128xbf16>, vector<8x128xf32> -> vector<8x128xf32>
    %74 = arith.addf %68, %73 : vector<8x128xf32>
    %c2_93 = arith.constant 2 : index
    %c0_94 = arith.constant 0 : index
    %c0_95 = arith.constant 0 : index
    %75 = vector.load %arg3[%c2_93, %c0_94, %c0_95] : memref<4x8x128xf32, #tpu.memory_space<vmem>>, vector<1x8x128xf32>
    %76 = vector.shape_cast %75 : vector<1x8x128xf32> to vector<8x128xf32>
    %77 = vector.shape_cast %74 : vector<8x128xf32> to vector<1x8x128xf32>
    tpu.vector_store %arg3[%c2_93, %c0_94, %c0_95], %77 {strides = array<i32>} : memref<4x8x128xf32, #tpu.memory_space<vmem>>, vector<1x8x128xf32>,
    %c3_96 = arith.constant 3 : index
    %c0_97 = arith.constant 0 : index
    %c0_98 = arith.constant 0 : index
    %c0_99 = arith.constant 0 : index
    %78 = vector.load %arg2[%c3_96, %c0_97, %c0_98, %c0_99] : memref<4x4x8x16xbf16, #tpu.memory_space<vmem>>, vector<1x1x8x16xbf16>
    %79 = vector.shape_cast %78 : vector<1x1x8x16xbf16> to vector<8x16xbf16>
    %c4_100 = arith.constant 4 : index
    %c0_101 = arith.constant 0 : index
    %c0_102 = arith.constant 0 : index
    %80 = vector.load %arg1[%c4_100, %c0_101, %c0_102] : memref<9x16x128xbf16, #tpu.memory_space<vmem>>, vector<1x16x128xbf16>
    %81 = vector.shape_cast %80 : vector<1x16x128xbf16> to vector<16x128xbf16>
    %cst_103 = arith.constant dense<0.000000e+00> : vector<8x128xf32>
    %82 = tpu.matmul %79, %81, %cst_103 {dimension_numbers = #tpu.dot_dimension_numbers<[1], [0], [0], [1], [0, 0, 1, 1], [], []>} : vector<8x16xbf16>, vector<16x128xbf16>, vector<8x128xf32> -> vector<8x128xf32>
    %c3_104 = arith.constant 3 : index
    %c1_105 = arith.constant 1 : index
    %c0_106 = arith.constant 0 : index
    %c0_107 = arith.constant 0 : index
    %83 = vector.load %arg2[%c3_104, %c1_105, %c0_106, %c0_107] : memref<4x4x8x16xbf16, #tpu.memory_space<vmem>>, vector<1x1x8x16xbf16>
    %84 = vector.shape_cast %83 : vector<1x1x8x16xbf16> to vector<8x16xbf16>
    %c5_108 = arith.constant 5 : index
    %c0_109 = arith.constant 0 : index
    %c0_110 = arith.constant 0 : index
    %85 = vector.load %arg1[%c5_108, %c0_109, %c0_110] : memref<9x16x128xbf16, #tpu.memory_space<vmem>>, vector<1x16x128xbf16>
    %86 = vector.shape_cast %85 : vector<1x16x128xbf16> to vector<16x128xbf16>
    %cst_111 = arith.constant dense<0.000000e+00> : vector<8x128xf32>
    %87 = tpu.matmul %84, %86, %cst_111 {dimension_numbers = #tpu.dot_dimension_numbers<[1], [0], [0], [1], [0, 0, 1, 1], [], []>} : vector<8x16xbf16>, vector<16x128xbf16>, vector<8x128xf32> -> vector<8x128xf32>
    %88 = arith.addf %82, %87 : vector<8x128xf32>
    %c3_112 = arith.constant 3 : index
    %c2_113 = arith.constant 2 : index
    %c0_114 = arith.constant 0 : index
    %c0_115 = arith.constant 0 : index
    %89 = vector.load %arg2[%c3_112, %c2_113, %c0_114, %c0_115] : memref<4x4x8x16xbf16, #tpu.memory_space<vmem>>, vector<1x1x8x16xbf16>
    %90 = vector.shape_cast %89 : vector<1x1x8x16xbf16> to vector<8x16xbf16>
    %c7_116 = arith.constant 7 : index
    %c0_117 = arith.constant 0 : index
    %c0_118 = arith.constant 0 : index
    %91 = vector.load %arg1[%c7_116, %c0_117, %c0_118] : memref<9x16x128xbf16, #tpu.memory_space<vmem>>, vector<1x16x128xbf16>
    %92 = vector.shape_cast %91 : vector<1x16x128xbf16> to vector<16x128xbf16>
    %cst_119 = arith.constant dense<0.000000e+00> : vector<8x128xf32>
    %93 = tpu.matmul %90, %92, %cst_119 {dimension_numbers = #tpu.dot_dimension_numbers<[1], [0], [0], [1], [0, 0, 1, 1], [], []>} : vector<8x16xbf16>, vector<16x128xbf16>, vector<8x128xf32> -> vector<8x128xf32>
    %94 = arith.addf %88, %93 : vector<8x128xf32>
    %c3_120 = arith.constant 3 : index
    %c3_121 = arith.constant 3 : index
    %c0_122 = arith.constant 0 : index
    %c0_123 = arith.constant 0 : index
    %95 = vector.load %arg2[%c3_120, %c3_121, %c0_122, %c0_123] : memref<4x4x8x16xbf16, #tpu.memory_space<vmem>>, vector<1x1x8x16xbf16>
    %96 = vector.shape_cast %95 : vector<1x1x8x16xbf16> to vector<8x16xbf16>
    %c8 = arith.constant 8 : index
    %c0_124 = arith.constant 0 : index
    %c0_125 = arith.constant 0 : index
    %97 = vector.load %arg1[%c8, %c0_124, %c0_125] : memref<9x16x128xbf16, #tpu.memory_space<vmem>>, vector<1x16x128xbf16>
    %98 = vector.shape_cast %97 : vector<1x16x128xbf16> to vector<16x128xbf16>
    %cst_126 = arith.constant dense<0.000000e+00> : vector<8x128xf32>
    %99 = tpu.matmul %96, %98, %cst_126 {dimension_numbers = #tpu.dot_dimension_numbers<[1], [0], [0], [1], [0, 0, 1, 1], [], []>} : vector<8x16xbf16>, vector<16x128xbf16>, vector<8x128xf32> -> vector<8x128xf32>
    %100 = arith.addf %94, %99 : vector<8x128xf32>
    %c3_127 = arith.constant 3 : index
    %c0_128 = arith.constant 0 : index
    %c0_129 = arith.constant 0 : index
    %101 = vector.load %arg3[%c3_127, %c0_128, %c0_129] : memref<4x8x128xf32, #tpu.memory_space<vmem>>, vector<1x8x128xf32>
    %102 = vector.shape_cast %101 : vector<1x8x128xf32> to vector<8x128xf32>
    %103 = vector.shape_cast %100 : vector<8x128xf32> to vector<1x8x128xf32>
    tpu.vector_store %arg3[%c3_127, %c0_128, %c0_129], %103 {strides = array<i32>} : memref<4x8x128xf32, #tpu.memory_space<vmem>>, vector<1x8x128xf32>,
    return
  }
  func.func @transform_0(%arg0: i32) -> (i32, i32, i32) {
    %c0_i32 = arith.constant 0 : i32
    %c0_i32_0 = arith.constant 0 : i32
    %c0_i32_1 = arith.constant 0 : i32
    return %c0_i32, %c0_i32_0, %arg0 : i32, i32, i32
  }
  func.func @transform_1(%arg0: i32) -> (i32, i32, i32, i32) {
    %c0_i32 = arith.constant 0 : i32
    %c0_i32_0 = arith.constant 0 : i32
    %c0_i32_1 = arith.constant 0 : i32
    %c0_i32_2 = arith.constant 0 : i32
    %c0_i32_3 = arith.constant 0 : i32
    return %c0_i32, %c0_i32_0, %c0_i32_1, %c0_i32_2 : i32, i32, i32, i32
  }
  func.func @transform_2(%arg0: i32) -> (i32, i32, i32) {
    %c0_i32 = arith.constant 0 : i32
    %c0_i32_0 = arith.constant 0 : i32
    %c0_i32_1 = arith.constant 0 : i32
    return %c0_i32, %c0_i32_0, %arg0 : i32, i32, i32
  }
}

module attributes {stable_mosaic.version = 11 : i64} {
  func.func @_bn_relu_kernel(%arg0: i32, %arg1: memref<4x8x128xf32, #tpu.memory_space<vmem>>, %arg2: memref<8x1xf32, #tpu.memory_space<vmem>>, %arg3: memref<8x1xf32, #tpu.memory_space<vmem>>, %arg4: memref<4x8x128xbf16, #tpu.memory_space<vmem>>) attributes {dimension_semantics = [#tpu.dimension_semantics<parallel>], iteration_bounds = array<i64: 1>, scalar_prefetch = 0 : i64, scratch_operands = 0 : i64, tpu.core_type = #tpu.core_type<tc>, window_params = [{transform_indices = @transform_0, window_bounds = array<i64: 4, 8, 128>}, {pipeline_mode = #tpu.pipeline_mode<synchronous>, transform_indices = @transform_1, window_bounds = array<i64: 8, 1>}, {pipeline_mode = #tpu.pipeline_mode<synchronous>, transform_indices = @transform_2, window_bounds = array<i64: 8, 1>}, {transform_indices = @transform_3, window_bounds = array<i64: 4, 8, 128>}]} {
    %c0 = arith.constant 0 : index
    %c0_0 = arith.constant 0 : index
    %c0_1 = arith.constant 0 : index
    %0 = vector.load %arg1[%c0, %c0_0, %c0_1] : memref<4x8x128xf32, #tpu.memory_space<vmem>>, vector<4x8x128xf32>
    %c0_2 = arith.constant 0 : index
    %c0_3 = arith.constant 0 : index
    %1 = vector.load %arg2[%c0_2, %c0_3] : memref<8x1xf32, #tpu.memory_space<vmem>>, vector<8x1xf32>
    %2 = vector.shape_cast %1 : vector<8x1xf32> to vector<1x8x1xf32>
    %c0_4 = arith.constant 0 : index
    %c0_5 = arith.constant 0 : index
    %3 = vector.load %arg3[%c0_4, %c0_5] : memref<8x1xf32, #tpu.memory_space<vmem>>, vector<8x1xf32>
    %4 = vector.shape_cast %3 : vector<8x1xf32> to vector<1x8x1xf32>
    %5 = vector.broadcast %2 : vector<1x8x1xf32> to vector<4x8x128xf32>
    %6 = arith.mulf %0, %5 : vector<4x8x128xf32>
    %7 = vector.broadcast %4 : vector<1x8x1xf32> to vector<4x8x128xf32>
    %8 = arith.addf %6, %7 : vector<4x8x128xf32>
    %cst = arith.constant 0.000000e+00 : f32
    %9 = vector.broadcast %cst : f32 to vector<4x8x128xf32>
    %10 = arith.maximumf %8, %9 : vector<4x8x128xf32>
    %11 = arith.truncf %10 : vector<4x8x128xf32> to vector<4x8x128xbf16>
    %c0_6 = arith.constant 0 : index
    %c0_7 = arith.constant 0 : index
    %c0_8 = arith.constant 0 : index
    %12 = vector.load %arg4[%c0_6, %c0_7, %c0_8] : memref<4x8x128xbf16, #tpu.memory_space<vmem>>, vector<4x8x128xbf16>
    tpu.vector_store %arg4[%c0_6, %c0_7, %c0_8], %11 {strides = array<i32>} : memref<4x8x128xbf16, #tpu.memory_space<vmem>>, vector<4x8x128xbf16>,
    return
  }
  func.func @transform_0(%arg0: i32) -> (i32, i32, i32) {
    %c0_i32 = arith.constant 0 : i32
    %c0_i32_0 = arith.constant 0 : i32
    %c0_i32_1 = arith.constant 0 : i32
    return %c0_i32, %c0_i32_0, %arg0 : i32, i32, i32
  }
  func.func @transform_1(%arg0: i32) -> (i32, i32) {
    %c0_i32 = arith.constant 0 : i32
    %c0_i32_0 = arith.constant 0 : i32
    %c0_i32_1 = arith.constant 0 : i32
    return %c0_i32, %c0_i32_0 : i32, i32
  }
  func.func @transform_2(%arg0: i32) -> (i32, i32) {
    %c0_i32 = arith.constant 0 : i32
    %c0_i32_0 = arith.constant 0 : i32
    %c0_i32_1 = arith.constant 0 : i32
    return %c0_i32, %c0_i32_0 : i32, i32
  }
  func.func @transform_3(%arg0: i32) -> (i32, i32, i32) {
    %c0_i32 = arith.constant 0 : i32
    %c0_i32_0 = arith.constant 0 : i32
    %c0_i32_1 = arith.constant 0 : i32
    return %c0_i32, %c0_i32_0, %arg0 : i32, i32, i32
  }
}

module attributes {stable_mosaic.version = 11 : i64} {
  func.func @_phase_mm_kernel(%arg0: i32, %arg1: memref<9x8x512xbf16, #tpu.memory_space<vmem>>, %arg2: memref<4x4x3x8xbf16, #tpu.memory_space<vmem>>, %arg3: memref<4x3x512xf32, #tpu.memory_space<vmem>>) attributes {dimension_semantics = [#tpu.dimension_semantics<parallel>], iteration_bounds = array<i64: 1>, scalar_prefetch = 0 : i64, scratch_operands = 0 : i64, tpu.core_type = #tpu.core_type<tc>, window_params = [{transform_indices = @transform_0, window_bounds = array<i64: 9, 8, 512>}, {pipeline_mode = #tpu.pipeline_mode<synchronous>, transform_indices = @transform_1, window_bounds = array<i64: 4, 4, 3, 8>}, {transform_indices = @transform_2, window_bounds = array<i64: 4, 3, 512>}]} {
    %c0 = arith.constant 0 : index
    %c0_0 = arith.constant 0 : index
    %c0_1 = arith.constant 0 : index
    %c0_2 = arith.constant 0 : index
    %0 = vector.load %arg2[%c0, %c0_0, %c0_1, %c0_2] : memref<4x4x3x8xbf16, #tpu.memory_space<vmem>>, vector<1x1x3x8xbf16>
    %1 = vector.shape_cast %0 : vector<1x1x3x8xbf16> to vector<3x8xbf16>
    %c0_3 = arith.constant 0 : index
    %c0_4 = arith.constant 0 : index
    %c0_5 = arith.constant 0 : index
    %2 = vector.load %arg1[%c0_3, %c0_4, %c0_5] : memref<9x8x512xbf16, #tpu.memory_space<vmem>>, vector<1x8x512xbf16>
    %3 = vector.shape_cast %2 : vector<1x8x512xbf16> to vector<8x512xbf16>
    %cst = arith.constant dense<0.000000e+00> : vector<3x512xf32>
    %4 = tpu.matmul %1, %3, %cst {dimension_numbers = #tpu.dot_dimension_numbers<[1], [0], [0], [1], [0, 0, 1, 1], [], []>} : vector<3x8xbf16>, vector<8x512xbf16>, vector<3x512xf32> -> vector<3x512xf32>
    %c0_6 = arith.constant 0 : index
    %c1 = arith.constant 1 : index
    %c0_7 = arith.constant 0 : index
    %c0_8 = arith.constant 0 : index
    %5 = vector.load %arg2[%c0_6, %c1, %c0_7, %c0_8] : memref<4x4x3x8xbf16, #tpu.memory_space<vmem>>, vector<1x1x3x8xbf16>
    %6 = vector.shape_cast %5 : vector<1x1x3x8xbf16> to vector<3x8xbf16>
    %c1_9 = arith.constant 1 : index
    %c0_10 = arith.constant 0 : index
    %c0_11 = arith.constant 0 : index
    %7 = vector.load %arg1[%c1_9, %c0_10, %c0_11] : memref<9x8x512xbf16, #tpu.memory_space<vmem>>, vector<1x8x512xbf16>
    %8 = vector.shape_cast %7 : vector<1x8x512xbf16> to vector<8x512xbf16>
    %cst_12 = arith.constant dense<0.000000e+00> : vector<3x512xf32>
    %9 = tpu.matmul %6, %8, %cst_12 {dimension_numbers = #tpu.dot_dimension_numbers<[1], [0], [0], [1], [0, 0, 1, 1], [], []>} : vector<3x8xbf16>, vector<8x512xbf16>, vector<3x512xf32> -> vector<3x512xf32>
    %10 = arith.addf %4, %9 : vector<3x512xf32>
    %c0_13 = arith.constant 0 : index
    %c2 = arith.constant 2 : index
    %c0_14 = arith.constant 0 : index
    %c0_15 = arith.constant 0 : index
    %11 = vector.load %arg2[%c0_13, %c2, %c0_14, %c0_15] : memref<4x4x3x8xbf16, #tpu.memory_space<vmem>>, vector<1x1x3x8xbf16>
    %12 = vector.shape_cast %11 : vector<1x1x3x8xbf16> to vector<3x8xbf16>
    %c3 = arith.constant 3 : index
    %c0_16 = arith.constant 0 : index
    %c0_17 = arith.constant 0 : index
    %13 = vector.load %arg1[%c3, %c0_16, %c0_17] : memref<9x8x512xbf16, #tpu.memory_space<vmem>>, vector<1x8x512xbf16>
    %14 = vector.shape_cast %13 : vector<1x8x512xbf16> to vector<8x512xbf16>
    %cst_18 = arith.constant dense<0.000000e+00> : vector<3x512xf32>
    %15 = tpu.matmul %12, %14, %cst_18 {dimension_numbers = #tpu.dot_dimension_numbers<[1], [0], [0], [1], [0, 0, 1, 1], [], []>} : vector<3x8xbf16>, vector<8x512xbf16>, vector<3x512xf32> -> vector<3x512xf32>
    %16 = arith.addf %10, %15 : vector<3x512xf32>
    %c0_19 = arith.constant 0 : index
    %c3_20 = arith.constant 3 : index
    %c0_21 = arith.constant 0 : index
    %c0_22 = arith.constant 0 : index
    %17 = vector.load %arg2[%c0_19, %c3_20, %c0_21, %c0_22] : memref<4x4x3x8xbf16, #tpu.memory_space<vmem>>, vector<1x1x3x8xbf16>
    %18 = vector.shape_cast %17 : vector<1x1x3x8xbf16> to vector<3x8xbf16>
    %c4 = arith.constant 4 : index
    %c0_23 = arith.constant 0 : index
    %c0_24 = arith.constant 0 : index
    %19 = vector.load %arg1[%c4, %c0_23, %c0_24] : memref<9x8x512xbf16, #tpu.memory_space<vmem>>, vector<1x8x512xbf16>
    %20 = vector.shape_cast %19 : vector<1x8x512xbf16> to vector<8x512xbf16>
    %cst_25 = arith.constant dense<0.000000e+00> : vector<3x512xf32>
    %21 = tpu.matmul %18, %20, %cst_25 {dimension_numbers = #tpu.dot_dimension_numbers<[1], [0], [0], [1], [0, 0, 1, 1], [], []>} : vector<3x8xbf16>, vector<8x512xbf16>, vector<3x512xf32> -> vector<3x512xf32>
    %22 = arith.addf %16, %21 : vector<3x512xf32>
    %23 = math.tanh %22 : vector<3x512xf32>
    %c0_26 = arith.constant 0 : index
    %c0_27 = arith.constant 0 : index
    %c0_28 = arith.constant 0 : index
    %24 = vector.load %arg3[%c0_26, %c0_27, %c0_28] : memref<4x3x512xf32, #tpu.memory_space<vmem>>, vector<1x3x512xf32>
    %25 = vector.shape_cast %24 : vector<1x3x512xf32> to vector<3x512xf32>
    %26 = vector.shape_cast %23 : vector<3x512xf32> to vector<1x3x512xf32>
    tpu.vector_store %arg3[%c0_26, %c0_27, %c0_28], %26 {strides = array<i32>} : memref<4x3x512xf32, #tpu.memory_space<vmem>>, vector<1x3x512xf32>,
    %c1_29 = arith.constant 1 : index
    %c0_30 = arith.constant 0 : index
    %c0_31 = arith.constant 0 : index
    %c0_32 = arith.constant 0 : index
    %27 = vector.load %arg2[%c1_29, %c0_30, %c0_31, %c0_32] : memref<4x4x3x8xbf16, #tpu.memory_space<vmem>>, vector<1x1x3x8xbf16>
    %28 = vector.shape_cast %27 : vector<1x1x3x8xbf16> to vector<3x8xbf16>
    %c1_33 = arith.constant 1 : index
    %c0_34 = arith.constant 0 : index
    %c0_35 = arith.constant 0 : index
    %29 = vector.load %arg1[%c1_33, %c0_34, %c0_35] : memref<9x8x512xbf16, #tpu.memory_space<vmem>>, vector<1x8x512xbf16>
    %30 = vector.shape_cast %29 : vector<1x8x512xbf16> to vector<8x512xbf16>
    %cst_36 = arith.constant dense<0.000000e+00> : vector<3x512xf32>
    %31 = tpu.matmul %28, %30, %cst_36 {dimension_numbers = #tpu.dot_dimension_numbers<[1], [0], [0], [1], [0, 0, 1, 1], [], []>} : vector<3x8xbf16>, vector<8x512xbf16>, vector<3x512xf32> -> vector<3x512xf32>
    %c1_37 = arith.constant 1 : index
    %c1_38 = arith.constant 1 : index
    %c0_39 = arith.constant 0 : index
    %c0_40 = arith.constant 0 : index
    %32 = vector.load %arg2[%c1_37, %c1_38, %c0_39, %c0_40] : memref<4x4x3x8xbf16, #tpu.memory_space<vmem>>, vector<1x1x3x8xbf16>
    %33 = vector.shape_cast %32 : vector<1x1x3x8xbf16> to vector<3x8xbf16>
    %c2_41 = arith.constant 2 : index
    %c0_42 = arith.constant 0 : index
    %c0_43 = arith.constant 0 : index
    %34 = vector.load %arg1[%c2_41, %c0_42, %c0_43] : memref<9x8x512xbf16, #tpu.memory_space<vmem>>, vector<1x8x512xbf16>
    %35 = vector.shape_cast %34 : vector<1x8x512xbf16> to vector<8x512xbf16>
    %cst_44 = arith.constant dense<0.000000e+00> : vector<3x512xf32>
    %36 = tpu.matmul %33, %35, %cst_44 {dimension_numbers = #tpu.dot_dimension_numbers<[1], [0], [0], [1], [0, 0, 1, 1], [], []>} : vector<3x8xbf16>, vector<8x512xbf16>, vector<3x512xf32> -> vector<3x512xf32>
    %37 = arith.addf %31, %36 : vector<3x512xf32>
    %c1_45 = arith.constant 1 : index
    %c2_46 = arith.constant 2 : index
    %c0_47 = arith.constant 0 : index
    %c0_48 = arith.constant 0 : index
    %38 = vector.load %arg2[%c1_45, %c2_46, %c0_47, %c0_48] : memref<4x4x3x8xbf16, #tpu.memory_space<vmem>>, vector<1x1x3x8xbf16>
    %39 = vector.shape_cast %38 : vector<1x1x3x8xbf16> to vector<3x8xbf16>
    %c4_49 = arith.constant 4 : index
    %c0_50 = arith.constant 0 : index
    %c0_51 = arith.constant 0 : index
    %40 = vector.load %arg1[%c4_49, %c0_50, %c0_51] : memref<9x8x512xbf16, #tpu.memory_space<vmem>>, vector<1x8x512xbf16>
    %41 = vector.shape_cast %40 : vector<1x8x512xbf16> to vector<8x512xbf16>
    %cst_52 = arith.constant dense<0.000000e+00> : vector<3x512xf32>
    %42 = tpu.matmul %39, %41, %cst_52 {dimension_numbers = #tpu.dot_dimension_numbers<[1], [0], [0], [1], [0, 0, 1, 1], [], []>} : vector<3x8xbf16>, vector<8x512xbf16>, vector<3x512xf32> -> vector<3x512xf32>
    %43 = arith.addf %37, %42 : vector<3x512xf32>
    %c1_53 = arith.constant 1 : index
    %c3_54 = arith.constant 3 : index
    %c0_55 = arith.constant 0 : index
    %c0_56 = arith.constant 0 : index
    %44 = vector.load %arg2[%c1_53, %c3_54, %c0_55, %c0_56] : memref<4x4x3x8xbf16, #tpu.memory_space<vmem>>, vector<1x1x3x8xbf16>
    %45 = vector.shape_cast %44 : vector<1x1x3x8xbf16> to vector<3x8xbf16>
    %c5 = arith.constant 5 : index
    %c0_57 = arith.constant 0 : index
    %c0_58 = arith.constant 0 : index
    %46 = vector.load %arg1[%c5, %c0_57, %c0_58] : memref<9x8x512xbf16, #tpu.memory_space<vmem>>, vector<1x8x512xbf16>
    %47 = vector.shape_cast %46 : vector<1x8x512xbf16> to vector<8x512xbf16>
    %cst_59 = arith.constant dense<0.000000e+00> : vector<3x512xf32>
    %48 = tpu.matmul %45, %47, %cst_59 {dimension_numbers = #tpu.dot_dimension_numbers<[1], [0], [0], [1], [0, 0, 1, 1], [], []>} : vector<3x8xbf16>, vector<8x512xbf16>, vector<3x512xf32> -> vector<3x512xf32>
    %49 = arith.addf %43, %48 : vector<3x512xf32>
    %50 = math.tanh %49 : vector<3x512xf32>
    %c1_60 = arith.constant 1 : index
    %c0_61 = arith.constant 0 : index
    %c0_62 = arith.constant 0 : index
    %51 = vector.load %arg3[%c1_60, %c0_61, %c0_62] : memref<4x3x512xf32, #tpu.memory_space<vmem>>, vector<1x3x512xf32>
    %52 = vector.shape_cast %51 : vector<1x3x512xf32> to vector<3x512xf32>
    %53 = vector.shape_cast %50 : vector<3x512xf32> to vector<1x3x512xf32>
    tpu.vector_store %arg3[%c1_60, %c0_61, %c0_62], %53 {strides = array<i32>} : memref<4x3x512xf32, #tpu.memory_space<vmem>>, vector<1x3x512xf32>,
    %c2_63 = arith.constant 2 : index
    %c0_64 = arith.constant 0 : index
    %c0_65 = arith.constant 0 : index
    %c0_66 = arith.constant 0 : index
    %54 = vector.load %arg2[%c2_63, %c0_64, %c0_65, %c0_66] : memref<4x4x3x8xbf16, #tpu.memory_space<vmem>>, vector<1x1x3x8xbf16>
    %55 = vector.shape_cast %54 : vector<1x1x3x8xbf16> to vector<3x8xbf16>
    %c3_67 = arith.constant 3 : index
    %c0_68 = arith.constant 0 : index
    %c0_69 = arith.constant 0 : index
    %56 = vector.load %arg1[%c3_67, %c0_68, %c0_69] : memref<9x8x512xbf16, #tpu.memory_space<vmem>>, vector<1x8x512xbf16>
    %57 = vector.shape_cast %56 : vector<1x8x512xbf16> to vector<8x512xbf16>
    %cst_70 = arith.constant dense<0.000000e+00> : vector<3x512xf32>
    %58 = tpu.matmul %55, %57, %cst_70 {dimension_numbers = #tpu.dot_dimension_numbers<[1], [0], [0], [1], [0, 0, 1, 1], [], []>} : vector<3x8xbf16>, vector<8x512xbf16>, vector<3x512xf32> -> vector<3x512xf32>
    %c2_71 = arith.constant 2 : index
    %c1_72 = arith.constant 1 : index
    %c0_73 = arith.constant 0 : index
    %c0_74 = arith.constant 0 : index
    %59 = vector.load %arg2[%c2_71, %c1_72, %c0_73, %c0_74] : memref<4x4x3x8xbf16, #tpu.memory_space<vmem>>, vector<1x1x3x8xbf16>
    %60 = vector.shape_cast %59 : vector<1x1x3x8xbf16> to vector<3x8xbf16>
    %c4_75 = arith.constant 4 : index
    %c0_76 = arith.constant 0 : index
    %c0_77 = arith.constant 0 : index
    %61 = vector.load %arg1[%c4_75, %c0_76, %c0_77] : memref<9x8x512xbf16, #tpu.memory_space<vmem>>, vector<1x8x512xbf16>
    %62 = vector.shape_cast %61 : vector<1x8x512xbf16> to vector<8x512xbf16>
    %cst_78 = arith.constant dense<0.000000e+00> : vector<3x512xf32>
    %63 = tpu.matmul %60, %62, %cst_78 {dimension_numbers = #tpu.dot_dimension_numbers<[1], [0], [0], [1], [0, 0, 1, 1], [], []>} : vector<3x8xbf16>, vector<8x512xbf16>, vector<3x512xf32> -> vector<3x512xf32>
    %64 = arith.addf %58, %63 : vector<3x512xf32>
    %c2_79 = arith.constant 2 : index
    %c2_80 = arith.constant 2 : index
    %c0_81 = arith.constant 0 : index
    %c0_82 = arith.constant 0 : index
    %65 = vector.load %arg2[%c2_79, %c2_80, %c0_81, %c0_82] : memref<4x4x3x8xbf16, #tpu.memory_space<vmem>>, vector<1x1x3x8xbf16>
    %66 = vector.shape_cast %65 : vector<1x1x3x8xbf16> to vector<3x8xbf16>
    %c6 = arith.constant 6 : index
    %c0_83 = arith.constant 0 : index
    %c0_84 = arith.constant 0 : index
    %67 = vector.load %arg1[%c6, %c0_83, %c0_84] : memref<9x8x512xbf16, #tpu.memory_space<vmem>>, vector<1x8x512xbf16>
    %68 = vector.shape_cast %67 : vector<1x8x512xbf16> to vector<8x512xbf16>
    %cst_85 = arith.constant dense<0.000000e+00> : vector<3x512xf32>
    %69 = tpu.matmul %66, %68, %cst_85 {dimension_numbers = #tpu.dot_dimension_numbers<[1], [0], [0], [1], [0, 0, 1, 1], [], []>} : vector<3x8xbf16>, vector<8x512xbf16>, vector<3x512xf32> -> vector<3x512xf32>
    %70 = arith.addf %64, %69 : vector<3x512xf32>
    %c2_86 = arith.constant 2 : index
    %c3_87 = arith.constant 3 : index
    %c0_88 = arith.constant 0 : index
    %c0_89 = arith.constant 0 : index
    %71 = vector.load %arg2[%c2_86, %c3_87, %c0_88, %c0_89] : memref<4x4x3x8xbf16, #tpu.memory_space<vmem>>, vector<1x1x3x8xbf16>
    %72 = vector.shape_cast %71 : vector<1x1x3x8xbf16> to vector<3x8xbf16>
    %c7 = arith.constant 7 : index
    %c0_90 = arith.constant 0 : index
    %c0_91 = arith.constant 0 : index
    %73 = vector.load %arg1[%c7, %c0_90, %c0_91] : memref<9x8x512xbf16, #tpu.memory_space<vmem>>, vector<1x8x512xbf16>
    %74 = vector.shape_cast %73 : vector<1x8x512xbf16> to vector<8x512xbf16>
    %cst_92 = arith.constant dense<0.000000e+00> : vector<3x512xf32>
    %75 = tpu.matmul %72, %74, %cst_92 {dimension_numbers = #tpu.dot_dimension_numbers<[1], [0], [0], [1], [0, 0, 1, 1], [], []>} : vector<3x8xbf16>, vector<8x512xbf16>, vector<3x512xf32> -> vector<3x512xf32>
    %76 = arith.addf %70, %75 : vector<3x512xf32>
    %77 = math.tanh %76 : vector<3x512xf32>
    %c2_93 = arith.constant 2 : index
    %c0_94 = arith.constant 0 : index
    %c0_95 = arith.constant 0 : index
    %78 = vector.load %arg3[%c2_93, %c0_94, %c0_95] : memref<4x3x512xf32, #tpu.memory_space<vmem>>, vector<1x3x512xf32>
    %79 = vector.shape_cast %78 : vector<1x3x512xf32> to vector<3x512xf32>
    %80 = vector.shape_cast %77 : vector<3x512xf32> to vector<1x3x512xf32>
    tpu.vector_store %arg3[%c2_93, %c0_94, %c0_95], %80 {strides = array<i32>} : memref<4x3x512xf32, #tpu.memory_space<vmem>>, vector<1x3x512xf32>,
    %c3_96 = arith.constant 3 : index
    %c0_97 = arith.constant 0 : index
    %c0_98 = arith.constant 0 : index
    %c0_99 = arith.constant 0 : index
    %81 = vector.load %arg2[%c3_96, %c0_97, %c0_98, %c0_99] : memref<4x4x3x8xbf16, #tpu.memory_space<vmem>>, vector<1x1x3x8xbf16>
    %82 = vector.shape_cast %81 : vector<1x1x3x8xbf16> to vector<3x8xbf16>
    %c4_100 = arith.constant 4 : index
    %c0_101 = arith.constant 0 : index
    %c0_102 = arith.constant 0 : index
    %83 = vector.load %arg1[%c4_100, %c0_101, %c0_102] : memref<9x8x512xbf16, #tpu.memory_space<vmem>>, vector<1x8x512xbf16>
    %84 = vector.shape_cast %83 : vector<1x8x512xbf16> to vector<8x512xbf16>
    %cst_103 = arith.constant dense<0.000000e+00> : vector<3x512xf32>
    %85 = tpu.matmul %82, %84, %cst_103 {dimension_numbers = #tpu.dot_dimension_numbers<[1], [0], [0], [1], [0, 0, 1, 1], [], []>} : vector<3x8xbf16>, vector<8x512xbf16>, vector<3x512xf32> -> vector<3x512xf32>
    %c3_104 = arith.constant 3 : index
    %c1_105 = arith.constant 1 : index
    %c0_106 = arith.constant 0 : index
    %c0_107 = arith.constant 0 : index
    %86 = vector.load %arg2[%c3_104, %c1_105, %c0_106, %c0_107] : memref<4x4x3x8xbf16, #tpu.memory_space<vmem>>, vector<1x1x3x8xbf16>
    %87 = vector.shape_cast %86 : vector<1x1x3x8xbf16> to vector<3x8xbf16>
    %c5_108 = arith.constant 5 : index
    %c0_109 = arith.constant 0 : index
    %c0_110 = arith.constant 0 : index
    %88 = vector.load %arg1[%c5_108, %c0_109, %c0_110] : memref<9x8x512xbf16, #tpu.memory_space<vmem>>, vector<1x8x512xbf16>
    %89 = vector.shape_cast %88 : vector<1x8x512xbf16> to vector<8x512xbf16>
    %cst_111 = arith.constant dense<0.000000e+00> : vector<3x512xf32>
    %90 = tpu.matmul %87, %89, %cst_111 {dimension_numbers = #tpu.dot_dimension_numbers<[1], [0], [0], [1], [0, 0, 1, 1], [], []>} : vector<3x8xbf16>, vector<8x512xbf16>, vector<3x512xf32> -> vector<3x512xf32>
    %91 = arith.addf %85, %90 : vector<3x512xf32>
    %c3_112 = arith.constant 3 : index
    %c2_113 = arith.constant 2 : index
    %c0_114 = arith.constant 0 : index
    %c0_115 = arith.constant 0 : index
    %92 = vector.load %arg2[%c3_112, %c2_113, %c0_114, %c0_115] : memref<4x4x3x8xbf16, #tpu.memory_space<vmem>>, vector<1x1x3x8xbf16>
    %93 = vector.shape_cast %92 : vector<1x1x3x8xbf16> to vector<3x8xbf16>
    %c7_116 = arith.constant 7 : index
    %c0_117 = arith.constant 0 : index
    %c0_118 = arith.constant 0 : index
    %94 = vector.load %arg1[%c7_116, %c0_117, %c0_118] : memref<9x8x512xbf16, #tpu.memory_space<vmem>>, vector<1x8x512xbf16>
    %95 = vector.shape_cast %94 : vector<1x8x512xbf16> to vector<8x512xbf16>
    %cst_119 = arith.constant dense<0.000000e+00> : vector<3x512xf32>
    %96 = tpu.matmul %93, %95, %cst_119 {dimension_numbers = #tpu.dot_dimension_numbers<[1], [0], [0], [1], [0, 0, 1, 1], [], []>} : vector<3x8xbf16>, vector<8x512xbf16>, vector<3x512xf32> -> vector<3x512xf32>
    %97 = arith.addf %91, %96 : vector<3x512xf32>
    %c3_120 = arith.constant 3 : index
    %c3_121 = arith.constant 3 : index
    %c0_122 = arith.constant 0 : index
    %c0_123 = arith.constant 0 : index
    %98 = vector.load %arg2[%c3_120, %c3_121, %c0_122, %c0_123] : memref<4x4x3x8xbf16, #tpu.memory_space<vmem>>, vector<1x1x3x8xbf16>
    %99 = vector.shape_cast %98 : vector<1x1x3x8xbf16> to vector<3x8xbf16>
    %c8 = arith.constant 8 : index
    %c0_124 = arith.constant 0 : index
    %c0_125 = arith.constant 0 : index
    %100 = vector.load %arg1[%c8, %c0_124, %c0_125] : memref<9x8x512xbf16, #tpu.memory_space<vmem>>, vector<1x8x512xbf16>
    %101 = vector.shape_cast %100 : vector<1x8x512xbf16> to vector<8x512xbf16>
    %cst_126 = arith.constant dense<0.000000e+00> : vector<3x512xf32>
    %102 = tpu.matmul %99, %101, %cst_126 {dimension_numbers = #tpu.dot_dimension_numbers<[1], [0], [0], [1], [0, 0, 1, 1], [], []>} : vector<3x8xbf16>, vector<8x512xbf16>, vector<3x512xf32> -> vector<3x512xf32>
    %103 = arith.addf %97, %102 : vector<3x512xf32>
    %104 = math.tanh %103 : vector<3x512xf32>
    %c3_127 = arith.constant 3 : index
    %c0_128 = arith.constant 0 : index
    %c0_129 = arith.constant 0 : index
    %105 = vector.load %arg3[%c3_127, %c0_128, %c0_129] : memref<4x3x512xf32, #tpu.memory_space<vmem>>, vector<1x3x512xf32>
    %106 = vector.shape_cast %105 : vector<1x3x512xf32> to vector<3x512xf32>
    %107 = vector.shape_cast %104 : vector<3x512xf32> to vector<1x3x512xf32>
    tpu.vector_store %arg3[%c3_127, %c0_128, %c0_129], %107 {strides = array<i32>} : memref<4x3x512xf32, #tpu.memory_space<vmem>>, vector<1x3x512xf32>,
    return
  }
  func.func @transform_0(%arg0: i32) -> (i32, i32, i32) {
    %c0_i32 = arith.constant 0 : i32
    %c0_i32_0 = arith.constant 0 : i32
    %c0_i32_1 = arith.constant 0 : i32
    return %c0_i32, %c0_i32_0, %arg0 : i32, i32, i32
  }
  func.func @transform_1(%arg0: i32) -> (i32, i32, i32, i32) {
    %c0_i32 = arith.constant 0 : i32
    %c0_i32_0 = arith.constant 0 : i32
    %c0_i32_1 = arith.constant 0 : i32
    %c0_i32_2 = arith.constant 0 : i32
    %c0_i32_3 = arith.constant 0 : i32
    return %c0_i32, %c0_i32_0, %c0_i32_1, %c0_i32_2 : i32, i32, i32, i32
  }
  func.func @transform_2(%arg0: i32) -> (i32, i32, i32) {
    %c0_i32 = arith.constant 0 : i32
    %c0_i32_0 = arith.constant 0 : i32
    %c0_i32_1 = arith.constant 0 : i32
    return %c0_i32, %c0_i32_0, %arg0 : i32, i32, i32
  }
}

</mosaic_0001>

<llo_original>
// kernel: generator_forward.10
$region0: #{generator_forward.10}
  #allocation0 [shape = 'u32[]', space=smem, size = 0x4, offset = 0x4, fixed_abs, tag = 'smem constant byte address 0x4 - core index']
  #allocation1 [shape = 'u32[144,128]{1,0:T(1,128)}', space=vmem, size = 0x12000, scoped, tag = 'internal scratch']
  %s0 = inlined_call_operand.vmem [shape: f32[1,256,128], index: 0, kind: input, shape index: {}]
  %s1 = inlined_call_operand.vmem [shape: f32[256,1], index: 1, kind: input, shape index: {}]
  %s2 = inlined_call_operand.vmem [shape: f32[256,1], index: 2, kind: input, shape index: {}]
  %s3 = inlined_call_operand.vmem [shape: bf16[1,256,128], index: 3, kind: output, shape index: {}]
  %s4 = sld [smem:[#allocation0]]
  $region22: #{generator_forward.10} parent=0
    _
  %s6 = ssub.s32 1, %s4
  %s7 = scalar_select 0, %s6, %s4
  // Predicated region
  $region2: #{generator_forward.10} parent=0 // pred_check
    _
  $region3: #{generator_forward.10} parent=0 // pred_check_branch
    %9 = sbr.rel (0) target = $region5
  $region4: #{generator_forward.10} parent=0 // pred_region
    _
  $region5: #{generator_forward.10} parent=0 // pred_fallthru
    _
  // Predicated region
  $region6: #{generator_forward.10} parent=0 // pred_check
    _
  $region7: #{generator_forward.10} parent=0 // pred_check_branch
    %11 = sbr.rel (0) target = $region9
  $region8: #{generator_forward.10} parent=0 // pred_region
    _
  $region9: #{generator_forward.10} parent=0 // pred_fallthru
    _
  // Predicated region
  $region10: #{generator_forward.10} parent=0 // pred_check
    _
  $region11: #{generator_forward.10} parent=0 // pred_check_branch
    %13 = sbr.rel (0) target = $region13
  $region12: #{generator_forward.10} parent=0 // pred_region
    _
  $region13: #{generator_forward.10} parent=0 // pred_fallthru
    _
  %v14 = vld [vmem:[%s0] sm:$0xff]
  %v15 = vld [vmem:[%s0 + $0x8] sm:$0xff]
  %v16 = vld [vmem:[%s0 + $0x10] sm:$0xff]
  %v17 = vld [vmem:[%s0 + $0x18] sm:$0xff]
  %v18 = vld [vmem:[%s0 + $0x20] sm:$0xff]
  %v19 = vld [vmem:[%s0 + $0x28] sm:$0xff]
  %v20 = vld [vmem:[%s0 + $0x30] sm:$0xff]
  %v21 = vld [vmem:[%s0 + $0x38] sm:$0xff]
  %v22 = vld [vmem:[%s0 + $0x40] sm:$0xff]
  %v23 = vld [vmem:[%s0 + $0x48] sm:$0xff]
  %v24 = vld [vmem:[%s0 + $0x50] sm:$0xff]
  %v25 = vld [vmem:[%s0 + $0x58] sm:$0xff]
  %v26 = vld [vmem:[%s0 + $0x60] sm:$0xff]
  %v27 = vld [vmem:[%s0 + $0x68] sm:$0xff]
  %v28 = vld [vmem:[%s0 + $0x70] sm:$0xff]
  %v29 = vld [vmem:[%s0 + $0x78] sm:$0xff]
  %v30 = vld [vmem:[%s0 + $0x80] sm:$0xff]
  %v31 = vld [vmem:[%s0 + $0x88] sm:$0xff]
  %v32 = vld [vmem:[%s0 + $0x90] sm:$0xff]
  %v33 = vld [vmem:[%s0 + $0x98] sm:$0xff]
  %v34 = vld [vmem:[%s0 + $0xa0] sm:$0xff]
  %v35 = vld [vmem:[%s0 + $0xa8] sm:$0xff]
  %v36 = vld [vmem:[%s0 + $0xb0] sm:$0xff]
  %v37 = vld [vmem:[%s0 + $0xb8] sm:$0xff]
  %v38 = vld [vmem:[%s0 + $0xc0] sm:$0xff]
  %v39 = vld [vmem:[%s0 + $0xc8] sm:$0xff]
  %v40 = vld [vmem:[%s0 + $0xd0] sm:$0xff]
  %v41 = vld [vmem:[%s0 + $0xd8] sm:$0xff]
  %v42 = vld [vmem:[%s0 + $0xe0] sm:$0xff]
  %v43 = vld [vmem:[%s0 + $0xe8] sm:$0xff]
  %v44 = vld [vmem:[%s0 + $0xf0] sm:$0xff]
  %v45 = vld [vmem:[%s0 + $0xf8] sm:$0xff]
  %v46 = vld [vmem:[%s1] sm:$0xff]
  %v47 = vld [vmem:[%s1 + $0x8] sm:$0xff]
  %v48 = vld [vmem:[%s1 + $0x10] sm:$0xff]
  %v49 = vld [vmem:[%s1 + $0x18] sm:$0xff]
  %v50 = vld [vmem:[%s1 + $0x20] sm:$0xff]
  %v51 = vld [vmem:[%s1 + $0x28] sm:$0xff]
  %v52 = vld [vmem:[%s1 + $0x30] sm:$0xff]
  %v53 = vld [vmem:[%s1 + $0x38] sm:$0xff]
  %v54 = vld [vmem:[%s1 + $0x40] sm:$0xff]
  %v55 = vld [vmem:[%s1 + $0x48] sm:$0xff]
  %v56 = vld [vmem:[%s1 + $0x50] sm:$0xff]
  %v57 = vld [vmem:[%s1 + $0x58] sm:$0xff]
  %v58 = vld [vmem:[%s1 + $0x60] sm:$0xff]
  %v59 = vld [vmem:[%s1 + $0x68] sm:$0xff]
  %v60 = vld [vmem:[%s1 + $0x70] sm:$0xff]
  %v61 = vld [vmem:[%s1 + $0x78] sm:$0xff]
  %v62 = vld [vmem:[%s1 + $0x80] sm:$0xff]
  %v63 = vld [vmem:[%s1 + $0x88] sm:$0xff]
  %v64 = vld [vmem:[%s1 + $0x90] sm:$0xff]
  %v65 = vld [vmem:[%s1 + $0x98] sm:$0xff]
  %v66 = vld [vmem:[%s1 + $0xa0] sm:$0xff]
  %v67 = vld [vmem:[%s1 + $0xa8] sm:$0xff]
  %v68 = vld [vmem:[%s1 + $0xb0] sm:$0xff]
  %v69 = vld [vmem:[%s1 + $0xb8] sm:$0xff]
  %v70 = vld [vmem:[%s1 + $0xc0] sm:$0xff]
  %v71 = vld [vmem:[%s1 + $0xc8] sm:$0xff]
  %v72 = vld [vmem:[%s1 + $0xd0] sm:$0xff]
  %v73 = vld [vmem:[%s1 + $0xd8] sm:$0xff]
  %v74 = vld [vmem:[%s1 + $0xe0] sm:$0xff]
  %v75 = vld [vmem:[%s1 + $0xe8] sm:$0xff]
  %v76 = vld [vmem:[%s1 + $0xf0] sm:$0xff]
  %v77 = vld [vmem:[%s1 + $0xf8] sm:$0xff]
  %v78 = vld [vmem:[%s2] sm:$0xff]
  %v79 = vld [vmem:[%s2 + $0x8] sm:$0xff]
  %v80 = vld [vmem:[%s2 + $0x10] sm:$0xff]
  %v81 = vld [vmem:[%s2 + $0x18] sm:$0xff]
  %v82 = vld [vmem:[%s2 + $0x20] sm:$0xff]
  %v83 = vld [vmem:[%s2 + $0x28] sm:$0xff]
  %v84 = vld [vmem:[%s2 + $0x30] sm:$0xff]
  %v85 = vld [vmem:[%s2 + $0x38] sm:$0xff]
  %v86 = vld [vmem:[%s2 + $0x40] sm:$0xff]
  %v87 = vld [vmem:[%s2 + $0x48] sm:$0xff]
  %v88 = vld [vmem:[%s2 + $0x50] sm:$0xff]
  %v89 = vld [vmem:[%s2 + $0x58] sm:$0xff]
  %v90 = vld [vmem:[%s2 + $0x60] sm:$0xff]
  %v91 = vld [vmem:[%s2 + $0x68] sm:$0xff]
  %v92 = vld [vmem:[%s2 + $0x70] sm:$0xff]
  %v93 = vld [vmem:[%s2 + $0x78] sm:$0xff]
  %v94 = vld [vmem:[%s2 + $0x80] sm:$0xff]
  %v95 = vld [vmem:[%s2 + $0x88] sm:$0xff]
  %v96 = vld [vmem:[%s2 + $0x90] sm:$0xff]
  %v97 = vld [vmem:[%s2 + $0x98] sm:$0xff]
  %v98 = vld [vmem:[%s2 + $0xa0] sm:$0xff]
  %v99 = vld [vmem:[%s2 + $0xa8] sm:$0xff]
  %v100 = vld [vmem:[%s2 + $0xb0] sm:$0xff]
  %v101 = vld [vmem:[%s2 + $0xb8] sm:$0xff]
  %v102 = vld [vmem:[%s2 + $0xc0] sm:$0xff]
  %v103 = vld [vmem:[%s2 + $0xc8] sm:$0xff]
  %v104 = vld [vmem:[%s2 + $0xd0] sm:$0xff]
  %v105 = vld [vmem:[%s2 + $0xd8] sm:$0xff]
  %v106 = vld [vmem:[%s2 + $0xe0] sm:$0xff]
  %v107 = vld [vmem:[%s2 + $0xe8] sm:$0xff]
  %v108 = vld [vmem:[%s2 + $0xf0] sm:$0xff]
  %v109 = vld [vmem:[%s2 + $0xf8] sm:$0xff]
  %111 = vset.pattern.permute.xlu0 0
  %112 = vperm.xlu0 %111, %v46
  %v113 = vpop.permute.xlu0 %112
  %116 = vset.pattern.permute.xlu0 0
  %117 = vperm.xlu0 %116, %v47
  %v118 = vpop.permute.xlu0 %117
  %121 = vset.pattern.permute.xlu0 0
  %122 = vperm.xlu0 %121, %v48
  %v123 = vpop.permute.xlu0 %122
  %126 = vset.pattern.permute.xlu0 0
  %127 = vperm.xlu0 %126, %v49
  %v128 = vpop.permute.xlu0 %127
  %131 = vset.pattern.permute.xlu0 0
  %132 = vperm.xlu0 %131, %v50
  %v133 = vpop.permute.xlu0 %132
  %136 = vset.pattern.permute.xlu0 0
  %137 = vperm.xlu0 %136, %v51
  %v138 = vpop.permute.xlu0 %137
  %141 = vset.pattern.permute.xlu0 0
  %142 = vperm.xlu0 %141, %v52
  %v143 = vpop.permute.xlu0 %142
  %146 = vset.pattern.permute.xlu0 0
  %147 = vperm.xlu0 %146, %v53
  %v148 = vpop.permute.xlu0 %147
  %151 = vset.pattern.permute.xlu0 0
  %152 = vperm.xlu0 %151, %v54
  %v153 = vpop.permute.xlu0 %152
  %156 = vset.pattern.permute.xlu0 0
  %157 = vperm.xlu0 %156, %v55
  %v158 = vpop.permute.xlu0 %157
  %161 = vset.pattern.permute.xlu0 0
  %162 = vperm.xlu0 %161, %v56
  %v163 = vpop.permute.xlu0 %162
  %166 = vset.pattern.permute.xlu0 0
  %167 = vperm.xlu0 %166, %v57
  %v168 = vpop.permute.xlu0 %167
  %171 = vset.pattern.permute.xlu0 0
  %172 = vperm.xlu0 %171, %v58
  %v173 = vpop.permute.xlu0 %172
  %176 = vset.pattern.permute.xlu0 0
  %177 = vperm.xlu0 %176, %v59
  %v178 = vpop.permute.xlu0 %177
  %181 = vset.pattern.permute.xlu0 0
  %182 = vperm.xlu0 %181, %v60
  %v183 = vpop.permute.xlu0 %182
  %186 = vset.pattern.permute.xlu0 0
  %187 = vperm.xlu0 %186, %v61
  %v188 = vpop.permute.xlu0 %187
  %191 = vset.pattern.permute.xlu0 0
  %192 = vperm.xlu0 %191, %v62
  %v193 = vpop.permute.xlu0 %192
  %196 = vset.pattern.permute.xlu0 0
  %197 = vperm.xlu0 %196, %v63
  %v198 = vpop.permute.xlu0 %197
  %201 = vset.pattern.permute.xlu0 0
  %202 = vperm.xlu0 %201, %v64
  %v203 = vpop.permute.xlu0 %202
  %206 = vset.pattern.permute.xlu0 0
  %207 = vperm.xlu0 %206, %v65
  %v208 = vpop.permute.xlu0 %207
  %211 = vset.pattern.permute.xlu0 0
  %212 = vperm.xlu0 %211, %v66
  %v213 = vpop.permute.xlu0 %212
  %216 = vset.pattern.permute.xlu0 0
  %217 = vperm.xlu0 %216, %v67
  %v218 = vpop.permute.xlu0 %217
  %221 = vset.pattern.permute.xlu0 0
  %222 = vperm.xlu0 %221, %v68
  %v223 = vpop.permute.xlu0 %222
  %226 = vset.pattern.permute.xlu0 0
  %227 = vperm.xlu0 %226, %v69
  %v228 = vpop.permute.xlu0 %227
  %231 = vset.pattern.permute.xlu0 0
  %232 = vperm.xlu0 %231, %v70
  %v233 = vpop.permute.xlu0 %232
  %236 = vset.pattern.permute.xlu0 0
  %237 = vperm.xlu0 %236, %v71
  %v238 = vpop.permute.xlu0 %237
  %241 = vset.pattern.permute.xlu0 0
  %242 = vperm.xlu0 %241, %v72
  %v243 = vpop.permute.xlu0 %242
  %246 = vset.pattern.permute.xlu0 0
  %247 = vperm.xlu0 %246, %v73
  %v248 = vpop.permute.xlu0 %247
  %251 = vset.pattern.permute.xlu0 0
  %252 = vperm.xlu0 %251, %v74
  %v253 = vpop.permute.xlu0 %252
  %256 = vset.pattern.permute.xlu0 0
  %257 = vperm.xlu0 %256, %v75
  %v258 = vpop.permute.xlu0 %257
  %261 = vset.pattern.permute.xlu0 0
  %262 = vperm.xlu0 %261, %v76
  %v263 = vpop.permute.xlu0 %262
  %266 = vset.pattern.permute.xlu0 0
  %267 = vperm.xlu0 %266, %v77
  %v268 = vpop.permute.xlu0 %267
  %v270 = vmul.f32 %v14, %v113
  %v271 = vmul.f32 %v15, %v118
  %v272 = vmul.f32 %v16, %v123
  %v273 = vmul.f32 %v17, %v128
  %v274 = vmul.f32 %v18, %v133
  %v275 = vmul.f32 %v19, %v138
  %v276 = vmul.f32 %v20, %v143
  %v277 = vmul.f32 %v21, %v148
  %v278 = vmul.f32 %v22, %v153
  %v279 = vmul.f32 %v23, %v158
  %v280 = vmul.f32 %v24, %v163
  %v281 = vmul.f32 %v25, %v168
  %v282 = vmul.f32 %v26, %v173
  %v283 = vmul.f32 %v27, %v178
  %v284 = vmul.f32 %v28, %v183
  %v285 = vmul.f32 %v29, %v188
  %v286 = vmul.f32 %v30, %v193
  %v287 = vmul.f32 %v31, %v198
  %v288 = vmul.f32 %v32, %v203
  %v289 = vmul.f32 %v33, %v208
  %v290 = vmul.f32 %v34, %v213
  %v291 = vmul.f32 %v35, %v218
  %v292 = vmul.f32 %v36, %v223
  %v293 = vmul.f32 %v37, %v228
  %v294 = vmul.f32 %v38, %v233
  %v295 = vmul.f32 %v39, %v238
  %v296 = vmul.f32 %v40, %v243
  %v297 = vmul.f32 %v41, %v248
  %v298 = vmul.f32 %v42, %v253
  %v299 = vmul.f32 %v43, %v258
  %v300 = vmul.f32 %v44, %v263
  %v301 = vmul.f32 %v45, %v268
  %303 = vset.pattern.permute.xlu0 0
  %304 = vperm.xlu0 %303, %v78
  %v305 = vpop.permute.xlu0 %304
  %308 = vset.pattern.permute.xlu0 0
  %309 = vperm.xlu0 %308, %v79
  %v310 = vpop.permute.xlu0 %309
  %313 = vset.pattern.permute.xlu0 0
  %314 = vperm.xlu0 %313, %v80
  %v315 = vpop.permute.xlu0 %314
  %318 = vset.pattern.permute.xlu0 0
  %319 = vperm.xlu0 %318, %v81
  %v320 = vpop.permute.xlu0 %319
  %323 = vset.pattern.permute.xlu0 0
  %324 = vperm.xlu0 %323, %v82
  %v325 = vpop.permute.xlu0 %324
  %328 = vset.pattern.permute.xlu0 0
  %329 = vperm.xlu0 %328, %v83
  %v330 = vpop.permute.xlu0 %329
  %333 = vset.pattern.permute.xlu0 0
  %334 = vperm.xlu0 %333, %v84
  %v335 = vpop.permute.xlu0 %334
  %338 = vset.pattern.permute.xlu0 0
  %339 = vperm.xlu0 %338, %v85
  %v340 = vpop.permute.xlu0 %339
  %343 = vset.pattern.permute.xlu0 0
  %344 = vperm.xlu0 %343, %v86
  %v345 = vpop.permute.xlu0 %344
  %348 = vset.pattern.permute.xlu0 0
  %349 = vperm.xlu0 %348, %v87
  %v350 = vpop.permute.xlu0 %349
  %353 = vset.pattern.permute.xlu0 0
  %354 = vperm.xlu0 %353, %v88
  %v355 = vpop.permute.xlu0 %354
  %358 = vset.pattern.permute.xlu0 0
  %359 = vperm.xlu0 %358, %v89
  %v360 = vpop.permute.xlu0 %359
  %363 = vset.pattern.permute.xlu0 0
  %364 = vperm.xlu0 %363, %v90
  %v365 = vpop.permute.xlu0 %364
  %368 = vset.pattern.permute.xlu0 0
  %369 = vperm.xlu0 %368, %v91
  %v370 = vpop.permute.xlu0 %369
  %373 = vset.pattern.permute.xlu0 0
  %374 = vperm.xlu0 %373, %v92
  %v375 = vpop.permute.xlu0 %374
  %378 = vset.pattern.permute.xlu0 0
  %379 = vperm.xlu0 %378, %v93
  %v380 = vpop.permute.xlu0 %379
  %383 = vset.pattern.permute.xlu0 0
  %384 = vperm.xlu0 %383, %v94
  %v385 = vpop.permute.xlu0 %384
  %388 = vset.pattern.permute.xlu0 0
  %389 = vperm.xlu0 %388, %v95
  %v390 = vpop.permute.xlu0 %389
  %393 = vset.pattern.permute.xlu0 0
  %394 = vperm.xlu0 %393, %v96
  %v395 = vpop.permute.xlu0 %394
  %398 = vset.pattern.permute.xlu0 0
  %399 = vperm.xlu0 %398, %v97
  %v400 = vpop.permute.xlu0 %399
  %403 = vset.pattern.permute.xlu0 0
  %404 = vperm.xlu0 %403, %v98
  %v405 = vpop.permute.xlu0 %404
  %408 = vset.pattern.permute.xlu0 0
  %409 = vperm.xlu0 %408, %v99
  %v410 = vpop.permute.xlu0 %409
  %413 = vset.pattern.permute.xlu0 0
  %414 = vperm.xlu0 %413, %v100
  %v415 = vpop.permute.xlu0 %414
  %418 = vset.pattern.permute.xlu0 0
  %419 = vperm.xlu0 %418, %v101
  %v420 = vpop.permute.xlu0 %419
  %423 = vset.pattern.permute.xlu0 0
  %424 = vperm.xlu0 %423, %v102
  %v425 = vpop.permute.xlu0 %424
  %428 = vset.pattern.permute.xlu0 0
  %429 = vperm.xlu0 %428, %v103
  %v430 = vpop.permute.xlu0 %429
  %433 = vset.pattern.permute.xlu0 0
  %434 = vperm.xlu0 %433, %v104
  %v435 = vpop.permute.xlu0 %434
  %438 = vset.pattern.permute.xlu0 0
  %439 = vperm.xlu0 %438, %v105
  %v440 = vpop.permute.xlu0 %439
  %443 = vset.pattern.permute.xlu0 0
  %444 = vperm.xlu0 %443, %v106
  %v445 = vpop.permute.xlu0 %444
  %448 = vset.pattern.permute.xlu0 0
  %449 = vperm.xlu0 %448, %v107
  %v450 = vpop.permute.xlu0 %449
  %453 = vset.pattern.permute.xlu0 0
  %454 = vperm.xlu0 %453, %v108
  %v455 = vpop.permute.xlu0 %454
  %458 = vset.pattern.permute.xlu0 0
  %459 = vperm.xlu0 %458, %v109
  %v460 = vpop.permute.xlu0 %459
  %v462 = vadd.f32 %v270, %v305
  %v463 = vadd.f32 %v271, %v310
  %v464 = vadd.f32 %v272, %v315
  %v465 = vadd.f32 %v273, %v320
  %v466 = vadd.f32 %v274, %v325
  %v467 = vadd.f32 %v275, %v330
  %v468 = vadd.f32 %v276, %v335
  %v469 = vadd.f32 %v277, %v340
  %v470 = vadd.f32 %v278, %v345
  %v471 = vadd.f32 %v279, %v350
  %v472 = vadd.f32 %v280, %v355
  %v473 = vadd.f32 %v281, %v360
  %v474 = vadd.f32 %v282, %v365
  %v475 = vadd.f32 %v283, %v370
  %v476 = vadd.f32 %v284, %v375
  %v477 = vadd.f32 %v285, %v380
  %v478 = vadd.f32 %v286, %v385
  %v479 = vadd.f32 %v287, %v390
  %v480 = vadd.f32 %v288, %v395
  %v481 = vadd.f32 %v289, %v400
  %v482 = vadd.f32 %v290, %v405
  %v483 = vadd.f32 %v291, %v410
  %v484 = vadd.f32 %v292, %v415
  %v485 = vadd.f32 %v293, %v420
  %v486 = vadd.f32 %v294, %v425
  %v487 = vadd.f32 %v295, %v430
  %v488 = vadd.f32 %v296, %v435
  %v489 = vadd.f32 %v297, %v440
  %v490 = vadd.f32 %v298, %v445
  %v491 = vadd.f32 %v299, %v450
  %v492 = vadd.f32 %v300, %v455
  %v493 = vadd.f32 %v301, %v460
  %v494 = vmax.f32 %v462, 0.0
  %v495 = vmax.f32 %v463, 0.0
  %v496 = vmax.f32 %v464, 0.0
  %v497 = vmax.f32 %v465, 0.0
  %v498 = vmax.f32 %v466, 0.0
  %v499 = vmax.f32 %v467, 0.0
  %v500 = vmax.f32 %v468, 0.0
  %v501 = vmax.f32 %v469, 0.0
  %v502 = vmax.f32 %v470, 0.0
  %v503 = vmax.f32 %v471, 0.0
  %v504 = vmax.f32 %v472, 0.0
  %v505 = vmax.f32 %v473, 0.0
  %v506 = vmax.f32 %v474, 0.0
  %v507 = vmax.f32 %v475, 0.0
  %v508 = vmax.f32 %v476, 0.0
  %v509 = vmax.f32 %v477, 0.0
  %v510 = vmax.f32 %v478, 0.0
  %v511 = vmax.f32 %v479, 0.0
  %v512 = vmax.f32 %v480, 0.0
  %v513 = vmax.f32 %v481, 0.0
  %v514 = vmax.f32 %v482, 0.0
  %v515 = vmax.f32 %v483, 0.0
  %v516 = vmax.f32 %v484, 0.0
  %v517 = vmax.f32 %v485, 0.0
  %v518 = vmax.f32 %v486, 0.0
  %v519 = vmax.f32 %v487, 0.0
  %v520 = vmax.f32 %v488, 0.0
  %v521 = vmax.f32 %v489, 0.0
  %v522 = vmax.f32 %v490, 0.0
  %v523 = vmax.f32 %v491, 0.0
  %v524 = vmax.f32 %v492, 0.0
  %v525 = vmax.f32 %v493, 0.0
  %v526 = vpack.c.bf16 %v495, %v494
  %v527 = vpack.c.bf16 %v497, %v496
  %v528 = vpack.c.bf16 %v499, %v498
  %v529 = vpack.c.bf16 %v501, %v500
  %v530 = vpack.c.bf16 %v503, %v502
  %v531 = vpack.c.bf16 %v505, %v504
  %v532 = vpack.c.bf16 %v507, %v506
  %v533 = vpack.c.bf16 %v509, %v508
  %v534 = vpack.c.bf16 %v511, %v510
  %v535 = vpack.c.bf16 %v513, %v512
  %v536 = vpack.c.bf16 %v515, %v514
  %v537 = vpack.c.bf16 %v517, %v516
  %v538 = vpack.c.bf16 %v519, %v518
  %v539 = vpack.c.bf16 %v521, %v520
  %v540 = vpack.c.bf16 %v523, %v522
  %v541 = vpack.c.bf16 %v525, %v524
  %v558 = vunpack.c.l.b16 %v526
  %v559 = vunpack.c.h.b16 %v526
  %v560 = vunpack.c.l.b16 %v527
  %v561 = vunpack.c.h.b16 %v527
  %v562 = vunpack.c.l.b16 %v528
  %v563 = vunpack.c.h.b16 %v528
  %v564 = vunpack.c.l.b16 %v529
  %v565 = vunpack.c.h.b16 %v529
  %v566 = vunpack.c.l.b16 %v530
  %v567 = vunpack.c.h.b16 %v530
  %v568 = vunpack.c.l.b16 %v531
  %v569 = vunpack.c.h.b16 %v531
  %v570 = vunpack.c.l.b16 %v532
  %v571 = vunpack.c.h.b16 %v532
  %v572 = vunpack.c.l.b16 %v533
  %v573 = vunpack.c.h.b16 %v533
  %v574 = vunpack.c.l.b16 %v534
  %v575 = vunpack.c.h.b16 %v534
  %v576 = vunpack.c.l.b16 %v535
  %v577 = vunpack.c.h.b16 %v535
  %v578 = vunpack.c.l.b16 %v536
  %v579 = vunpack.c.h.b16 %v536
  %v580 = vunpack.c.l.b16 %v537
  %v581 = vunpack.c.h.b16 %v537
  %v582 = vunpack.c.l.b16 %v538
  %v583 = vunpack.c.h.b16 %v538
  %v584 = vunpack.c.l.b16 %v539
  %v585 = vunpack.c.h.b16 %v539
  %v586 = vunpack.c.l.b16 %v540
  %v587 = vunpack.c.h.b16 %v540
  %v588 = vunpack.c.l.b16 %v541
  %v589 = vunpack.c.h.b16 %v541
  %v590 = vpack.c.b16 %v558, %v558
  %v591 = vpack.c.b16 %v559, %v559
  %v592 = vpack.c.b16 %v560, %v560
  %v593 = vpack.c.b16 %v561, %v561
  %v594 = vpack.c.b16 %v562, %v562
  %v595 = vpack.c.b16 %v563, %v563
  %v596 = vpack.c.b16 %v564, %v564
  %v597 = vpack.c.b16 %v565, %v565
  %v598 = vpack.c.b16 %v566, %v566
  %v599 = vpack.c.b16 %v567, %v567
  %v600 = vpack.c.b16 %v568, %v568
  %v601 = vpack.c.b16 %v569, %v569
  %v602 = vpack.c.b16 %v570, %v570
  %v603 = vpack.c.b16 %v571, %v571
  %v604 = vpack.c.b16 %v572, %v572
  %v605 = vpack.c.b16 %v573, %v573
  %v606 = vpack.c.b16 %v574, %v574
  %v607 = vpack.c.b16 %v575, %v575
  %v608 = vpack.c.b16 %v576, %v576
  %v609 = vpack.c.b16 %v577, %v577
  %v610 = vpack.c.b16 %v578, %v578
  %v611 = vpack.c.b16 %v579, %v579
  %v612 = vpack.c.b16 %v580, %v580
  %v613 = vpack.c.b16 %v581, %v581
  %v614 = vpack.c.b16 %v582, %v582
  %v615 = vpack.c.b16 %v583, %v583
  %v616 = vpack.c.b16 %v584, %v584
  %v617 = vpack.c.b16 %v585, %v585
  %v618 = vpack.c.b16 %v586, %v586
  %v619 = vpack.c.b16 %v587, %v587
  %v620 = vpack.c.b16 %v588, %v588
  %v621 = vpack.c.b16 %v589, %v589
  %654 = vst [vmem:[%s3] sm:$0xf] %v590
  %655 = vst [vmem:[%s3 + $0x4] sm:$0xf] %v591
  %656 = vst [vmem:[%s3 + $0x8] sm:$0xf] %v592
  %657 = vst [vmem:[%s3 + $0xc] sm:$0xf] %v593
  %658 = vst [vmem:[%s3 + $0x10] sm:$0xf] %v594
  %659 = vst [vmem:[%s3 + $0x14] sm:$0xf] %v595
  %660 = vst [vmem:[%s3 + $0x18] sm:$0xf] %v596
  %661 = vst [vmem:[%s3 + $0x1c] sm:$0xf] %v597
  %662 = vst [vmem:[%s3 + $0x20] sm:$0xf] %v598
  %663 = vst [vmem:[%s3 + $0x24] sm:$0xf] %v599
  %664 = vst [vmem:[%s3 + $0x28] sm:$0xf] %v600
  %665 = vst [vmem:[%s3 + $0x2c] sm:$0xf] %v601
  %666 = vst [vmem:[%s3 + $0x30] sm:$0xf] %v602
  %667 = vst [vmem:[%s3 + $0x34] sm:$0xf] %v603
  %668 = vst [vmem:[%s3 + $0x38] sm:$0xf] %v604
  %669 = vst [vmem:[%s3 + $0x3c] sm:$0xf] %v605
  %670 = vst [vmem:[%s3 + $0x40] sm:$0xf] %v606
  %671 = vst [vmem:[%s3 + $0x44] sm:$0xf] %v607
  %672 = vst [vmem:[%s3 + $0x48] sm:$0xf] %v608
  %673 = vst [vmem:[%s3 + $0x4c] sm:$0xf] %v609
  %674 = vst [vmem:[%s3 + $0x50] sm:$0xf] %v610
  %675 = vst [vmem:[%s3 + $0x54] sm:$0xf] %v611
  %676 = vst [vmem:[%s3 + $0x58] sm:$0xf] %v612
  %677 = vst [vmem:[%s3 + $0x5c] sm:$0xf] %v613
  %678 = vst [vmem:[%s3 + $0x60] sm:$0xf] %v614
  %679 = vst [vmem:[%s3 + $0x64] sm:$0xf] %v615
  %680 = vst [vmem:[%s3 + $0x68] sm:$0xf] %v616
  %681 = vst [vmem:[%s3 + $0x6c] sm:$0xf] %v617
  %682 = vst [vmem:[%s3 + $0x70] sm:$0xf] %v618
  %683 = vst [vmem:[%s3 + $0x74] sm:$0xf] %v619
  %684 = vst [vmem:[%s3 + $0x78] sm:$0xf] %v620
  %685 = vst [vmem:[%s3 + $0x7c] sm:$0xf] %v621
  // Predicated region
  $region14: #{generator_forward.10} parent=0 // pred_check
    _
  $region15: #{generator_forward.10} parent=0 // pred_check_branch
    %687 = sbr.rel (0) target = $region17
  $region16: #{generator_forward.10} parent=0 // pred_region
    _
  $region17: #{generator_forward.10} parent=0 // pred_fallthru
    _
  // Predicated region
  $region18: #{generator_forward.10} parent=0 // pred_check
    _
  $region19: #{generator_forward.10} parent=0 // pred_check_branch
    %689 = sbr.rel (0) target = $region21
  $region20: #{generator_forward.10} parent=0 // pred_region
    _
  $region21: #{generator_forward.10} parent=0 // pred_fallthru
    _

// kernel: generator_forward.9
$region0: #{generator_forward.9}
  #allocation0 [shape = 'u32[]', space=smem, size = 0x4, offset = 0x4, fixed_abs, tag = 'smem constant byte address 0x4 - core index']
  #allocation1 [shape = 'u32[144,128]{1,0:T(1,128)}', space=vmem, size = 0x12000, scoped, tag = 'internal scratch']
  %s0 = inlined_call_operand.vmem [shape: bf16[1,8,128], index: 0, kind: input, shape index: {}]
  %s1 = inlined_call_operand.vmem [shape: bf16[1,1,256,8], index: 1, kind: input, shape index: {}]
  %s2 = inlined_call_operand.vmem [shape: f32[1,256,128], index: 2, kind: output, shape index: {}]
  %s3 = sld [smem:[#allocation0]]
  $region18: #{generator_forward.9} parent=0
    _
  %s5 = ssub.s32 1, %s3
  %s6 = scalar_select 0, %s5, %s3
  // Predicated region
  $region2: #{generator_forward.9} parent=0 // pred_check
    _
  $region3: #{generator_forward.9} parent=0 // pred_check_branch
    %8 = sbr.rel (0) target = $region5
  $region4: #{generator_forward.9} parent=0 // pred_region
    _
  $region5: #{generator_forward.9} parent=0 // pred_fallthru
    _
  // Predicated region
  $region6: #{generator_forward.9} parent=0 // pred_check
    _
  $region7: #{generator_forward.9} parent=0 // pred_check_branch
    %10 = sbr.rel (0) target = $region9
  $region8: #{generator_forward.9} parent=0 // pred_region
    _
  $region9: #{generator_forward.9} parent=0 // pred_fallthru
    _
  %v12 = vld [vmem:[%s1] sm:$0xf]
  %v13 = vld [vmem:[%s1 + $0x4] sm:$0xf]
  %v14 = vld [vmem:[%s1 + $0x8] sm:$0xf]
  %v15 = vld [vmem:[%s1 + $0xc] sm:$0xf]
  %v16 = vld [vmem:[%s1 + $0x10] sm:$0xf]
  %v17 = vld [vmem:[%s1 + $0x14] sm:$0xf]
  %v18 = vld [vmem:[%s1 + $0x18] sm:$0xf]
  %v19 = vld [vmem:[%s1 + $0x1c] sm:$0xf]
  %v20 = vld [vmem:[%s1 + $0x20] sm:$0xf]
  %v21 = vld [vmem:[%s1 + $0x24] sm:$0xf]
  %v22 = vld [vmem:[%s1 + $0x28] sm:$0xf]
  %v23 = vld [vmem:[%s1 + $0x2c] sm:$0xf]
  %v24 = vld [vmem:[%s1 + $0x30] sm:$0xf]
  %v25 = vld [vmem:[%s1 + $0x34] sm:$0xf]
  %v26 = vld [vmem:[%s1 + $0x38] sm:$0xf]
  %v27 = vld [vmem:[%s1 + $0x3c] sm:$0xf]
  %v28 = vld [vmem:[%s1 + $0x40] sm:$0xf]
  %v29 = vld [vmem:[%s1 + $0x44] sm:$0xf]
  %v30 = vld [vmem:[%s1 + $0x48] sm:$0xf]
  %v31 = vld [vmem:[%s1 + $0x4c] sm:$0xf]
  %v32 = vld [vmem:[%s1 + $0x50] sm:$0xf]
  %v33 = vld [vmem:[%s1 + $0x54] sm:$0xf]
  %v34 = vld [vmem:[%s1 + $0x58] sm:$0xf]
  %v35 = vld [vmem:[%s1 + $0x5c] sm:$0xf]
  %v36 = vld [vmem:[%s1 + $0x60] sm:$0xf]
  %v37 = vld [vmem:[%s1 + $0x64] sm:$0xf]
  %v38 = vld [vmem:[%s1 + $0x68] sm:$0xf]
  %v39 = vld [vmem:[%s1 + $0x6c] sm:$0xf]
  %v40 = vld [vmem:[%s1 + $0x70] sm:$0xf]
  %v41 = vld [vmem:[%s1 + $0x74] sm:$0xf]
  %v42 = vld [vmem:[%s1 + $0x78] sm:$0xf]
  %v43 = vld [vmem:[%s1 + $0x7c] sm:$0xf]
  %v44 = vld [vmem:[%s0] sm:$0xf]
  %v77 = vunpack.c.l.b16 %v12
  %v78 = vunpack.c.l.b16 %v13
  %v79 = vunpack.c.l.b16 %v14
  %v80 = vunpack.c.l.b16 %v15
  %v81 = vunpack.c.l.b16 %v16
  %v82 = vunpack.c.l.b16 %v17
  %v83 = vunpack.c.l.b16 %v18
  %v84 = vunpack.c.l.b16 %v19
  %v85 = vunpack.c.l.b16 %v20
  %v86 = vunpack.c.l.b16 %v21
  %v87 = vunpack.c.l.b16 %v22
  %v88 = vunpack.c.l.b16 %v23
  %v89 = vunpack.c.l.b16 %v24
  %v90 = vunpack.c.l.b16 %v25
  %v91 = vunpack.c.l.b16 %v26
  %v92 = vunpack.c.l.b16 %v27
  %v93 = vunpack.c.l.b16 %v28
  %v94 = vunpack.c.l.b16 %v29
  %v95 = vunpack.c.l.b16 %v30
  %v96 = vunpack.c.l.b16 %v31
  %v97 = vunpack.c.l.b16 %v32
  %v98 = vunpack.c.l.b16 %v33
  %v99 = vunpack.c.l.b16 %v34
  %v100 = vunpack.c.l.b16 %v35
  %v101 = vunpack.c.l.b16 %v36
  %v102 = vunpack.c.l.b16 %v37
  %v103 = vunpack.c.l.b16 %v38
  %v104 = vunpack.c.l.b16 %v39
  %v105 = vunpack.c.l.b16 %v40
  %v106 = vunpack.c.l.b16 %v41
  %v107 = vunpack.c.l.b16 %v42
  %v108 = vunpack.c.l.b16 %v43
  %v109 = vpack.c.b16 %v78, %v77
  %v110 = vpack.c.b16 %v80, %v79
  %v111 = vpack.c.b16 %v82, %v81
  %v112 = vpack.c.b16 %v84, %v83
  %v113 = vpack.c.b16 %v86, %v85
  %v114 = vpack.c.b16 %v88, %v87
  %v115 = vpack.c.b16 %v90, %v89
  %v116 = vpack.c.b16 %v92, %v91
  %v117 = vpack.c.b16 %v94, %v93
  %v118 = vpack.c.b16 %v96, %v95
  %v119 = vpack.c.b16 %v98, %v97
  %v120 = vpack.c.b16 %v100, %v99
  %v121 = vpack.c.b16 %v102, %v101
  %v122 = vpack.c.b16 %v104, %v103
  %v123 = vpack.c.b16 %v106, %v105
  %v124 = vpack.c.b16 %v108, %v107
  %vm125 = vcmask 64512
  %v127 = vsel %vm125, %v109, 0
  %v130 = vsel %vm125, %v110, 0
  %v133 = vsel %vm125, %v111, 0
  %v136 = vsel %vm125, %v112, 0
  %v139 = vsel %vm125, %v113, 0
  %v142 = vsel %vm125, %v114, 0
  %v145 = vsel %vm125, %v115, 0
  %v148 = vsel %vm125, %v116, 0
  %v151 = vsel %vm125, %v117, 0
  %v154 = vsel %vm125, %v118, 0
  %v157 = vsel %vm125, %v119, 0
  %v160 = vsel %vm125, %v120, 0
  %v163 = vsel %vm125, %v121, 0
  %v166 = vsel %vm125, %v122, 0
  %v169 = vsel %vm125, %v123, 0
  %v172 = vsel %vm125, %v124, 0
  %vm174 = vcmask 1043456
  %v176 = vsel %vm174, %v44, 0
  %178 = vmatprep.subr.bf16.mxu0 0
  %179 = vmatpush1.bf16.msra.mxu0 %v176
  %180 = vmatprep.subr.bf16.mxu0 0
  %181 = vmatpush1.bf16.msra.mxu0 0
  %182 = vmatprep.subr.bf16.mxu0 0
  %183 = vmatpush1.bf16.msra.mxu0 0
  %184 = vmatprep.subr.bf16.mxu0 0
  %185 = vmatpush1.bf16.msra.mxu0 0
  %186 = vmatprep.subr.bf16.mxu0 0
  %187 = vmatpush1.bf16.msra.mxu0 0
  %188 = vmatprep.subr.bf16.mxu0 0
  %189 = vmatpush1.bf16.msra.mxu0 0
  %190 = vmatprep.subr.bf16.mxu0 0
  %191 = vmatpush1.bf16.msra.mxu0 0
  %192 = vmatprep.subr.bf16.mxu0 0
  %193 = vmatpush1.bf16.msra.mxu0 0
  %194 = vmatprep.subr.bf16.mxu0 0
  %195 = vmatpush1.bf16.msra.mxu0 0
  %196 = vmatprep.subr.bf16.mxu0 0
  %197 = vmatpush1.bf16.msra.mxu0 0
  %198 = vmatprep.subr.bf16.mxu0 0
  %199 = vmatpush1.bf16.msra.mxu0 0
  %200 = vmatprep.subr.bf16.mxu0 0
  %201 = vmatpush1.bf16.msra.mxu0 0
  %202 = vmatprep.subr.bf16.mxu0 0
  %203 = vmatpush1.bf16.msra.mxu0 0
  %204 = vmatprep.subr.bf16.mxu0 0
  %205 = vmatpush1.bf16.msra.mxu0 0
  %206 = vmatprep.subr.bf16.mxu0 0
  %207 = vmatpush1.bf16.msra.mxu0 0
  %208 = vmatprep.subr.bf16.mxu0 0
  %209 = vmatpush1.bf16.msra.mxu0 0
  %210 = vmatprep.mubr.bf16.mxu0 0
  %211 = vmatmul.mubr.bf16.gmra.mrb[0].mxu0 %v127
  %v212 = vpop.f32.mrb[0].mxu0
  %v213 = vadd.f32 0.0, %v212
  %v214 = vpop.f32.mrb[0].mxu0
  %v215 = vpop.f32.mrb[0].mxu0
  %v216 = vadd.f32 0.0, %v215
  %v217 = vpop.f32.mrb[0].mxu0
  %218 = vmatprep.mubr.bf16.mxu0 0
  %219 = vmatmul.mubr.bf16.gmra.mrb[0].mxu0 %v130
  %v220 = vpop.f32.mrb[0].mxu0
  %v221 = vadd.f32 0.0, %v220
  %v222 = vpop.f32.mrb[0].mxu0
  %v223 = vpop.f32.mrb[0].mxu0
  %v224 = vadd.f32 0.0, %v223
  %v225 = vpop.f32.mrb[0].mxu0
  %226 = vmatprep.mubr.bf16.mxu0 0
  %227 = vmatmul.mubr.bf16.gmra.mrb[0].mxu0 %v133
  %v228 = vpop.f32.mrb[0].mxu0
  %v229 = vadd.f32 0.0, %v228
  %v230 = vpop.f32.mrb[0].mxu0
  %v231 = vpop.f32.mrb[0].mxu0
  %v232 = vadd.f32 0.0, %v231
  %v233 = vpop.f32.mrb[0].mxu0
  %234 = vmatprep.mubr.bf16.mxu0 0
  %235 = vmatmul.mubr.bf16.gmra.mrb[0].mxu0 %v136
  %v236 = vpop.f32.mrb[0].mxu0
  %v237 = vadd.f32 0.0, %v236
  %v238 = vpop.f32.mrb[0].mxu0
  %v239 = vpop.f32.mrb[0].mxu0
  %v240 = vadd.f32 0.0, %v239
  %v241 = vpop.f32.mrb[0].mxu0
  %242 = vmatprep.mubr.bf16.mxu0 0
  %243 = vmatmul.mubr.bf16.gmra.mrb[0].mxu0 %v139
  %v244 = vpop.f32.mrb[0].mxu0
  %v245 = vadd.f32 0.0, %v244
  %v246 = vpop.f32.mrb[0].mxu0
  %v247 = vpop.f32.mrb[0].mxu0
  %v248 = vadd.f32 0.0, %v247
  %v249 = vpop.f32.mrb[0].mxu0
  %250 = vmatprep.mubr.bf16.mxu0 0
  %251 = vmatmul.mubr.bf16.gmra.mrb[0].mxu0 %v142
  %v252 = vpop.f32.mrb[0].mxu0
  %v253 = vadd.f32 0.0, %v252
  %v254 = vpop.f32.mrb[0].mxu0
  %v255 = vpop.f32.mrb[0].mxu0
  %v256 = vadd.f32 0.0, %v255
  %v257 = vpop.f32.mrb[0].mxu0
  %258 = vmatprep.mubr.bf16.mxu0 0
  %259 = vmatmul.mubr.bf16.gmra.mrb[0].mxu0 %v145
  %v260 = vpop.f32.mrb[0].mxu0
  %v261 = vadd.f32 0.0, %v260
  %v262 = vpop.f32.mrb[0].mxu0
  %v263 = vpop.f32.mrb[0].mxu0
  %v264 = vadd.f32 0.0, %v263
  %v265 = vpop.f32.mrb[0].mxu0
  %266 = vmatprep.mubr.bf16.mxu0 0
  %267 = vmatmul.mubr.bf16.gmra.mrb[0].mxu0 %v148
  %v268 = vpop.f32.mrb[0].mxu0
  %v269 = vadd.f32 0.0, %v268
  %v270 = vpop.f32.mrb[0].mxu0
  %v271 = vpop.f32.mrb[0].mxu0
  %v272 = vadd.f32 0.0, %v271
  %v273 = vpop.f32.mrb[0].mxu0
  %274 = vmatprep.mubr.bf16.mxu0 0
  %275 = vmatmul.mubr.bf16.gmra.mrb[0].mxu0 %v151
  %v276 = vpop.f32.mrb[0].mxu0
  %v277 = vadd.f32 0.0, %v276
  %v278 = vpop.f32.mrb[0].mxu0
  %v279 = vpop.f32.mrb[0].mxu0
  %v280 = vadd.f32 0.0, %v279
  %v281 = vpop.f32.mrb[0].mxu0
  %282 = vmatprep.mubr.bf16.mxu0 0
  %283 = vmatmul.mubr.bf16.gmra.mrb[0].mxu0 %v154
  %v284 = vpop.f32.mrb[0].mxu0
  %v285 = vadd.f32 0.0, %v284
  %v286 = vpop.f32.mrb[0].mxu0
  %v287 = vpop.f32.mrb[0].mxu0
  %v288 = vadd.f32 0.0, %v287
  %v289 = vpop.f32.mrb[0].mxu0
  %290 = vmatprep.mubr.bf16.mxu0 0
  %291 = vmatmul.mubr.bf16.gmra.mrb[0].mxu0 %v157
  %v292 = vpop.f32.mrb[0].mxu0
  %v293 = vadd.f32 0.0, %v292
  %v294 = vpop.f32.mrb[0].mxu0
  %v295 = vpop.f32.mrb[0].mxu0
  %v296 = vadd.f32 0.0, %v295
  %v297 = vpop.f32.mrb[0].mxu0
  %298 = vmatprep.mubr.bf16.mxu0 0
  %299 = vmatmul.mubr.bf16.gmra.mrb[0].mxu0 %v160
  %v300 = vpop.f32.mrb[0].mxu0
  %v301 = vadd.f32 0.0, %v300
  %v302 = vpop.f32.mrb[0].mxu0
  %v303 = vpop.f32.mrb[0].mxu0
  %v304 = vadd.f32 0.0, %v303
  %v305 = vpop.f32.mrb[0].mxu0
  %306 = vmatprep.mubr.bf16.mxu0 0
  %307 = vmatmul.mubr.bf16.gmra.mrb[0].mxu0 %v163
  %v308 = vpop.f32.mrb[0].mxu0
  %v309 = vadd.f32 0.0, %v308
  %v310 = vpop.f32.mrb[0].mxu0
  %v311 = vpop.f32.mrb[0].mxu0
  %v312 = vadd.f32 0.0, %v311
  %v313 = vpop.f32.mrb[0].mxu0
  %314 = vmatprep.mubr.bf16.mxu0 0
  %315 = vmatmul.mubr.bf16.gmra.mrb[0].mxu0 %v166
  %v316 = vpop.f32.mrb[0].mxu0
  %v317 = vadd.f32 0.0, %v316
  %v318 = vpop.f32.mrb[0].mxu0
  %v319 = vpop.f32.mrb[0].mxu0
  %v320 = vadd.f32 0.0, %v319
  %v321 = vpop.f32.mrb[0].mxu0
  %322 = vmatprep.mubr.bf16.mxu0 0
  %323 = vmatmul.mubr.bf16.gmra.mrb[0].mxu0 %v169
  %v324 = vpop.f32.mrb[0].mxu0
  %v325 = vadd.f32 0.0, %v324
  %v326 = vpop.f32.mrb[0].mxu0
  %v327 = vpop.f32.mrb[0].mxu0
  %v328 = vadd.f32 0.0, %v327
  %v329 = vpop.f32.mrb[0].mxu0
  %330 = vmatprep.mubr.bf16.mxu0 0
  %331 = vmatmul.mubr.bf16.gmra.mrb[0].mxu0 %v172
  %v332 = vpop.f32.mrb[0].mxu0
  %v333 = vadd.f32 0.0, %v332
  %v334 = vpop.f32.mrb[0].mxu0
  %v335 = vpop.f32.mrb[0].mxu0
  %v336 = vadd.f32 0.0, %v335
  %v337 = vpop.f32.mrb[0].mxu0
  %338 = vdwg.mxu0
  %339 = vst [vmem:[%s2] sm:$0xff] %v213
  %340 = vst [vmem:[%s2 + $0x8] sm:$0xff] %v216
  %341 = vst [vmem:[%s2 + $0x10] sm:$0xff] %v221
  %342 = vst [vmem:[%s2 + $0x18] sm:$0xff] %v224
  %343 = vst [vmem:[%s2 + $0x20] sm:$0xff] %v229
  %344 = vst [vmem:[%s2 + $0x28] sm:$0xff] %v232
  %345 = vst [vmem:[%s2 + $0x30] sm:$0xff] %v237
  %346 = vst [vmem:[%s2 + $0x38] sm:$0xff] %v240
  %347 = vst [vmem:[%s2 + $0x40] sm:$0xff] %v245
  %348 = vst [vmem:[%s2 + $0x48] sm:$0xff] %v248
  %349 = vst [vmem:[%s2 + $0x50] sm:$0xff] %v253
  %350 = vst [vmem:[%s2 + $0x58] sm:$0xff] %v256
  %351 = vst [vmem:[%s2 + $0x60] sm:$0xff] %v261
  %352 = vst [vmem:[%s2 + $0x68] sm:$0xff] %v264
  %353 = vst [vmem:[%s2 + $0x70] sm:$0xff] %v269
  %354 = vst [vmem:[%s2 + $0x78] sm:$0xff] %v272
  %355 = vst [vmem:[%s2 + $0x80] sm:$0xff] %v277
  %356 = vst [vmem:[%s2 + $0x88] sm:$0xff] %v280
  %357 = vst [vmem:[%s2 + $0x90] sm:$0xff] %v285
  %358 = vst [vmem:[%s2 + $0x98] sm:$0xff] %v288
  %359 = vst [vmem:[%s2 + $0xa0] sm:$0xff] %v293
  %360 = vst [vmem:[%s2 + $0xa8] sm:$0xff] %v296
  %361 = vst [vmem:[%s2 + $0xb0] sm:$0xff] %v301
  %362 = vst [vmem:[%s2 + $0xb8] sm:$0xff] %v304
  %363 = vst [vmem:[%s2 + $0xc0] sm:$0xff] %v309
  %364 = vst [vmem:[%s2 + $0xc8] sm:$0xff] %v312
  %365 = vst [vmem:[%s2 + $0xd0] sm:$0xff] %v317
  %366 = vst [vmem:[%s2 + $0xd8] sm:$0xff] %v320
  %367 = vst [vmem:[%s2 + $0xe0] sm:$0xff] %v325
  %368 = vst [vmem:[%s2 + $0xe8] sm:$0xff] %v328
  %369 = vst [vmem:[%s2 + $0xf0] sm:$0xff] %v333
  %370 = vst [vmem:[%s2 + $0xf8] sm:$0xff] %v336
  // Predicated region
  $region10: #{generator_forward.9} parent=0 // pred_check
    _
  $region11: #{generator_forward.9} parent=0 // pred_check_branch
    %372 = sbr.rel (0) target = $region13
  $region12: #{generator_forward.9} parent=0 // pred_region
    _
  $region13: #{generator_forward.9} parent=0 // pred_fallthru
    _
  // Predicated region
  $region14: #{generator_forward.9} parent=0 // pred_check
    _
  $region15: #{generator_forward.9} parent=0 // pred_check_branch
    %374 = sbr.rel (0) target = $region17
  $region16: #{generator_forward.9} parent=0 // pred_region
    _
  $region17: #{generator_forward.9} parent=0 // pred_fallthru
    _

// kernel: generator_forward.12
$region0: #{generator_forward.12}
  #allocation0 [shape = 'u32[]', space=smem, size = 0x4, offset = 0x4, fixed_abs, tag = 'smem constant byte address 0x4 - core index']
  #allocation1 [shape = 'u32[144,128]{1,0:T(1,128)}', space=vmem, size = 0x12000, scoped, tag = 'internal scratch']
  %s0 = inlined_call_operand.vmem [shape: f32[4,32,128], index: 0, kind: input, shape index: {}]
  %s1 = inlined_call_operand.vmem [shape: f32[32,1], index: 1, kind: input, shape index: {}]
  %s2 = inlined_call_operand.vmem [shape: f32[32,1], index: 2, kind: input, shape index: {}]
  %s3 = inlined_call_operand.vmem [shape: bf16[4,32,128], index: 3, kind: output, shape index: {}]
  %s4 = sld [smem:[#allocation0]]
  $region22: #{generator_forward.12} parent=0
    _
  %s6 = ssub.s32 1, %s4
  %s7 = scalar_select 0, %s6, %s4
  // Predicated region
  $region2: #{generator_forward.12} parent=0 // pred_check
    _
  $region3: #{generator_forward.12} parent=0 // pred_check_branch
    %9 = sbr.rel (0) target = $region5
  $region4: #{generator_forward.12} parent=0 // pred_region
    _
  $region5: #{generator_forward.12} parent=0 // pred_fallthru
    _
  // Predicated region
  $region6: #{generator_forward.12} parent=0 // pred_check
    _
  $region7: #{generator_forward.12} parent=0 // pred_check_branch
    %11 = sbr.rel (0) target = $region9
  $region8: #{generator_forward.12} parent=0 // pred_region
    _
  $region9: #{generator_forward.12} parent=0 // pred_fallthru
    _
  // Predicated region
  $region10: #{generator_forward.12} parent=0 // pred_check
    _
  $region11: #{generator_forward.12} parent=0 // pred_check_branch
    %13 = sbr.rel (0) target = $region13
  $region12: #{generator_forward.12} parent=0 // pred_region
    _
  $region13: #{generator_forward.12} parent=0 // pred_fallthru
    _
  %v14 = vld [vmem:[%s0] sm:$0xff]
  %v15 = vld [vmem:[%s0 + $0x8] sm:$0xff]
  %v16 = vld [vmem:[%s0 + $0x10] sm:$0xff]
  %v17 = vld [vmem:[%s0 + $0x18] sm:$0xff]
  %v18 = vld [vmem:[%s0 + $0x20] sm:$0xff]
  %v19 = vld [vmem:[%s0 + $0x28] sm:$0xff]
  %v20 = vld [vmem:[%s0 + $0x30] sm:$0xff]
  %v21 = vld [vmem:[%s0 + $0x38] sm:$0xff]
  %v22 = vld [vmem:[%s0 + $0x40] sm:$0xff]
  %v23 = vld [vmem:[%s0 + $0x48] sm:$0xff]
  %v24 = vld [vmem:[%s0 + $0x50] sm:$0xff]
  %v25 = vld [vmem:[%s0 + $0x58] sm:$0xff]
  %v26 = vld [vmem:[%s0 + $0x60] sm:$0xff]
  %v27 = vld [vmem:[%s0 + $0x68] sm:$0xff]
  %v28 = vld [vmem:[%s0 + $0x70] sm:$0xff]
  %v29 = vld [vmem:[%s0 + $0x78] sm:$0xff]
  %v30 = vld [vmem:[%s1] sm:$0xff]
  %v31 = vld [vmem:[%s1 + $0x8] sm:$0xff]
  %v32 = vld [vmem:[%s1 + $0x10] sm:$0xff]
  %v33 = vld [vmem:[%s1 + $0x18] sm:$0xff]
  %v34 = vld [vmem:[%s2] sm:$0xff]
  %v35 = vld [vmem:[%s2 + $0x8] sm:$0xff]
  %v36 = vld [vmem:[%s2 + $0x10] sm:$0xff]
  %v37 = vld [vmem:[%s2 + $0x18] sm:$0xff]
  %39 = vset.pattern.permute.xlu0 0
  %40 = vperm.xlu0 %39, %v30
  %v41 = vpop.permute.xlu0 %40
  %44 = vset.pattern.permute.xlu0 0
  %45 = vperm.xlu0 %44, %v31
  %v46 = vpop.permute.xlu0 %45
  %49 = vset.pattern.permute.xlu0 0
  %50 = vperm.xlu0 %49, %v32
  %v51 = vpop.permute.xlu0 %50
  %54 = vset.pattern.permute.xlu0 0
  %55 = vperm.xlu0 %54, %v33
  %v56 = vpop.permute.xlu0 %55
  %v58 = vmul.f32 %v14, %v41
  %v59 = vmul.f32 %v15, %v46
  %v60 = vmul.f32 %v16, %v51
  %v61 = vmul.f32 %v17, %v56
  %v62 = vmul.f32 %v18, %v41
  %v63 = vmul.f32 %v19, %v46
  %v64 = vmul.f32 %v20, %v51
  %v65 = vmul.f32 %v21, %v56
  %v66 = vmul.f32 %v22, %v41
  %v67 = vmul.f32 %v23, %v46
  %v68 = vmul.f32 %v24, %v51
  %v69 = vmul.f32 %v25, %v56
  %v70 = vmul.f32 %v26, %v41
  %v71 = vmul.f32 %v27, %v46
  %v72 = vmul.f32 %v28, %v51
  %v73 = vmul.f32 %v29, %v56
  %75 = vset.pattern.permute.xlu0 0
  %76 = vperm.xlu0 %75, %v34
  %v77 = vpop.permute.xlu0 %76
  %80 = vset.pattern.permute.xlu0 0
  %81 = vperm.xlu0 %80, %v35
  %v82 = vpop.permute.xlu0 %81
  %85 = vset.pattern.permute.xlu0 0
  %86 = vperm.xlu0 %85, %v36
  %v87 = vpop.permute.xlu0 %86
  %90 = vset.pattern.permute.xlu0 0
  %91 = vperm.xlu0 %90, %v37
  %v92 = vpop.permute.xlu0 %91
  %v94 = vadd.f32 %v58, %v77
  %v95 = vadd.f32 %v59, %v82
  %v96 = vadd.f32 %v60, %v87
  %v97 = vadd.f32 %v61, %v92
  %v98 = vadd.f32 %v62, %v77
  %v99 = vadd.f32 %v63, %v82
  %v100 = vadd.f32 %v64, %v87
  %v101 = vadd.f32 %v65, %v92
  %v102 = vadd.f32 %v66, %v77
  %v103 = vadd.f32 %v67, %v82
  %v104 = vadd.f32 %v68, %v87
  %v105 = vadd.f32 %v69, %v92
  %v106 = vadd.f32 %v70, %v77
  %v107 = vadd.f32 %v71, %v82
  %v108 = vadd.f32 %v72, %v87
  %v109 = vadd.f32 %v73, %v92
  %v110 = vmax.f32 %v94, 0.0
  %v111 = vmax.f32 %v95, 0.0
  %v112 = vmax.f32 %v96, 0.0
  %v113 = vmax.f32 %v97, 0.0
  %v114 = vmax.f32 %v98, 0.0
  %v115 = vmax.f32 %v99, 0.0
  %v116 = vmax.f32 %v100, 0.0
  %v117 = vmax.f32 %v101, 0.0
  %v118 = vmax.f32 %v102, 0.0
  %v119 = vmax.f32 %v103, 0.0
  %v120 = vmax.f32 %v104, 0.0
  %v121 = vmax.f32 %v105, 0.0
  %v122 = vmax.f32 %v106, 0.0
  %v123 = vmax.f32 %v107, 0.0
  %v124 = vmax.f32 %v108, 0.0
  %v125 = vmax.f32 %v109, 0.0
  %v126 = vpack.c.bf16 %v111, %v110
  %v127 = vpack.c.bf16 %v113, %v112
  %v128 = vpack.c.bf16 %v115, %v114
  %v129 = vpack.c.bf16 %v117, %v116
  %v130 = vpack.c.bf16 %v119, %v118
  %v131 = vpack.c.bf16 %v121, %v120
  %v132 = vpack.c.bf16 %v123, %v122
  %v133 = vpack.c.bf16 %v125, %v124
  %v142 = vunpack.c.l.b16 %v126
  %v143 = vunpack.c.h.b16 %v126
  %v144 = vunpack.c.l.b16 %v127
  %v145 = vunpack.c.h.b16 %v127
  %v146 = vunpack.c.l.b16 %v128
  %v147 = vunpack.c.h.b16 %v128
  %v148 = vunpack.c.l.b16 %v129
  %v149 = vunpack.c.h.b16 %v129
  %v150 = vunpack.c.l.b16 %v130
  %v151 = vunpack.c.h.b16 %v130
  %v152 = vunpack.c.l.b16 %v131
  %v153 = vunpack.c.h.b16 %v131
  %v154 = vunpack.c.l.b16 %v132
  %v155 = vunpack.c.h.b16 %v132
  %v156 = vunpack.c.l.b16 %v133
  %v157 = vunpack.c.h.b16 %v133
  %v158 = vpack.c.b16 %v142, %v142
  %v159 = vpack.c.b16 %v143, %v143
  %v160 = vpack.c.b16 %v144, %v144
  %v161 = vpack.c.b16 %v145, %v145
  %v162 = vpack.c.b16 %v146, %v146
  %v163 = vpack.c.b16 %v147, %v147
  %v164 = vpack.c.b16 %v148, %v148
  %v165 = vpack.c.b16 %v149, %v149
  %v166 = vpack.c.b16 %v150, %v150
  %v167 = vpack.c.b16 %v151, %v151
  %v168 = vpack.c.b16 %v152, %v152
  %v169 = vpack.c.b16 %v153, %v153
  %v170 = vpack.c.b16 %v154, %v154
  %v171 = vpack.c.b16 %v155, %v155
  %v172 = vpack.c.b16 %v156, %v156
  %v173 = vpack.c.b16 %v157, %v157
  %190 = vst [vmem:[%s3] sm:$0xf] %v158
  %191 = vst [vmem:[%s3 + $0x4] sm:$0xf] %v159
  %192 = vst [vmem:[%s3 + $0x8] sm:$0xf] %v160
  %193 = vst [vmem:[%s3 + $0xc] sm:$0xf] %v161
  %194 = vst [vmem:[%s3 + $0x10] sm:$0xf] %v162
  %195 = vst [vmem:[%s3 + $0x14] sm:$0xf] %v163
  %196 = vst [vmem:[%s3 + $0x18] sm:$0xf] %v164
  %197 = vst [vmem:[%s3 + $0x1c] sm:$0xf] %v165
  %198 = vst [vmem:[%s3 + $0x20] sm:$0xf] %v166
  %199 = vst [vmem:[%s3 + $0x24] sm:$0xf] %v167
  %200 = vst [vmem:[%s3 + $0x28] sm:$0xf] %v168
  %201 = vst [vmem:[%s3 + $0x2c] sm:$0xf] %v169
  %202 = vst [vmem:[%s3 + $0x30] sm:$0xf] %v170
  %203 = vst [vmem:[%s3 + $0x34] sm:$0xf] %v171
  %204 = vst [vmem:[%s3 + $0x38] sm:$0xf] %v172
  %205 = vst [vmem:[%s3 + $0x3c] sm:$0xf] %v173
  // Predicated region
  $region14: #{generator_forward.12} parent=0 // pred_check
    _
  $region15: #{generator_forward.12} parent=0 // pred_check_branch
    %207 = sbr.rel (0) target = $region17
  $region16: #{generator_forward.12} parent=0 // pred_region
    _
  $region17: #{generator_forward.12} parent=0 // pred_fallthru
    _
  // Predicated region
  $region18: #{generator_forward.12} parent=0 // pred_check
    _
  $region19: #{generator_forward.12} parent=0 // pred_check_branch
    %209 = sbr.rel (0) target = $region21
  $region20: #{generator_forward.12} parent=0 // pred_region
    _
  $region21: #{generator_forward.12} parent=0 // pred_fallthru
    _

// kernel: generator_forward.11
$region0: #{generator_forward.11}
  #allocation0 [shape = 'u32[]', space=smem, size = 0x4, offset = 0x4, fixed_abs, tag = 'smem constant byte address 0x4 - core index']
  #allocation1 [shape = 'u32[144,128]{1,0:T(1,128)}', space=vmem, size = 0x12000, scoped, tag = 'internal scratch']
  %s0 = inlined_call_operand.vmem [shape: bf16[9,64,128], index: 0, kind: input, shape index: {}]
  %s1 = inlined_call_operand.vmem [shape: bf16[4,4,32,64], index: 1, kind: input, shape index: {}]
  %s2 = inlined_call_operand.vmem [shape: f32[4,32,128], index: 2, kind: output, shape index: {}]
  %s3 = sld [smem:[#allocation0]]
  $region18: #{generator_forward.11} parent=0
    _
  %s5 = ssub.s32 1, %s3
  %s6 = scalar_select 0, %s5, %s3
  // Predicated region
  $region2: #{generator_forward.11} parent=0 // pred_check
    _
  $region3: #{generator_forward.11} parent=0 // pred_check_branch
    %8 = sbr.rel (0) target = $region5
  $region4: #{generator_forward.11} parent=0 // pred_region
    _
  $region5: #{generator_forward.11} parent=0 // pred_fallthru
    _
  // Predicated region
  $region6: #{generator_forward.11} parent=0 // pred_check
    _
  $region7: #{generator_forward.11} parent=0 // pred_check_branch
    %10 = sbr.rel (0) target = $region9
  $region8: #{generator_forward.11} parent=0 // pred_region
    _
  $region9: #{generator_forward.11} parent=0 // pred_fallthru
    _
  %v12 = vld [vmem:[%s1] sm:$0xf]
  %v13 = vld [vmem:[%s1 + $0x4] sm:$0xf]
  %v14 = vld [vmem:[%s1 + $0x8] sm:$0xf]
  %v15 = vld [vmem:[%s1 + $0xc] sm:$0xf]
  %v16 = vld [vmem:[%s0] sm:$0xf]
  %v17 = vld [vmem:[%s0 + $0x4] sm:$0xf]
  %v18 = vld [vmem:[%s0 + $0x8] sm:$0xf]
  %v19 = vld [vmem:[%s0 + $0xc] sm:$0xf]
  %v20 = vld [vmem:[%s0 + $0x10] sm:$0xf]
  %v21 = vld [vmem:[%s0 + $0x14] sm:$0xf]
  %v22 = vld [vmem:[%s0 + $0x18] sm:$0xf]
  %v23 = vld [vmem:[%s0 + $0x1c] sm:$0xf]
  %s24 = scalar_lea.vmem %s1, 16
  %v25 = vld [vmem:[%s24] sm:$0xf]
  %v26 = vld [vmem:[%s24 + $0x4] sm:$0xf]
  %v27 = vld [vmem:[%s24 + $0x8] sm:$0xf]
  %v28 = vld [vmem:[%s24 + $0xc] sm:$0xf]
  %s29 = scalar_lea.vmem %s0, 32
  %v30 = vld [vmem:[%s29] sm:$0xf]
  %v31 = vld [vmem:[%s29 + $0x4] sm:$0xf]
  %v32 = vld [vmem:[%s29 + $0x8] sm:$0xf]
  %v33 = vld [vmem:[%s29 + $0xc] sm:$0xf]
  %v34 = vld [vmem:[%s29 + $0x10] sm:$0xf]
  %v35 = vld [vmem:[%s29 + $0x14] sm:$0xf]
  %v36 = vld [vmem:[%s29 + $0x18] sm:$0xf]
  %v37 = vld [vmem:[%s29 + $0x1c] sm:$0xf]
  %v42 = vunpack.c.l.b16 %v25
  %v43 = vunpack.c.l.b16 %v26
  %v44 = vunpack.c.l.b16 %v27
  %v45 = vunpack.c.l.b16 %v28
  %v46 = vpack.c.b16 %v43, %v42
  %v47 = vpack.c.b16 %v45, %v44
  %v56 = vunpack.c.l.b16 %v30
  %v57 = vunpack.c.l.b16 %v31
  %v58 = vunpack.c.l.b16 %v32
  %v59 = vunpack.c.l.b16 %v33
  %v60 = vunpack.c.l.b16 %v34
  %v61 = vunpack.c.l.b16 %v35
  %v62 = vunpack.c.l.b16 %v36
  %v63 = vunpack.c.l.b16 %v37
  %v64 = vpack.c.b16 %v57, %v56
  %v65 = vpack.c.b16 %v59, %v58
  %v66 = vpack.c.b16 %v61, %v60
  %v67 = vpack.c.b16 %v63, %v62
  %vm72 = vcmask 523264
  %v74 = vsel %vm72, %v46, 0
  %v77 = vsel %vm72, %v47, 0
  %79 = vmatprep.subr.bf16.mxu0 0
  %80 = vmatpush1.bf16.msra.mxu0 %v64
  %81 = vmatprep.subr.bf16.mxu0 0
  %82 = vmatpush1.bf16.msra.mxu0 %v65
  %83 = vmatprep.subr.bf16.mxu0 0
  %84 = vmatpush1.bf16.msra.mxu0 %v66
  %85 = vmatprep.subr.bf16.mxu0 0
  %86 = vmatpush1.bf16.msra.mxu0 %v67
  %87 = vmatprep.subr.bf16.mxu0 0
  %88 = vmatpush1.bf16.msra.mxu0 0
  %89 = vmatprep.subr.bf16.mxu0 0
  %90 = vmatpush1.bf16.msra.mxu0 0
  %91 = vmatprep.subr.bf16.mxu0 0
  %92 = vmatpush1.bf16.msra.mxu0 0
  %93 = vmatprep.subr.bf16.mxu0 0
  %94 = vmatpush1.bf16.msra.mxu0 0
  %95 = vmatprep.subr.bf16.mxu0 0
  %96 = vmatpush1.bf16.msra.mxu0 0
  %97 = vmatprep.subr.bf16.mxu0 0
  %98 = vmatpush1.bf16.msra.mxu0 0
  %99 = vmatprep.subr.bf16.mxu0 0
  %100 = vmatpush1.bf16.msra.mxu0 0
  %101 = vmatprep.subr.bf16.mxu0 0
  %102 = vmatpush1.bf16.msra.mxu0 0
  %103 = vmatprep.subr.bf16.mxu0 0
  %104 = vmatpush1.bf16.msra.mxu0 0
  %105 = vmatprep.subr.bf16.mxu0 0
  %106 = vmatpush1.bf16.msra.mxu0 0
  %107 = vmatprep.subr.bf16.mxu0 0
  %108 = vmatpush1.bf16.msra.mxu0 0
  %109 = vmatprep.subr.bf16.mxu0 0
  %110 = vmatpush1.bf16.msra.mxu0 0
  %111 = vmatprep.mubr.bf16.mxu0 0
  %112 = vmatmul.mubr.bf16.gmra.mrb[0].mxu0 %v74
  %v113 = vpop.f32.mrb[0].mxu0
  %v114 = vadd.f32 0.0, %v113
  %v115 = vpop.f32.mrb[0].mxu0
  %v116 = vpop.f32.mrb[0].mxu0
  %v117 = vadd.f32 0.0, %v116
  %v118 = vpop.f32.mrb[0].mxu0
  %119 = vmatprep.mubr.bf16.mxu0 0
  %120 = vmatmul.mubr.bf16.gmra.mrb[0].mxu0 %v77
  %v121 = vpop.f32.mrb[0].mxu0
  %v122 = vadd.f32 0.0, %v121
  %v123 = vpop.f32.mrb[0].mxu0
  %v124 = vpop.f32.mrb[0].mxu0
  %v125 = vadd.f32 0.0, %v124
  %v126 = vpop.f32.mrb[0].mxu0
  %127 = vdwg.mxu0
  %v132 = vunpack.c.l.b16 %v12
  %v133 = vunpack.c.l.b16 %v13
  %v134 = vunpack.c.l.b16 %v14
  %v135 = vunpack.c.l.b16 %v15
  %v136 = vpack.c.b16 %v133, %v132
  %v137 = vpack.c.b16 %v135, %v134
  %v146 = vunpack.c.l.b16 %v16
  %v147 = vunpack.c.l.b16 %v17
  %v148 = vunpack.c.l.b16 %v18
  %v149 = vunpack.c.l.b16 %v19
  %v150 = vunpack.c.l.b16 %v20
  %v151 = vunpack.c.l.b16 %v21
  %v152 = vunpack.c.l.b16 %v22
  %v153 = vunpack.c.l.b16 %v23
  %v154 = vpack.c.b16 %v147, %v146
  %v155 = vpack.c.b16 %v149, %v148
  %v156 = vpack.c.b16 %v151, %v150
  %v157 = vpack.c.b16 %v153, %v152
  %v163 = vsel %vm72, %v136, 0
  %v166 = vsel %vm72, %v137, 0
  %168 = vmatprep.subr.bf16.mxu0 0
  %169 = vmatpush1.bf16.msra.mxu0 %v154
  %170 = vmatprep.subr.bf16.mxu0 0
  %171 = vmatpush1.bf16.msra.mxu0 %v155
  %172 = vmatprep.subr.bf16.mxu0 0
  %173 = vmatpush1.bf16.msra.mxu0 %v156
  %174 = vmatprep.subr.bf16.mxu0 0
  %175 = vmatpush1.bf16.msra.mxu0 %v157
  %176 = vmatprep.subr.bf16.mxu0 0
  %177 = vmatpush1.bf16.msra.mxu0 0
  %178 = vmatprep.subr.bf16.mxu0 0
  %179 = vmatpush1.bf16.msra.mxu0 0
  %180 = vmatprep.subr.bf16.mxu0 0
  %181 = vmatpush1.bf16.msra.mxu0 0
  %182 = vmatprep.subr.bf16.mxu0 0
  %183 = vmatpush1.bf16.msra.mxu0 0
  %184 = vmatprep.subr.bf16.mxu0 0
  %185 = vmatpush1.bf16.msra.mxu0 0
  %186 = vmatprep.subr.bf16.mxu0 0
  %187 = vmatpush1.bf16.msra.mxu0 0
  %188 = vmatprep.subr.bf16.mxu0 0
  %189 = vmatpush1.bf16.msra.mxu0 0
  %190 = vmatprep.subr.bf16.mxu0 0
  %191 = vmatpush1.bf16.msra.mxu0 0
  %192 = vmatprep.subr.bf16.mxu0 0
  %193 = vmatpush1.bf16.msra.mxu0 0
  %194 = vmatprep.subr.bf16.mxu0 0
  %195 = vmatpush1.bf16.msra.mxu0 0
  %196 = vmatprep.subr.bf16.mxu0 0
  %197 = vmatpush1.bf16.msra.mxu0 0
  %198 = vmatprep.subr.bf16.mxu0 0
  %199 = vmatpush1.bf16.msra.mxu0 0
  %200 = vmatprep.mubr.bf16.mxu0 0
  %201 = vmatmul.mubr.bf16.gmra.mrb[0].mxu0 %v163
  %v202 = vpop.f32.mrb[0].mxu0
  %v203 = vadd.f32 %v114, %v202
  %v204 = vpop.f32.mrb[0].mxu0
  %v205 = vpop.f32.mrb[0].mxu0
  %v206 = vadd.f32 %v117, %v205
  %v207 = vpop.f32.mrb[0].mxu0
  %208 = vmatprep.mubr.bf16.mxu0 0
  %209 = vmatmul.mubr.bf16.gmra.mrb[0].mxu0 %v166
  %v210 = vpop.f32.mrb[0].mxu0
  %v211 = vadd.f32 %v122, %v210
  %v212 = vpop.f32.mrb[0].mxu0
  %v213 = vpop.f32.mrb[0].mxu0
  %v214 = vadd.f32 %v125, %v213
  %v215 = vpop.f32.mrb[0].mxu0
  %216 = vdwg.mxu0
  %s217 = scalar_lea.vmem %s1, 32
  %v218 = vld [vmem:[%s217] sm:$0xf]
  %v219 = vld [vmem:[%s217 + $0x4] sm:$0xf]
  %v220 = vld [vmem:[%s217 + $0x8] sm:$0xf]
  %v221 = vld [vmem:[%s217 + $0xc] sm:$0xf]
  %s222 = scalar_lea.vmem %s0, 96
  %v223 = vld [vmem:[%s222] sm:$0xf]
  %v224 = vld [vmem:[%s222 + $0x4] sm:$0xf]
  %v225 = vld [vmem:[%s222 + $0x8] sm:$0xf]
  %v226 = vld [vmem:[%s222 + $0xc] sm:$0xf]
  %v227 = vld [vmem:[%s222 + $0x10] sm:$0xf]
  %v228 = vld [vmem:[%s222 + $0x14] sm:$0xf]
  %v229 = vld [vmem:[%s222 + $0x18] sm:$0xf]
  %v230 = vld [vmem:[%s222 + $0x1c] sm:$0xf]
  %v235 = vunpack.c.l.b16 %v218
  %v236 = vunpack.c.l.b16 %v219
  %v237 = vunpack.c.l.b16 %v220
  %v238 = vunpack.c.l.b16 %v221
  %v239 = vpack.c.b16 %v236, %v235
  %v240 = vpack.c.b16 %v238, %v237
  %v249 = vunpack.c.l.b16 %v223
  %v250 = vunpack.c.l.b16 %v224
  %v251 = vunpack.c.l.b16 %v225
  %v252 = vunpack.c.l.b16 %v226
  %v253 = vunpack.c.l.b16 %v227
  %v254 = vunpack.c.l.b16 %v228
  %v255 = vunpack.c.l.b16 %v229
  %v256 = vunpack.c.l.b16 %v230
  %v257 = vpack.c.b16 %v250, %v249
  %v258 = vpack.c.b16 %v252, %v251
  %v259 = vpack.c.b16 %v254, %v253
  %v260 = vpack.c.b16 %v256, %v255
  %v266 = vsel %vm72, %v239, 0
  %v269 = vsel %vm72, %v240, 0
  %271 = vmatprep.subr.bf16.mxu0 0
  %272 = vmatpush1.bf16.msra.mxu0 %v257
  %273 = vmatprep.subr.bf16.mxu0 0
  %274 = vmatpush1.bf16.msra.mxu0 %v258
  %275 = vmatprep.subr.bf16.mxu0 0
  %276 = vmatpush1.bf16.msra.mxu0 %v259
  %277 = vmatprep.subr.bf16.mxu0 0
  %278 = vmatpush1.bf16.msra.mxu0 %v260
  %279 = vmatprep.subr.bf16.mxu0 0
  %280 = vmatpush1.bf16.msra.mxu0 0
  %281 = vmatprep.subr.bf16.mxu0 0
  %282 = vmatpush1.bf16.msra.mxu0 0
  %283 = vmatprep.subr.bf16.mxu0 0
  %284 = vmatpush1.bf16.msra.mxu0 0
  %285 = vmatprep.subr.bf16.mxu0 0
  %286 = vmatpush1.bf16.msra.mxu0 0
  %287 = vmatprep.subr.bf16.mxu0 0
  %288 = vmatpush1.bf16.msra.mxu0 0
  %289 = vmatprep.subr.bf16.mxu0 0
  %290 = vmatpush1.bf16.msra.mxu0 0
  %291 = vmatprep.subr.bf16.mxu0 0
  %292 = vmatpush1.bf16.msra.mxu0 0
  %293 = vmatprep.subr.bf16.mxu0 0
  %294 = vmatpush1.bf16.msra.mxu0 0
  %295 = vmatprep.subr.bf16.mxu0 0
  %296 = vmatpush1.bf16.msra.mxu0 0
  %297 = vmatprep.subr.bf16.mxu0 0
  %298 = vmatpush1.bf16.msra.mxu0 0
  %299 = vmatprep.subr.bf16.mxu0 0
  %300 = vmatpush1.bf16.msra.mxu0 0
  %301 = vmatprep.subr.bf16.mxu0 0
  %302 = vmatpush1.bf16.msra.mxu0 0
  %303 = vmatprep.mubr.bf16.mxu0 0
  %304 = vmatmul.mubr.bf16.gmra.mrb[0].mxu0 %v266
  %v305 = vpop.f32.mrb[0].mxu0
  %v306 = vadd.f32 0.0, %v305
  %v307 = vpop.f32.mrb[0].mxu0
  %v308 = vpop.f32.mrb[0].mxu0
  %v309 = vadd.f32 0.0, %v308
  %v310 = vpop.f32.mrb[0].mxu0
  %311 = vmatprep.mubr.bf16.mxu0 0
  %312 = vmatmul.mubr.bf16.gmra.mrb[0].mxu0 %v269
  %v313 = vpop.f32.mrb[0].mxu0
  %v314 = vadd.f32 0.0, %v313
  %v315 = vpop.f32.mrb[0].mxu0
  %v316 = vpop.f32.mrb[0].mxu0
  %v317 = vadd.f32 0.0, %v316
  %v318 = vpop.f32.mrb[0].mxu0
  %319 = vdwg.mxu0
  %v320 = vadd.f32 %v203, %v306
  %v321 = vadd.f32 %v206, %v309
  %v322 = vadd.f32 %v211, %v314
  %v323 = vadd.f32 %v214, %v317
  %s324 = scalar_lea.vmem %s1, 48
  %v325 = vld [vmem:[%s324] sm:$0xf]
  %v326 = vld [vmem:[%s324 + $0x4] sm:$0xf]
  %v327 = vld [vmem:[%s324 + $0x8] sm:$0xf]
  %v328 = vld [vmem:[%s324 + $0xc] sm:$0xf]
  %s329 = scalar_lea.vmem %s0, 128
  %v330 = vld [vmem:[%s329] sm:$0xf]
  %v331 = vld [vmem:[%s329 + $0x4] sm:$0xf]
  %v332 = vld [vmem:[%s329 + $0x8] sm:$0xf]
  %v333 = vld [vmem:[%s329 + $0xc] sm:$0xf]
  %v334 = vld [vmem:[%s329 + $0x10] sm:$0xf]
  %v335 = vld [vmem:[%s329 + $0x14] sm:$0xf]
  %v336 = vld [vmem:[%s329 + $0x18] sm:$0xf]
  %v337 = vld [vmem:[%s329 + $0x1c] sm:$0xf]
  %v342 = vunpack.c.l.b16 %v325
  %v343 = vunpack.c.l.b16 %v326
  %v344 = vunpack.c.l.b16 %v327
  %v345 = vunpack.c.l.b16 %v328
  %v346 = vpack.c.b16 %v343, %v342
  %v347 = vpack.c.b16 %v345, %v344
  %v356 = vunpack.c.l.b16 %v330
  %v357 = vunpack.c.l.b16 %v331
  %v358 = vunpack.c.l.b16 %v332
  %v359 = vunpack.c.l.b16 %v333
  %v360 = vunpack.c.l.b16 %v334
  %v361 = vunpack.c.l.b16 %v335
  %v362 = vunpack.c.l.b16 %v336
  %v363 = vunpack.c.l.b16 %v337
  %v364 = vpack.c.b16 %v357, %v356
  %v365 = vpack.c.b16 %v359, %v358
  %v366 = vpack.c.b16 %v361, %v360
  %v367 = vpack.c.b16 %v363, %v362
  %v373 = vsel %vm72, %v346, 0
  %v376 = vsel %vm72, %v347, 0
  %378 = vmatprep.subr.bf16.mxu0 0
  %379 = vmatpush1.bf16.msra.mxu0 %v364
  %380 = vmatprep.subr.bf16.mxu0 0
  %381 = vmatpush1.bf16.msra.mxu0 %v365
  %382 = vmatprep.subr.bf16.mxu0 0
  %383 = vmatpush1.bf16.msra.mxu0 %v366
  %384 = vmatprep.subr.bf16.mxu0 0
  %385 = vmatpush1.bf16.msra.mxu0 %v367
  %386 = vmatprep.subr.bf16.mxu0 0
  %387 = vmatpush1.bf16.msra.mxu0 0
  %388 = vmatprep.subr.bf16.mxu0 0
  %389 = vmatpush1.bf16.msra.mxu0 0
  %390 = vmatprep.subr.bf16.mxu0 0
  %391 = vmatpush1.bf16.msra.mxu0 0
  %392 = vmatprep.subr.bf16.mxu0 0
  %393 = vmatpush1.bf16.msra.mxu0 0
  %394 = vmatprep.subr.bf16.mxu0 0
  %395 = vmatpush1.bf16.msra.mxu0 0
  %396 = vmatprep.subr.bf16.mxu0 0
  %397 = vmatpush1.bf16.msra.mxu0 0
  %398 = vmatprep.subr.bf16.mxu0 0
  %399 = vmatpush1.bf16.msra.mxu0 0
  %400 = vmatprep.subr.bf16.mxu0 0
  %401 = vmatpush1.bf16.msra.mxu0 0
  %402 = vmatprep.subr.bf16.mxu0 0
  %403 = vmatpush1.bf16.msra.mxu0 0
  %404 = vmatprep.subr.bf16.mxu0 0
  %405 = vmatpush1.bf16.msra.mxu0 0
  %406 = vmatprep.subr.bf16.mxu0 0
  %407 = vmatpush1.bf16.msra.mxu0 0
  %408 = vmatprep.subr.bf16.mxu0 0
  %409 = vmatpush1.bf16.msra.mxu0 0
  %410 = vmatprep.mubr.bf16.mxu0 0
  %411 = vmatmul.mubr.bf16.gmra.mrb[0].mxu0 %v373
  %v412 = vpop.f32.mrb[0].mxu0
  %v413 = vadd.f32 0.0, %v412
  %v414 = vpop.f32.mrb[0].mxu0
  %v415 = vpop.f32.mrb[0].mxu0
  %v416 = vadd.f32 0.0, %v415
  %v417 = vpop.f32.mrb[0].mxu0
  %418 = vmatprep.mubr.bf16.mxu0 0
  %419 = vmatmul.mubr.bf16.gmra.mrb[0].mxu0 %v376
  %v420 = vpop.f32.mrb[0].mxu0
  %v421 = vadd.f32 0.0, %v420
  %v422 = vpop.f32.mrb[0].mxu0
  %v423 = vpop.f32.mrb[0].mxu0
  %v424 = vadd.f32 0.0, %v423
  %v425 = vpop.f32.mrb[0].mxu0
  %426 = vdwg.mxu0
  %v427 = vadd.f32 %v320, %v413
  %v428 = vadd.f32 %v321, %v416
  %v429 = vadd.f32 %v322, %v421
  %v430 = vadd.f32 %v323, %v424
  %431 = vst [vmem:[%s2] sm:$0xff] %v427
  %432 = vst [vmem:[%s2 + $0x8] sm:$0xff] %v428
  %433 = vst [vmem:[%s2 + $0x10] sm:$0xff] %v429
  %434 = vst [vmem:[%s2 + $0x18] sm:$0xff] %v430
  %s435 = scalar_lea.vmem %s1, 64
  %v436 = vld [vmem:[%s435] sm:$0xf]
  %v437 = vld [vmem:[%s435 + $0x4] sm:$0xf]
  %v438 = vld [vmem:[%s435 + $0x8] sm:$0xf]
  %v439 = vld [vmem:[%s435 + $0xc] sm:$0xf]
  %v440 = vld [vmem:[%s29] sm:$0xf]
  %v441 = vld [vmem:[%s29 + $0x4] sm:$0xf]
  %v442 = vld [vmem:[%s29 + $0x8] sm:$0xf]
  %v443 = vld [vmem:[%s29 + $0xc] sm:$0xf]
  %v444 = vld [vmem:[%s29 + $0x10] sm:$0xf]
  %v445 = vld [vmem:[%s29 + $0x14] sm:$0xf]
  %v446 = vld [vmem:[%s29 + $0x18] sm:$0xf]
  %v447 = vld [vmem:[%s29 + $0x1c] sm:$0xf]
  %s448 = scalar_lea.vmem %s1, 80
  %v449 = vld [vmem:[%s448] sm:$0xf]
  %v450 = vld [vmem:[%s448 + $0x4] sm:$0xf]
  %v451 = vld [vmem:[%s448 + $0x8] sm:$0xf]
  %v452 = vld [vmem:[%s448 + $0xc] sm:$0xf]
  %s453 = scalar_lea.vmem %s0, 64
  %v454 = vld [vmem:[%s453] sm:$0xf]
  %v455 = vld [vmem:[%s453 + $0x4] sm:$0xf]
  %v456 = vld [vmem:[%s453 + $0x8] sm:$0xf]
  %v457 = vld [vmem:[%s453 + $0xc] sm:$0xf]
  %v458 = vld [vmem:[%s453 + $0x10] sm:$0xf]
  %v459 = vld [vmem:[%s453 + $0x14] sm:$0xf]
  %v460 = vld [vmem:[%s453 + $0x18] sm:$0xf]
  %v461 = vld [vmem:[%s453 + $0x1c] sm:$0xf]
  %v466 = vunpack.c.l.b16 %v449
  %v467 = vunpack.c.l.b16 %v450
  %v468 = vunpack.c.l.b16 %v451
  %v469 = vunpack.c.l.b16 %v452
  %v470 = vpack.c.b16 %v467, %v466
  %v471 = vpack.c.b16 %v469, %v468
  %v480 = vunpack.c.l.b16 %v454
  %v481 = vunpack.c.l.b16 %v455
  %v482 = vunpack.c.l.b16 %v456
  %v483 = vunpack.c.l.b16 %v457
  %v484 = vunpack.c.l.b16 %v458
  %v485 = vunpack.c.l.b16 %v459
  %v486 = vunpack.c.l.b16 %v460
  %v487 = vunpack.c.l.b16 %v461
  %v488 = vpack.c.b16 %v481, %v480
  %v489 = vpack.c.b16 %v483, %v482
  %v490 = vpack.c.b16 %v485, %v484
  %v491 = vpack.c.b16 %v487, %v486
  %v497 = vsel %vm72, %v470, 0
  %v500 = vsel %vm72, %v471, 0
  %502 = vmatprep.subr.bf16.mxu0 0
  %503 = vmatpush1.bf16.msra.mxu0 %v488
  %504 = vmatprep.subr.bf16.mxu0 0
  %505 = vmatpush1.bf16.msra.mxu0 %v489
  %506 = vmatprep.subr.bf16.mxu0 0
  %507 = vmatpush1.bf16.msra.mxu0 %v490
  %508 = vmatprep.subr.bf16.mxu0 0
  %509 = vmatpush1.bf16.msra.mxu0 %v491
  %510 = vmatprep.subr.bf16.mxu0 0
  %511 = vmatpush1.bf16.msra.mxu0 0
  %512 = vmatprep.subr.bf16.mxu0 0
  %513 = vmatpush1.bf16.msra.mxu0 0
  %514 = vmatprep.subr.bf16.mxu0 0
  %515 = vmatpush1.bf16.msra.mxu0 0
  %516 = vmatprep.subr.bf16.mxu0 0
  %517 = vmatpush1.bf16.msra.mxu0 0
  %518 = vmatprep.subr.bf16.mxu0 0
  %519 = vmatpush1.bf16.msra.mxu0 0
  %520 = vmatprep.subr.bf16.mxu0 0
  %521 = vmatpush1.bf16.msra.mxu0 0
  %522 = vmatprep.subr.bf16.mxu0 0
  %523 = vmatpush1.bf16.msra.mxu0 0
  %524 = vmatprep.subr.bf16.mxu0 0
  %525 = vmatpush1.bf16.msra.mxu0 0
  %526 = vmatprep.subr.bf16.mxu0 0
  %527 = vmatpush1.bf16.msra.mxu0 0
  %528 = vmatprep.subr.bf16.mxu0 0
  %529 = vmatpush1.bf16.msra.mxu0 0
  %530 = vmatprep.subr.bf16.mxu0 0
  %531 = vmatpush1.bf16.msra.mxu0 0
  %532 = vmatprep.subr.bf16.mxu0 0
  %533 = vmatpush1.bf16.msra.mxu0 0
  %534 = vmatprep.mubr.bf16.mxu0 0
  %535 = vmatmul.mubr.bf16.gmra.mrb[0].mxu0 %v497
  %v536 = vpop.f32.mrb[0].mxu0
  %v537 = vadd.f32 0.0, %v536
  %v538 = vpop.f32.mrb[0].mxu0
  %v539 = vpop.f32.mrb[0].mxu0
  %v540 = vadd.f32 0.0, %v539
  %v541 = vpop.f32.mrb[0].mxu0
  %542 = vmatprep.mubr.bf16.mxu0 0
  %543 = vmatmul.mubr.bf16.gmra.mrb[0].mxu0 %v500
  %v544 = vpop.f32.mrb[0].mxu0
  %v545 = vadd.f32 0.0, %v544
  %v546 = vpop.f32.mrb[0].mxu0
  %v547 = vpop.f32.mrb[0].mxu0
  %v548 = vadd.f32 0.0, %v547
  %v549 = vpop.f32.mrb[0].mxu0
  %550 = vdwg.mxu0
  %v555 = vunpack.c.l.b16 %v436
  %v556 = vunpack.c.l.b16 %v437
  %v557 = vunpack.c.l.b16 %v438
  %v558 = vunpack.c.l.b16 %v439
  %v559 = vpack.c.b16 %v556, %v555
  %v560 = vpack.c.b16 %v558, %v557
  %v569 = vunpack.c.l.b16 %v440
  %v570 = vunpack.c.l.b16 %v441
  %v571 = vunpack.c.l.b16 %v442
  %v572 = vunpack.c.l.b16 %v443
  %v573 = vunpack.c.l.b16 %v444
  %v574 = vunpack.c.l.b16 %v445
  %v575 = vunpack.c.l.b16 %v446
  %v576 = vunpack.c.l.b16 %v447
  %v577 = vpack.c.b16 %v570, %v569
  %v578 = vpack.c.b16 %v572, %v571
  %v579 = vpack.c.b16 %v574, %v573
  %v580 = vpack.c.b16 %v576, %v575
  %v586 = vsel %vm72, %v559, 0
  %v589 = vsel %vm72, %v560, 0
  %591 = vmatprep.subr.bf16.mxu0 0
  %592 = vmatpush1.bf16.msra.mxu0 %v577
  %593 = vmatprep.subr.bf16.mxu0 0
  %594 = vmatpush1.bf16.msra.mxu0 %v578
  %595 = vmatprep.subr.bf16.mxu0 0
  %596 = vmatpush1.bf16.msra.mxu0 %v579
  %597 = vmatprep.subr.bf16.mxu0 0
  %598 = vmatpush1.bf16.msra.mxu0 %v580
  %599 = vmatprep.subr.bf16.mxu0 0
  %600 = vmatpush1.bf16.msra.mxu0 0
  %601 = vmatprep.subr.bf16.mxu0 0
  %602 = vmatpush1.bf16.msra.mxu0 0
  %603 = vmatprep.subr.bf16.mxu0 0
  %604 = vmatpush1.bf16.msra.mxu0 0
  %605 = vmatprep.subr.bf16.mxu0 0
  %606 = vmatpush1.bf16.msra.mxu0 0
  %607 = vmatprep.subr.bf16.mxu0 0
  %608 = vmatpush1.bf16.msra.mxu0 0
  %609 = vmatprep.subr.bf16.mxu0 0
  %610 = vmatpush1.bf16.msra.mxu0 0
  %611 = vmatprep.subr.bf16.mxu0 0
  %612 = vmatpush1.bf16.msra.mxu0 0
  %613 = vmatprep.subr.bf16.mxu0 0
  %614 = vmatpush1.bf16.msra.mxu0 0
  %615 = vmatprep.subr.bf16.mxu0 0
  %616 = vmatpush1.bf16.msra.mxu0 0
  %617 = vmatprep.subr.bf16.mxu0 0
  %618 = vmatpush1.bf16.msra.mxu0 0
  %619 = vmatprep.subr.bf16.mxu0 0
  %620 = vmatpush1.bf16.msra.mxu0 0
  %621 = vmatprep.subr.bf16.mxu0 0
  %622 = vmatpush1.bf16.msra.mxu0 0
  %623 = vmatprep.mubr.bf16.mxu0 0
  %624 = vmatmul.mubr.bf16.gmra.mrb[0].mxu0 %v586
  %v625 = vpop.f32.mrb[0].mxu0
  %v626 = vadd.f32 %v537, %v625
  %v627 = vpop.f32.mrb[0].mxu0
  %v628 = vpop.f32.mrb[0].mxu0
  %v629 = vadd.f32 %v540, %v628
  %v630 = vpop.f32.mrb[0].mxu0
  %631 = vmatprep.mubr.bf16.mxu0 0
  %632 = vmatmul.mubr.bf16.gmra.mrb[0].mxu0 %v589
  %v633 = vpop.f32.mrb[0].mxu0
  %v634 = vadd.f32 %v545, %v633
  %v635 = vpop.f32.mrb[0].mxu0
  %v636 = vpop.f32.mrb[0].mxu0
  %v637 = vadd.f32 %v548, %v636
  %v638 = vpop.f32.mrb[0].mxu0
  %639 = vdwg.mxu0
  %s640 = scalar_lea.vmem %s1, 96
  %v641 = vld [vmem:[%s640] sm:$0xf]
  %v642 = vld [vmem:[%s640 + $0x4] sm:$0xf]
  %v643 = vld [vmem:[%s640 + $0x8] sm:$0xf]
  %v644 = vld [vmem:[%s640 + $0xc] sm:$0xf]
  %v645 = vld [vmem:[%s329] sm:$0xf]
  %v646 = vld [vmem:[%s329 + $0x4] sm:$0xf]
  %v647 = vld [vmem:[%s329 + $0x8] sm:$0xf]
  %v648 = vld [vmem:[%s329 + $0xc] sm:$0xf]
  %v649 = vld [vmem:[%s329 + $0x10] sm:$0xf]
  %v650 = vld [vmem:[%s329 + $0x14] sm:$0xf]
  %v651 = vld [vmem:[%s329 + $0x18] sm:$0xf]
  %v652 = vld [vmem:[%s329 + $0x1c] sm:$0xf]
  %v657 = vunpack.c.l.b16 %v641
  %v658 = vunpack.c.l.b16 %v642
  %v659 = vunpack.c.l.b16 %v643
  %v660 = vunpack.c.l.b16 %v644
  %v661 = vpack.c.b16 %v658, %v657
  %v662 = vpack.c.b16 %v660, %v659
  %v671 = vunpack.c.l.b16 %v645
  %v672 = vunpack.c.l.b16 %v646
  %v673 = vunpack.c.l.b16 %v647
  %v674 = vunpack.c.l.b16 %v648
  %v675 = vunpack.c.l.b16 %v649
  %v676 = vunpack.c.l.b16 %v650
  %v677 = vunpack.c.l.b16 %v651
  %v678 = vunpack.c.l.b16 %v652
  %v679 = vpack.c.b16 %v672, %v671
  %v680 = vpack.c.b16 %v674, %v673
  %v681 = vpack.c.b16 %v676, %v675
  %v682 = vpack.c.b16 %v678, %v677
  %v688 = vsel %vm72, %v661, 0
  %v691 = vsel %vm72, %v662, 0
  %693 = vmatprep.subr.bf16.mxu0 0
  %694 = vmatpush1.bf16.msra.mxu0 %v679
  %695 = vmatprep.subr.bf16.mxu0 0
  %696 = vmatpush1.bf16.msra.mxu0 %v680
  %697 = vmatprep.subr.bf16.mxu0 0
  %698 = vmatpush1.bf16.msra.mxu0 %v681
  %699 = vmatprep.subr.bf16.mxu0 0
  %700 = vmatpush1.bf16.msra.mxu0 %v682
  %701 = vmatprep.subr.bf16.mxu0 0
  %702 = vmatpush1.bf16.msra.mxu0 0
  %703 = vmatprep.subr.bf16.mxu0 0
  %704 = vmatpush1.bf16.msra.mxu0 0
  %705 = vmatprep.subr.bf16.mxu0 0
  %706 = vmatpush1.bf16.msra.mxu0 0
  %707 = vmatprep.subr.bf16.mxu0 0
  %708 = vmatpush1.bf16.msra.mxu0 0
  %709 = vmatprep.subr.bf16.mxu0 0
  %710 = vmatpush1.bf16.msra.mxu0 0
  %711 = vmatprep.subr.bf16.mxu0 0
  %712 = vmatpush1.bf16.msra.mxu0 0
  %713 = vmatprep.subr.bf16.mxu0 0
  %714 = vmatpush1.bf16.msra.mxu0 0
  %715 = vmatprep.subr.bf16.mxu0 0
  %716 = vmatpush1.bf16.msra.mxu0 0
  %717 = vmatprep.subr.bf16.mxu0 0
  %718 = vmatpush1.bf16.msra.mxu0 0
  %719 = vmatprep.subr.bf16.mxu0 0
  %720 = vmatpush1.bf16.msra.mxu0 0
  %721 = vmatprep.subr.bf16.mxu0 0
  %722 = vmatpush1.bf16.msra.mxu0 0
  %723 = vmatprep.subr.bf16.mxu0 0
  %724 = vmatpush1.bf16.msra.mxu0 0
  %725 = vmatprep.mubr.bf16.mxu0 0
  %726 = vmatmul.mubr.bf16.gmra.mrb[0].mxu0 %v688
  %v727 = vpop.f32.mrb[0].mxu0
  %v728 = vadd.f32 0.0, %v727
  %v729 = vpop.f32.mrb[0].mxu0
  %v730 = vpop.f32.mrb[0].mxu0
  %v731 = vadd.f32 0.0, %v730
  %v732 = vpop.f32.mrb[0].mxu0
  %733 = vmatprep.mubr.bf16.mxu0 0
  %734 = vmatmul.mubr.bf16.gmra.mrb[0].mxu0 %v691
  %v735 = vpop.f32.mrb[0].mxu0
  %v736 = vadd.f32 0.0, %v735
  %v737 = vpop.f32.mrb[0].mxu0
  %v738 = vpop.f32.mrb[0].mxu0
  %v739 = vadd.f32 0.0, %v738
  %v740 = vpop.f32.mrb[0].mxu0
  %741 = vdwg.mxu0
  %v742 = vadd.f32 %v626, %v728
  %v743 = vadd.f32 %v629, %v731
  %v744 = vadd.f32 %v634, %v736
  %v745 = vadd.f32 %v637, %v739
  %s746 = scalar_lea.vmem %s1, 112
  %v747 = vld [vmem:[%s746] sm:$0xf]
  %v748 = vld [vmem:[%s746 + $0x4] sm:$0xf]
  %v749 = vld [vmem:[%s746 + $0x8] sm:$0xf]
  %v750 = vld [vmem:[%s746 + $0xc] sm:$0xf]
  %s751 = scalar_lea.vmem %s0, 160
  %v752 = vld [vmem:[%s751] sm:$0xf]
  %v753 = vld [vmem:[%s751 + $0x4] sm:$0xf]
  %v754 = vld [vmem:[%s751 + $0x8] sm:$0xf]
  %v755 = vld [vmem:[%s751 + $0xc] sm:$0xf]
  %v756 = vld [vmem:[%s751 + $0x10] sm:$0xf]
  %v757 = vld [vmem:[%s751 + $0x14] sm:$0xf]
  %v758 = vld [vmem:[%s751 + $0x18] sm:$0xf]
  %v759 = vld [vmem:[%s751 + $0x1c] sm:$0xf]
  %v764 = vunpack.c.l.b16 %v747
  %v765 = vunpack.c.l.b16 %v748
  %v766 = vunpack.c.l.b16 %v749
  %v767 = vunpack.c.l.b16 %v750
  %v768 = vpack.c.b16 %v765, %v764
  %v769 = vpack.c.b16 %v767, %v766
  %v778 = vunpack.c.l.b16 %v752
  %v779 = vunpack.c.l.b16 %v753
  %v780 = vunpack.c.l.b16 %v754
  %v781 = vunpack.c.l.b16 %v755
  %v782 = vunpack.c.l.b16 %v756
  %v783 = vunpack.c.l.b16 %v757
  %v784 = vunpack.c.l.b16 %v758
  %v785 = vunpack.c.l.b16 %v759
  %v786 = vpack.c.b16 %v779, %v778
  %v787 = vpack.c.b16 %v781, %v780
  %v788 = vpack.c.b16 %v783, %v782
  %v789 = vpack.c.b16 %v785, %v784
  %v795 = vsel %vm72, %v768, 0
  %v798 = vsel %vm72, %v769, 0
  %800 = vmatprep.subr.bf16.mxu0 0
  %801 = vmatpush1.bf16.msra.mxu0 %v786
  %802 = vmatprep.subr.bf16.mxu0 0
  %803 = vmatpush1.bf16.msra.mxu0 %v787
  %804 = vmatprep.subr.bf16.mxu0 0
  %805 = vmatpush1.bf16.msra.mxu0 %v788
  %806 = vmatprep.subr.bf16.mxu0 0
  %807 = vmatpush1.bf16.msra.mxu0 %v789
  %808 = vmatprep.subr.bf16.mxu0 0
  %809 = vmatpush1.bf16.msra.mxu0 0
  %810 = vmatprep.subr.bf16.mxu0 0
  %811 = vmatpush1.bf16.msra.mxu0 0
  %812 = vmatprep.subr.bf16.mxu0 0
  %813 = vmatpush1.bf16.msra.mxu0 0
  %814 = vmatprep.subr.bf16.mxu0 0
  %815 = vmatpush1.bf16.msra.mxu0 0
  %816 = vmatprep.subr.bf16.mxu0 0
  %817 = vmatpush1.bf16.msra.mxu0 0
  %818 = vmatprep.subr.bf16.mxu0 0
  %819 = vmatpush1.bf16.msra.mxu0 0
  %820 = vmatprep.subr.bf16.mxu0 0
  %821 = vmatpush1.bf16.msra.mxu0 0
  %822 = vmatprep.subr.bf16.mxu0 0
  %823 = vmatpush1.bf16.msra.mxu0 0
  %824 = vmatprep.subr.bf16.mxu0 0
  %825 = vmatpush1.bf16.msra.mxu0 0
  %826 = vmatprep.subr.bf16.mxu0 0
  %827 = vmatpush1.bf16.msra.mxu0 0
  %828 = vmatprep.subr.bf16.mxu0 0
  %829 = vmatpush1.bf16.msra.mxu0 0
  %830 = vmatprep.subr.bf16.mxu0 0
  %831 = vmatpush1.bf16.msra.mxu0 0
  %832 = vmatprep.mubr.bf16.mxu0 0
  %833 = vmatmul.mubr.bf16.gmra.mrb[0].mxu0 %v795
  %v834 = vpop.f32.mrb[0].mxu0
  %v835 = vadd.f32 0.0, %v834
  %v836 = vpop.f32.mrb[0].mxu0
  %v837 = vpop.f32.mrb[0].mxu0
  %v838 = vadd.f32 0.0, %v837
  %v839 = vpop.f32.mrb[0].mxu0
  %840 = vmatprep.mubr.bf16.mxu0 0
  %841 = vmatmul.mubr.bf16.gmra.mrb[0].mxu0 %v798
  %v842 = vpop.f32.mrb[0].mxu0
  %v843 = vadd.f32 0.0, %v842
  %v844 = vpop.f32.mrb[0].mxu0
  %v845 = vpop.f32.mrb[0].mxu0
  %v846 = vadd.f32 0.0, %v845
  %v847 = vpop.f32.mrb[0].mxu0
  %848 = vdwg.mxu0
  %v849 = vadd.f32 %v742, %v835
  %v850 = vadd.f32 %v743, %v838
  %v851 = vadd.f32 %v744, %v843
  %v852 = vadd.f32 %v745, %v846
  %s853 = scalar_lea.vmem %s2, 32
  %854 = vst [vmem:[%s853] sm:$0xff] %v849
  %855 = vst [vmem:[%s853 + $0x8] sm:$0xff] %v850
  %856 = vst [vmem:[%s853 + $0x10] sm:$0xff] %v851
  %857 = vst [vmem:[%s853 + $0x18] sm:$0xff] %v852
  %s858 = scalar_lea.vmem %s1, 128
  %v859 = vld [vmem:[%s858] sm:$0xf]
  %v860 = vld [vmem:[%s858 + $0x4] sm:$0xf]
  %v861 = vld [vmem:[%s858 + $0x8] sm:$0xf]
  %v862 = vld [vmem:[%s858 + $0xc] sm:$0xf]
  %v863 = vld [vmem:[%s222] sm:$0xf]
  %v864 = vld [vmem:[%s222 + $0x4] sm:$0xf]
  %v865 = vld [vmem:[%s222 + $0x8] sm:$0xf]
  %v866 = vld [vmem:[%s222 + $0xc] sm:$0xf]
  %v867 = vld [vmem:[%s222 + $0x10] sm:$0xf]
  %v868 = vld [vmem:[%s222 + $0x14] sm:$0xf]
  %v869 = vld [vmem:[%s222 + $0x18] sm:$0xf]
  %v870 = vld [vmem:[%s222 + $0x1c] sm:$0xf]
  %s871 = scalar_lea.vmem %s1, 144
  %v872 = vld [vmem:[%s871] sm:$0xf]
  %v873 = vld [vmem:[%s871 + $0x4] sm:$0xf]
  %v874 = vld [vmem:[%s871 + $0x8] sm:$0xf]
  %v875 = vld [vmem:[%s871 + $0xc] sm:$0xf]
  %v876 = vld [vmem:[%s329] sm:$0xf]
  %v877 = vld [vmem:[%s329 + $0x4] sm:$0xf]
  %v878 = vld [vmem:[%s329 + $0x8] sm:$0xf]
  %v879 = vld [vmem:[%s329 + $0xc] sm:$0xf]
  %v880 = vld [vmem:[%s329 + $0x10] sm:$0xf]
  %v881 = vld [vmem:[%s329 + $0x14] sm:$0xf]
  %v882 = vld [vmem:[%s329 + $0x18] sm:$0xf]
  %v883 = vld [vmem:[%s329 + $0x1c] sm:$0xf]
  %v888 = vunpack.c.l.b16 %v872
  %v889 = vunpack.c.l.b16 %v873
  %v890 = vunpack.c.l.b16 %v874
  %v891 = vunpack.c.l.b16 %v875
  %v892 = vpack.c.b16 %v889, %v888
  %v893 = vpack.c.b16 %v891, %v890
  %v902 = vunpack.c.l.b16 %v876
  %v903 = vunpack.c.l.b16 %v877
  %v904 = vunpack.c.l.b16 %v878
  %v905 = vunpack.c.l.b16 %v879
  %v906 = vunpack.c.l.b16 %v880
  %v907 = vunpack.c.l.b16 %v881
  %v908 = vunpack.c.l.b16 %v882
  %v909 = vunpack.c.l.b16 %v883
  %v910 = vpack.c.b16 %v903, %v902
  %v911 = vpack.c.b16 %v905, %v904
  %v912 = vpack.c.b16 %v907, %v906
  %v913 = vpack.c.b16 %v909, %v908
  %v919 = vsel %vm72, %v892, 0
  %v922 = vsel %vm72, %v893, 0
  %924 = vmatprep.subr.bf16.mxu0 0
  %925 = vmatpush1.bf16.msra.mxu0 %v910
  %926 = vmatprep.subr.bf16.mxu0 0
  %927 = vmatpush1.bf16.msra.mxu0 %v911
  %928 = vmatprep.subr.bf16.mxu0 0
  %929 = vmatpush1.bf16.msra.mxu0 %v912
  %930 = vmatprep.subr.bf16.mxu0 0
  %931 = vmatpush1.bf16.msra.mxu0 %v913
  %932 = vmatprep.subr.bf16.mxu0 0
  %933 = vmatpush1.bf16.msra.mxu0 0
  %934 = vmatprep.subr.bf16.mxu0 0
  %935 = vmatpush1.bf16.msra.mxu0 0
  %936 = vmatprep.subr.bf16.mxu0 0
  %937 = vmatpush1.bf16.msra.mxu0 0
  %938 = vmatprep.subr.bf16.mxu0 0
  %939 = vmatpush1.bf16.msra.mxu0 0
  %940 = vmatprep.subr.bf16.mxu0 0
  %941 = vmatpush1.bf16.msra.mxu0 0
  %942 = vmatprep.subr.bf16.mxu0 0
  %943 = vmatpush1.bf16.msra.mxu0 0
  %944 = vmatprep.subr.bf16.mxu0 0
  %945 = vmatpush1.bf16.msra.mxu0 0
  %946 = vmatprep.subr.bf16.mxu0 0
  %947 = vmatpush1.bf16.msra.mxu0 0
  %948 = vmatprep.subr.bf16.mxu0 0
  %949 = vmatpush1.bf16.msra.mxu0 0
  %950 = vmatprep.subr.bf16.mxu0 0
  %951 = vmatpush1.bf16.msra.mxu0 0
  %952 = vmatprep.subr.bf16.mxu0 0
  %953 = vmatpush1.bf16.msra.mxu0 0
  %954 = vmatprep.subr.bf16.mxu0 0
  %955 = vmatpush1.bf16.msra.mxu0 0
  %956 = vmatprep.mubr.bf16.mxu0 0
  %957 = vmatmul.mubr.bf16.gmra.mrb[0].mxu0 %v919
  %v958 = vpop.f32.mrb[0].mxu0
  %v959 = vadd.f32 0.0, %v958
  %v960 = vpop.f32.mrb[0].mxu0
  %v961 = vpop.f32.mrb[0].mxu0
  %v962 = vadd.f32 0.0, %v961
  %v963 = vpop.f32.mrb[0].mxu0
  %964 = vmatprep.mubr.bf16.mxu0 0
  %965 = vmatmul.mubr.bf16.gmra.mrb[0].mxu0 %v922
  %v966 = vpop.f32.mrb[0].mxu0
  %v967 = vadd.f32 0.0, %v966
  %v968 = vpop.f32.mrb[0].mxu0
  %v969 = vpop.f32.mrb[0].mxu0
  %v970 = vadd.f32 0.0, %v969
  %v971 = vpop.f32.mrb[0].mxu0
  %972 = vdwg.mxu0
  %v977 = vunpack.c.l.b16 %v859
  %v978 = vunpack.c.l.b16 %v860
  %v979 = vunpack.c.l.b16 %v861
  %v980 = vunpack.c.l.b16 %v862
  %v981 = vpack.c.b16 %v978, %v977
  %v982 = vpack.c.b16 %v980, %v979
  %v991 = vunpack.c.l.b16 %v863
  %v992 = vunpack.c.l.b16 %v864
  %v993 = vunpack.c.l.b16 %v865
  %v994 = vunpack.c.l.b16 %v866
  %v995 = vunpack.c.l.b16 %v867
  %v996 = vunpack.c.l.b16 %v868
  %v997 = vunpack.c.l.b16 %v869
  %v998 = vunpack.c.l.b16 %v870
  %v999 = vpack.c.b16 %v992, %v991
  %v1000 = vpack.c.b16 %v994, %v993
  %v1001 = vpack.c.b16 %v996, %v995
  %v1002 = vpack.c.b16 %v998, %v997
  %v1008 = vsel %vm72, %v981, 0
  %v1011 = vsel %vm72, %v982, 0
  %1013 = vmatprep.subr.bf16.mxu0 0
  %1014 = vmatpush1.bf16.msra.mxu0 %v999
  %1015 = vmatprep.subr.bf16.mxu0 0
  %1016 = vmatpush1.bf16.msra.mxu0 %v1000
  %1017 = vmatprep.subr.bf16.mxu0 0
  %1018 = vmatpush1.bf16.msra.mxu0 %v1001
  %1019 = vmatprep.subr.bf16.mxu0 0
  %1020 = vmatpush1.bf16.msra.mxu0 %v1002
  %1021 = vmatprep.subr.bf16.mxu0 0
  %1022 = vmatpush1.bf16.msra.mxu0 0
  %1023 = vmatprep.subr.bf16.mxu0 0
  %1024 = vmatpush1.bf16.msra.mxu0 0
  %1025 = vmatprep.subr.bf16.mxu0 0
  %1026 = vmatpush1.bf16.msra.mxu0 0
  %1027 = vmatprep.subr.bf16.mxu0 0
  %1028 = vmatpush1.bf16.msra.mxu0 0
  %1029 = vmatprep.subr.bf16.mxu0 0
  %1030 = vmatpush1.bf16.msra.mxu0 0
  %1031 = vmatprep.subr.bf16.mxu0 0
  %1032 = vmatpush1.bf16.msra.mxu0 0
  %1033 = vmatprep.subr.bf16.mxu0 0
  %1034 = vmatpush1.bf16.msra.mxu0 0
  %1035 = vmatprep.subr.bf16.mxu0 0
  %1036 = vmatpush1.bf16.msra.mxu0 0
  %1037 = vmatprep.subr.bf16.mxu0 0
  %1038 = vmatpush1.bf16.msra.mxu0 0
  %1039 = vmatprep.subr.bf16.mxu0 0
  %1040 = vmatpush1.bf16.msra.mxu0 0
  %1041 = vmatprep.subr.bf16.mxu0 0
  %1042 = vmatpush1.bf16.msra.mxu0 0
  %1043 = vmatprep.subr.bf16.mxu0 0
  %1044 = vmatpush1.bf16.msra.mxu0 0
  %1045 = vmatprep.mubr.bf16.mxu0 0
  %1046 = vmatmul.mubr.bf16.gmra.mrb[0].mxu0 %v1008
  %v1047 = vpop.f32.mrb[0].mxu0
  %v1048 = vadd.f32 %v959, %v1047
  %v1049 = vpop.f32.mrb[0].mxu0
  %v1050 = vpop.f32.mrb[0].mxu0
  %v1051 = vadd.f32 %v962, %v1050
  %v1052 = vpop.f32.mrb[0].mxu0
  %1053 = vmatprep.mubr.bf16.mxu0 0
  %1054 = vmatmul.mubr.bf16.gmra.mrb[0].mxu0 %v1011
  %v1055 = vpop.f32.mrb[0].mxu0
  %v1056 = vadd.f32 %v967, %v1055
  %v1057 = vpop.f32.mrb[0].mxu0
  %v1058 = vpop.f32.mrb[0].mxu0
  %v1059 = vadd.f32 %v970, %v1058
  %v1060 = vpop.f32.mrb[0].mxu0
  %1061 = vdwg.mxu0
  %s1062 = scalar_lea.vmem %s1, 160
  %v1063 = vld [vmem:[%s1062] sm:$0xf]
  %v1064 = vld [vmem:[%s1062 + $0x4] sm:$0xf]
  %v1065 = vld [vmem:[%s1062 + $0x8] sm:$0xf]
  %v1066 = vld [vmem:[%s1062 + $0xc] sm:$0xf]
  %s1067 = scalar_lea.vmem %s0, 192
  %v1068 = vld [vmem:[%s1067] sm:$0xf]
  %v1069 = vld [vmem:[%s1067 + $0x4] sm:$0xf]
  %v1070 = vld [vmem:[%s1067 + $0x8] sm:$0xf]
  %v1071 = vld [vmem:[%s1067 + $0xc] sm:$0xf]
  %v1072 = vld [vmem:[%s1067 + $0x10] sm:$0xf]
  %v1073 = vld [vmem:[%s1067 + $0x14] sm:$0xf]
  %v1074 = vld [vmem:[%s1067 + $0x18] sm:$0xf]
  %v1075 = vld [vmem:[%s1067 + $0x1c] sm:$0xf]
  %v1080 = vunpack.c.l.b16 %v1063
  %v1081 = vunpack.c.l.b16 %v1064
  %v1082 = vunpack.c.l.b16 %v1065
  %v1083 = vunpack.c.l.b16 %v1066
  %v1084 = vpack.c.b16 %v1081, %v1080
  %v1085 = vpack.c.b16 %v1083, %v1082
  %v1094 = vunpack.c.l.b16 %v1068
  %v1095 = vunpack.c.l.b16 %v1069
  %v1096 = vunpack.c.l.b16 %v1070
  %v1097 = vunpack.c.l.b16 %v1071
  %v1098 = vunpack.c.l.b16 %v1072
  %v1099 = vunpack.c.l.b16 %v1073
  %v1100 = vunpack.c.l.b16 %v1074
  %v1101 = vunpack.c.l.b16 %v1075
  %v1102 = vpack.c.b16 %v1095, %v1094
  %v1103 = vpack.c.b16 %v1097, %v1096
  %v1104 = vpack.c.b16 %v1099, %v1098
  %v1105 = vpack.c.b16 %v1101, %v1100
  %v1111 = vsel %vm72, %v1084, 0
  %v1114 = vsel %vm72, %v1085, 0
  %1116 = vmatprep.subr.bf16.mxu0 0
  %1117 = vmatpush1.bf16.msra.mxu0 %v1102
  %1118 = vmatprep.subr.bf16.mxu0 0
  %1119 = vmatpush1.bf16.msra.mxu0 %v1103
  %1120 = vmatprep.subr.bf16.mxu0 0
  %1121 = vmatpush1.bf16.msra.mxu0 %v1104
  %1122 = vmatprep.subr.bf16.mxu0 0
  %1123 = vmatpush1.bf16.msra.mxu0 %v1105
  %1124 = vmatprep.subr.bf16.mxu0 0
  %1125 = vmatpush1.bf16.msra.mxu0 0
  %1126 = vmatprep.subr.bf16.mxu0 0
  %1127 = vmatpush1.bf16.msra.mxu0 0
  %1128 = vmatprep.subr.bf16.mxu0 0
  %1129 = vmatpush1.bf16.msra.mxu0 0
  %1130 = vmatprep.subr.bf16.mxu0 0
  %1131 = vmatpush1.bf16.msra.mxu0 0
  %1132 = vmatprep.subr.bf16.mxu0 0
  %1133 = vmatpush1.bf16.msra.mxu0 0
  %1134 = vmatprep.subr.bf16.mxu0 0
  %1135 = vmatpush1.bf16.msra.mxu0 0
  %1136 = vmatprep.subr.bf16.mxu0 0
  %1137 = vmatpush1.bf16.msra.mxu0 0
  %1138 = vmatprep.subr.bf16.mxu0 0
  %1139 = vmatpush1.bf16.msra.mxu0 0
  %1140 = vmatprep.subr.bf16.mxu0 0
  %1141 = vmatpush1.bf16.msra.mxu0 0
  %1142 = vmatprep.subr.bf16.mxu0 0
  %1143 = vmatpush1.bf16.msra.mxu0 0
  %1144 = vmatprep.subr.bf16.mxu0 0
  %1145 = vmatpush1.bf16.msra.mxu0 0
  %1146 = vmatprep.subr.bf16.mxu0 0
  %1147 = vmatpush1.bf16.msra.mxu0 0
  %1148 = vmatprep.mubr.bf16.mxu0 0
  %1149 = vmatmul.mubr.bf16.gmra.mrb[0].mxu0 %v1111
  %v1150 = vpop.f32.mrb[0].mxu0
  %v1151 = vadd.f32 0.0, %v1150
  %v1152 = vpop.f32.mrb[0].mxu0
  %v1153 = vpop.f32.mrb[0].mxu0
  %v1154 = vadd.f32 0.0, %v1153
  %v1155 = vpop.f32.mrb[0].mxu0
  %1156 = vmatprep.mubr.bf16.mxu0 0
  %1157 = vmatmul.mubr.bf16.gmra.mrb[0].mxu0 %v1114
  %v1158 = vpop.f32.mrb[0].mxu0
  %v1159 = vadd.f32 0.0, %v1158
  %v1160 = vpop.f32.mrb[0].mxu0
  %v1161 = vpop.f32.mrb[0].mxu0
  %v1162 = vadd.f32 0.0, %v1161
  %v1163 = vpop.f32.mrb[0].mxu0
  %1164 = vdwg.mxu0
  %v1165 = vadd.f32 %v1048, %v1151
  %v1166 = vadd.f32 %v1051, %v1154
  %v1167 = vadd.f32 %v1056, %v1159
  %v1168 = vadd.f32 %v1059, %v1162
  %s1169 = scalar_lea.vmem %s1, 176
  %v1170 = vld [vmem:[%s1169] sm:$0xf]
  %v1171 = vld [vmem:[%s1169 + $0x4] sm:$0xf]
  %v1172 = vld [vmem:[%s1169 + $0x8] sm:$0xf]
  %v1173 = vld [vmem:[%s1169 + $0xc] sm:$0xf]
  %s1174 = scalar_lea.vmem %s0, 224
  %v1175 = vld [vmem:[%s1174] sm:$0xf]
  %v1176 = vld [vmem:[%s1174 + $0x4] sm:$0xf]
  %v1177 = vld [vmem:[%s1174 + $0x8] sm:$0xf]
  %v1178 = vld [vmem:[%s1174 + $0xc] sm:$0xf]
  %v1179 = vld [vmem:[%s1174 + $0x10] sm:$0xf]
  %v1180 = vld [vmem:[%s1174 + $0x14] sm:$0xf]
  %v1181 = vld [vmem:[%s1174 + $0x18] sm:$0xf]
  %v1182 = vld [vmem:[%s1174 + $0x1c] sm:$0xf]
  %v1187 = vunpack.c.l.b16 %v1170
  %v1188 = vunpack.c.l.b16 %v1171
  %v1189 = vunpack.c.l.b16 %v1172
  %v1190 = vunpack.c.l.b16 %v1173
  %v1191 = vpack.c.b16 %v1188, %v1187
  %v1192 = vpack.c.b16 %v1190, %v1189
  %v1201 = vunpack.c.l.b16 %v1175
  %v1202 = vunpack.c.l.b16 %v1176
  %v1203 = vunpack.c.l.b16 %v1177
  %v1204 = vunpack.c.l.b16 %v1178
  %v1205 = vunpack.c.l.b16 %v1179
  %v1206 = vunpack.c.l.b16 %v1180
  %v1207 = vunpack.c.l.b16 %v1181
  %v1208 = vunpack.c.l.b16 %v1182
  %v1209 = vpack.c.b16 %v1202, %v1201
  %v1210 = vpack.c.b16 %v1204, %v1203
  %v1211 = vpack.c.b16 %v1206, %v1205
  %v1212 = vpack.c.b16 %v1208, %v1207
  %v1218 = vsel %vm72, %v1191, 0
  %v1221 = vsel %vm72, %v1192, 0
  %1223 = vmatprep.subr.bf16.mxu0 0
  %1224 = vmatpush1.bf16.msra.mxu0 %v1209
  %1225 = vmatprep.subr.bf16.mxu0 0
  %1226 = vmatpush1.bf16.msra.mxu0 %v1210
  %1227 = vmatprep.subr.bf16.mxu0 0
  %1228 = vmatpush1.bf16.msra.mxu0 %v1211
  %1229 = vmatprep.subr.bf16.mxu0 0
  %1230 = vmatpush1.bf16.msra.mxu0 %v1212
  %1231 = vmatprep.subr.bf16.mxu0 0
  %1232 = vmatpush1.bf16.msra.mxu0 0
  %1233 = vmatprep.subr.bf16.mxu0 0
  %1234 = vmatpush1.bf16.msra.mxu0 0
  %1235 = vmatprep.subr.bf16.mxu0 0
  %1236 = vmatpush1.bf16.msra.mxu0 0
  %1237 = vmatprep.subr.bf16.mxu0 0
  %1238 = vmatpush1.bf16.msra.mxu0 0
  %1239 = vmatprep.subr.bf16.mxu0 0
  %1240 = vmatpush1.bf16.msra.mxu0 0
  %1241 = vmatprep.subr.bf16.mxu0 0
  %1242 = vmatpush1.bf16.msra.mxu0 0
  %1243 = vmatprep.subr.bf16.mxu0 0
  %1244 = vmatpush1.bf16.msra.mxu0 0
  %1245 = vmatprep.subr.bf16.mxu0 0
  %1246 = vmatpush1.bf16.msra.mxu0 0
  %1247 = vmatprep.subr.bf16.mxu0 0
  %1248 = vmatpush1.bf16.msra.mxu0 0
  %1249 = vmatprep.subr.bf16.mxu0 0
  %1250 = vmatpush1.bf16.msra.mxu0 0
  %1251 = vmatprep.subr.bf16.mxu0 0
  %1252 = vmatpush1.bf16.msra.mxu0 0
  %1253 = vmatprep.subr.bf16.mxu0 0
  %1254 = vmatpush1.bf16.msra.mxu0 0
  %1255 = vmatprep.mubr.bf16.mxu0 0
  %1256 = vmatmul.mubr.bf16.gmra.mrb[0].mxu0 %v1218
  %v1257 = vpop.f32.mrb[0].mxu0
  %v1258 = vadd.f32 0.0, %v1257
  %v1259 = vpop.f32.mrb[0].mxu0
  %v1260 = vpop.f32.mrb[0].mxu0
  %v1261 = vadd.f32 0.0, %v1260
  %v1262 = vpop.f32.mrb[0].mxu0
  %1263 = vmatprep.mubr.bf16.mxu0 0
  %1264 = vmatmul.mubr.bf16.gmra.mrb[0].mxu0 %v1221
  %v1265 = vpop.f32.mrb[0].mxu0
  %v1266 = vadd.f32 0.0, %v1265
  %v1267 = vpop.f32.mrb[0].mxu0
  %v1268 = vpop.f32.mrb[0].mxu0
  %v1269 = vadd.f32 0.0, %v1268
  %v1270 = vpop.f32.mrb[0].mxu0
  %1271 = vdwg.mxu0
  %v1272 = vadd.f32 %v1165, %v1258
  %v1273 = vadd.f32 %v1166, %v1261
  %v1274 = vadd.f32 %v1167, %v1266
  %v1275 = vadd.f32 %v1168, %v1269
  %s1276 = scalar_lea.vmem %s2, 64
  %1277 = vst [vmem:[%s1276] sm:$0xff] %v1272
  %1278 = vst [vmem:[%s1276 + $0x8] sm:$0xff] %v1273
  %1279 = vst [vmem:[%s1276 + $0x10] sm:$0xff] %v1274
  %1280 = vst [vmem:[%s1276 + $0x18] sm:$0xff] %v1275
  %s1281 = scalar_lea.vmem %s1, 192
  %v1282 = vld [vmem:[%s1281] sm:$0xf]
  %v1283 = vld [vmem:[%s1281 + $0x4] sm:$0xf]
  %v1284 = vld [vmem:[%s1281 + $0x8] sm:$0xf]
  %v1285 = vld [vmem:[%s1281 + $0xc] sm:$0xf]
  %v1286 = vld [vmem:[%s329] sm:$0xf]
  %v1287 = vld [vmem:[%s329 + $0x4] sm:$0xf]
  %v1288 = vld [vmem:[%s329 + $0x8] sm:$0xf]
  %v1289 = vld [vmem:[%s329 + $0xc] sm:$0xf]
  %v1290 = vld [vmem:[%s329 + $0x10] sm:$0xf]
  %v1291 = vld [vmem:[%s329 + $0x14] sm:$0xf]
  %v1292 = vld [vmem:[%s329 + $0x18] sm:$0xf]
  %v1293 = vld [vmem:[%s329 + $0x1c] sm:$0xf]
  %s1294 = scalar_lea.vmem %s1, 208
  %v1295 = vld [vmem:[%s1294] sm:$0xf]
  %v1296 = vld [vmem:[%s1294 + $0x4] sm:$0xf]
  %v1297 = vld [vmem:[%s1294 + $0x8] sm:$0xf]
  %v1298 = vld [vmem:[%s1294 + $0xc] sm:$0xf]
  %v1299 = vld [vmem:[%s751] sm:$0xf]
  %v1300 = vld [vmem:[%s751 + $0x4] sm:$0xf]
  %v1301 = vld [vmem:[%s751 + $0x8] sm:$0xf]
  %v1302 = vld [vmem:[%s751 + $0xc] sm:$0xf]
  %v1303 = vld [vmem:[%s751 + $0x10] sm:$0xf]
  %v1304 = vld [vmem:[%s751 + $0x14] sm:$0xf]
  %v1305 = vld [vmem:[%s751 + $0x18] sm:$0xf]
  %v1306 = vld [vmem:[%s751 + $0x1c] sm:$0xf]
  %v1311 = vunpack.c.l.b16 %v1295
  %v1312 = vunpack.c.l.b16 %v1296
  %v1313 = vunpack.c.l.b16 %v1297
  %v1314 = vunpack.c.l.b16 %v1298
  %v1315 = vpack.c.b16 %v1312, %v1311
  %v1316 = vpack.c.b16 %v1314, %v1313
  %v1325 = vunpack.c.l.b16 %v1299
  %v1326 = vunpack.c.l.b16 %v1300
  %v1327 = vunpack.c.l.b16 %v1301
  %v1328 = vunpack.c.l.b16 %v1302
  %v1329 = vunpack.c.l.b16 %v1303
  %v1330 = vunpack.c.l.b16 %v1304
  %v1331 = vunpack.c.l.b16 %v1305
  %v1332 = vunpack.c.l.b16 %v1306
  %v1333 = vpack.c.b16 %v1326, %v1325
  %v1334 = vpack.c.b16 %v1328, %v1327
  %v1335 = vpack.c.b16 %v1330, %v1329
  %v1336 = vpack.c.b16 %v1332, %v1331
  %v1342 = vsel %vm72, %v1315, 0
  %v1345 = vsel %vm72, %v1316, 0
  %1347 = vmatprep.subr.bf16.mxu0 0
  %1348 = vmatpush1.bf16.msra.mxu0 %v1333
  %1349 = vmatprep.subr.bf16.mxu0 0
  %1350 = vmatpush1.bf16.msra.mxu0 %v1334
  %1351 = vmatprep.subr.bf16.mxu0 0
  %1352 = vmatpush1.bf16.msra.mxu0 %v1335
  %1353 = vmatprep.subr.bf16.mxu0 0
  %1354 = vmatpush1.bf16.msra.mxu0 %v1336
  %1355 = vmatprep.subr.bf16.mxu0 0
  %1356 = vmatpush1.bf16.msra.mxu0 0
  %1357 = vmatprep.subr.bf16.mxu0 0
  %1358 = vmatpush1.bf16.msra.mxu0 0
  %1359 = vmatprep.subr.bf16.mxu0 0
  %1360 = vmatpush1.bf16.msra.mxu0 0
  %1361 = vmatprep.subr.bf16.mxu0 0
  %1362 = vmatpush1.bf16.msra.mxu0 0
  %1363 = vmatprep.subr.bf16.mxu0 0
  %1364 = vmatpush1.bf16.msra.mxu0 0
  %1365 = vmatprep.subr.bf16.mxu0 0
  %1366 = vmatpush1.bf16.msra.mxu0 0
  %1367 = vmatprep.subr.bf16.mxu0 0
  %1368 = vmatpush1.bf16.msra.mxu0 0
  %1369 = vmatprep.subr.bf16.mxu0 0
  %1370 = vmatpush1.bf16.msra.mxu0 0
  %1371 = vmatprep.subr.bf16.mxu0 0
  %1372 = vmatpush1.bf16.msra.mxu0 0
  %1373 = vmatprep.subr.bf16.mxu0 0
  %1374 = vmatpush1.bf16.msra.mxu0 0
  %1375 = vmatprep.subr.bf16.mxu0 0
  %1376 = vmatpush1.bf16.msra.mxu0 0
  %1377 = vmatprep.subr.bf16.mxu0 0
  %1378 = vmatpush1.bf16.msra.mxu0 0
  %1379 = vmatprep.mubr.bf16.mxu0 0
  %1380 = vmatmul.mubr.bf16.gmra.mrb[0].mxu0 %v1342
  %v1381 = vpop.f32.mrb[0].mxu0
  %v1382 = vadd.f32 0.0, %v1381
  %v1383 = vpop.f32.mrb[0].mxu0
  %v1384 = vpop.f32.mrb[0].mxu0
  %v1385 = vadd.f32 0.0, %v1384
  %v1386 = vpop.f32.mrb[0].mxu0
  %1387 = vmatprep.mubr.bf16.mxu0 0
  %1388 = vmatmul.mubr.bf16.gmra.mrb[0].mxu0 %v1345
  %v1389 = vpop.f32.mrb[0].mxu0
  %v1390 = vadd.f32 0.0, %v1389
  %v1391 = vpop.f32.mrb[0].mxu0
  %v1392 = vpop.f32.mrb[0].mxu0
  %v1393 = vadd.f32 0.0, %v1392
  %v1394 = vpop.f32.mrb[0].mxu0
  %1395 = vdwg.mxu0
  %v1400 = vunpack.c.l.b16 %v1282
  %v1401 = vunpack.c.l.b16 %v1283
  %v1402 = vunpack.c.l.b16 %v1284
  %v1403 = vunpack.c.l.b16 %v1285
  %v1404 = vpack.c.b16 %v1401, %v1400
  %v1405 = vpack.c.b16 %v1403, %v1402
  %v1414 = vunpack.c.l.b16 %v1286
  %v1415 = vunpack.c.l.b16 %v1287
  %v1416 = vunpack.c.l.b16 %v1288
  %v1417 = vunpack.c.l.b16 %v1289
  %v1418 = vunpack.c.l.b16 %v1290
  %v1419 = vunpack.c.l.b16 %v1291
  %v1420 = vunpack.c.l.b16 %v1292
  %v1421 = vunpack.c.l.b16 %v1293
  %v1422 = vpack.c.b16 %v1415, %v1414
  %v1423 = vpack.c.b16 %v1417, %v1416
  %v1424 = vpack.c.b16 %v1419, %v1418
  %v1425 = vpack.c.b16 %v1421, %v1420
  %v1431 = vsel %vm72, %v1404, 0
  %v1434 = vsel %vm72, %v1405, 0
  %1436 = vmatprep.subr.bf16.mxu0 0
  %1437 = vmatpush1.bf16.msra.mxu0 %v1422
  %1438 = vmatprep.subr.bf16.mxu0 0
  %1439 = vmatpush1.bf16.msra.mxu0 %v1423
  %1440 = vmatprep.subr.bf16.mxu0 0
  %1441 = vmatpush1.bf16.msra.mxu0 %v1424
  %1442 = vmatprep.subr.bf16.mxu0 0
  %1443 = vmatpush1.bf16.msra.mxu0 %v1425
  %1444 = vmatprep.subr.bf16.mxu0 0
  %1445 = vmatpush1.bf16.msra.mxu0 0
  %1446 = vmatprep.subr.bf16.mxu0 0
  %1447 = vmatpush1.bf16.msra.mxu0 0
  %1448 = vmatprep.subr.bf16.mxu0 0
  %1449 = vmatpush1.bf16.msra.mxu0 0
  %1450 = vmatprep.subr.bf16.mxu0 0
  %1451 = vmatpush1.bf16.msra.mxu0 0
  %1452 = vmatprep.subr.bf16.mxu0 0
  %1453 = vmatpush1.bf16.msra.mxu0 0
  %1454 = vmatprep.subr.bf16.mxu0 0
  %1455 = vmatpush1.bf16.msra.mxu0 0
  %1456 = vmatprep.subr.bf16.mxu0 0
  %1457 = vmatpush1.bf16.msra.mxu0 0
  %1458 = vmatprep.subr.bf16.mxu0 0
  %1459 = vmatpush1.bf16.msra.mxu0 0
  %1460 = vmatprep.subr.bf16.mxu0 0
  %1461 = vmatpush1.bf16.msra.mxu0 0
  %1462 = vmatprep.subr.bf16.mxu0 0
  %1463 = vmatpush1.bf16.msra.mxu0 0
  %1464 = vmatprep.subr.bf16.mxu0 0
  %1465 = vmatpush1.bf16.msra.mxu0 0
  %1466 = vmatprep.subr.bf16.mxu0 0
  %1467 = vmatpush1.bf16.msra.mxu0 0
  %1468 = vmatprep.mubr.bf16.mxu0 0
  %1469 = vmatmul.mubr.bf16.gmra.mrb[0].mxu0 %v1431
  %v1470 = vpop.f32.mrb[0].mxu0
  %v1471 = vadd.f32 %v1382, %v1470
  %v1472 = vpop.f32.mrb[0].mxu0
  %v1473 = vpop.f32.mrb[0].mxu0
  %v1474 = vadd.f32 %v1385, %v1473
  %v1475 = vpop.f32.mrb[0].mxu0
  %1476 = vmatprep.mubr.bf16.mxu0 0
  %1477 = vmatmul.mubr.bf16.gmra.mrb[0].mxu0 %v1434
  %v1478 = vpop.f32.mrb[0].mxu0
  %v1479 = vadd.f32 %v1390, %v1478
  %v1480 = vpop.f32.mrb[0].mxu0
  %v1481 = vpop.f32.mrb[0].mxu0
  %v1482 = vadd.f32 %v1393, %v1481
  %v1483 = vpop.f32.mrb[0].mxu0
  %1484 = vdwg.mxu0
  %s1485 = scalar_lea.vmem %s1, 224
  %v1486 = vld [vmem:[%s1485] sm:$0xf]
  %v1487 = vld [vmem:[%s1485 + $0x4] sm:$0xf]
  %v1488 = vld [vmem:[%s1485 + $0x8] sm:$0xf]
  %v1489 = vld [vmem:[%s1485 + $0xc] sm:$0xf]
  %v1490 = vld [vmem:[%s1174] sm:$0xf]
  %v1491 = vld [vmem:[%s1174 + $0x4] sm:$0xf]
  %v1492 = vld [vmem:[%s1174 + $0x8] sm:$0xf]
  %v1493 = vld [vmem:[%s1174 + $0xc] sm:$0xf]
  %v1494 = vld [vmem:[%s1174 + $0x10] sm:$0xf]
  %v1495 = vld [vmem:[%s1174 + $0x14] sm:$0xf]
  %v1496 = vld [vmem:[%s1174 + $0x18] sm:$0xf]
  %v1497 = vld [vmem:[%s1174 + $0x1c] sm:$0xf]
  %v1502 = vunpack.c.l.b16 %v1486
  %v1503 = vunpack.c.l.b16 %v1487
  %v1504 = vunpack.c.l.b16 %v1488
  %v1505 = vunpack.c.l.b16 %v1489
  %v1506 = vpack.c.b16 %v1503, %v1502
  %v1507 = vpack.c.b16 %v1505, %v1504
  %v1516 = vunpack.c.l.b16 %v1490
  %v1517 = vunpack.c.l.b16 %v1491
  %v1518 = vunpack.c.l.b16 %v1492
  %v1519 = vunpack.c.l.b16 %v1493
  %v1520 = vunpack.c.l.b16 %v1494
  %v1521 = vunpack.c.l.b16 %v1495
  %v1522 = vunpack.c.l.b16 %v1496
  %v1523 = vunpack.c.l.b16 %v1497
  %v1524 = vpack.c.b16 %v1517, %v1516
  %v1525 = vpack.c.b16 %v1519, %v1518
  %v1526 = vpack.c.b16 %v1521, %v1520
  %v1527 = vpack.c.b16 %v1523, %v1522
  %v1533 = vsel %vm72, %v1506, 0
  %v1536 = vsel %vm72, %v1507, 0
  %1538 = vmatprep.subr.bf16.mxu0 0
  %1539 = vmatpush1.bf16.msra.mxu0 %v1524
  %1540 = vmatprep.subr.bf16.mxu0 0
  %1541 = vmatpush1.bf16.msra.mxu0 %v1525
  %1542 = vmatprep.subr.bf16.mxu0 0
  %1543 = vmatpush1.bf16.msra.mxu0 %v1526
  %1544 = vmatprep.subr.bf16.mxu0 0
  %1545 = vmatpush1.bf16.msra.mxu0 %v1527
  %1546 = vmatprep.subr.bf16.mxu0 0
  %1547 = vmatpush1.bf16.msra.mxu0 0
  %1548 = vmatprep.subr.bf16.mxu0 0
  %1549 = vmatpush1.bf16.msra.mxu0 0
  %1550 = vmatprep.subr.bf16.mxu0 0
  %1551 = vmatpush1.bf16.msra.mxu0 0
  %1552 = vmatprep.subr.bf16.mxu0 0
  %1553 = vmatpush1.bf16.msra.mxu0 0
  %1554 = vmatprep.subr.bf16.mxu0 0
  %1555 = vmatpush1.bf16.msra.mxu0 0
  %1556 = vmatprep.subr.bf16.mxu0 0
  %1557 = vmatpush1.bf16.msra.mxu0 0
  %1558 = vmatprep.subr.bf16.mxu0 0
  %1559 = vmatpush1.bf16.msra.mxu0 0
  %1560 = vmatprep.subr.bf16.mxu0 0
  %1561 = vmatpush1.bf16.msra.mxu0 0
  %1562 = vmatprep.subr.bf16.mxu0 0
  %1563 = vmatpush1.bf16.msra.mxu0 0
  %1564 = vmatprep.subr.bf16.mxu0 0
  %1565 = vmatpush1.bf16.msra.mxu0 0
  %1566 = vmatprep.subr.bf16.mxu0 0
  %1567 = vmatpush1.bf16.msra.mxu0 0
  %1568 = vmatprep.subr.bf16.mxu0 0
  %1569 = vmatpush1.bf16.msra.mxu0 0
  %1570 = vmatprep.mubr.bf16.mxu0 0
  %1571 = vmatmul.mubr.bf16.gmra.mrb[0].mxu0 %v1533
  %v1572 = vpop.f32.mrb[0].mxu0
  %v1573 = vadd.f32 0.0, %v1572
  %v1574 = vpop.f32.mrb[0].mxu0
  %v1575 = vpop.f32.mrb[0].mxu0
  %v1576 = vadd.f32 0.0, %v1575
  %v1577 = vpop.f32.mrb[0].mxu0
  %1578 = vmatprep.mubr.bf16.mxu0 0
  %1579 = vmatmul.mubr.bf16.gmra.mrb[0].mxu0 %v1536
  %v1580 = vpop.f32.mrb[0].mxu0
  %v1581 = vadd.f32 0.0, %v1580
  %v1582 = vpop.f32.mrb[0].mxu0
  %v1583 = vpop.f32.mrb[0].mxu0
  %v1584 = vadd.f32 0.0, %v1583
  %v1585 = vpop.f32.mrb[0].mxu0
  %1586 = vdwg.mxu0
  %v1587 = vadd.f32 %v1471, %v1573
  %v1588 = vadd.f32 %v1474, %v1576
  %v1589 = vadd.f32 %v1479, %v1581
  %v1590 = vadd.f32 %v1482, %v1584
  %s1591 = scalar_lea.vmem %s1, 240
  %v1592 = vld [vmem:[%s1591] sm:$0xf]
  %v1593 = vld [vmem:[%s1591 + $0x4] sm:$0xf]
  %v1594 = vld [vmem:[%s1591 + $0x8] sm:$0xf]
  %v1595 = vld [vmem:[%s1591 + $0xc] sm:$0xf]
  %s1596 = scalar_lea.vmem %s0, 256
  %v1597 = vld [vmem:[%s1596] sm:$0xf]
  %v1598 = vld [vmem:[%s1596 + $0x4] sm:$0xf]
  %v1599 = vld [vmem:[%s1596 + $0x8] sm:$0xf]
  %v1600 = vld [vmem:[%s1596 + $0xc] sm:$0xf]
  %v1601 = vld [vmem:[%s1596 + $0x10] sm:$0xf]
  %v1602 = vld [vmem:[%s1596 + $0x14] sm:$0xf]
  %v1603 = vld [vmem:[%s1596 + $0x18] sm:$0xf]
  %v1604 = vld [vmem:[%s1596 + $0x1c] sm:$0xf]
  %v1609 = vunpack.c.l.b16 %v1592
  %v1610 = vunpack.c.l.b16 %v1593
  %v1611 = vunpack.c.l.b16 %v1594
  %v1612 = vunpack.c.l.b16 %v1595
  %v1613 = vpack.c.b16 %v1610, %v1609
  %v1614 = vpack.c.b16 %v1612, %v1611
  %v1623 = vunpack.c.l.b16 %v1597
  %v1624 = vunpack.c.l.b16 %v1598
  %v1625 = vunpack.c.l.b16 %v1599
  %v1626 = vunpack.c.l.b16 %v1600
  %v1627 = vunpack.c.l.b16 %v1601
  %v1628 = vunpack.c.l.b16 %v1602
  %v1629 = vunpack.c.l.b16 %v1603
  %v1630 = vunpack.c.l.b16 %v1604
  %v1631 = vpack.c.b16 %v1624, %v1623
  %v1632 = vpack.c.b16 %v1626, %v1625
  %v1633 = vpack.c.b16 %v1628, %v1627
  %v1634 = vpack.c.b16 %v1630, %v1629
  %v1640 = vsel %vm72, %v1613, 0
  %v1643 = vsel %vm72, %v1614, 0
  %1645 = vmatprep.subr.bf16.mxu0 0
  %1646 = vmatpush1.bf16.msra.mxu0 %v1631
  %1647 = vmatprep.subr.bf16.mxu0 0
  %1648 = vmatpush1.bf16.msra.mxu0 %v1632
  %1649 = vmatprep.subr.bf16.mxu0 0
  %1650 = vmatpush1.bf16.msra.mxu0 %v1633
  %1651 = vmatprep.subr.bf16.mxu0 0
  %1652 = vmatpush1.bf16.msra.mxu0 %v1634
  %1653 = vmatprep.subr.bf16.mxu0 0
  %1654 = vmatpush1.bf16.msra.mxu0 0
  %1655 = vmatprep.subr.bf16.mxu0 0
  %1656 = vmatpush1.bf16.msra.mxu0 0
  %1657 = vmatprep.subr.bf16.mxu0 0
  %1658 = vmatpush1.bf16.msra.mxu0 0
  %1659 = vmatprep.subr.bf16.mxu0 0
  %1660 = vmatpush1.bf16.msra.mxu0 0
  %1661 = vmatprep.subr.bf16.mxu0 0
  %1662 = vmatpush1.bf16.msra.mxu0 0
  %1663 = vmatprep.subr.bf16.mxu0 0
  %1664 = vmatpush1.bf16.msra.mxu0 0
  %1665 = vmatprep.subr.bf16.mxu0 0
  %1666 = vmatpush1.bf16.msra.mxu0 0
  %1667 = vmatprep.subr.bf16.mxu0 0
  %1668 = vmatpush1.bf16.msra.mxu0 0
  %1669 = vmatprep.subr.bf16.mxu0 0
  %1670 = vmatpush1.bf16.msra.mxu0 0
  %1671 = vmatprep.subr.bf16.mxu0 0
  %1672 = vmatpush1.bf16.msra.mxu0 0
  %1673 = vmatprep.subr.bf16.mxu0 0
  %1674 = vmatpush1.bf16.msra.mxu0 0
  %1675 = vmatprep.subr.bf16.mxu0 0
  %1676 = vmatpush1.bf16.msra.mxu0 0
  %1677 = vmatprep.mubr.bf16.mxu0 0
  %1678 = vmatmul.mubr.bf16.gmra.mrb[0].mxu0 %v1640
  %v1679 = vpop.f32.mrb[0].mxu0
  %v1680 = vadd.f32 0.0, %v1679
  %v1681 = vpop.f32.mrb[0].mxu0
  %v1682 = vpop.f32.mrb[0].mxu0
  %v1683 = vadd.f32 0.0, %v1682
  %v1684 = vpop.f32.mrb[0].mxu0
  %1685 = vmatprep.mubr.bf16.mxu0 0
  %1686 = vmatmul.mubr.bf16.gmra.mrb[0].mxu0 %v1643
  %v1687 = vpop.f32.mrb[0].mxu0
  %v1688 = vadd.f32 0.0, %v1687
  %v1689 = vpop.f32.mrb[0].mxu0
  %v1690 = vpop.f32.mrb[0].mxu0
  %v1691 = vadd.f32 0.0, %v1690
  %v1692 = vpop.f32.mrb[0].mxu0
  %1693 = vdwg.mxu0
  %v1694 = vadd.f32 %v1587, %v1680
  %v1695 = vadd.f32 %v1588, %v1683
  %v1696 = vadd.f32 %v1589, %v1688
  %v1697 = vadd.f32 %v1590, %v1691
  %s1698 = scalar_lea.vmem %s2, 96
  %1699 = vst [vmem:[%s1698] sm:$0xff] %v1694
  %1700 = vst [vmem:[%s1698 + $0x8] sm:$0xff] %v1695
  %1701 = vst [vmem:[%s1698 + $0x10] sm:$0xff] %v1696
  %1702 = vst [vmem:[%s1698 + $0x18] sm:$0xff] %v1697
  // Predicated region
  $region10: #{generator_forward.11} parent=0 // pred_check
    _
  $region11: #{generator_forward.11} parent=0 // pred_check_branch
    %1704 = sbr.rel (0) target = $region13
  $region12: #{generator_forward.11} parent=0 // pred_region
    _
  $region13: #{generator_forward.11} parent=0 // pred_fallthru
    _
  // Predicated region
  $region14: #{generator_forward.11} parent=0 // pred_check
    _
  $region15: #{generator_forward.11} parent=0 // pred_check_branch
    %1706 = sbr.rel (0) target = $region17
  $region16: #{generator_forward.11} parent=0 // pred_region
    _
  $region17: #{generator_forward.11} parent=0 // pred_fallthru
    _

// kernel: generator_forward.14
$region0: #{generator_forward.14}
  #allocation0 [shape = 'u32[]', space=smem, size = 0x4, offset = 0x4, fixed_abs, tag = 'smem constant byte address 0x4 - core index']
  #allocation1 [shape = 'u32[144,128]{1,0:T(1,128)}', space=vmem, size = 0x12000, scoped, tag = 'internal scratch']
  %s0 = inlined_call_operand.vmem [shape: f32[4,16,128], index: 0, kind: input, shape index: {}]
  %s1 = inlined_call_operand.vmem [shape: f32[16,1], index: 1, kind: input, shape index: {}]
  %s2 = inlined_call_operand.vmem [shape: f32[16,1], index: 2, kind: input, shape index: {}]
  %s3 = inlined_call_operand.vmem [shape: bf16[4,16,128], index: 3, kind: output, shape index: {}]
  %s4 = sld [smem:[#allocation0]]
  $region22: #{generator_forward.14} parent=0
    _
  %s6 = ssub.s32 1, %s4
  %s7 = scalar_select 0, %s6, %s4
  // Predicated region
  $region2: #{generator_forward.14} parent=0 // pred_check
    _
  $region3: #{generator_forward.14} parent=0 // pred_check_branch
    %9 = sbr.rel (0) target = $region5
  $region4: #{generator_forward.14} parent=0 // pred_region
    _
  $region5: #{generator_forward.14} parent=0 // pred_fallthru
    _
  // Predicated region
  $region6: #{generator_forward.14} parent=0 // pred_check
    _
  $region7: #{generator_forward.14} parent=0 // pred_check_branch
    %11 = sbr.rel (0) target = $region9
  $region8: #{generator_forward.14} parent=0 // pred_region
    _
  $region9: #{generator_forward.14} parent=0 // pred_fallthru
    _
  // Predicated region
  $region10: #{generator_forward.14} parent=0 // pred_check
    _
  $region11: #{generator_forward.14} parent=0 // pred_check_branch
    %13 = sbr.rel (0) target = $region13
  $region12: #{generator_forward.14} parent=0 // pred_region
    _
  $region13: #{generator_forward.14} parent=0 // pred_fallthru
    _
  %v14 = vld [vmem:[%s0] sm:$0xff]
  %v15 = vld [vmem:[%s0 + $0x8] sm:$0xff]
  %v16 = vld [vmem:[%s0 + $0x10] sm:$0xff]
  %v17 = vld [vmem:[%s0 + $0x18] sm:$0xff]
  %v18 = vld [vmem:[%s0 + $0x20] sm:$0xff]
  %v19 = vld [vmem:[%s0 + $0x28] sm:$0xff]
  %v20 = vld [vmem:[%s0 + $0x30] sm:$0xff]
  %v21 = vld [vmem:[%s0 + $0x38] sm:$0xff]
  %v22 = vld [vmem:[%s1] sm:$0xff]
  %v23 = vld [vmem:[%s1 + $0x8] sm:$0xff]
  %v24 = vld [vmem:[%s2] sm:$0xff]
  %v25 = vld [vmem:[%s2 + $0x8] sm:$0xff]
  %27 = vset.pattern.permute.xlu0 0
  %28 = vperm.xlu0 %27, %v22
  %v29 = vpop.permute.xlu0 %28
  %32 = vset.pattern.permute.xlu0 0
  %33 = vperm.xlu0 %32, %v23
  %v34 = vpop.permute.xlu0 %33
  %v36 = vmul.f32 %v14, %v29
  %v37 = vmul.f32 %v15, %v34
  %v38 = vmul.f32 %v16, %v29
  %v39 = vmul.f32 %v17, %v34
  %v40 = vmul.f32 %v18, %v29
  %v41 = vmul.f32 %v19, %v34
  %v42 = vmul.f32 %v20, %v29
  %v43 = vmul.f32 %v21, %v34
  %45 = vset.pattern.permute.xlu0 0
  %46 = vperm.xlu0 %45, %v24
  %v47 = vpop.permute.xlu0 %46
  %50 = vset.pattern.permute.xlu0 0
  %51 = vperm.xlu0 %50, %v25
  %v52 = vpop.permute.xlu0 %51
  %v54 = vadd.f32 %v36, %v47
  %v55 = vadd.f32 %v37, %v52
  %v56 = vadd.f32 %v38, %v47
  %v57 = vadd.f32 %v39, %v52
  %v58 = vadd.f32 %v40, %v47
  %v59 = vadd.f32 %v41, %v52
  %v60 = vadd.f32 %v42, %v47
  %v61 = vadd.f32 %v43, %v52
  %v62 = vmax.f32 %v54, 0.0
  %v63 = vmax.f32 %v55, 0.0
  %v64 = vmax.f32 %v56, 0.0
  %v65 = vmax.f32 %v57, 0.0
  %v66 = vmax.f32 %v58, 0.0
  %v67 = vmax.f32 %v59, 0.0
  %v68 = vmax.f32 %v60, 0.0
  %v69 = vmax.f32 %v61, 0.0
  %v70 = vpack.c.bf16 %v63, %v62
  %v71 = vpack.c.bf16 %v65, %v64
  %v72 = vpack.c.bf16 %v67, %v66
  %v73 = vpack.c.bf16 %v69, %v68
  %v78 = vunpack.c.l.b16 %v70
  %v79 = vunpack.c.h.b16 %v70
  %v80 = vunpack.c.l.b16 %v71
  %v81 = vunpack.c.h.b16 %v71
  %v82 = vunpack.c.l.b16 %v72
  %v83 = vunpack.c.h.b16 %v72
  %v84 = vunpack.c.l.b16 %v73
  %v85 = vunpack.c.h.b16 %v73
  %v86 = vpack.c.b16 %v78, %v78
  %v87 = vpack.c.b16 %v79, %v79
  %v88 = vpack.c.b16 %v80, %v80
  %v89 = vpack.c.b16 %v81, %v81
  %v90 = vpack.c.b16 %v82, %v82
  %v91 = vpack.c.b16 %v83, %v83
  %v92 = vpack.c.b16 %v84, %v84
  %v93 = vpack.c.b16 %v85, %v85
  %102 = vst [vmem:[%s3] sm:$0xf] %v86
  %103 = vst [vmem:[%s3 + $0x4] sm:$0xf] %v87
  %104 = vst [vmem:[%s3 + $0x8] sm:$0xf] %v88
  %105 = vst [vmem:[%s3 + $0xc] sm:$0xf] %v89
  %106 = vst [vmem:[%s3 + $0x10] sm:$0xf] %v90
  %107 = vst [vmem:[%s3 + $0x14] sm:$0xf] %v91
  %108 = vst [vmem:[%s3 + $0x18] sm:$0xf] %v92
  %109 = vst [vmem:[%s3 + $0x1c] sm:$0xf] %v93
  // Predicated region
  $region14: #{generator_forward.14} parent=0 // pred_check
    _
  $region15: #{generator_forward.14} parent=0 // pred_check_branch
    %111 = sbr.rel (0) target = $region17
  $region16: #{generator_forward.14} parent=0 // pred_region
    _
  $region17: #{generator_forward.14} parent=0 // pred_fallthru
    _
  // Predicated region
  $region18: #{generator_forward.14} parent=0 // pred_check
    _
  $region19: #{generator_forward.14} parent=0 // pred_check_branch
    %113 = sbr.rel (0) target = $region21
  $region20: #{generator_forward.14} parent=0 // pred_region
    _
  $region21: #{generator_forward.14} parent=0 // pred_fallthru
    _

// kernel: generator_forward.13
$region0: #{generator_forward.13}
  #allocation0 [shape = 'u32[]', space=smem, size = 0x4, offset = 0x4, fixed_abs, tag = 'smem constant byte address 0x4 - core index']
  #allocation1 [shape = 'u32[144,128]{1,0:T(1,128)}', space=vmem, size = 0x12000, scoped, tag = 'internal scratch']
  %s0 = inlined_call_operand.vmem [shape: bf16[9,32,128], index: 0, kind: input, shape index: {}]
  %s1 = inlined_call_operand.vmem [shape: bf16[4,4,16,32], index: 1, kind: input, shape index: {}]
  %s2 = inlined_call_operand.vmem [shape: f32[4,16,128], index: 2, kind: output, shape index: {}]
  %s3 = sld [smem:[#allocation0]]
  $region18: #{generator_forward.13} parent=0
    _
  %s5 = ssub.s32 1, %s3
  %s6 = scalar_select 0, %s5, %s3
  // Predicated region
  $region2: #{generator_forward.13} parent=0 // pred_check
    _
  $region3: #{generator_forward.13} parent=0 // pred_check_branch
    %8 = sbr.rel (0) target = $region5
  $region4: #{generator_forward.13} parent=0 // pred_region
    _
  $region5: #{generator_forward.13} parent=0 // pred_fallthru
    _
  // Predicated region
  $region6: #{generator_forward.13} parent=0 // pred_check
    _
  $region7: #{generator_forward.13} parent=0 // pred_check_branch
    %10 = sbr.rel (0) target = $region9
  $region8: #{generator_forward.13} parent=0 // pred_region
    _
  $region9: #{generator_forward.13} parent=0 // pred_fallthru
    _
  %v12 = vld [vmem:[%s1] sm:$0xf]
  %v13 = vld [vmem:[%s1 + $0x4] sm:$0xf]
  %v14 = vld [vmem:[%s0] sm:$0xf]
  %v15 = vld [vmem:[%s0 + $0x4] sm:$0xf]
  %v16 = vld [vmem:[%s0 + $0x8] sm:$0xf]
  %v17 = vld [vmem:[%s0 + $0xc] sm:$0xf]
  %s18 = scalar_lea.vmem %s1, 8
  %v19 = vld [vmem:[%s18] sm:$0xf]
  %v20 = vld [vmem:[%s18 + $0x4] sm:$0xf]
  %s21 = scalar_lea.vmem %s0, 16
  %v22 = vld [vmem:[%s21] sm:$0xf]
  %v23 = vld [vmem:[%s21 + $0x4] sm:$0xf]
  %v24 = vld [vmem:[%s21 + $0x8] sm:$0xf]
  %v25 = vld [vmem:[%s21 + $0xc] sm:$0xf]
  %v28 = vunpack.c.l.b16 %v19
  %v29 = vunpack.c.l.b16 %v20
  %v30 = vpack.c.b16 %v29, %v28
  %v35 = vunpack.c.l.b16 %v22
  %v36 = vunpack.c.l.b16 %v23
  %v37 = vunpack.c.l.b16 %v24
  %v38 = vunpack.c.l.b16 %v25
  %v39 = vpack.c.b16 %v36, %v35
  %v40 = vpack.c.b16 %v38, %v37
  %vm43 = vcmask 261120
  %v45 = vsel %vm43, %v30, 0
  %47 = vmatprep.subr.bf16.mxu0 0
  %48 = vmatpush1.bf16.msra.mxu0 %v39
  %49 = vmatprep.subr.bf16.mxu0 0
  %50 = vmatpush1.bf16.msra.mxu0 %v40
  %51 = vmatprep.subr.bf16.mxu0 0
  %52 = vmatpush1.bf16.msra.mxu0 0
  %53 = vmatprep.subr.bf16.mxu0 0
  %54 = vmatpush1.bf16.msra.mxu0 0
  %55 = vmatprep.subr.bf16.mxu0 0
  %56 = vmatpush1.bf16.msra.mxu0 0
  %57 = vmatprep.subr.bf16.mxu0 0
  %58 = vmatpush1.bf16.msra.mxu0 0
  %59 = vmatprep.subr.bf16.mxu0 0
  %60 = vmatpush1.bf16.msra.mxu0 0
  %61 = vmatprep.subr.bf16.mxu0 0
  %62 = vmatpush1.bf16.msra.mxu0 0
  %63 = vmatprep.subr.bf16.mxu0 0
  %64 = vmatpush1.bf16.msra.mxu0 0
  %65 = vmatprep.subr.bf16.mxu0 0
  %66 = vmatpush1.bf16.msra.mxu0 0
  %67 = vmatprep.subr.bf16.mxu0 0
  %68 = vmatpush1.bf16.msra.mxu0 0
  %69 = vmatprep.subr.bf16.mxu0 0
  %70 = vmatpush1.bf16.msra.mxu0 0
  %71 = vmatprep.subr.bf16.mxu0 0
  %72 = vmatpush1.bf16.msra.mxu0 0
  %73 = vmatprep.subr.bf16.mxu0 0
  %74 = vmatpush1.bf16.msra.mxu0 0
  %75 = vmatprep.subr.bf16.mxu0 0
  %76 = vmatpush1.bf16.msra.mxu0 0
  %77 = vmatprep.subr.bf16.mxu0 0
  %78 = vmatpush1.bf16.msra.mxu0 0
  %79 = vmatprep.mubr.bf16.mxu0 0
  %80 = vmatmul.mubr.bf16.gmra.mrb[0].mxu0 %v45
  %v81 = vpop.f32.mrb[0].mxu0
  %v82 = vadd.f32 0.0, %v81
  %v83 = vpop.f32.mrb[0].mxu0
  %v84 = vpop.f32.mrb[0].mxu0
  %v85 = vadd.f32 0.0, %v84
  %v86 = vpop.f32.mrb[0].mxu0
  %87 = vdwg.mxu0
  %v90 = vunpack.c.l.b16 %v12
  %v91 = vunpack.c.l.b16 %v13
  %v92 = vpack.c.b16 %v91, %v90
  %v97 = vunpack.c.l.b16 %v14
  %v98 = vunpack.c.l.b16 %v15
  %v99 = vunpack.c.l.b16 %v16
  %v100 = vunpack.c.l.b16 %v17
  %v101 = vpack.c.b16 %v98, %v97
  %v102 = vpack.c.b16 %v100, %v99
  %v106 = vsel %vm43, %v92, 0
  %108 = vmatprep.subr.bf16.mxu0 0
  %109 = vmatpush1.bf16.msra.mxu0 %v101
  %110 = vmatprep.subr.bf16.mxu0 0
  %111 = vmatpush1.bf16.msra.mxu0 %v102
  %112 = vmatprep.subr.bf16.mxu0 0
  %113 = vmatpush1.bf16.msra.mxu0 0
  %114 = vmatprep.subr.bf16.mxu0 0
  %115 = vmatpush1.bf16.msra.mxu0 0
  %116 = vmatprep.subr.bf16.mxu0 0
  %117 = vmatpush1.bf16.msra.mxu0 0
  %118 = vmatprep.subr.bf16.mxu0 0
  %119 = vmatpush1.bf16.msra.mxu0 0
  %120 = vmatprep.subr.bf16.mxu0 0
  %121 = vmatpush1.bf16.msra.mxu0 0
  %122 = vmatprep.subr.bf16.mxu0 0
  %123 = vmatpush1.bf16.msra.mxu0 0
  %124 = vmatprep.subr.bf16.mxu0 0
  %125 = vmatpush1.bf16.msra.mxu0 0
  %126 = vmatprep.subr.bf16.mxu0 0
  %127 = vmatpush1.bf16.msra.mxu0 0
  %128 = vmatprep.subr.bf16.mxu0 0
  %129 = vmatpush1.bf16.msra.mxu0 0
  %130 = vmatprep.subr.bf16.mxu0 0
  %131 = vmatpush1.bf16.msra.mxu0 0
  %132 = vmatprep.subr.bf16.mxu0 0
  %133 = vmatpush1.bf16.msra.mxu0 0
  %134 = vmatprep.subr.bf16.mxu0 0
  %135 = vmatpush1.bf16.msra.mxu0 0
  %136 = vmatprep.subr.bf16.mxu0 0
  %137 = vmatpush1.bf16.msra.mxu0 0
  %138 = vmatprep.subr.bf16.mxu0 0
  %139 = vmatpush1.bf16.msra.mxu0 0
  %140 = vmatprep.mubr.bf16.mxu0 0
  %141 = vmatmul.mubr.bf16.gmra.mrb[0].mxu0 %v106
  %v142 = vpop.f32.mrb[0].mxu0
  %v143 = vadd.f32 %v82, %v142
  %v144 = vpop.f32.mrb[0].mxu0
  %v145 = vpop.f32.mrb[0].mxu0
  %v146 = vadd.f32 %v85, %v145
  %v147 = vpop.f32.mrb[0].mxu0
  %148 = vdwg.mxu0
  %s149 = scalar_lea.vmem %s1, 16
  %v150 = vld [vmem:[%s149] sm:$0xf]
  %v151 = vld [vmem:[%s149 + $0x4] sm:$0xf]
  %s152 = scalar_lea.vmem %s0, 48
  %v153 = vld [vmem:[%s152] sm:$0xf]
  %v154 = vld [vmem:[%s152 + $0x4] sm:$0xf]
  %v155 = vld [vmem:[%s152 + $0x8] sm:$0xf]
  %v156 = vld [vmem:[%s152 + $0xc] sm:$0xf]
  %v159 = vunpack.c.l.b16 %v150
  %v160 = vunpack.c.l.b16 %v151
  %v161 = vpack.c.b16 %v160, %v159
  %v166 = vunpack.c.l.b16 %v153
  %v167 = vunpack.c.l.b16 %v154
  %v168 = vunpack.c.l.b16 %v155
  %v169 = vunpack.c.l.b16 %v156
  %v170 = vpack.c.b16 %v167, %v166
  %v171 = vpack.c.b16 %v169, %v168
  %v175 = vsel %vm43, %v161, 0
  %177 = vmatprep.subr.bf16.mxu0 0
  %178 = vmatpush1.bf16.msra.mxu0 %v170
  %179 = vmatprep.subr.bf16.mxu0 0
  %180 = vmatpush1.bf16.msra.mxu0 %v171
  %181 = vmatprep.subr.bf16.mxu0 0
  %182 = vmatpush1.bf16.msra.mxu0 0
  %183 = vmatprep.subr.bf16.mxu0 0
  %184 = vmatpush1.bf16.msra.mxu0 0
  %185 = vmatprep.subr.bf16.mxu0 0
  %186 = vmatpush1.bf16.msra.mxu0 0
  %187 = vmatprep.subr.bf16.mxu0 0
  %188 = vmatpush1.bf16.msra.mxu0 0
  %189 = vmatprep.subr.bf16.mxu0 0
  %190 = vmatpush1.bf16.msra.mxu0 0
  %191 = vmatprep.subr.bf16.mxu0 0
  %192 = vmatpush1.bf16.msra.mxu0 0
  %193 = vmatprep.subr.bf16.mxu0 0
  %194 = vmatpush1.bf16.msra.mxu0 0
  %195 = vmatprep.subr.bf16.mxu0 0
  %196 = vmatpush1.bf16.msra.mxu0 0
  %197 = vmatprep.subr.bf16.mxu0 0
  %198 = vmatpush1.bf16.msra.mxu0 0
  %199 = vmatprep.subr.bf16.mxu0 0
  %200 = vmatpush1.bf16.msra.mxu0 0
  %201 = vmatprep.subr.bf16.mxu0 0
  %202 = vmatpush1.bf16.msra.mxu0 0
  %203 = vmatprep.subr.bf16.mxu0 0
  %204 = vmatpush1.bf16.msra.mxu0 0
  %205 = vmatprep.subr.bf16.mxu0 0
  %206 = vmatpush1.bf16.msra.mxu0 0
  %207 = vmatprep.subr.bf16.mxu0 0
  %208 = vmatpush1.bf16.msra.mxu0 0
  %209 = vmatprep.mubr.bf16.mxu0 0
  %210 = vmatmul.mubr.bf16.gmra.mrb[0].mxu0 %v175
  %v211 = vpop.f32.mrb[0].mxu0
  %v212 = vadd.f32 0.0, %v211
  %v213 = vpop.f32.mrb[0].mxu0
  %v214 = vpop.f32.mrb[0].mxu0
  %v215 = vadd.f32 0.0, %v214
  %v216 = vpop.f32.mrb[0].mxu0
  %217 = vdwg.mxu0
  %v218 = vadd.f32 %v143, %v212
  %v219 = vadd.f32 %v146, %v215
  %s220 = scalar_lea.vmem %s1, 24
  %v221 = vld [vmem:[%s220] sm:$0xf]
  %v222 = vld [vmem:[%s220 + $0x4] sm:$0xf]
  %s223 = scalar_lea.vmem %s0, 64
  %v224 = vld [vmem:[%s223] sm:$0xf]
  %v225 = vld [vmem:[%s223 + $0x4] sm:$0xf]
  %v226 = vld [vmem:[%s223 + $0x8] sm:$0xf]
  %v227 = vld [vmem:[%s223 + $0xc] sm:$0xf]
  %v230 = vunpack.c.l.b16 %v221
  %v231 = vunpack.c.l.b16 %v222
  %v232 = vpack.c.b16 %v231, %v230
  %v237 = vunpack.c.l.b16 %v224
  %v238 = vunpack.c.l.b16 %v225
  %v239 = vunpack.c.l.b16 %v226
  %v240 = vunpack.c.l.b16 %v227
  %v241 = vpack.c.b16 %v238, %v237
  %v242 = vpack.c.b16 %v240, %v239
  %v246 = vsel %vm43, %v232, 0
  %248 = vmatprep.subr.bf16.mxu0 0
  %249 = vmatpush1.bf16.msra.mxu0 %v241
  %250 = vmatprep.subr.bf16.mxu0 0
  %251 = vmatpush1.bf16.msra.mxu0 %v242
  %252 = vmatprep.subr.bf16.mxu0 0
  %253 = vmatpush1.bf16.msra.mxu0 0
  %254 = vmatprep.subr.bf16.mxu0 0
  %255 = vmatpush1.bf16.msra.mxu0 0
  %256 = vmatprep.subr.bf16.mxu0 0
  %257 = vmatpush1.bf16.msra.mxu0 0
  %258 = vmatprep.subr.bf16.mxu0 0
  %259 = vmatpush1.bf16.msra.mxu0 0
  %260 = vmatprep.subr.bf16.mxu0 0
  %261 = vmatpush1.bf16.msra.mxu0 0
  %262 = vmatprep.subr.bf16.mxu0 0
  %263 = vmatpush1.bf16.msra.mxu0 0
  %264 = vmatprep.subr.bf16.mxu0 0
  %265 = vmatpush1.bf16.msra.mxu0 0
  %266 = vmatprep.subr.bf16.mxu0 0
  %267 = vmatpush1.bf16.msra.mxu0 0
  %268 = vmatprep.subr.bf16.mxu0 0
  %269 = vmatpush1.bf16.msra.mxu0 0
  %270 = vmatprep.subr.bf16.mxu0 0
  %271 = vmatpush1.bf16.msra.mxu0 0
  %272 = vmatprep.subr.bf16.mxu0 0
  %273 = vmatpush1.bf16.msra.mxu0 0
  %274 = vmatprep.subr.bf16.mxu0 0
  %275 = vmatpush1.bf16.msra.mxu0 0
  %276 = vmatprep.subr.bf16.mxu0 0
  %277 = vmatpush1.bf16.msra.mxu0 0
  %278 = vmatprep.subr.bf16.mxu0 0
  %279 = vmatpush1.bf16.msra.mxu0 0
  %280 = vmatprep.mubr.bf16.mxu0 0
  %281 = vmatmul.mubr.bf16.gmra.mrb[0].mxu0 %v246
  %v282 = vpop.f32.mrb[0].mxu0
  %v283 = vadd.f32 0.0, %v282
  %v284 = vpop.f32.mrb[0].mxu0
  %v285 = vpop.f32.mrb[0].mxu0
  %v286 = vadd.f32 0.0, %v285
  %v287 = vpop.f32.mrb[0].mxu0
  %288 = vdwg.mxu0
  %v289 = vadd.f32 %v218, %v283
  %v290 = vadd.f32 %v219, %v286
  %291 = vst [vmem:[%s2] sm:$0xff] %v289
  %292 = vst [vmem:[%s2 + $0x8] sm:$0xff] %v290
  %s293 = scalar_lea.vmem %s1, 32
  %v294 = vld [vmem:[%s293] sm:$0xf]
  %v295 = vld [vmem:[%s293 + $0x4] sm:$0xf]
  %v296 = vld [vmem:[%s21] sm:$0xf]
  %v297 = vld [vmem:[%s21 + $0x4] sm:$0xf]
  %v298 = vld [vmem:[%s21 + $0x8] sm:$0xf]
  %v299 = vld [vmem:[%s21 + $0xc] sm:$0xf]
  %s300 = scalar_lea.vmem %s1, 40
  %v301 = vld [vmem:[%s300] sm:$0xf]
  %v302 = vld [vmem:[%s300 + $0x4] sm:$0xf]
  %s303 = scalar_lea.vmem %s0, 32
  %v304 = vld [vmem:[%s303] sm:$0xf]
  %v305 = vld [vmem:[%s303 + $0x4] sm:$0xf]
  %v306 = vld [vmem:[%s303 + $0x8] sm:$0xf]
  %v307 = vld [vmem:[%s303 + $0xc] sm:$0xf]
  %v310 = vunpack.c.l.b16 %v301
  %v311 = vunpack.c.l.b16 %v302
  %v312 = vpack.c.b16 %v311, %v310
  %v317 = vunpack.c.l.b16 %v304
  %v318 = vunpack.c.l.b16 %v305
  %v319 = vunpack.c.l.b16 %v306
  %v320 = vunpack.c.l.b16 %v307
  %v321 = vpack.c.b16 %v318, %v317
  %v322 = vpack.c.b16 %v320, %v319
  %v326 = vsel %vm43, %v312, 0
  %328 = vmatprep.subr.bf16.mxu0 0
  %329 = vmatpush1.bf16.msra.mxu0 %v321
  %330 = vmatprep.subr.bf16.mxu0 0
  %331 = vmatpush1.bf16.msra.mxu0 %v322
  %332 = vmatprep.subr.bf16.mxu0 0
  %333 = vmatpush1.bf16.msra.mxu0 0
  %334 = vmatprep.subr.bf16.mxu0 0
  %335 = vmatpush1.bf16.msra.mxu0 0
  %336 = vmatprep.subr.bf16.mxu0 0
  %337 = vmatpush1.bf16.msra.mxu0 0
  %338 = vmatprep.subr.bf16.mxu0 0
  %339 = vmatpush1.bf16.msra.mxu0 0
  %340 = vmatprep.subr.bf16.mxu0 0
  %341 = vmatpush1.bf16.msra.mxu0 0
  %342 = vmatprep.subr.bf16.mxu0 0
  %343 = vmatpush1.bf16.msra.mxu0 0
  %344 = vmatprep.subr.bf16.mxu0 0
  %345 = vmatpush1.bf16.msra.mxu0 0
  %346 = vmatprep.subr.bf16.mxu0 0
  %347 = vmatpush1.bf16.msra.mxu0 0
  %348 = vmatprep.subr.bf16.mxu0 0
  %349 = vmatpush1.bf16.msra.mxu0 0
  %350 = vmatprep.subr.bf16.mxu0 0
  %351 = vmatpush1.bf16.msra.mxu0 0
  %352 = vmatprep.subr.bf16.mxu0 0
  %353 = vmatpush1.bf16.msra.mxu0 0
  %354 = vmatprep.subr.bf16.mxu0 0
  %355 = vmatpush1.bf16.msra.mxu0 0
  %356 = vmatprep.subr.bf16.mxu0 0
  %357 = vmatpush1.bf16.msra.mxu0 0
  %358 = vmatprep.subr.bf16.mxu0 0
  %359 = vmatpush1.bf16.msra.mxu0 0
  %360 = vmatprep.mubr.bf16.mxu0 0
  %361 = vmatmul.mubr.bf16.gmra.mrb[0].mxu0 %v326
  %v362 = vpop.f32.mrb[0].mxu0
  %v363 = vadd.f32 0.0, %v362
  %v364 = vpop.f32.mrb[0].mxu0
  %v365 = vpop.f32.mrb[0].mxu0
  %v366 = vadd.f32 0.0, %v365
  %v367 = vpop.f32.mrb[0].mxu0
  %368 = vdwg.mxu0
  %v371 = vunpack.c.l.b16 %v294
  %v372 = vunpack.c.l.b16 %v295
  %v373 = vpack.c.b16 %v372, %v371
  %v378 = vunpack.c.l.b16 %v296
  %v379 = vunpack.c.l.b16 %v297
  %v380 = vunpack.c.l.b16 %v298
  %v381 = vunpack.c.l.b16 %v299
  %v382 = vpack.c.b16 %v379, %v378
  %v383 = vpack.c.b16 %v381, %v380
  %v387 = vsel %vm43, %v373, 0
  %389 = vmatprep.subr.bf16.mxu0 0
  %390 = vmatpush1.bf16.msra.mxu0 %v382
  %391 = vmatprep.subr.bf16.mxu0 0
  %392 = vmatpush1.bf16.msra.mxu0 %v383
  %393 = vmatprep.subr.bf16.mxu0 0
  %394 = vmatpush1.bf16.msra.mxu0 0
  %395 = vmatprep.subr.bf16.mxu0 0
  %396 = vmatpush1.bf16.msra.mxu0 0
  %397 = vmatprep.subr.bf16.mxu0 0
  %398 = vmatpush1.bf16.msra.mxu0 0
  %399 = vmatprep.subr.bf16.mxu0 0
  %400 = vmatpush1.bf16.msra.mxu0 0
  %401 = vmatprep.subr.bf16.mxu0 0
  %402 = vmatpush1.bf16.msra.mxu0 0
  %403 = vmatprep.subr.bf16.mxu0 0
  %404 = vmatpush1.bf16.msra.mxu0 0
  %405 = vmatprep.subr.bf16.mxu0 0
  %406 = vmatpush1.bf16.msra.mxu0 0
  %407 = vmatprep.subr.bf16.mxu0 0
  %408 = vmatpush1.bf16.msra.mxu0 0
  %409 = vmatprep.subr.bf16.mxu0 0
  %410 = vmatpush1.bf16.msra.mxu0 0
  %411 = vmatprep.subr.bf16.mxu0 0
  %412 = vmatpush1.bf16.msra.mxu0 0
  %413 = vmatprep.subr.bf16.mxu0 0
  %414 = vmatpush1.bf16.msra.mxu0 0
  %415 = vmatprep.subr.bf16.mxu0 0
  %416 = vmatpush1.bf16.msra.mxu0 0
  %417 = vmatprep.subr.bf16.mxu0 0
  %418 = vmatpush1.bf16.msra.mxu0 0
  %419 = vmatprep.subr.bf16.mxu0 0
  %420 = vmatpush1.bf16.msra.mxu0 0
  %421 = vmatprep.mubr.bf16.mxu0 0
  %422 = vmatmul.mubr.bf16.gmra.mrb[0].mxu0 %v387
  %v423 = vpop.f32.mrb[0].mxu0
  %v424 = vadd.f32 %v363, %v423
  %v425 = vpop.f32.mrb[0].mxu0
  %v426 = vpop.f32.mrb[0].mxu0
  %v427 = vadd.f32 %v366, %v426
  %v428 = vpop.f32.mrb[0].mxu0
  %429 = vdwg.mxu0
  %s430 = scalar_lea.vmem %s1, 48
  %v431 = vld [vmem:[%s430] sm:$0xf]
  %v432 = vld [vmem:[%s430 + $0x4] sm:$0xf]
  %v433 = vld [vmem:[%s223] sm:$0xf]
  %v434 = vld [vmem:[%s223 + $0x4] sm:$0xf]
  %v435 = vld [vmem:[%s223 + $0x8] sm:$0xf]
  %v436 = vld [vmem:[%s223 + $0xc] sm:$0xf]
  %v439 = vunpack.c.l.b16 %v431
  %v440 = vunpack.c.l.b16 %v432
  %v441 = vpack.c.b16 %v440, %v439
  %v446 = vunpack.c.l.b16 %v433
  %v447 = vunpack.c.l.b16 %v434
  %v448 = vunpack.c.l.b16 %v435
  %v449 = vunpack.c.l.b16 %v436
  %v450 = vpack.c.b16 %v447, %v446
  %v451 = vpack.c.b16 %v449, %v448
  %v455 = vsel %vm43, %v441, 0
  %457 = vmatprep.subr.bf16.mxu0 0
  %458 = vmatpush1.bf16.msra.mxu0 %v450
  %459 = vmatprep.subr.bf16.mxu0 0
  %460 = vmatpush1.bf16.msra.mxu0 %v451
  %461 = vmatprep.subr.bf16.mxu0 0
  %462 = vmatpush1.bf16.msra.mxu0 0
  %463 = vmatprep.subr.bf16.mxu0 0
  %464 = vmatpush1.bf16.msra.mxu0 0
  %465 = vmatprep.subr.bf16.mxu0 0
  %466 = vmatpush1.bf16.msra.mxu0 0
  %467 = vmatprep.subr.bf16.mxu0 0
  %468 = vmatpush1.bf16.msra.mxu0 0
  %469 = vmatprep.subr.bf16.mxu0 0
  %470 = vmatpush1.bf16.msra.mxu0 0
  %471 = vmatprep.subr.bf16.mxu0 0
  %472 = vmatpush1.bf16.msra.mxu0 0
  %473 = vmatprep.subr.bf16.mxu0 0
  %474 = vmatpush1.bf16.msra.mxu0 0
  %475 = vmatprep.subr.bf16.mxu0 0
  %476 = vmatpush1.bf16.msra.mxu0 0
  %477 = vmatprep.subr.bf16.mxu0 0
  %478 = vmatpush1.bf16.msra.mxu0 0
  %479 = vmatprep.subr.bf16.mxu0 0
  %480 = vmatpush1.bf16.msra.mxu0 0
  %481 = vmatprep.subr.bf16.mxu0 0
  %482 = vmatpush1.bf16.msra.mxu0 0
  %483 = vmatprep.subr.bf16.mxu0 0
  %484 = vmatpush1.bf16.msra.mxu0 0
  %485 = vmatprep.subr.bf16.mxu0 0
  %486 = vmatpush1.bf16.msra.mxu0 0
  %487 = vmatprep.subr.bf16.mxu0 0
  %488 = vmatpush1.bf16.msra.mxu0 0
  %489 = vmatprep.mubr.bf16.mxu0 0
  %490 = vmatmul.mubr.bf16.gmra.mrb[0].mxu0 %v455
  %v491 = vpop.f32.mrb[0].mxu0
  %v492 = vadd.f32 0.0, %v491
  %v493 = vpop.f32.mrb[0].mxu0
  %v494 = vpop.f32.mrb[0].mxu0
  %v495 = vadd.f32 0.0, %v494
  %v496 = vpop.f32.mrb[0].mxu0
  %497 = vdwg.mxu0
  %v498 = vadd.f32 %v424, %v492
  %v499 = vadd.f32 %v427, %v495
  %s500 = scalar_lea.vmem %s1, 56
  %v501 = vld [vmem:[%s500] sm:$0xf]
  %v502 = vld [vmem:[%s500 + $0x4] sm:$0xf]
  %s503 = scalar_lea.vmem %s0, 80
  %v504 = vld [vmem:[%s503] sm:$0xf]
  %v505 = vld [vmem:[%s503 + $0x4] sm:$0xf]
  %v506 = vld [vmem:[%s503 + $0x8] sm:$0xf]
  %v507 = vld [vmem:[%s503 + $0xc] sm:$0xf]
  %v510 = vunpack.c.l.b16 %v501
  %v511 = vunpack.c.l.b16 %v502
  %v512 = vpack.c.b16 %v511, %v510
  %v517 = vunpack.c.l.b16 %v504
  %v518 = vunpack.c.l.b16 %v505
  %v519 = vunpack.c.l.b16 %v506
  %v520 = vunpack.c.l.b16 %v507
  %v521 = vpack.c.b16 %v518, %v517
  %v522 = vpack.c.b16 %v520, %v519
  %v526 = vsel %vm43, %v512, 0
  %528 = vmatprep.subr.bf16.mxu0 0
  %529 = vmatpush1.bf16.msra.mxu0 %v521
  %530 = vmatprep.subr.bf16.mxu0 0
  %531 = vmatpush1.bf16.msra.mxu0 %v522
  %532 = vmatprep.subr.bf16.mxu0 0
  %533 = vmatpush1.bf16.msra.mxu0 0
  %534 = vmatprep.subr.bf16.mxu0 0
  %535 = vmatpush1.bf16.msra.mxu0 0
  %536 = vmatprep.subr.bf16.mxu0 0
  %537 = vmatpush1.bf16.msra.mxu0 0
  %538 = vmatprep.subr.bf16.mxu0 0
  %539 = vmatpush1.bf16.msra.mxu0 0
  %540 = vmatprep.subr.bf16.mxu0 0
  %541 = vmatpush1.bf16.msra.mxu0 0
  %542 = vmatprep.subr.bf16.mxu0 0
  %543 = vmatpush1.bf16.msra.mxu0 0
  %544 = vmatprep.subr.bf16.mxu0 0
  %545 = vmatpush1.bf16.msra.mxu0 0
  %546 = vmatprep.subr.bf16.mxu0 0
  %547 = vmatpush1.bf16.msra.mxu0 0
  %548 = vmatprep.subr.bf16.mxu0 0
  %549 = vmatpush1.bf16.msra.mxu0 0
  %550 = vmatprep.subr.bf16.mxu0 0
  %551 = vmatpush1.bf16.msra.mxu0 0
  %552 = vmatprep.subr.bf16.mxu0 0
  %553 = vmatpush1.bf16.msra.mxu0 0
  %554 = vmatprep.subr.bf16.mxu0 0
  %555 = vmatpush1.bf16.msra.mxu0 0
  %556 = vmatprep.subr.bf16.mxu0 0
  %557 = vmatpush1.bf16.msra.mxu0 0
  %558 = vmatprep.subr.bf16.mxu0 0
  %559 = vmatpush1.bf16.msra.mxu0 0
  %560 = vmatprep.mubr.bf16.mxu0 0
  %561 = vmatmul.mubr.bf16.gmra.mrb[0].mxu0 %v526
  %v562 = vpop.f32.mrb[0].mxu0
  %v563 = vadd.f32 0.0, %v562
  %v564 = vpop.f32.mrb[0].mxu0
  %v565 = vpop.f32.mrb[0].mxu0
  %v566 = vadd.f32 0.0, %v565
  %v567 = vpop.f32.mrb[0].mxu0
  %568 = vdwg.mxu0
  %v569 = vadd.f32 %v498, %v563
  %v570 = vadd.f32 %v499, %v566
  %s571 = scalar_lea.vmem %s2, 16
  %572 = vst [vmem:[%s571] sm:$0xff] %v569
  %573 = vst [vmem:[%s571 + $0x8] sm:$0xff] %v570
  %s574 = scalar_lea.vmem %s1, 64
  %v575 = vld [vmem:[%s574] sm:$0xf]
  %v576 = vld [vmem:[%s574 + $0x4] sm:$0xf]
  %v577 = vld [vmem:[%s152] sm:$0xf]
  %v578 = vld [vmem:[%s152 + $0x4] sm:$0xf]
  %v579 = vld [vmem:[%s152 + $0x8] sm:$0xf]
  %v580 = vld [vmem:[%s152 + $0xc] sm:$0xf]
  %s581 = scalar_lea.vmem %s1, 72
  %v582 = vld [vmem:[%s581] sm:$0xf]
  %v583 = vld [vmem:[%s581 + $0x4] sm:$0xf]
  %v584 = vld [vmem:[%s223] sm:$0xf]
  %v585 = vld [vmem:[%s223 + $0x4] sm:$0xf]
  %v586 = vld [vmem:[%s223 + $0x8] sm:$0xf]
  %v587 = vld [vmem:[%s223 + $0xc] sm:$0xf]
  %v590 = vunpack.c.l.b16 %v582
  %v591 = vunpack.c.l.b16 %v583
  %v592 = vpack.c.b16 %v591, %v590
  %v597 = vunpack.c.l.b16 %v584
  %v598 = vunpack.c.l.b16 %v585
  %v599 = vunpack.c.l.b16 %v586
  %v600 = vunpack.c.l.b16 %v587
  %v601 = vpack.c.b16 %v598, %v597
  %v602 = vpack.c.b16 %v600, %v599
  %v606 = vsel %vm43, %v592, 0
  %608 = vmatprep.subr.bf16.mxu0 0
  %609 = vmatpush1.bf16.msra.mxu0 %v601
  %610 = vmatprep.subr.bf16.mxu0 0
  %611 = vmatpush1.bf16.msra.mxu0 %v602
  %612 = vmatprep.subr.bf16.mxu0 0
  %613 = vmatpush1.bf16.msra.mxu0 0
  %614 = vmatprep.subr.bf16.mxu0 0
  %615 = vmatpush1.bf16.msra.mxu0 0
  %616 = vmatprep.subr.bf16.mxu0 0
  %617 = vmatpush1.bf16.msra.mxu0 0
  %618 = vmatprep.subr.bf16.mxu0 0
  %619 = vmatpush1.bf16.msra.mxu0 0
  %620 = vmatprep.subr.bf16.mxu0 0
  %621 = vmatpush1.bf16.msra.mxu0 0
  %622 = vmatprep.subr.bf16.mxu0 0
  %623 = vmatpush1.bf16.msra.mxu0 0
  %624 = vmatprep.subr.bf16.mxu0 0
  %625 = vmatpush1.bf16.msra.mxu0 0
  %626 = vmatprep.subr.bf16.mxu0 0
  %627 = vmatpush1.bf16.msra.mxu0 0
  %628 = vmatprep.subr.bf16.mxu0 0
  %629 = vmatpush1.bf16.msra.mxu0 0
  %630 = vmatprep.subr.bf16.mxu0 0
  %631 = vmatpush1.bf16.msra.mxu0 0
  %632 = vmatprep.subr.bf16.mxu0 0
  %633 = vmatpush1.bf16.msra.mxu0 0
  %634 = vmatprep.subr.bf16.mxu0 0
  %635 = vmatpush1.bf16.msra.mxu0 0
  %636 = vmatprep.subr.bf16.mxu0 0
  %637 = vmatpush1.bf16.msra.mxu0 0
  %638 = vmatprep.subr.bf16.mxu0 0
  %639 = vmatpush1.bf16.msra.mxu0 0
  %640 = vmatprep.mubr.bf16.mxu0 0
  %641 = vmatmul.mubr.bf16.gmra.mrb[0].mxu0 %v606
  %v642 = vpop.f32.mrb[0].mxu0
  %v643 = vadd.f32 0.0, %v642
  %v644 = vpop.f32.mrb[0].mxu0
  %v645 = vpop.f32.mrb[0].mxu0
  %v646 = vadd.f32 0.0, %v645
  %v647 = vpop.f32.mrb[0].mxu0
  %648 = vdwg.mxu0
  %v651 = vunpack.c.l.b16 %v575
  %v652 = vunpack.c.l.b16 %v576
  %v653 = vpack.c.b16 %v652, %v651
  %v658 = vunpack.c.l.b16 %v577
  %v659 = vunpack.c.l.b16 %v578
  %v660 = vunpack.c.l.b16 %v579
  %v661 = vunpack.c.l.b16 %v580
  %v662 = vpack.c.b16 %v659, %v658
  %v663 = vpack.c.b16 %v661, %v660
  %v667 = vsel %vm43, %v653, 0
  %669 = vmatprep.subr.bf16.mxu0 0
  %670 = vmatpush1.bf16.msra.mxu0 %v662
  %671 = vmatprep.subr.bf16.mxu0 0
  %672 = vmatpush1.bf16.msra.mxu0 %v663
  %673 = vmatprep.subr.bf16.mxu0 0
  %674 = vmatpush1.bf16.msra.mxu0 0
  %675 = vmatprep.subr.bf16.mxu0 0
  %676 = vmatpush1.bf16.msra.mxu0 0
  %677 = vmatprep.subr.bf16.mxu0 0
  %678 = vmatpush1.bf16.msra.mxu0 0
  %679 = vmatprep.subr.bf16.mxu0 0
  %680 = vmatpush1.bf16.msra.mxu0 0
  %681 = vmatprep.subr.bf16.mxu0 0
  %682 = vmatpush1.bf16.msra.mxu0 0
  %683 = vmatprep.subr.bf16.mxu0 0
  %684 = vmatpush1.bf16.msra.mxu0 0
  %685 = vmatprep.subr.bf16.mxu0 0
  %686 = vmatpush1.bf16.msra.mxu0 0
  %687 = vmatprep.subr.bf16.mxu0 0
  %688 = vmatpush1.bf16.msra.mxu0 0
  %689 = vmatprep.subr.bf16.mxu0 0
  %690 = vmatpush1.bf16.msra.mxu0 0
  %691 = vmatprep.subr.bf16.mxu0 0
  %692 = vmatpush1.bf16.msra.mxu0 0
  %693 = vmatprep.subr.bf16.mxu0 0
  %694 = vmatpush1.bf16.msra.mxu0 0
  %695 = vmatprep.subr.bf16.mxu0 0
  %696 = vmatpush1.bf16.msra.mxu0 0
  %697 = vmatprep.subr.bf16.mxu0 0
  %698 = vmatpush1.bf16.msra.mxu0 0
  %699 = vmatprep.subr.bf16.mxu0 0
  %700 = vmatpush1.bf16.msra.mxu0 0
  %701 = vmatprep.mubr.bf16.mxu0 0
  %702 = vmatmul.mubr.bf16.gmra.mrb[0].mxu0 %v667
  %v703 = vpop.f32.mrb[0].mxu0
  %v704 = vadd.f32 %v643, %v703
  %v705 = vpop.f32.mrb[0].mxu0
  %v706 = vpop.f32.mrb[0].mxu0
  %v707 = vadd.f32 %v646, %v706
  %v708 = vpop.f32.mrb[0].mxu0
  %709 = vdwg.mxu0
  %s710 = scalar_lea.vmem %s1, 80
  %v711 = vld [vmem:[%s710] sm:$0xf]
  %v712 = vld [vmem:[%s710 + $0x4] sm:$0xf]
  %s713 = scalar_lea.vmem %s0, 96
  %v714 = vld [vmem:[%s713] sm:$0xf]
  %v715 = vld [vmem:[%s713 + $0x4] sm:$0xf]
  %v716 = vld [vmem:[%s713 + $0x8] sm:$0xf]
  %v717 = vld [vmem:[%s713 + $0xc] sm:$0xf]
  %v720 = vunpack.c.l.b16 %v711
  %v721 = vunpack.c.l.b16 %v712
  %v722 = vpack.c.b16 %v721, %v720
  %v727 = vunpack.c.l.b16 %v714
  %v728 = vunpack.c.l.b16 %v715
  %v729 = vunpack.c.l.b16 %v716
  %v730 = vunpack.c.l.b16 %v717
  %v731 = vpack.c.b16 %v728, %v727
  %v732 = vpack.c.b16 %v730, %v729
  %v736 = vsel %vm43, %v722, 0
  %738 = vmatprep.subr.bf16.mxu0 0
  %739 = vmatpush1.bf16.msra.mxu0 %v731
  %740 = vmatprep.subr.bf16.mxu0 0
  %741 = vmatpush1.bf16.msra.mxu0 %v732
  %742 = vmatprep.subr.bf16.mxu0 0
  %743 = vmatpush1.bf16.msra.mxu0 0
  %744 = vmatprep.subr.bf16.mxu0 0
  %745 = vmatpush1.bf16.msra.mxu0 0
  %746 = vmatprep.subr.bf16.mxu0 0
  %747 = vmatpush1.bf16.msra.mxu0 0
  %748 = vmatprep.subr.bf16.mxu0 0
  %749 = vmatpush1.bf16.msra.mxu0 0
  %750 = vmatprep.subr.bf16.mxu0 0
  %751 = vmatpush1.bf16.msra.mxu0 0
  %752 = vmatprep.subr.bf16.mxu0 0
  %753 = vmatpush1.bf16.msra.mxu0 0
  %754 = vmatprep.subr.bf16.mxu0 0
  %755 = vmatpush1.bf16.msra.mxu0 0
  %756 = vmatprep.subr.bf16.mxu0 0
  %757 = vmatpush1.bf16.msra.mxu0 0
  %758 = vmatprep.subr.bf16.mxu0 0
  %759 = vmatpush1.bf16.msra.mxu0 0
  %760 = vmatprep.subr.bf16.mxu0 0
  %761 = vmatpush1.bf16.msra.mxu0 0
  %762 = vmatprep.subr.bf16.mxu0 0
  %763 = vmatpush1.bf16.msra.mxu0 0
  %764 = vmatprep.subr.bf16.mxu0 0
  %765 = vmatpush1.bf16.msra.mxu0 0
  %766 = vmatprep.subr.bf16.mxu0 0
  %767 = vmatpush1.bf16.msra.mxu0 0
  %768 = vmatprep.subr.bf16.mxu0 0
  %769 = vmatpush1.bf16.msra.mxu0 0
  %770 = vmatprep.mubr.bf16.mxu0 0
  %771 = vmatmul.mubr.bf16.gmra.mrb[0].mxu0 %v736
  %v772 = vpop.f32.mrb[0].mxu0
  %v773 = vadd.f32 0.0, %v772
  %v774 = vpop.f32.mrb[0].mxu0
  %v775 = vpop.f32.mrb[0].mxu0
  %v776 = vadd.f32 0.0, %v775
  %v777 = vpop.f32.mrb[0].mxu0
  %778 = vdwg.mxu0
  %v779 = vadd.f32 %v704, %v773
  %v780 = vadd.f32 %v707, %v776
  %s781 = scalar_lea.vmem %s1, 88
  %v782 = vld [vmem:[%s781] sm:$0xf]
  %v783 = vld [vmem:[%s781 + $0x4] sm:$0xf]
  %s784 = scalar_lea.vmem %s0, 112
  %v785 = vld [vmem:[%s784] sm:$0xf]
  %v786 = vld [vmem:[%s784 + $0x4] sm:$0xf]
  %v787 = vld [vmem:[%s784 + $0x8] sm:$0xf]
  %v788 = vld [vmem:[%s784 + $0xc] sm:$0xf]
  %v791 = vunpack.c.l.b16 %v782
  %v792 = vunpack.c.l.b16 %v783
  %v793 = vpack.c.b16 %v792, %v791
  %v798 = vunpack.c.l.b16 %v785
  %v799 = vunpack.c.l.b16 %v786
  %v800 = vunpack.c.l.b16 %v787
  %v801 = vunpack.c.l.b16 %v788
  %v802 = vpack.c.b16 %v799, %v798
  %v803 = vpack.c.b16 %v801, %v800
  %v807 = vsel %vm43, %v793, 0
  %809 = vmatprep.subr.bf16.mxu0 0
  %810 = vmatpush1.bf16.msra.mxu0 %v802
  %811 = vmatprep.subr.bf16.mxu0 0
  %812 = vmatpush1.bf16.msra.mxu0 %v803
  %813 = vmatprep.subr.bf16.mxu0 0
  %814 = vmatpush1.bf16.msra.mxu0 0
  %815 = vmatprep.subr.bf16.mxu0 0
  %816 = vmatpush1.bf16.msra.mxu0 0
  %817 = vmatprep.subr.bf16.mxu0 0
  %818 = vmatpush1.bf16.msra.mxu0 0
  %819 = vmatprep.subr.bf16.mxu0 0
  %820 = vmatpush1.bf16.msra.mxu0 0
  %821 = vmatprep.subr.bf16.mxu0 0
  %822 = vmatpush1.bf16.msra.mxu0 0
  %823 = vmatprep.subr.bf16.mxu0 0
  %824 = vmatpush1.bf16.msra.mxu0 0
  %825 = vmatprep.subr.bf16.mxu0 0
  %826 = vmatpush1.bf16.msra.mxu0 0
  %827 = vmatprep.subr.bf16.mxu0 0
  %828 = vmatpush1.bf16.msra.mxu0 0
  %829 = vmatprep.subr.bf16.mxu0 0
  %830 = vmatpush1.bf16.msra.mxu0 0
  %831 = vmatprep.subr.bf16.mxu0 0
  %832 = vmatpush1.bf16.msra.mxu0 0
  %833 = vmatprep.subr.bf16.mxu0 0
  %834 = vmatpush1.bf16.msra.mxu0 0
  %835 = vmatprep.subr.bf16.mxu0 0
  %836 = vmatpush1.bf16.msra.mxu0 0
  %837 = vmatprep.subr.bf16.mxu0 0
  %838 = vmatpush1.bf16.msra.mxu0 0
  %839 = vmatprep.subr.bf16.mxu0 0
  %840 = vmatpush1.bf16.msra.mxu0 0
  %841 = vmatprep.mubr.bf16.mxu0 0
  %842 = vmatmul.mubr.bf16.gmra.mrb[0].mxu0 %v807
  %v843 = vpop.f32.mrb[0].mxu0
  %v844 = vadd.f32 0.0, %v843
  %v845 = vpop.f32.mrb[0].mxu0
  %v846 = vpop.f32.mrb[0].mxu0
  %v847 = vadd.f32 0.0, %v846
  %v848 = vpop.f32.mrb[0].mxu0
  %849 = vdwg.mxu0
  %v850 = vadd.f32 %v779, %v844
  %v851 = vadd.f32 %v780, %v847
  %s852 = scalar_lea.vmem %s2, 32
  %853 = vst [vmem:[%s852] sm:$0xff] %v850
  %854 = vst [vmem:[%s852 + $0x8] sm:$0xff] %v851
  %s855 = scalar_lea.vmem %s1, 96
  %v856 = vld [vmem:[%s855] sm:$0xf]
  %v857 = vld [vmem:[%s855 + $0x4] sm:$0xf]
  %v858 = vld [vmem:[%s223] sm:$0xf]
  %v859 = vld [vmem:[%s223 + $0x4] sm:$0xf]
  %v860 = vld [vmem:[%s223 + $0x8] sm:$0xf]
  %v861 = vld [vmem:[%s223 + $0xc] sm:$0xf]
  %s862 = scalar_lea.vmem %s1, 104
  %v863 = vld [vmem:[%s862] sm:$0xf]
  %v864 = vld [vmem:[%s862 + $0x4] sm:$0xf]
  %v865 = vld [vmem:[%s503] sm:$0xf]
  %v866 = vld [vmem:[%s503 + $0x4] sm:$0xf]
  %v867 = vld [vmem:[%s503 + $0x8] sm:$0xf]
  %v868 = vld [vmem:[%s503 + $0xc] sm:$0xf]
  %v871 = vunpack.c.l.b16 %v863
  %v872 = vunpack.c.l.b16 %v864
  %v873 = vpack.c.b16 %v872, %v871
  %v878 = vunpack.c.l.b16 %v865
  %v879 = vunpack.c.l.b16 %v866
  %v880 = vunpack.c.l.b16 %v867
  %v881 = vunpack.c.l.b16 %v868
  %v882 = vpack.c.b16 %v879, %v878
  %v883 = vpack.c.b16 %v881, %v880
  %v887 = vsel %vm43, %v873, 0
  %889 = vmatprep.subr.bf16.mxu0 0
  %890 = vmatpush1.bf16.msra.mxu0 %v882
  %891 = vmatprep.subr.bf16.mxu0 0
  %892 = vmatpush1.bf16.msra.mxu0 %v883
  %893 = vmatprep.subr.bf16.mxu0 0
  %894 = vmatpush1.bf16.msra.mxu0 0
  %895 = vmatprep.subr.bf16.mxu0 0
  %896 = vmatpush1.bf16.msra.mxu0 0
  %897 = vmatprep.subr.bf16.mxu0 0
  %898 = vmatpush1.bf16.msra.mxu0 0
  %899 = vmatprep.subr.bf16.mxu0 0
  %900 = vmatpush1.bf16.msra.mxu0 0
  %901 = vmatprep.subr.bf16.mxu0 0
  %902 = vmatpush1.bf16.msra.mxu0 0
  %903 = vmatprep.subr.bf16.mxu0 0
  %904 = vmatpush1.bf16.msra.mxu0 0
  %905 = vmatprep.subr.bf16.mxu0 0
  %906 = vmatpush1.bf16.msra.mxu0 0
  %907 = vmatprep.subr.bf16.mxu0 0
  %908 = vmatpush1.bf16.msra.mxu0 0
  %909 = vmatprep.subr.bf16.mxu0 0
  %910 = vmatpush1.bf16.msra.mxu0 0
  %911 = vmatprep.subr.bf16.mxu0 0
  %912 = vmatpush1.bf16.msra.mxu0 0
  %913 = vmatprep.subr.bf16.mxu0 0
  %914 = vmatpush1.bf16.msra.mxu0 0
  %915 = vmatprep.subr.bf16.mxu0 0
  %916 = vmatpush1.bf16.msra.mxu0 0
  %917 = vmatprep.subr.bf16.mxu0 0
  %918 = vmatpush1.bf16.msra.mxu0 0
  %919 = vmatprep.subr.bf16.mxu0 0
  %920 = vmatpush1.bf16.msra.mxu0 0
  %921 = vmatprep.mubr.bf16.mxu0 0
  %922 = vmatmul.mubr.bf16.gmra.mrb[0].mxu0 %v887
  %v923 = vpop.f32.mrb[0].mxu0
  %v924 = vadd.f32 0.0, %v923
  %v925 = vpop.f32.mrb[0].mxu0
  %v926 = vpop.f32.mrb[0].mxu0
  %v927 = vadd.f32 0.0, %v926
  %v928 = vpop.f32.mrb[0].mxu0
  %929 = vdwg.mxu0
  %v932 = vunpack.c.l.b16 %v856
  %v933 = vunpack.c.l.b16 %v857
  %v934 = vpack.c.b16 %v933, %v932
  %v939 = vunpack.c.l.b16 %v858
  %v940 = vunpack.c.l.b16 %v859
  %v941 = vunpack.c.l.b16 %v860
  %v942 = vunpack.c.l.b16 %v861
  %v943 = vpack.c.b16 %v940, %v939
  %v944 = vpack.c.b16 %v942, %v941
  %v948 = vsel %vm43, %v934, 0
  %950 = vmatprep.subr.bf16.mxu0 0
  %951 = vmatpush1.bf16.msra.mxu0 %v943
  %952 = vmatprep.subr.bf16.mxu0 0
  %953 = vmatpush1.bf16.msra.mxu0 %v944
  %954 = vmatprep.subr.bf16.mxu0 0
  %955 = vmatpush1.bf16.msra.mxu0 0
  %956 = vmatprep.subr.bf16.mxu0 0
  %957 = vmatpush1.bf16.msra.mxu0 0
  %958 = vmatprep.subr.bf16.mxu0 0
  %959 = vmatpush1.bf16.msra.mxu0 0
  %960 = vmatprep.subr.bf16.mxu0 0
  %961 = vmatpush1.bf16.msra.mxu0 0
  %962 = vmatprep.subr.bf16.mxu0 0
  %963 = vmatpush1.bf16.msra.mxu0 0
  %964 = vmatprep.subr.bf16.mxu0 0
  %965 = vmatpush1.bf16.msra.mxu0 0
  %966 = vmatprep.subr.bf16.mxu0 0
  %967 = vmatpush1.bf16.msra.mxu0 0
  %968 = vmatprep.subr.bf16.mxu0 0
  %969 = vmatpush1.bf16.msra.mxu0 0
  %970 = vmatprep.subr.bf16.mxu0 0
  %971 = vmatpush1.bf16.msra.mxu0 0
  %972 = vmatprep.subr.bf16.mxu0 0
  %973 = vmatpush1.bf16.msra.mxu0 0
  %974 = vmatprep.subr.bf16.mxu0 0
  %975 = vmatpush1.bf16.msra.mxu0 0
  %976 = vmatprep.subr.bf16.mxu0 0
  %977 = vmatpush1.bf16.msra.mxu0 0
  %978 = vmatprep.subr.bf16.mxu0 0
  %979 = vmatpush1.bf16.msra.mxu0 0
  %980 = vmatprep.subr.bf16.mxu0 0
  %981 = vmatpush1.bf16.msra.mxu0 0
  %982 = vmatprep.mubr.bf16.mxu0 0
  %983 = vmatmul.mubr.bf16.gmra.mrb[0].mxu0 %v948
  %v984 = vpop.f32.mrb[0].mxu0
  %v985 = vadd.f32 %v924, %v984
  %v986 = vpop.f32.mrb[0].mxu0
  %v987 = vpop.f32.mrb[0].mxu0
  %v988 = vadd.f32 %v927, %v987
  %v989 = vpop.f32.mrb[0].mxu0
  %990 = vdwg.mxu0
  %s991 = scalar_lea.vmem %s1, 112
  %v992 = vld [vmem:[%s991] sm:$0xf]
  %v993 = vld [vmem:[%s991 + $0x4] sm:$0xf]
  %v994 = vld [vmem:[%s784] sm:$0xf]
  %v995 = vld [vmem:[%s784 + $0x4] sm:$0xf]
  %v996 = vld [vmem:[%s784 + $0x8] sm:$0xf]
  %v997 = vld [vmem:[%s784 + $0xc] sm:$0xf]
  %v1000 = vunpack.c.l.b16 %v992
  %v1001 = vunpack.c.l.b16 %v993
  %v1002 = vpack.c.b16 %v1001, %v1000
  %v1007 = vunpack.c.l.b16 %v994
  %v1008 = vunpack.c.l.b16 %v995
  %v1009 = vunpack.c.l.b16 %v996
  %v1010 = vunpack.c.l.b16 %v997
  %v1011 = vpack.c.b16 %v1008, %v1007
  %v1012 = vpack.c.b16 %v1010, %v1009
  %v1016 = vsel %vm43, %v1002, 0
  %1018 = vmatprep.subr.bf16.mxu0 0
  %1019 = vmatpush1.bf16.msra.mxu0 %v1011
  %1020 = vmatprep.subr.bf16.mxu0 0
  %1021 = vmatpush1.bf16.msra.mxu0 %v1012
  %1022 = vmatprep.subr.bf16.mxu0 0
  %1023 = vmatpush1.bf16.msra.mxu0 0
  %1024 = vmatprep.subr.bf16.mxu0 0
  %1025 = vmatpush1.bf16.msra.mxu0 0
  %1026 = vmatprep.subr.bf16.mxu0 0
  %1027 = vmatpush1.bf16.msra.mxu0 0
  %1028 = vmatprep.subr.bf16.mxu0 0
  %1029 = vmatpush1.bf16.msra.mxu0 0
  %1030 = vmatprep.subr.bf16.mxu0 0
  %1031 = vmatpush1.bf16.msra.mxu0 0
  %1032 = vmatprep.subr.bf16.mxu0 0
  %1033 = vmatpush1.bf16.msra.mxu0 0
  %1034 = vmatprep.subr.bf16.mxu0 0
  %1035 = vmatpush1.bf16.msra.mxu0 0
  %1036 = vmatprep.subr.bf16.mxu0 0
  %1037 = vmatpush1.bf16.msra.mxu0 0
  %1038 = vmatprep.subr.bf16.mxu0 0
  %1039 = vmatpush1.bf16.msra.mxu0 0
  %1040 = vmatprep.subr.bf16.mxu0 0
  %1041 = vmatpush1.bf16.msra.mxu0 0
  %1042 = vmatprep.subr.bf16.mxu0 0
  %1043 = vmatpush1.bf16.msra.mxu0 0
  %1044 = vmatprep.subr.bf16.mxu0 0
  %1045 = vmatpush1.bf16.msra.mxu0 0
  %1046 = vmatprep.subr.bf16.mxu0 0
  %1047 = vmatpush1.bf16.msra.mxu0 0
  %1048 = vmatprep.subr.bf16.mxu0 0
  %1049 = vmatpush1.bf16.msra.mxu0 0
  %1050 = vmatprep.mubr.bf16.mxu0 0
  %1051 = vmatmul.mubr.bf16.gmra.mrb[0].mxu0 %v1016
  %v1052 = vpop.f32.mrb[0].mxu0
  %v1053 = vadd.f32 0.0, %v1052
  %v1054 = vpop.f32.mrb[0].mxu0
  %v1055 = vpop.f32.mrb[0].mxu0
  %v1056 = vadd.f32 0.0, %v1055
  %v1057 = vpop.f32.mrb[0].mxu0
  %1058 = vdwg.mxu0
  %v1059 = vadd.f32 %v985, %v1053
  %v1060 = vadd.f32 %v988, %v1056
  %s1061 = scalar_lea.vmem %s1, 120
  %v1062 = vld [vmem:[%s1061] sm:$0xf]
  %v1063 = vld [vmem:[%s1061 + $0x4] sm:$0xf]
  %s1064 = scalar_lea.vmem %s0, 128
  %v1065 = vld [vmem:[%s1064] sm:$0xf]
  %v1066 = vld [vmem:[%s1064 + $0x4] sm:$0xf]
  %v1067 = vld [vmem:[%s1064 + $0x8] sm:$0xf]
  %v1068 = vld [vmem:[%s1064 + $0xc] sm:$0xf]
  %v1071 = vunpack.c.l.b16 %v1062
  %v1072 = vunpack.c.l.b16 %v1063
  %v1073 = vpack.c.b16 %v1072, %v1071
  %v1078 = vunpack.c.l.b16 %v1065
  %v1079 = vunpack.c.l.b16 %v1066
  %v1080 = vunpack.c.l.b16 %v1067
  %v1081 = vunpack.c.l.b16 %v1068
  %v1082 = vpack.c.b16 %v1079, %v1078
  %v1083 = vpack.c.b16 %v1081, %v1080
  %v1087 = vsel %vm43, %v1073, 0
  %1089 = vmatprep.subr.bf16.mxu0 0
  %1090 = vmatpush1.bf16.msra.mxu0 %v1082
  %1091 = vmatprep.subr.bf16.mxu0 0
  %1092 = vmatpush1.bf16.msra.mxu0 %v1083
  %1093 = vmatprep.subr.bf16.mxu0 0
  %1094 = vmatpush1.bf16.msra.mxu0 0
  %1095 = vmatprep.subr.bf16.mxu0 0
  %1096 = vmatpush1.bf16.msra.mxu0 0
  %1097 = vmatprep.subr.bf16.mxu0 0
  %1098 = vmatpush1.bf16.msra.mxu0 0
  %1099 = vmatprep.subr.bf16.mxu0 0
  %1100 = vmatpush1.bf16.msra.mxu0 0
  %1101 = vmatprep.subr.bf16.mxu0 0
  %1102 = vmatpush1.bf16.msra.mxu0 0
  %1103 = vmatprep.subr.bf16.mxu0 0
  %1104 = vmatpush1.bf16.msra.mxu0 0
  %1105 = vmatprep.subr.bf16.mxu0 0
  %1106 = vmatpush1.bf16.msra.mxu0 0
  %1107 = vmatprep.subr.bf16.mxu0 0
  %1108 = vmatpush1.bf16.msra.mxu0 0
  %1109 = vmatprep.subr.bf16.mxu0 0
  %1110 = vmatpush1.bf16.msra.mxu0 0
  %1111 = vmatprep.subr.bf16.mxu0 0
  %1112 = vmatpush1.bf16.msra.mxu0 0
  %1113 = vmatprep.subr.bf16.mxu0 0
  %1114 = vmatpush1.bf16.msra.mxu0 0
  %1115 = vmatprep.subr.bf16.mxu0 0
  %1116 = vmatpush1.bf16.msra.mxu0 0
  %1117 = vmatprep.subr.bf16.mxu0 0
  %1118 = vmatpush1.bf16.msra.mxu0 0
  %1119 = vmatprep.subr.bf16.mxu0 0
  %1120 = vmatpush1.bf16.msra.mxu0 0
  %1121 = vmatprep.mubr.bf16.mxu0 0
  %1122 = vmatmul.mubr.bf16.gmra.mrb[0].mxu0 %v1087
  %v1123 = vpop.f32.mrb[0].mxu0
  %v1124 = vadd.f32 0.0, %v1123
  %v1125 = vpop.f32.mrb[0].mxu0
  %v1126 = vpop.f32.mrb[0].mxu0
  %v1127 = vadd.f32 0.0, %v1126
  %v1128 = vpop.f32.mrb[0].mxu0
  %1129 = vdwg.mxu0
  %v1130 = vadd.f32 %v1059, %v1124
  %v1131 = vadd.f32 %v1060, %v1127
  %s1132 = scalar_lea.vmem %s2, 48
  %1133 = vst [vmem:[%s1132] sm:$0xff] %v1130
  %1134 = vst [vmem:[%s1132 + $0x8] sm:$0xff] %v1131
  // Predicated region
  $region10: #{generator_forward.13} parent=0 // pred_check
    _
  $region11: #{generator_forward.13} parent=0 // pred_check_branch
    %1136 = sbr.rel (0) target = $region13
  $region12: #{generator_forward.13} parent=0 // pred_region
    _
  $region13: #{generator_forward.13} parent=0 // pred_fallthru
    _
  // Predicated region
  $region14: #{generator_forward.13} parent=0 // pred_check
    _
  $region15: #{generator_forward.13} parent=0 // pred_check_branch
    %1138 = sbr.rel (0) target = $region17
  $region16: #{generator_forward.13} parent=0 // pred_region
    _
  $region17: #{generator_forward.13} parent=0 // pred_fallthru
    _

// kernel: generator_forward.16
$region0: #{generator_forward.16}
  #allocation0 [shape = 'u32[]', space=smem, size = 0x4, offset = 0x4, fixed_abs, tag = 'smem constant byte address 0x4 - core index']
  #allocation1 [shape = 'u32[144,128]{1,0:T(1,128)}', space=vmem, size = 0x12000, scoped, tag = 'internal scratch']
  %s0 = inlined_call_operand.vmem [shape: f32[4,8,128], index: 0, kind: input, shape index: {}]
  %s1 = inlined_call_operand.vmem [shape: f32[8,1], index: 1, kind: input, shape index: {}]
  %s2 = inlined_call_operand.vmem [shape: f32[8,1], index: 2, kind: input, shape index: {}]
  %s3 = inlined_call_operand.vmem [shape: bf16[4,8,128], index: 3, kind: output, shape index: {}]
  %s4 = sld [smem:[#allocation0]]
  $region22: #{generator_forward.16} parent=0
    _
  %s6 = ssub.s32 1, %s4
  %s7 = scalar_select 0, %s6, %s4
  // Predicated region
  $region2: #{generator_forward.16} parent=0 // pred_check
    _
  $region3: #{generator_forward.16} parent=0 // pred_check_branch
    %9 = sbr.rel (0) target = $region5
  $region4: #{generator_forward.16} parent=0 // pred_region
    _
  $region5: #{generator_forward.16} parent=0 // pred_fallthru
    _
  // Predicated region
  $region6: #{generator_forward.16} parent=0 // pred_check
    _
  $region7: #{generator_forward.16} parent=0 // pred_check_branch
    %11 = sbr.rel (0) target = $region9
  $region8: #{generator_forward.16} parent=0 // pred_region
    _
  $region9: #{generator_forward.16} parent=0 // pred_fallthru
    _
  // Predicated region
  $region10: #{generator_forward.16} parent=0 // pred_check
    _
  $region11: #{generator_forward.16} parent=0 // pred_check_branch
    %13 = sbr.rel (0) target = $region13
  $region12: #{generator_forward.16} parent=0 // pred_region
    _
  $region13: #{generator_forward.16} parent=0 // pred_fallthru
    _
  %v14 = vld [vmem:[%s0] sm:$0xff]
  %v15 = vld [vmem:[%s0 + $0x8] sm:$0xff]
  %v16 = vld [vmem:[%s0 + $0x10] sm:$0xff]
  %v17 = vld [vmem:[%s0 + $0x18] sm:$0xff]
  %v18 = vld [vmem:[%s1] sm:$0xff]
  %v19 = vld [vmem:[%s2] sm:$0xff]
  %21 = vset.pattern.permute.xlu0 0
  %22 = vperm.xlu0 %21, %v18
  %v23 = vpop.permute.xlu0 %22
  %v25 = vmul.f32 %v14, %v23
  %v26 = vmul.f32 %v15, %v23
  %v27 = vmul.f32 %v16, %v23
  %v28 = vmul.f32 %v17, %v23
  %30 = vset.pattern.permute.xlu0 0
  %31 = vperm.xlu0 %30, %v19
  %v32 = vpop.permute.xlu0 %31
  %v34 = vadd.f32 %v25, %v32
  %v35 = vadd.f32 %v26, %v32
  %v36 = vadd.f32 %v27, %v32
  %v37 = vadd.f32 %v28, %v32
  %v38 = vmax.f32 %v34, 0.0
  %v39 = vmax.f32 %v35, 0.0
  %v40 = vmax.f32 %v36, 0.0
  %v41 = vmax.f32 %v37, 0.0
  %v42 = vpack.c.bf16 %v38, %v38
  %v43 = vpack.c.bf16 %v39, %v39
  %v44 = vpack.c.bf16 %v40, %v40
  %v45 = vpack.c.bf16 %v41, %v41
  %46 = vst [vmem:[%s3] sm:$0xf] %v42
  %47 = vst [vmem:[%s3 + $0x4] sm:$0xf] %v43
  %48 = vst [vmem:[%s3 + $0x8] sm:$0xf] %v44
  %49 = vst [vmem:[%s3 + $0xc] sm:$0xf] %v45
  // Predicated region
  $region14: #{generator_forward.16} parent=0 // pred_check
    _
  $region15: #{generator_forward.16} parent=0 // pred_check_branch
    %51 = sbr.rel (0) target = $region17
  $region16: #{generator_forward.16} parent=0 // pred_region
    _
  $region17: #{generator_forward.16} parent=0 // pred_fallthru
    _
  // Predicated region
  $region18: #{generator_forward.16} parent=0 // pred_check
    _
  $region19: #{generator_forward.16} parent=0 // pred_check_branch
    %53 = sbr.rel (0) target = $region21
  $region20: #{generator_forward.16} parent=0 // pred_region
    _
  $region21: #{generator_forward.16} parent=0 // pred_fallthru
    _

// kernel: generator_forward.15
$region0: #{generator_forward.15}
  #allocation0 [shape = 'u32[]', space=smem, size = 0x4, offset = 0x4, fixed_abs, tag = 'smem constant byte address 0x4 - core index']
  #allocation1 [shape = 'u32[144,128]{1,0:T(1,128)}', space=vmem, size = 0x12000, scoped, tag = 'internal scratch']
  %s0 = inlined_call_operand.vmem [shape: bf16[9,16,128], index: 0, kind: input, shape index: {}]
  %s1 = inlined_call_operand.vmem [shape: bf16[4,4,8,16], index: 1, kind: input, shape index: {}]
  %s2 = inlined_call_operand.vmem [shape: f32[4,8,128], index: 2, kind: output, shape index: {}]
  %s3 = sld [smem:[#allocation0]]
  $region18: #{generator_forward.15} parent=0
    _
  %s5 = ssub.s32 1, %s3
  %s6 = scalar_select 0, %s5, %s3
  // Predicated region
  $region2: #{generator_forward.15} parent=0 // pred_check
    _
  $region3: #{generator_forward.15} parent=0 // pred_check_branch
    %8 = sbr.rel (0) target = $region5
  $region4: #{generator_forward.15} parent=0 // pred_region
    _
  $region5: #{generator_forward.15} parent=0 // pred_fallthru
    _
  // Predicated region
  $region6: #{generator_forward.15} parent=0 // pred_check
    _
  $region7: #{generator_forward.15} parent=0 // pred_check_branch
    %10 = sbr.rel (0) target = $region9
  $region8: #{generator_forward.15} parent=0 // pred_region
    _
  $region9: #{generator_forward.15} parent=0 // pred_fallthru
    _
  %v12 = vld [vmem:[%s1] sm:$0xf]
  %v13 = vld [vmem:[%s0] sm:$0xf]
  %v14 = vld [vmem:[%s0 + $0x4] sm:$0xf]
  %s15 = scalar_lea.vmem %s1, 4
  %v16 = vld [vmem:[%s15] sm:$0xf]
  %s17 = scalar_lea.vmem %s0, 8
  %v18 = vld [vmem:[%s17] sm:$0xf]
  %v19 = vld [vmem:[%s17 + $0x4] sm:$0xf]
  %v22 = vunpack.c.l.b16 %v18
  %v23 = vunpack.c.l.b16 %v19
  %v24 = vpack.c.b16 %v23, %v22
  %vm26 = vcmask 130048
  %v28 = vsel %vm26, %v16, 0
  %30 = vmatprep.subr.bf16.mxu0 0
  %31 = vmatpush1.bf16.msra.mxu0 %v24
  %32 = vmatprep.subr.bf16.mxu0 0
  %33 = vmatpush1.bf16.msra.mxu0 0
  %34 = vmatprep.subr.bf16.mxu0 0
  %35 = vmatpush1.bf16.msra.mxu0 0
  %36 = vmatprep.subr.bf16.mxu0 0
  %37 = vmatpush1.bf16.msra.mxu0 0
  %38 = vmatprep.subr.bf16.mxu0 0
  %39 = vmatpush1.bf16.msra.mxu0 0
  %40 = vmatprep.subr.bf16.mxu0 0
  %41 = vmatpush1.bf16.msra.mxu0 0
  %42 = vmatprep.subr.bf16.mxu0 0
  %43 = vmatpush1.bf16.msra.mxu0 0
  %44 = vmatprep.subr.bf16.mxu0 0
  %45 = vmatpush1.bf16.msra.mxu0 0
  %46 = vmatprep.subr.bf16.mxu0 0
  %47 = vmatpush1.bf16.msra.mxu0 0
  %48 = vmatprep.subr.bf16.mxu0 0
  %49 = vmatpush1.bf16.msra.mxu0 0
  %50 = vmatprep.subr.bf16.mxu0 0
  %51 = vmatpush1.bf16.msra.mxu0 0
  %52 = vmatprep.subr.bf16.mxu0 0
  %53 = vmatpush1.bf16.msra.mxu0 0
  %54 = vmatprep.subr.bf16.mxu0 0
  %55 = vmatpush1.bf16.msra.mxu0 0
  %56 = vmatprep.subr.bf16.mxu0 0
  %57 = vmatpush1.bf16.msra.mxu0 0
  %58 = vmatprep.subr.bf16.mxu0 0
  %59 = vmatpush1.bf16.msra.mxu0 0
  %60 = vmatprep.subr.bf16.mxu0 0
  %61 = vmatpush1.bf16.msra.mxu0 0
  %62 = vmatprep.mubr.bf16.mxu0 0
  %63 = vmatmul.mubr.bf16.gmra.mrb[0].mxu0 %v28
  %v64 = vpop.f32.mrb[0].mxu0
  %v65 = vadd.f32 0.0, %v64
  %v66 = vpop.f32.mrb[0].mxu0
  %v67 = vpop.f32.mrb[0].mxu0
  %v68 = vpop.f32.mrb[0].mxu0
  %69 = vdwg.mxu0
  %v72 = vunpack.c.l.b16 %v13
  %v73 = vunpack.c.l.b16 %v14
  %v74 = vpack.c.b16 %v73, %v72
  %v77 = vsel %vm26, %v12, 0
  %79 = vmatprep.subr.bf16.mxu0 0
  %80 = vmatpush1.bf16.msra.mxu0 %v74
  %81 = vmatprep.subr.bf16.mxu0 0
  %82 = vmatpush1.bf16.msra.mxu0 0
  %83 = vmatprep.subr.bf16.mxu0 0
  %84 = vmatpush1.bf16.msra.mxu0 0
  %85 = vmatprep.subr.bf16.mxu0 0
  %86 = vmatpush1.bf16.msra.mxu0 0
  %87 = vmatprep.subr.bf16.mxu0 0
  %88 = vmatpush1.bf16.msra.mxu0 0
  %89 = vmatprep.subr.bf16.mxu0 0
  %90 = vmatpush1.bf16.msra.mxu0 0
  %91 = vmatprep.subr.bf16.mxu0 0
  %92 = vmatpush1.bf16.msra.mxu0 0
  %93 = vmatprep.subr.bf16.mxu0 0
  %94 = vmatpush1.bf16.msra.mxu0 0
  %95 = vmatprep.subr.bf16.mxu0 0
  %96 = vmatpush1.bf16.msra.mxu0 0
  %97 = vmatprep.subr.bf16.mxu0 0
  %98 = vmatpush1.bf16.msra.mxu0 0
  %99 = vmatprep.subr.bf16.mxu0 0
  %100 = vmatpush1.bf16.msra.mxu0 0
  %101 = vmatprep.subr.bf16.mxu0 0
  %102 = vmatpush1.bf16.msra.mxu0 0
  %103 = vmatprep.subr.bf16.mxu0 0
  %104 = vmatpush1.bf16.msra.mxu0 0
  %105 = vmatprep.subr.bf16.mxu0 0
  %106 = vmatpush1.bf16.msra.mxu0 0
  %107 = vmatprep.subr.bf16.mxu0 0
  %108 = vmatpush1.bf16.msra.mxu0 0
  %109 = vmatprep.subr.bf16.mxu0 0
  %110 = vmatpush1.bf16.msra.mxu0 0
  %111 = vmatprep.mubr.bf16.mxu0 0
  %112 = vmatmul.mubr.bf16.gmra.mrb[0].mxu0 %v77
  %v113 = vpop.f32.mrb[0].mxu0
  %v114 = vadd.f32 %v65, %v113
  %v115 = vpop.f32.mrb[0].mxu0
  %v116 = vpop.f32.mrb[0].mxu0
  %v117 = vpop.f32.mrb[0].mxu0
  %118 = vdwg.mxu0
  %s119 = scalar_lea.vmem %s1, 8
  %v120 = vld [vmem:[%s119] sm:$0xf]
  %s121 = scalar_lea.vmem %s0, 24
  %v122 = vld [vmem:[%s121] sm:$0xf]
  %v123 = vld [vmem:[%s121 + $0x4] sm:$0xf]
  %v126 = vunpack.c.l.b16 %v122
  %v127 = vunpack.c.l.b16 %v123
  %v128 = vpack.c.b16 %v127, %v126
  %v131 = vsel %vm26, %v120, 0
  %133 = vmatprep.subr.bf16.mxu0 0
  %134 = vmatpush1.bf16.msra.mxu0 %v128
  %135 = vmatprep.subr.bf16.mxu0 0
  %136 = vmatpush1.bf16.msra.mxu0 0
  %137 = vmatprep.subr.bf16.mxu0 0
  %138 = vmatpush1.bf16.msra.mxu0 0
  %139 = vmatprep.subr.bf16.mxu0 0
  %140 = vmatpush1.bf16.msra.mxu0 0
  %141 = vmatprep.subr.bf16.mxu0 0
  %142 = vmatpush1.bf16.msra.mxu0 0
  %143 = vmatprep.subr.bf16.mxu0 0
  %144 = vmatpush1.bf16.msra.mxu0 0
  %145 = vmatprep.subr.bf16.mxu0 0
  %146 = vmatpush1.bf16.msra.mxu0 0
  %147 = vmatprep.subr.bf16.mxu0 0
  %148 = vmatpush1.bf16.msra.mxu0 0
  %149 = vmatprep.subr.bf16.mxu0 0
  %150 = vmatpush1.bf16.msra.mxu0 0
  %151 = vmatprep.subr.bf16.mxu0 0
  %152 = vmatpush1.bf16.msra.mxu0 0
  %153 = vmatprep.subr.bf16.mxu0 0
  %154 = vmatpush1.bf16.msra.mxu0 0
  %155 = vmatprep.subr.bf16.mxu0 0
  %156 = vmatpush1.bf16.msra.mxu0 0
  %157 = vmatprep.subr.bf16.mxu0 0
  %158 = vmatpush1.bf16.msra.mxu0 0
  %159 = vmatprep.subr.bf16.mxu0 0
  %160 = vmatpush1.bf16.msra.mxu0 0
  %161 = vmatprep.subr.bf16.mxu0 0
  %162 = vmatpush1.bf16.msra.mxu0 0
  %163 = vmatprep.subr.bf16.mxu0 0
  %164 = vmatpush1.bf16.msra.mxu0 0
  %165 = vmatprep.mubr.bf16.mxu0 0
  %166 = vmatmul.mubr.bf16.gmra.mrb[0].mxu0 %v131
  %v167 = vpop.f32.mrb[0].mxu0
  %v168 = vadd.f32 0.0, %v167
  %v169 = vpop.f32.mrb[0].mxu0
  %v170 = vpop.f32.mrb[0].mxu0
  %v171 = vpop.f32.mrb[0].mxu0
  %172 = vdwg.mxu0
  %v173 = vadd.f32 %v114, %v168
  %s174 = scalar_lea.vmem %s1, 12
  %v175 = vld [vmem:[%s174] sm:$0xf]
  %s176 = scalar_lea.vmem %s0, 32
  %v177 = vld [vmem:[%s176] sm:$0xf]
  %v178 = vld [vmem:[%s176 + $0x4] sm:$0xf]
  %v181 = vunpack.c.l.b16 %v177
  %v182 = vunpack.c.l.b16 %v178
  %v183 = vpack.c.b16 %v182, %v181
  %v186 = vsel %vm26, %v175, 0
  %188 = vmatprep.subr.bf16.mxu0 0
  %189 = vmatpush1.bf16.msra.mxu0 %v183
  %190 = vmatprep.subr.bf16.mxu0 0
  %191 = vmatpush1.bf16.msra.mxu0 0
  %192 = vmatprep.subr.bf16.mxu0 0
  %193 = vmatpush1.bf16.msra.mxu0 0
  %194 = vmatprep.subr.bf16.mxu0 0
  %195 = vmatpush1.bf16.msra.mxu0 0
  %196 = vmatprep.subr.bf16.mxu0 0
  %197 = vmatpush1.bf16.msra.mxu0 0
  %198 = vmatprep.subr.bf16.mxu0 0
  %199 = vmatpush1.bf16.msra.mxu0 0
  %200 = vmatprep.subr.bf16.mxu0 0
  %201 = vmatpush1.bf16.msra.mxu0 0
  %202 = vmatprep.subr.bf16.mxu0 0
  %203 = vmatpush1.bf16.msra.mxu0 0
  %204 = vmatprep.subr.bf16.mxu0 0
  %205 = vmatpush1.bf16.msra.mxu0 0
  %206 = vmatprep.subr.bf16.mxu0 0
  %207 = vmatpush1.bf16.msra.mxu0 0
  %208 = vmatprep.subr.bf16.mxu0 0
  %209 = vmatpush1.bf16.msra.mxu0 0
  %210 = vmatprep.subr.bf16.mxu0 0
  %211 = vmatpush1.bf16.msra.mxu0 0
  %212 = vmatprep.subr.bf16.mxu0 0
  %213 = vmatpush1.bf16.msra.mxu0 0
  %214 = vmatprep.subr.bf16.mxu0 0
  %215 = vmatpush1.bf16.msra.mxu0 0
  %216 = vmatprep.subr.bf16.mxu0 0
  %217 = vmatpush1.bf16.msra.mxu0 0
  %218 = vmatprep.subr.bf16.mxu0 0
  %219 = vmatpush1.bf16.msra.mxu0 0
  %220 = vmatprep.mubr.bf16.mxu0 0
  %221 = vmatmul.mubr.bf16.gmra.mrb[0].mxu0 %v186
  %v222 = vpop.f32.mrb[0].mxu0
  %v223 = vadd.f32 0.0, %v222
  %v224 = vpop.f32.mrb[0].mxu0
  %v225 = vpop.f32.mrb[0].mxu0
  %v226 = vpop.f32.mrb[0].mxu0
  %227 = vdwg.mxu0
  %v228 = vadd.f32 %v173, %v223
  %229 = vst [vmem:[%s2] sm:$0xff] %v228
  %s230 = scalar_lea.vmem %s1, 16
  %v231 = vld [vmem:[%s230] sm:$0xf]
  %v232 = vld [vmem:[%s17] sm:$0xf]
  %v233 = vld [vmem:[%s17 + $0x4] sm:$0xf]
  %s234 = scalar_lea.vmem %s1, 20
  %v235 = vld [vmem:[%s234] sm:$0xf]
  %s236 = scalar_lea.vmem %s0, 16
  %v237 = vld [vmem:[%s236] sm:$0xf]
  %v238 = vld [vmem:[%s236 + $0x4] sm:$0xf]
  %v241 = vunpack.c.l.b16 %v237
  %v242 = vunpack.c.l.b16 %v238
  %v243 = vpack.c.b16 %v242, %v241
  %v246 = vsel %vm26, %v235, 0
  %248 = vmatprep.subr.bf16.mxu0 0
  %249 = vmatpush1.bf16.msra.mxu0 %v243
  %250 = vmatprep.subr.bf16.mxu0 0
  %251 = vmatpush1.bf16.msra.mxu0 0
  %252 = vmatprep.subr.bf16.mxu0 0
  %253 = vmatpush1.bf16.msra.mxu0 0
  %254 = vmatprep.subr.bf16.mxu0 0
  %255 = vmatpush1.bf16.msra.mxu0 0
  %256 = vmatprep.subr.bf16.mxu0 0
  %257 = vmatpush1.bf16.msra.mxu0 0
  %258 = vmatprep.subr.bf16.mxu0 0
  %259 = vmatpush1.bf16.msra.mxu0 0
  %260 = vmatprep.subr.bf16.mxu0 0
  %261 = vmatpush1.bf16.msra.mxu0 0
  %262 = vmatprep.subr.bf16.mxu0 0
  %263 = vmatpush1.bf16.msra.mxu0 0
  %264 = vmatprep.subr.bf16.mxu0 0
  %265 = vmatpush1.bf16.msra.mxu0 0
  %266 = vmatprep.subr.bf16.mxu0 0
  %267 = vmatpush1.bf16.msra.mxu0 0
  %268 = vmatprep.subr.bf16.mxu0 0
  %269 = vmatpush1.bf16.msra.mxu0 0
  %270 = vmatprep.subr.bf16.mxu0 0
  %271 = vmatpush1.bf16.msra.mxu0 0
  %272 = vmatprep.subr.bf16.mxu0 0
  %273 = vmatpush1.bf16.msra.mxu0 0
  %274 = vmatprep.subr.bf16.mxu0 0
  %275 = vmatpush1.bf16.msra.mxu0 0
  %276 = vmatprep.subr.bf16.mxu0 0
  %277 = vmatpush1.bf16.msra.mxu0 0
  %278 = vmatprep.subr.bf16.mxu0 0
  %279 = vmatpush1.bf16.msra.mxu0 0
  %280 = vmatprep.mubr.bf16.mxu0 0
  %281 = vmatmul.mubr.bf16.gmra.mrb[0].mxu0 %v246
  %v282 = vpop.f32.mrb[0].mxu0
  %v283 = vadd.f32 0.0, %v282
  %v284 = vpop.f32.mrb[0].mxu0
  %v285 = vpop.f32.mrb[0].mxu0
  %v286 = vpop.f32.mrb[0].mxu0
  %287 = vdwg.mxu0
  %v290 = vunpack.c.l.b16 %v232
  %v291 = vunpack.c.l.b16 %v233
  %v292 = vpack.c.b16 %v291, %v290
  %v295 = vsel %vm26, %v231, 0
  %297 = vmatprep.subr.bf16.mxu0 0
  %298 = vmatpush1.bf16.msra.mxu0 %v292
  %299 = vmatprep.subr.bf16.mxu0 0
  %300 = vmatpush1.bf16.msra.mxu0 0
  %301 = vmatprep.subr.bf16.mxu0 0
  %302 = vmatpush1.bf16.msra.mxu0 0
  %303 = vmatprep.subr.bf16.mxu0 0
  %304 = vmatpush1.bf16.msra.mxu0 0
  %305 = vmatprep.subr.bf16.mxu0 0
  %306 = vmatpush1.bf16.msra.mxu0 0
  %307 = vmatprep.subr.bf16.mxu0 0
  %308 = vmatpush1.bf16.msra.mxu0 0
  %309 = vmatprep.subr.bf16.mxu0 0
  %310 = vmatpush1.bf16.msra.mxu0 0
  %311 = vmatprep.subr.bf16.mxu0 0
  %312 = vmatpush1.bf16.msra.mxu0 0
  %313 = vmatprep.subr.bf16.mxu0 0
  %314 = vmatpush1.bf16.msra.mxu0 0
  %315 = vmatprep.subr.bf16.mxu0 0
  %316 = vmatpush1.bf16.msra.mxu0 0
  %317 = vmatprep.subr.bf16.mxu0 0
  %318 = vmatpush1.bf16.msra.mxu0 0
  %319 = vmatprep.subr.bf16.mxu0 0
  %320 = vmatpush1.bf16.msra.mxu0 0
  %321 = vmatprep.subr.bf16.mxu0 0
  %322 = vmatpush1.bf16.msra.mxu0 0
  %323 = vmatprep.subr.bf16.mxu0 0
  %324 = vmatpush1.bf16.msra.mxu0 0
  %325 = vmatprep.subr.bf16.mxu0 0
  %326 = vmatpush1.bf16.msra.mxu0 0
  %327 = vmatprep.subr.bf16.mxu0 0
  %328 = vmatpush1.bf16.msra.mxu0 0
  %329 = vmatprep.mubr.bf16.mxu0 0
  %330 = vmatmul.mubr.bf16.gmra.mrb[0].mxu0 %v295
  %v331 = vpop.f32.mrb[0].mxu0
  %v332 = vadd.f32 %v283, %v331
  %v333 = vpop.f32.mrb[0].mxu0
  %v334 = vpop.f32.mrb[0].mxu0
  %v335 = vpop.f32.mrb[0].mxu0
  %336 = vdwg.mxu0
  %s337 = scalar_lea.vmem %s1, 24
  %v338 = vld [vmem:[%s337] sm:$0xf]
  %v339 = vld [vmem:[%s176] sm:$0xf]
  %v340 = vld [vmem:[%s176 + $0x4] sm:$0xf]
  %v343 = vunpack.c.l.b16 %v339
  %v344 = vunpack.c.l.b16 %v340
  %v345 = vpack.c.b16 %v344, %v343
  %v348 = vsel %vm26, %v338, 0
  %350 = vmatprep.subr.bf16.mxu0 0
  %351 = vmatpush1.bf16.msra.mxu0 %v345
  %352 = vmatprep.subr.bf16.mxu0 0
  %353 = vmatpush1.bf16.msra.mxu0 0
  %354 = vmatprep.subr.bf16.mxu0 0
  %355 = vmatpush1.bf16.msra.mxu0 0
  %356 = vmatprep.subr.bf16.mxu0 0
  %357 = vmatpush1.bf16.msra.mxu0 0
  %358 = vmatprep.subr.bf16.mxu0 0
  %359 = vmatpush1.bf16.msra.mxu0 0
  %360 = vmatprep.subr.bf16.mxu0 0
  %361 = vmatpush1.bf16.msra.mxu0 0
  %362 = vmatprep.subr.bf16.mxu0 0
  %363 = vmatpush1.bf16.msra.mxu0 0
  %364 = vmatprep.subr.bf16.mxu0 0
  %365 = vmatpush1.bf16.msra.mxu0 0
  %366 = vmatprep.subr.bf16.mxu0 0
  %367 = vmatpush1.bf16.msra.mxu0 0
  %368 = vmatprep.subr.bf16.mxu0 0
  %369 = vmatpush1.bf16.msra.mxu0 0
  %370 = vmatprep.subr.bf16.mxu0 0
  %371 = vmatpush1.bf16.msra.mxu0 0
  %372 = vmatprep.subr.bf16.mxu0 0
  %373 = vmatpush1.bf16.msra.mxu0 0
  %374 = vmatprep.subr.bf16.mxu0 0
  %375 = vmatpush1.bf16.msra.mxu0 0
  %376 = vmatprep.subr.bf16.mxu0 0
  %377 = vmatpush1.bf16.msra.mxu0 0
  %378 = vmatprep.subr.bf16.mxu0 0
  %379 = vmatpush1.bf16.msra.mxu0 0
  %380 = vmatprep.subr.bf16.mxu0 0
  %381 = vmatpush1.bf16.msra.mxu0 0
  %382 = vmatprep.mubr.bf16.mxu0 0
  %383 = vmatmul.mubr.bf16.gmra.mrb[0].mxu0 %v348
  %v384 = vpop.f32.mrb[0].mxu0
  %v385 = vadd.f32 0.0, %v384
  %v386 = vpop.f32.mrb[0].mxu0
  %v387 = vpop.f32.mrb[0].mxu0
  %v388 = vpop.f32.mrb[0].mxu0
  %389 = vdwg.mxu0
  %v390 = vadd.f32 %v332, %v385
  %s391 = scalar_lea.vmem %s1, 28
  %v392 = vld [vmem:[%s391] sm:$0xf]
  %s393 = scalar_lea.vmem %s0, 40
  %v394 = vld [vmem:[%s393] sm:$0xf]
  %v395 = vld [vmem:[%s393 + $0x4] sm:$0xf]
  %v398 = vunpack.c.l.b16 %v394
  %v399 = vunpack.c.l.b16 %v395
  %v400 = vpack.c.b16 %v399, %v398
  %v403 = vsel %vm26, %v392, 0
  %405 = vmatprep.subr.bf16.mxu0 0
  %406 = vmatpush1.bf16.msra.mxu0 %v400
  %407 = vmatprep.subr.bf16.mxu0 0
  %408 = vmatpush1.bf16.msra.mxu0 0
  %409 = vmatprep.subr.bf16.mxu0 0
  %410 = vmatpush1.bf16.msra.mxu0 0
  %411 = vmatprep.subr.bf16.mxu0 0
  %412 = vmatpush1.bf16.msra.mxu0 0
  %413 = vmatprep.subr.bf16.mxu0 0
  %414 = vmatpush1.bf16.msra.mxu0 0
  %415 = vmatprep.subr.bf16.mxu0 0
  %416 = vmatpush1.bf16.msra.mxu0 0
  %417 = vmatprep.subr.bf16.mxu0 0
  %418 = vmatpush1.bf16.msra.mxu0 0
  %419 = vmatprep.subr.bf16.mxu0 0
  %420 = vmatpush1.bf16.msra.mxu0 0
  %421 = vmatprep.subr.bf16.mxu0 0
  %422 = vmatpush1.bf16.msra.mxu0 0
  %423 = vmatprep.subr.bf16.mxu0 0
  %424 = vmatpush1.bf16.msra.mxu0 0
  %425 = vmatprep.subr.bf16.mxu0 0
  %426 = vmatpush1.bf16.msra.mxu0 0
  %427 = vmatprep.subr.bf16.mxu0 0
  %428 = vmatpush1.bf16.msra.mxu0 0
  %429 = vmatprep.subr.bf16.mxu0 0
  %430 = vmatpush1.bf16.msra.mxu0 0
  %431 = vmatprep.subr.bf16.mxu0 0
  %432 = vmatpush1.bf16.msra.mxu0 0
  %433 = vmatprep.subr.bf16.mxu0 0
  %434 = vmatpush1.bf16.msra.mxu0 0
  %435 = vmatprep.subr.bf16.mxu0 0
  %436 = vmatpush1.bf16.msra.mxu0 0
  %437 = vmatprep.mubr.bf16.mxu0 0
  %438 = vmatmul.mubr.bf16.gmra.mrb[0].mxu0 %v403
  %v439 = vpop.f32.mrb[0].mxu0
  %v440 = vadd.f32 0.0, %v439
  %v441 = vpop.f32.mrb[0].mxu0
  %v442 = vpop.f32.mrb[0].mxu0
  %v443 = vpop.f32.mrb[0].mxu0
  %444 = vdwg.mxu0
  %v445 = vadd.f32 %v390, %v440
  %s446 = scalar_lea.vmem %s2, 8
  %447 = vst [vmem:[%s446] sm:$0xff] %v445
  %s448 = scalar_lea.vmem %s1, 32
  %v449 = vld [vmem:[%s448] sm:$0xf]
  %v450 = vld [vmem:[%s121] sm:$0xf]
  %v451 = vld [vmem:[%s121 + $0x4] sm:$0xf]
  %s452 = scalar_lea.vmem %s1, 36
  %v453 = vld [vmem:[%s452] sm:$0xf]
  %v454 = vld [vmem:[%s176] sm:$0xf]
  %v455 = vld [vmem:[%s176 + $0x4] sm:$0xf]
  %v458 = vunpack.c.l.b16 %v454
  %v459 = vunpack.c.l.b16 %v455
  %v460 = vpack.c.b16 %v459, %v458
  %v463 = vsel %vm26, %v453, 0
  %465 = vmatprep.subr.bf16.mxu0 0
  %466 = vmatpush1.bf16.msra.mxu0 %v460
  %467 = vmatprep.subr.bf16.mxu0 0
  %468 = vmatpush1.bf16.msra.mxu0 0
  %469 = vmatprep.subr.bf16.mxu0 0
  %470 = vmatpush1.bf16.msra.mxu0 0
  %471 = vmatprep.subr.bf16.mxu0 0
  %472 = vmatpush1.bf16.msra.mxu0 0
  %473 = vmatprep.subr.bf16.mxu0 0
  %474 = vmatpush1.bf16.msra.mxu0 0
  %475 = vmatprep.subr.bf16.mxu0 0
  %476 = vmatpush1.bf16.msra.mxu0 0
  %477 = vmatprep.subr.bf16.mxu0 0
  %478 = vmatpush1.bf16.msra.mxu0 0
  %479 = vmatprep.subr.bf16.mxu0 0
  %480 = vmatpush1.bf16.msra.mxu0 0
  %481 = vmatprep.subr.bf16.mxu0 0
  %482 = vmatpush1.bf16.msra.mxu0 0
  %483 = vmatprep.subr.bf16.mxu0 0
  %484 = vmatpush1.bf16.msra.mxu0 0
  %485 = vmatprep.subr.bf16.mxu0 0
  %486 = vmatpush1.bf16.msra.mxu0 0
  %487 = vmatprep.subr.bf16.mxu0 0
  %488 = vmatpush1.bf16.msra.mxu0 0
  %489 = vmatprep.subr.bf16.mxu0 0
  %490 = vmatpush1.bf16.msra.mxu0 0
  %491 = vmatprep.subr.bf16.mxu0 0
  %492 = vmatpush1.bf16.msra.mxu0 0
  %493 = vmatprep.subr.bf16.mxu0 0
  %494 = vmatpush1.bf16.msra.mxu0 0
  %495 = vmatprep.subr.bf16.mxu0 0
  %496 = vmatpush1.bf16.msra.mxu0 0
  %497 = vmatprep.mubr.bf16.mxu0 0
  %498 = vmatmul.mubr.bf16.gmra.mrb[0].mxu0 %v463
  %v499 = vpop.f32.mrb[0].mxu0
  %v500 = vadd.f32 0.0, %v499
  %v501 = vpop.f32.mrb[0].mxu0
  %v502 = vpop.f32.mrb[0].mxu0
  %v503 = vpop.f32.mrb[0].mxu0
  %504 = vdwg.mxu0
  %v507 = vunpack.c.l.b16 %v450
  %v508 = vunpack.c.l.b16 %v451
  %v509 = vpack.c.b16 %v508, %v507
  %v512 = vsel %vm26, %v449, 0
  %514 = vmatprep.subr.bf16.mxu0 0
  %515 = vmatpush1.bf16.msra.mxu0 %v509
  %516 = vmatprep.subr.bf16.mxu0 0
  %517 = vmatpush1.bf16.msra.mxu0 0
  %518 = vmatprep.subr.bf16.mxu0 0
  %519 = vmatpush1.bf16.msra.mxu0 0
  %520 = vmatprep.subr.bf16.mxu0 0
  %521 = vmatpush1.bf16.msra.mxu0 0
  %522 = vmatprep.subr.bf16.mxu0 0
  %523 = vmatpush1.bf16.msra.mxu0 0
  %524 = vmatprep.subr.bf16.mxu0 0
  %525 = vmatpush1.bf16.msra.mxu0 0
  %526 = vmatprep.subr.bf16.mxu0 0
  %527 = vmatpush1.bf16.msra.mxu0 0
  %528 = vmatprep.subr.bf16.mxu0 0
  %529 = vmatpush1.bf16.msra.mxu0 0
  %530 = vmatprep.subr.bf16.mxu0 0
  %531 = vmatpush1.bf16.msra.mxu0 0
  %532 = vmatprep.subr.bf16.mxu0 0
  %533 = vmatpush1.bf16.msra.mxu0 0
  %534 = vmatprep.subr.bf16.mxu0 0
  %535 = vmatpush1.bf16.msra.mxu0 0
  %536 = vmatprep.subr.bf16.mxu0 0
  %537 = vmatpush1.bf16.msra.mxu0 0
  %538 = vmatprep.subr.bf16.mxu0 0
  %539 = vmatpush1.bf16.msra.mxu0 0
  %540 = vmatprep.subr.bf16.mxu0 0
  %541 = vmatpush1.bf16.msra.mxu0 0
  %542 = vmatprep.subr.bf16.mxu0 0
  %543 = vmatpush1.bf16.msra.mxu0 0
  %544 = vmatprep.subr.bf16.mxu0 0
  %545 = vmatpush1.bf16.msra.mxu0 0
  %546 = vmatprep.mubr.bf16.mxu0 0
  %547 = vmatmul.mubr.bf16.gmra.mrb[0].mxu0 %v512
  %v548 = vpop.f32.mrb[0].mxu0
  %v549 = vadd.f32 %v500, %v548
  %v550 = vpop.f32.mrb[0].mxu0
  %v551 = vpop.f32.mrb[0].mxu0
  %v552 = vpop.f32.mrb[0].mxu0
  %553 = vdwg.mxu0
  %s554 = scalar_lea.vmem %s1, 40
  %v555 = vld [vmem:[%s554] sm:$0xf]
  %s556 = scalar_lea.vmem %s0, 48
  %v557 = vld [vmem:[%s556] sm:$0xf]
  %v558 = vld [vmem:[%s556 + $0x4] sm:$0xf]
  %v561 = vunpack.c.l.b16 %v557
  %v562 = vunpack.c.l.b16 %v558
  %v563 = vpack.c.b16 %v562, %v561
  %v566 = vsel %vm26, %v555, 0
  %568 = vmatprep.subr.bf16.mxu0 0
  %569 = vmatpush1.bf16.msra.mxu0 %v563
  %570 = vmatprep.subr.bf16.mxu0 0
  %571 = vmatpush1.bf16.msra.mxu0 0
  %572 = vmatprep.subr.bf16.mxu0 0
  %573 = vmatpush1.bf16.msra.mxu0 0
  %574 = vmatprep.subr.bf16.mxu0 0
  %575 = vmatpush1.bf16.msra.mxu0 0
  %576 = vmatprep.subr.bf16.mxu0 0
  %577 = vmatpush1.bf16.msra.mxu0 0
  %578 = vmatprep.subr.bf16.mxu0 0
  %579 = vmatpush1.bf16.msra.mxu0 0
  %580 = vmatprep.subr.bf16.mxu0 0
  %581 = vmatpush1.bf16.msra.mxu0 0
  %582 = vmatprep.subr.bf16.mxu0 0
  %583 = vmatpush1.bf16.msra.mxu0 0
  %584 = vmatprep.subr.bf16.mxu0 0
  %585 = vmatpush1.bf16.msra.mxu0 0
  %586 = vmatprep.subr.bf16.mxu0 0
  %587 = vmatpush1.bf16.msra.mxu0 0
  %588 = vmatprep.subr.bf16.mxu0 0
  %589 = vmatpush1.bf16.msra.mxu0 0
  %590 = vmatprep.subr.bf16.mxu0 0
  %591 = vmatpush1.bf16.msra.mxu0 0
  %592 = vmatprep.subr.bf16.mxu0 0
  %593 = vmatpush1.bf16.msra.mxu0 0
  %594 = vmatprep.subr.bf16.mxu0 0
  %595 = vmatpush1.bf16.msra.mxu0 0
  %596 = vmatprep.subr.bf16.mxu0 0
  %597 = vmatpush1.bf16.msra.mxu0 0
  %598 = vmatprep.subr.bf16.mxu0 0
  %599 = vmatpush1.bf16.msra.mxu0 0
  %600 = vmatprep.mubr.bf16.mxu0 0
  %601 = vmatmul.mubr.bf16.gmra.mrb[0].mxu0 %v566
  %v602 = vpop.f32.mrb[0].mxu0
  %v603 = vadd.f32 0.0, %v602
  %v604 = vpop.f32.mrb[0].mxu0
  %v605 = vpop.f32.mrb[0].mxu0
  %v606 = vpop.f32.mrb[0].mxu0
  %607 = vdwg.mxu0
  %v608 = vadd.f32 %v549, %v603
  %s609 = scalar_lea.vmem %s1, 44
  %v610 = vld [vmem:[%s609] sm:$0xf]
  %s611 = scalar_lea.vmem %s0, 56
  %v612 = vld [vmem:[%s611] sm:$0xf]
  %v613 = vld [vmem:[%s611 + $0x4] sm:$0xf]
  %v616 = vunpack.c.l.b16 %v612
  %v617 = vunpack.c.l.b16 %v613
  %v618 = vpack.c.b16 %v617, %v616
  %v621 = vsel %vm26, %v610, 0
  %623 = vmatprep.subr.bf16.mxu0 0
  %624 = vmatpush1.bf16.msra.mxu0 %v618
  %625 = vmatprep.subr.bf16.mxu0 0
  %626 = vmatpush1.bf16.msra.mxu0 0
  %627 = vmatprep.subr.bf16.mxu0 0
  %628 = vmatpush1.bf16.msra.mxu0 0
  %629 = vmatprep.subr.bf16.mxu0 0
  %630 = vmatpush1.bf16.msra.mxu0 0
  %631 = vmatprep.subr.bf16.mxu0 0
  %632 = vmatpush1.bf16.msra.mxu0 0
  %633 = vmatprep.subr.bf16.mxu0 0
  %634 = vmatpush1.bf16.msra.mxu0 0
  %635 = vmatprep.subr.bf16.mxu0 0
  %636 = vmatpush1.bf16.msra.mxu0 0
  %637 = vmatprep.subr.bf16.mxu0 0
  %638 = vmatpush1.bf16.msra.mxu0 0
  %639 = vmatprep.subr.bf16.mxu0 0
  %640 = vmatpush1.bf16.msra.mxu0 0
  %641 = vmatprep.subr.bf16.mxu0 0
  %642 = vmatpush1.bf16.msra.mxu0 0
  %643 = vmatprep.subr.bf16.mxu0 0
  %644 = vmatpush1.bf16.msra.mxu0 0
  %645 = vmatprep.subr.bf16.mxu0 0
  %646 = vmatpush1.bf16.msra.mxu0 0
  %647 = vmatprep.subr.bf16.mxu0 0
  %648 = vmatpush1.bf16.msra.mxu0 0
  %649 = vmatprep.subr.bf16.mxu0 0
  %650 = vmatpush1.bf16.msra.mxu0 0
  %651 = vmatprep.subr.bf16.mxu0 0
  %652 = vmatpush1.bf16.msra.mxu0 0
  %653 = vmatprep.subr.bf16.mxu0 0
  %654 = vmatpush1.bf16.msra.mxu0 0
  %655 = vmatprep.mubr.bf16.mxu0 0
  %656 = vmatmul.mubr.bf16.gmra.mrb[0].mxu0 %v621
  %v657 = vpop.f32.mrb[0].mxu0
  %v658 = vadd.f32 0.0, %v657
  %v659 = vpop.f32.mrb[0].mxu0
  %v660 = vpop.f32.mrb[0].mxu0
  %v661 = vpop.f32.mrb[0].mxu0
  %662 = vdwg.mxu0
  %v663 = vadd.f32 %v608, %v658
  %s664 = scalar_lea.vmem %s2, 16
  %665 = vst [vmem:[%s664] sm:$0xff] %v663
  %s666 = scalar_lea.vmem %s1, 48
  %v667 = vld [vmem:[%s666] sm:$0xf]
  %v668 = vld [vmem:[%s176] sm:$0xf]
  %v669 = vld [vmem:[%s176 + $0x4] sm:$0xf]
  %s670 = scalar_lea.vmem %s1, 52
  %v671 = vld [vmem:[%s670] sm:$0xf]
  %v672 = vld [vmem:[%s393] sm:$0xf]
  %v673 = vld [vmem:[%s393 + $0x4] sm:$0xf]
  %v676 = vunpack.c.l.b16 %v672
  %v677 = vunpack.c.l.b16 %v673
  %v678 = vpack.c.b16 %v677, %v676
  %v681 = vsel %vm26, %v671, 0
  %683 = vmatprep.subr.bf16.mxu0 0
  %684 = vmatpush1.bf16.msra.mxu0 %v678
  %685 = vmatprep.subr.bf16.mxu0 0
  %686 = vmatpush1.bf16.msra.mxu0 0
  %687 = vmatprep.subr.bf16.mxu0 0
  %688 = vmatpush1.bf16.msra.mxu0 0
  %689 = vmatprep.subr.bf16.mxu0 0
  %690 = vmatpush1.bf16.msra.mxu0 0
  %691 = vmatprep.subr.bf16.mxu0 0
  %692 = vmatpush1.bf16.msra.mxu0 0
  %693 = vmatprep.subr.bf16.mxu0 0
  %694 = vmatpush1.bf16.msra.mxu0 0
  %695 = vmatprep.subr.bf16.mxu0 0
  %696 = vmatpush1.bf16.msra.mxu0 0
  %697 = vmatprep.subr.bf16.mxu0 0
  %698 = vmatpush1.bf16.msra.mxu0 0
  %699 = vmatprep.subr.bf16.mxu0 0
  %700 = vmatpush1.bf16.msra.mxu0 0
  %701 = vmatprep.subr.bf16.mxu0 0
  %702 = vmatpush1.bf16.msra.mxu0 0
  %703 = vmatprep.subr.bf16.mxu0 0
  %704 = vmatpush1.bf16.msra.mxu0 0
  %705 = vmatprep.subr.bf16.mxu0 0
  %706 = vmatpush1.bf16.msra.mxu0 0
  %707 = vmatprep.subr.bf16.mxu0 0
  %708 = vmatpush1.bf16.msra.mxu0 0
  %709 = vmatprep.subr.bf16.mxu0 0
  %710 = vmatpush1.bf16.msra.mxu0 0
  %711 = vmatprep.subr.bf16.mxu0 0
  %712 = vmatpush1.bf16.msra.mxu0 0
  %713 = vmatprep.subr.bf16.mxu0 0
  %714 = vmatpush1.bf16.msra.mxu0 0
  %715 = vmatprep.mubr.bf16.mxu0 0
  %716 = vmatmul.mubr.bf16.gmra.mrb[0].mxu0 %v681
  %v717 = vpop.f32.mrb[0].mxu0
  %v718 = vadd.f32 0.0, %v717
  %v719 = vpop.f32.mrb[0].mxu0
  %v720 = vpop.f32.mrb[0].mxu0
  %v721 = vpop.f32.mrb[0].mxu0
  %722 = vdwg.mxu0
  %v725 = vunpack.c.l.b16 %v668
  %v726 = vunpack.c.l.b16 %v669
  %v727 = vpack.c.b16 %v726, %v725
  %v730 = vsel %vm26, %v667, 0
  %732 = vmatprep.subr.bf16.mxu0 0
  %733 = vmatpush1.bf16.msra.mxu0 %v727
  %734 = vmatprep.subr.bf16.mxu0 0
  %735 = vmatpush1.bf16.msra.mxu0 0
  %736 = vmatprep.subr.bf16.mxu0 0
  %737 = vmatpush1.bf16.msra.mxu0 0
  %738 = vmatprep.subr.bf16.mxu0 0
  %739 = vmatpush1.bf16.msra.mxu0 0
  %740 = vmatprep.subr.bf16.mxu0 0
  %741 = vmatpush1.bf16.msra.mxu0 0
  %742 = vmatprep.subr.bf16.mxu0 0
  %743 = vmatpush1.bf16.msra.mxu0 0
  %744 = vmatprep.subr.bf16.mxu0 0
  %745 = vmatpush1.bf16.msra.mxu0 0
  %746 = vmatprep.subr.bf16.mxu0 0
  %747 = vmatpush1.bf16.msra.mxu0 0
  %748 = vmatprep.subr.bf16.mxu0 0
  %749 = vmatpush1.bf16.msra.mxu0 0
  %750 = vmatprep.subr.bf16.mxu0 0
  %751 = vmatpush1.bf16.msra.mxu0 0
  %752 = vmatprep.subr.bf16.mxu0 0
  %753 = vmatpush1.bf16.msra.mxu0 0
  %754 = vmatprep.subr.bf16.mxu0 0
  %755 = vmatpush1.bf16.msra.mxu0 0
  %756 = vmatprep.subr.bf16.mxu0 0
  %757 = vmatpush1.bf16.msra.mxu0 0
  %758 = vmatprep.subr.bf16.mxu0 0
  %759 = vmatpush1.bf16.msra.mxu0 0
  %760 = vmatprep.subr.bf16.mxu0 0
  %761 = vmatpush1.bf16.msra.mxu0 0
  %762 = vmatprep.subr.bf16.mxu0 0
  %763 = vmatpush1.bf16.msra.mxu0 0
  %764 = vmatprep.mubr.bf16.mxu0 0
  %765 = vmatmul.mubr.bf16.gmra.mrb[0].mxu0 %v730
  %v766 = vpop.f32.mrb[0].mxu0
  %v767 = vadd.f32 %v718, %v766
  %v768 = vpop.f32.mrb[0].mxu0
  %v769 = vpop.f32.mrb[0].mxu0
  %v770 = vpop.f32.mrb[0].mxu0
  %771 = vdwg.mxu0
  %s772 = scalar_lea.vmem %s1, 56
  %v773 = vld [vmem:[%s772] sm:$0xf]
  %v774 = vld [vmem:[%s611] sm:$0xf]
  %v775 = vld [vmem:[%s611 + $0x4] sm:$0xf]
  %v778 = vunpack.c.l.b16 %v774
  %v779 = vunpack.c.l.b16 %v775
  %v780 = vpack.c.b16 %v779, %v778
  %v783 = vsel %vm26, %v773, 0
  %785 = vmatprep.subr.bf16.mxu0 0
  %786 = vmatpush1.bf16.msra.mxu0 %v780
  %787 = vmatprep.subr.bf16.mxu0 0
  %788 = vmatpush1.bf16.msra.mxu0 0
  %789 = vmatprep.subr.bf16.mxu0 0
  %790 = vmatpush1.bf16.msra.mxu0 0
  %791 = vmatprep.subr.bf16.mxu0 0
  %792 = vmatpush1.bf16.msra.mxu0 0
  %793 = vmatprep.subr.bf16.mxu0 0
  %794 = vmatpush1.bf16.msra.mxu0 0
  %795 = vmatprep.subr.bf16.mxu0 0
  %796 = vmatpush1.bf16.msra.mxu0 0
  %797 = vmatprep.subr.bf16.mxu0 0
  %798 = vmatpush1.bf16.msra.mxu0 0
  %799 = vmatprep.subr.bf16.mxu0 0
  %800 = vmatpush1.bf16.msra.mxu0 0
  %801 = vmatprep.subr.bf16.mxu0 0
  %802 = vmatpush1.bf16.msra.mxu0 0
  %803 = vmatprep.subr.bf16.mxu0 0
  %804 = vmatpush1.bf16.msra.mxu0 0
  %805 = vmatprep.subr.bf16.mxu0 0
  %806 = vmatpush1.bf16.msra.mxu0 0
  %807 = vmatprep.subr.bf16.mxu0 0
  %808 = vmatpush1.bf16.msra.mxu0 0
  %809 = vmatprep.subr.bf16.mxu0 0
  %810 = vmatpush1.bf16.msra.mxu0 0
  %811 = vmatprep.subr.bf16.mxu0 0
  %812 = vmatpush1.bf16.msra.mxu0 0
  %813 = vmatprep.subr.bf16.mxu0 0
  %814 = vmatpush1.bf16.msra.mxu0 0
  %815 = vmatprep.subr.bf16.mxu0 0
  %816 = vmatpush1.bf16.msra.mxu0 0
  %817 = vmatprep.mubr.bf16.mxu0 0
  %818 = vmatmul.mubr.bf16.gmra.mrb[0].mxu0 %v783
  %v819 = vpop.f32.mrb[0].mxu0
  %v820 = vadd.f32 0.0, %v819
  %v821 = vpop.f32.mrb[0].mxu0
  %v822 = vpop.f32.mrb[0].mxu0
  %v823 = vpop.f32.mrb[0].mxu0
  %824 = vdwg.mxu0
  %v825 = vadd.f32 %v767, %v820
  %s826 = scalar_lea.vmem %s1, 60
  %v827 = vld [vmem:[%s826] sm:$0xf]
  %s828 = scalar_lea.vmem %s0, 64
  %v829 = vld [vmem:[%s828] sm:$0xf]
  %v830 = vld [vmem:[%s828 + $0x4] sm:$0xf]
  %v833 = vunpack.c.l.b16 %v829
  %v834 = vunpack.c.l.b16 %v830
  %v835 = vpack.c.b16 %v834, %v833
  %v838 = vsel %vm26, %v827, 0
  %840 = vmatprep.subr.bf16.mxu0 0
  %841 = vmatpush1.bf16.msra.mxu0 %v835
  %842 = vmatprep.subr.bf16.mxu0 0
  %843 = vmatpush1.bf16.msra.mxu0 0
  %844 = vmatprep.subr.bf16.mxu0 0
  %845 = vmatpush1.bf16.msra.mxu0 0
  %846 = vmatprep.subr.bf16.mxu0 0
  %847 = vmatpush1.bf16.msra.mxu0 0
  %848 = vmatprep.subr.bf16.mxu0 0
  %849 = vmatpush1.bf16.msra.mxu0 0
  %850 = vmatprep.subr.bf16.mxu0 0
  %851 = vmatpush1.bf16.msra.mxu0 0
  %852 = vmatprep.subr.bf16.mxu0 0
  %853 = vmatpush1.bf16.msra.mxu0 0
  %854 = vmatprep.subr.bf16.mxu0 0
  %855 = vmatpush1.bf16.msra.mxu0 0
  %856 = vmatprep.subr.bf16.mxu0 0
  %857 = vmatpush1.bf16.msra.mxu0 0
  %858 = vmatprep.subr.bf16.mxu0 0
  %859 = vmatpush1.bf16.msra.mxu0 0
  %860 = vmatprep.subr.bf16.mxu0 0
  %861 = vmatpush1.bf16.msra.mxu0 0
  %862 = vmatprep.subr.bf16.mxu0 0
  %863 = vmatpush1.bf16.msra.mxu0 0
  %864 = vmatprep.subr.bf16.mxu0 0
  %865 = vmatpush1.bf16.msra.mxu0 0
  %866 = vmatprep.subr.bf16.mxu0 0
  %867 = vmatpush1.bf16.msra.mxu0 0
  %868 = vmatprep.subr.bf16.mxu0 0
  %869 = vmatpush1.bf16.msra.mxu0 0
  %870 = vmatprep.subr.bf16.mxu0 0
  %871 = vmatpush1.bf16.msra.mxu0 0
  %872 = vmatprep.mubr.bf16.mxu0 0
  %873 = vmatmul.mubr.bf16.gmra.mrb[0].mxu0 %v838
  %v874 = vpop.f32.mrb[0].mxu0
  %v875 = vadd.f32 0.0, %v874
  %v876 = vpop.f32.mrb[0].mxu0
  %v877 = vpop.f32.mrb[0].mxu0
  %v878 = vpop.f32.mrb[0].mxu0
  %879 = vdwg.mxu0
  %v880 = vadd.f32 %v825, %v875
  %s881 = scalar_lea.vmem %s2, 24
  %882 = vst [vmem:[%s881] sm:$0xff] %v880
  // Predicated region
  $region10: #{generator_forward.15} parent=0 // pred_check
    _
  $region11: #{generator_forward.15} parent=0 // pred_check_branch
    %884 = sbr.rel (0) target = $region13
  $region12: #{generator_forward.15} parent=0 // pred_region
    _
  $region13: #{generator_forward.15} parent=0 // pred_fallthru
    _
  // Predicated region
  $region14: #{generator_forward.15} parent=0 // pred_check
    _
  $region15: #{generator_forward.15} parent=0 // pred_check_branch
    %886 = sbr.rel (0) target = $region17
  $region16: #{generator_forward.15} parent=0 // pred_region
    _
  $region17: #{generator_forward.15} parent=0 // pred_fallthru
    _

// kernel: generator_forward.17
$region0: #{generator_forward.17}
  #allocation0 [shape = 'u32[]', space=smem, size = 0x4, offset = 0x4, fixed_abs, tag = 'smem constant byte address 0x4 - core index']
  #allocation1 [shape = 'u32[144,128]{1,0:T(1,128)}', space=vmem, size = 0x12000, scoped, tag = 'internal scratch']
  %s0 = inlined_call_operand.vmem [shape: bf16[9,8,512], index: 0, kind: input, shape index: {}]
  %s1 = inlined_call_operand.vmem [shape: bf16[4,4,3,8], index: 1, kind: input, shape index: {}]
  %s2 = inlined_call_operand.vmem [shape: f32[4,3,512], index: 2, kind: output, shape index: {}]
  %s3 = sld [smem:[#allocation0]]
  $region18: #{generator_forward.17} parent=0
    _
  %s5 = ssub.s32 1, %s3
  %s6 = scalar_select 0, %s5, %s3
  // Predicated region
  $region2: #{generator_forward.17} parent=0 // pred_check
    _
  $region3: #{generator_forward.17} parent=0 // pred_check_branch
    %8 = sbr.rel (0) target = $region5
  $region4: #{generator_forward.17} parent=0 // pred_region
    _
  $region5: #{generator_forward.17} parent=0 // pred_fallthru
    _
  // Predicated region
  $region6: #{generator_forward.17} parent=0 // pred_check
    _
  $region7: #{generator_forward.17} parent=0 // pred_check_branch
    %10 = sbr.rel (0) target = $region9
  $region8: #{generator_forward.17} parent=0 // pred_region
    _
  $region9: #{generator_forward.17} parent=0 // pred_fallthru
    _
  %v12 = vld [vmem:[%s1] sm:$0x3]
  %v13 = vld [vmem:[%s0] sm:$0xff]
  %v14 = vld [vmem:[%s0 + $0x8] sm:$0xff]
  %s15 = scalar_lea.vmem %s1, 2
  %v16 = vld [vmem:[%s15] sm:$0x3]
  %s17 = scalar_lea.vmem %s0, 16
  %v18 = vld [vmem:[%s17] sm:$0xff]
  %v19 = vld [vmem:[%s17 + $0x8] sm:$0xff]
  %v22 = vunpack.c.l.b16 %v18
  %v23 = vunpack.c.h.b16 %v18
  %v24 = vunpack.c.l.b16 %v19
  %v25 = vunpack.c.h.b16 %v19
  %v26 = vpack.c.b16 %v22, %v22
  %v27 = vpack.c.b16 %v23, %v23
  %v28 = vpack.c.b16 %v24, %v24
  %v29 = vpack.c.b16 %v25, %v25
  %vm30 = vcmask 64512
  %v32 = vsel %vm30, %v16, 0
  %vm34 = vcmask 1043456
  %v36 = vsel %vm34, %v26, 0
  %v39 = vsel %vm34, %v27, 0
  %v42 = vsel %vm34, %v28, 0
  %v45 = vsel %vm34, %v29, 0
  %47 = vmatprep.subr.bf16.mxu0 %v39
  %48 = vmatpush1.bf16.msra.mxu0 %v36
  %49 = vmatprep.subr.bf16.mxu0 0
  %50 = vmatpush1.bf16.msra.mxu0 0
  %51 = vmatprep.subr.bf16.mxu0 0
  %52 = vmatpush1.bf16.msra.mxu0 0
  %53 = vmatprep.subr.bf16.mxu0 0
  %54 = vmatpush1.bf16.msra.mxu0 0
  %55 = vmatprep.subr.bf16.mxu0 0
  %56 = vmatpush1.bf16.msra.mxu0 0
  %57 = vmatprep.subr.bf16.mxu0 0
  %58 = vmatpush1.bf16.msra.mxu0 0
  %59 = vmatprep.subr.bf16.mxu0 0
  %60 = vmatpush1.bf16.msra.mxu0 0
  %61 = vmatprep.subr.bf16.mxu0 0
  %62 = vmatpush1.bf16.msra.mxu0 0
  %63 = vmatprep.subr.bf16.mxu0 0
  %64 = vmatpush1.bf16.msra.mxu0 0
  %65 = vmatprep.subr.bf16.mxu0 0
  %66 = vmatpush1.bf16.msra.mxu0 0
  %67 = vmatprep.subr.bf16.mxu0 0
  %68 = vmatpush1.bf16.msra.mxu0 0
  %69 = vmatprep.subr.bf16.mxu0 0
  %70 = vmatpush1.bf16.msra.mxu0 0
  %71 = vmatprep.subr.bf16.mxu0 0
  %72 = vmatpush1.bf16.msra.mxu0 0
  %73 = vmatprep.subr.bf16.mxu0 0
  %74 = vmatpush1.bf16.msra.mxu0 0
  %75 = vmatprep.subr.bf16.mxu0 0
  %76 = vmatpush1.bf16.msra.mxu0 0
  %77 = vmatprep.subr.bf16.mxu0 0
  %78 = vmatpush1.bf16.msra.mxu0 0
  %79 = vmatprep.mubr.bf16.mxu0 0
  %80 = vmatmul.mubr.bf16.gmra.mrb[0].mxu0 %v32
  %v81 = vpop.f32.mrb[0].mxu0
  %v82 = vadd.f32 0.0, %v81
  %v83 = vpop.f32.mrb[0].mxu0
  %v84 = vadd.f32 0.0, %v83
  %v85 = vpop.f32.mrb[0].mxu0
  %v86 = vpop.f32.mrb[0].mxu0
  %87 = vdwg.mxu0
  %88 = vmatprep.subr.bf16.mxu0 %v45
  %89 = vmatpush1.bf16.msra.mxu0 %v42
  %90 = vmatprep.subr.bf16.mxu0 0
  %91 = vmatpush1.bf16.msra.mxu0 0
  %92 = vmatprep.subr.bf16.mxu0 0
  %93 = vmatpush1.bf16.msra.mxu0 0
  %94 = vmatprep.subr.bf16.mxu0 0
  %95 = vmatpush1.bf16.msra.mxu0 0
  %96 = vmatprep.subr.bf16.mxu0 0
  %97 = vmatpush1.bf16.msra.mxu0 0
  %98 = vmatprep.subr.bf16.mxu0 0
  %99 = vmatpush1.bf16.msra.mxu0 0
  %100 = vmatprep.subr.bf16.mxu0 0
  %101 = vmatpush1.bf16.msra.mxu0 0
  %102 = vmatprep.subr.bf16.mxu0 0
  %103 = vmatpush1.bf16.msra.mxu0 0
  %104 = vmatprep.subr.bf16.mxu0 0
  %105 = vmatpush1.bf16.msra.mxu0 0
  %106 = vmatprep.subr.bf16.mxu0 0
  %107 = vmatpush1.bf16.msra.mxu0 0
  %108 = vmatprep.subr.bf16.mxu0 0
  %109 = vmatpush1.bf16.msra.mxu0 0
  %110 = vmatprep.subr.bf16.mxu0 0
  %111 = vmatpush1.bf16.msra.mxu0 0
  %112 = vmatprep.subr.bf16.mxu0 0
  %113 = vmatpush1.bf16.msra.mxu0 0
  %114 = vmatprep.subr.bf16.mxu0 0
  %115 = vmatpush1.bf16.msra.mxu0 0
  %116 = vmatprep.subr.bf16.mxu0 0
  %117 = vmatpush1.bf16.msra.mxu0 0
  %118 = vmatprep.subr.bf16.mxu0 0
  %119 = vmatpush1.bf16.msra.mxu0 0
  %120 = vmatprep.mubr.bf16.mxu0 0
  %121 = vmatmul.mubr.bf16.gmra.mrb[0].mxu0 %v32
  %v122 = vpop.f32.mrb[0].mxu0
  %v123 = vadd.f32 0.0, %v122
  %v124 = vpop.f32.mrb[0].mxu0
  %v125 = vadd.f32 0.0, %v124
  %v126 = vpop.f32.mrb[0].mxu0
  %v127 = vpop.f32.mrb[0].mxu0
  %128 = vdwg.mxu0
  %v131 = vunpack.c.l.b16 %v13
  %v132 = vunpack.c.h.b16 %v13
  %v133 = vunpack.c.l.b16 %v14
  %v134 = vunpack.c.h.b16 %v14
  %v135 = vpack.c.b16 %v131, %v131
  %v136 = vpack.c.b16 %v132, %v132
  %v137 = vpack.c.b16 %v133, %v133
  %v138 = vpack.c.b16 %v134, %v134
  %v140 = vsel %vm30, %v12, 0
  %v143 = vsel %vm34, %v135, 0
  %v146 = vsel %vm34, %v136, 0
  %v149 = vsel %vm34, %v137, 0
  %v152 = vsel %vm34, %v138, 0
  %154 = vmatprep.subr.bf16.mxu0 %v146
  %155 = vmatpush1.bf16.msra.mxu0 %v143
  %156 = vmatprep.subr.bf16.mxu0 0
  %157 = vmatpush1.bf16.msra.mxu0 0
  %158 = vmatprep.subr.bf16.mxu0 0
  %159 = vmatpush1.bf16.msra.mxu0 0
  %160 = vmatprep.subr.bf16.mxu0 0
  %161 = vmatpush1.bf16.msra.mxu0 0
  %162 = vmatprep.subr.bf16.mxu0 0
  %163 = vmatpush1.bf16.msra.mxu0 0
  %164 = vmatprep.subr.bf16.mxu0 0
  %165 = vmatpush1.bf16.msra.mxu0 0
  %166 = vmatprep.subr.bf16.mxu0 0
  %167 = vmatpush1.bf16.msra.mxu0 0
  %168 = vmatprep.subr.bf16.mxu0 0
  %169 = vmatpush1.bf16.msra.mxu0 0
  %170 = vmatprep.subr.bf16.mxu0 0
  %171 = vmatpush1.bf16.msra.mxu0 0
  %172 = vmatprep.subr.bf16.mxu0 0
  %173 = vmatpush1.bf16.msra.mxu0 0
  %174 = vmatprep.subr.bf16.mxu0 0
  %175 = vmatpush1.bf16.msra.mxu0 0
  %176 = vmatprep.subr.bf16.mxu0 0
  %177 = vmatpush1.bf16.msra.mxu0 0
  %178 = vmatprep.subr.bf16.mxu0 0
  %179 = vmatpush1.bf16.msra.mxu0 0
  %180 = vmatprep.subr.bf16.mxu0 0
  %181 = vmatpush1.bf16.msra.mxu0 0
  %182 = vmatprep.subr.bf16.mxu0 0
  %183 = vmatpush1.bf16.msra.mxu0 0
  %184 = vmatprep.subr.bf16.mxu0 0
  %185 = vmatpush1.bf16.msra.mxu0 0
  %186 = vmatprep.mubr.bf16.mxu0 0
  %187 = vmatmul.mubr.bf16.gmra.mrb[0].mxu0 %v140
  %v188 = vpop.f32.mrb[0].mxu0
  %v189 = vadd.f32 %v82, %v188
  %v190 = vpop.f32.mrb[0].mxu0
  %v191 = vadd.f32 %v84, %v190
  %v192 = vpop.f32.mrb[0].mxu0
  %v193 = vpop.f32.mrb[0].mxu0
  %194 = vdwg.mxu0
  %195 = vmatprep.subr.bf16.mxu0 %v152
  %196 = vmatpush1.bf16.msra.mxu0 %v149
  %197 = vmatprep.subr.bf16.mxu0 0
  %198 = vmatpush1.bf16.msra.mxu0 0
  %199 = vmatprep.subr.bf16.mxu0 0
  %200 = vmatpush1.bf16.msra.mxu0 0
  %201 = vmatprep.subr.bf16.mxu0 0
  %202 = vmatpush1.bf16.msra.mxu0 0
  %203 = vmatprep.subr.bf16.mxu0 0
  %204 = vmatpush1.bf16.msra.mxu0 0
  %205 = vmatprep.subr.bf16.mxu0 0
  %206 = vmatpush1.bf16.msra.mxu0 0
  %207 = vmatprep.subr.bf16.mxu0 0
  %208 = vmatpush1.bf16.msra.mxu0 0
  %209 = vmatprep.subr.bf16.mxu0 0
  %210 = vmatpush1.bf16.msra.mxu0 0
  %211 = vmatprep.subr.bf16.mxu0 0
  %212 = vmatpush1.bf16.msra.mxu0 0
  %213 = vmatprep.subr.bf16.mxu0 0
  %214 = vmatpush1.bf16.msra.mxu0 0
  %215 = vmatprep.subr.bf16.mxu0 0
  %216 = vmatpush1.bf16.msra.mxu0 0
  %217 = vmatprep.subr.bf16.mxu0 0
  %218 = vmatpush1.bf16.msra.mxu0 0
  %219 = vmatprep.subr.bf16.mxu0 0
  %220 = vmatpush1.bf16.msra.mxu0 0
  %221 = vmatprep.subr.bf16.mxu0 0
  %222 = vmatpush1.bf16.msra.mxu0 0
  %223 = vmatprep.subr.bf16.mxu0 0
  %224 = vmatpush1.bf16.msra.mxu0 0
  %225 = vmatprep.subr.bf16.mxu0 0
  %226 = vmatpush1.bf16.msra.mxu0 0
  %227 = vmatprep.mubr.bf16.mxu0 0
  %228 = vmatmul.mubr.bf16.gmra.mrb[0].mxu0 %v140
  %v229 = vpop.f32.mrb[0].mxu0
  %v230 = vadd.f32 %v123, %v229
  %v231 = vpop.f32.mrb[0].mxu0
  %v232 = vadd.f32 %v125, %v231
  %v233 = vpop.f32.mrb[0].mxu0
  %v234 = vpop.f32.mrb[0].mxu0
  %235 = vdwg.mxu0
  %s236 = scalar_lea.vmem %s1, 4
  %v237 = vld [vmem:[%s236] sm:$0x3]
  %s238 = scalar_lea.vmem %s0, 48
  %v239 = vld [vmem:[%s238] sm:$0xff]
  %v240 = vld [vmem:[%s238 + $0x8] sm:$0xff]
  %v243 = vunpack.c.l.b16 %v239
  %v244 = vunpack.c.h.b16 %v239
  %v245 = vunpack.c.l.b16 %v240
  %v246 = vunpack.c.h.b16 %v240
  %v247 = vpack.c.b16 %v243, %v243
  %v248 = vpack.c.b16 %v244, %v244
  %v249 = vpack.c.b16 %v245, %v245
  %v250 = vpack.c.b16 %v246, %v246
  %v252 = vsel %vm30, %v237, 0
  %v255 = vsel %vm34, %v247, 0
  %v258 = vsel %vm34, %v248, 0
  %v261 = vsel %vm34, %v249, 0
  %v264 = vsel %vm34, %v250, 0
  %266 = vmatprep.subr.bf16.mxu0 %v258
  %267 = vmatpush1.bf16.msra.mxu0 %v255
  %268 = vmatprep.subr.bf16.mxu0 0
  %269 = vmatpush1.bf16.msra.mxu0 0
  %270 = vmatprep.subr.bf16.mxu0 0
  %271 = vmatpush1.bf16.msra.mxu0 0
  %272 = vmatprep.subr.bf16.mxu0 0
  %273 = vmatpush1.bf16.msra.mxu0 0
  %274 = vmatprep.subr.bf16.mxu0 0
  %275 = vmatpush1.bf16.msra.mxu0 0
  %276 = vmatprep.subr.bf16.mxu0 0
  %277 = vmatpush1.bf16.msra.mxu0 0
  %278 = vmatprep.subr.bf16.mxu0 0
  %279 = vmatpush1.bf16.msra.mxu0 0
  %280 = vmatprep.subr.bf16.mxu0 0
  %281 = vmatpush1.bf16.msra.mxu0 0
  %282 = vmatprep.subr.bf16.mxu0 0
  %283 = vmatpush1.bf16.msra.mxu0 0
  %284 = vmatprep.subr.bf16.mxu0 0
  %285 = vmatpush1.bf16.msra.mxu0 0
  %286 = vmatprep.subr.bf16.mxu0 0
  %287 = vmatpush1.bf16.msra.mxu0 0
  %288 = vmatprep.subr.bf16.mxu0 0
  %289 = vmatpush1.bf16.msra.mxu0 0
  %290 = vmatprep.subr.bf16.mxu0 0
  %291 = vmatpush1.bf16.msra.mxu0 0
  %292 = vmatprep.subr.bf16.mxu0 0
  %293 = vmatpush1.bf16.msra.mxu0 0
  %294 = vmatprep.subr.bf16.mxu0 0
  %295 = vmatpush1.bf16.msra.mxu0 0
  %296 = vmatprep.subr.bf16.mxu0 0
  %297 = vmatpush1.bf16.msra.mxu0 0
  %298 = vmatprep.mubr.bf16.mxu0 0
  %299 = vmatmul.mubr.bf16.gmra.mrb[0].mxu0 %v252
  %v300 = vpop.f32.mrb[0].mxu0
  %v301 = vadd.f32 0.0, %v300
  %v302 = vpop.f32.mrb[0].mxu0
  %v303 = vadd.f32 0.0, %v302
  %v304 = vpop.f32.mrb[0].mxu0
  %v305 = vpop.f32.mrb[0].mxu0
  %306 = vdwg.mxu0
  %307 = vmatprep.subr.bf16.mxu0 %v264
  %308 = vmatpush1.bf16.msra.mxu0 %v261
  %309 = vmatprep.subr.bf16.mxu0 0
  %310 = vmatpush1.bf16.msra.mxu0 0
  %311 = vmatprep.subr.bf16.mxu0 0
  %312 = vmatpush1.bf16.msra.mxu0 0
  %313 = vmatprep.subr.bf16.mxu0 0
  %314 = vmatpush1.bf16.msra.mxu0 0
  %315 = vmatprep.subr.bf16.mxu0 0
  %316 = vmatpush1.bf16.msra.mxu0 0
  %317 = vmatprep.subr.bf16.mxu0 0
  %318 = vmatpush1.bf16.msra.mxu0 0
  %319 = vmatprep.subr.bf16.mxu0 0
  %320 = vmatpush1.bf16.msra.mxu0 0
  %321 = vmatprep.subr.bf16.mxu0 0
  %322 = vmatpush1.bf16.msra.mxu0 0
  %323 = vmatprep.subr.bf16.mxu0 0
  %324 = vmatpush1.bf16.msra.mxu0 0
  %325 = vmatprep.subr.bf16.mxu0 0
  %326 = vmatpush1.bf16.msra.mxu0 0
  %327 = vmatprep.subr.bf16.mxu0 0
  %328 = vmatpush1.bf16.msra.mxu0 0
  %329 = vmatprep.subr.bf16.mxu0 0
  %330 = vmatpush1.bf16.msra.mxu0 0
  %331 = vmatprep.subr.bf16.mxu0 0
  %332 = vmatpush1.bf16.msra.mxu0 0
  %333 = vmatprep.subr.bf16.mxu0 0
  %334 = vmatpush1.bf16.msra.mxu0 0
  %335 = vmatprep.subr.bf16.mxu0 0
  %336 = vmatpush1.bf16.msra.mxu0 0
  %337 = vmatprep.subr.bf16.mxu0 0
  %338 = vmatpush1.bf16.msra.mxu0 0
  %339 = vmatprep.mubr.bf16.mxu0 0
  %340 = vmatmul.mubr.bf16.gmra.mrb[0].mxu0 %v252
  %v341 = vpop.f32.mrb[0].mxu0
  %v342 = vadd.f32 0.0, %v341
  %v343 = vpop.f32.mrb[0].mxu0
  %v344 = vadd.f32 0.0, %v343
  %v345 = vpop.f32.mrb[0].mxu0
  %v346 = vpop.f32.mrb[0].mxu0
  %347 = vdwg.mxu0
  %v348 = vadd.f32 %v189, %v301
  %v349 = vadd.f32 %v191, %v303
  %v350 = vadd.f32 %v230, %v342
  %v351 = vadd.f32 %v232, %v344
  %s352 = scalar_lea.vmem %s1, 6
  %v353 = vld [vmem:[%s352] sm:$0x3]
  %s354 = scalar_lea.vmem %s0, 64
  %v355 = vld [vmem:[%s354] sm:$0xff]
  %v356 = vld [vmem:[%s354 + $0x8] sm:$0xff]
  %v359 = vunpack.c.l.b16 %v355
  %v360 = vunpack.c.h.b16 %v355
  %v361 = vunpack.c.l.b16 %v356
  %v362 = vunpack.c.h.b16 %v356
  %v363 = vpack.c.b16 %v359, %v359
  %v364 = vpack.c.b16 %v360, %v360
  %v365 = vpack.c.b16 %v361, %v361
  %v366 = vpack.c.b16 %v362, %v362
  %v368 = vsel %vm30, %v353, 0
  %v371 = vsel %vm34, %v363, 0
  %v374 = vsel %vm34, %v364, 0
  %v377 = vsel %vm34, %v365, 0
  %v380 = vsel %vm34, %v366, 0
  %382 = vmatprep.subr.bf16.mxu0 %v374
  %383 = vmatpush1.bf16.msra.mxu0 %v371
  %384 = vmatprep.subr.bf16.mxu0 0
  %385 = vmatpush1.bf16.msra.mxu0 0
  %386 = vmatprep.subr.bf16.mxu0 0
  %387 = vmatpush1.bf16.msra.mxu0 0
  %388 = vmatprep.subr.bf16.mxu0 0
  %389 = vmatpush1.bf16.msra.mxu0 0
  %390 = vmatprep.subr.bf16.mxu0 0
  %391 = vmatpush1.bf16.msra.mxu0 0
  %392 = vmatprep.subr.bf16.mxu0 0
  %393 = vmatpush1.bf16.msra.mxu0 0
  %394 = vmatprep.subr.bf16.mxu0 0
  %395 = vmatpush1.bf16.msra.mxu0 0
  %396 = vmatprep.subr.bf16.mxu0 0
  %397 = vmatpush1.bf16.msra.mxu0 0
  %398 = vmatprep.subr.bf16.mxu0 0
  %399 = vmatpush1.bf16.msra.mxu0 0
  %400 = vmatprep.subr.bf16.mxu0 0
  %401 = vmatpush1.bf16.msra.mxu0 0
  %402 = vmatprep.subr.bf16.mxu0 0
  %403 = vmatpush1.bf16.msra.mxu0 0
  %404 = vmatprep.subr.bf16.mxu0 0
  %405 = vmatpush1.bf16.msra.mxu0 0
  %406 = vmatprep.subr.bf16.mxu0 0
  %407 = vmatpush1.bf16.msra.mxu0 0
  %408 = vmatprep.subr.bf16.mxu0 0
  %409 = vmatpush1.bf16.msra.mxu0 0
  %410 = vmatprep.subr.bf16.mxu0 0
  %411 = vmatpush1.bf16.msra.mxu0 0
  %412 = vmatprep.subr.bf16.mxu0 0
  %413 = vmatpush1.bf16.msra.mxu0 0
  %414 = vmatprep.mubr.bf16.mxu0 0
  %415 = vmatmul.mubr.bf16.gmra.mrb[0].mxu0 %v368
  %v416 = vpop.f32.mrb[0].mxu0
  %v417 = vadd.f32 0.0, %v416
  %v418 = vpop.f32.mrb[0].mxu0
  %v419 = vadd.f32 0.0, %v418
  %v420 = vpop.f32.mrb[0].mxu0
  %v421 = vpop.f32.mrb[0].mxu0
  %422 = vdwg.mxu0
  %423 = vmatprep.subr.bf16.mxu0 %v380
  %424 = vmatpush1.bf16.msra.mxu0 %v377
  %425 = vmatprep.subr.bf16.mxu0 0
  %426 = vmatpush1.bf16.msra.mxu0 0
  %427 = vmatprep.subr.bf16.mxu0 0
  %428 = vmatpush1.bf16.msra.mxu0 0
  %429 = vmatprep.subr.bf16.mxu0 0
  %430 = vmatpush1.bf16.msra.mxu0 0
  %431 = vmatprep.subr.bf16.mxu0 0
  %432 = vmatpush1.bf16.msra.mxu0 0
  %433 = vmatprep.subr.bf16.mxu0 0
  %434 = vmatpush1.bf16.msra.mxu0 0
  %435 = vmatprep.subr.bf16.mxu0 0
  %436 = vmatpush1.bf16.msra.mxu0 0
  %437 = vmatprep.subr.bf16.mxu0 0
  %438 = vmatpush1.bf16.msra.mxu0 0
  %439 = vmatprep.subr.bf16.mxu0 0
  %440 = vmatpush1.bf16.msra.mxu0 0
  %441 = vmatprep.subr.bf16.mxu0 0
  %442 = vmatpush1.bf16.msra.mxu0 0
  %443 = vmatprep.subr.bf16.mxu0 0
  %444 = vmatpush1.bf16.msra.mxu0 0
  %445 = vmatprep.subr.bf16.mxu0 0
  %446 = vmatpush1.bf16.msra.mxu0 0
  %447 = vmatprep.subr.bf16.mxu0 0
  %448 = vmatpush1.bf16.msra.mxu0 0
  %449 = vmatprep.subr.bf16.mxu0 0
  %450 = vmatpush1.bf16.msra.mxu0 0
  %451 = vmatprep.subr.bf16.mxu0 0
  %452 = vmatpush1.bf16.msra.mxu0 0
  %453 = vmatprep.subr.bf16.mxu0 0
  %454 = vmatpush1.bf16.msra.mxu0 0
  %455 = vmatprep.mubr.bf16.mxu0 0
  %456 = vmatmul.mubr.bf16.gmra.mrb[0].mxu0 %v368
  %v457 = vpop.f32.mrb[0].mxu0
  %v458 = vadd.f32 0.0, %v457
  %v459 = vpop.f32.mrb[0].mxu0
  %v460 = vadd.f32 0.0, %v459
  %v461 = vpop.f32.mrb[0].mxu0
  %v462 = vpop.f32.mrb[0].mxu0
  %463 = vdwg.mxu0
  %v464 = vadd.f32 %v348, %v417
  %v465 = vadd.f32 %v349, %v419
  %v466 = vadd.f32 %v350, %v458
  %v467 = vadd.f32 %v351, %v460
  %v468 = vtanh.pop %v464
  %v469 = vtanh.pop %v465
  %v470 = vtanh.pop %v466
  %v471 = vtanh.pop %v467
  %v476 = vcombine.low %v468, %v469
  %v477 = vcombine.low %v470, %v471
  %480 = vst [vmem:[%s2] sm:$0x77] %v476
  %481 = vst [vmem:[%s2 + $0x8] sm:$0x77] %v477
  %s482 = scalar_lea.vmem %s1, 8
  %v483 = vld [vmem:[%s482] sm:$0x3]
  %v484 = vld [vmem:[%s17] sm:$0xff]
  %v485 = vld [vmem:[%s17 + $0x8] sm:$0xff]
  %s486 = scalar_lea.vmem %s1, 10
  %v487 = vld [vmem:[%s486] sm:$0x3]
  %s488 = scalar_lea.vmem %s0, 32
  %v489 = vld [vmem:[%s488] sm:$0xff]
  %v490 = vld [vmem:[%s488 + $0x8] sm:$0xff]
  %v493 = vunpack.c.l.b16 %v489
  %v494 = vunpack.c.h.b16 %v489
  %v495 = vunpack.c.l.b16 %v490
  %v496 = vunpack.c.h.b16 %v490
  %v497 = vpack.c.b16 %v493, %v493
  %v498 = vpack.c.b16 %v494, %v494
  %v499 = vpack.c.b16 %v495, %v495
  %v500 = vpack.c.b16 %v496, %v496
  %v502 = vsel %vm30, %v487, 0
  %v505 = vsel %vm34, %v497, 0
  %v508 = vsel %vm34, %v498, 0
  %v511 = vsel %vm34, %v499, 0
  %v514 = vsel %vm34, %v500, 0
  %516 = vmatprep.subr.bf16.mxu0 %v508
  %517 = vmatpush1.bf16.msra.mxu0 %v505
  %518 = vmatprep.subr.bf16.mxu0 0
  %519 = vmatpush1.bf16.msra.mxu0 0
  %520 = vmatprep.subr.bf16.mxu0 0
  %521 = vmatpush1.bf16.msra.mxu0 0
  %522 = vmatprep.subr.bf16.mxu0 0
  %523 = vmatpush1.bf16.msra.mxu0 0
  %524 = vmatprep.subr.bf16.mxu0 0
  %525 = vmatpush1.bf16.msra.mxu0 0
  %526 = vmatprep.subr.bf16.mxu0 0
  %527 = vmatpush1.bf16.msra.mxu0 0
  %528 = vmatprep.subr.bf16.mxu0 0
  %529 = vmatpush1.bf16.msra.mxu0 0
  %530 = vmatprep.subr.bf16.mxu0 0
  %531 = vmatpush1.bf16.msra.mxu0 0
  %532 = vmatprep.subr.bf16.mxu0 0
  %533 = vmatpush1.bf16.msra.mxu0 0
  %534 = vmatprep.subr.bf16.mxu0 0
  %535 = vmatpush1.bf16.msra.mxu0 0
  %536 = vmatprep.subr.bf16.mxu0 0
  %537 = vmatpush1.bf16.msra.mxu0 0
  %538 = vmatprep.subr.bf16.mxu0 0
  %539 = vmatpush1.bf16.msra.mxu0 0
  %540 = vmatprep.subr.bf16.mxu0 0
  %541 = vmatpush1.bf16.msra.mxu0 0
  %542 = vmatprep.subr.bf16.mxu0 0
  %543 = vmatpush1.bf16.msra.mxu0 0
  %544 = vmatprep.subr.bf16.mxu0 0
  %545 = vmatpush1.bf16.msra.mxu0 0
  %546 = vmatprep.subr.bf16.mxu0 0
  %547 = vmatpush1.bf16.msra.mxu0 0
  %548 = vmatprep.mubr.bf16.mxu0 0
  %549 = vmatmul.mubr.bf16.gmra.mrb[0].mxu0 %v502
  %v550 = vpop.f32.mrb[0].mxu0
  %v551 = vadd.f32 0.0, %v550
  %v552 = vpop.f32.mrb[0].mxu0
  %v553 = vadd.f32 0.0, %v552
  %v554 = vpop.f32.mrb[0].mxu0
  %v555 = vpop.f32.mrb[0].mxu0
  %556 = vdwg.mxu0
  %557 = vmatprep.subr.bf16.mxu0 %v514
  %558 = vmatpush1.bf16.msra.mxu0 %v511
  %559 = vmatprep.subr.bf16.mxu0 0
  %560 = vmatpush1.bf16.msra.mxu0 0
  %561 = vmatprep.subr.bf16.mxu0 0
  %562 = vmatpush1.bf16.msra.mxu0 0
  %563 = vmatprep.subr.bf16.mxu0 0
  %564 = vmatpush1.bf16.msra.mxu0 0
  %565 = vmatprep.subr.bf16.mxu0 0
  %566 = vmatpush1.bf16.msra.mxu0 0
  %567 = vmatprep.subr.bf16.mxu0 0
  %568 = vmatpush1.bf16.msra.mxu0 0
  %569 = vmatprep.subr.bf16.mxu0 0
  %570 = vmatpush1.bf16.msra.mxu0 0
  %571 = vmatprep.subr.bf16.mxu0 0
  %572 = vmatpush1.bf16.msra.mxu0 0
  %573 = vmatprep.subr.bf16.mxu0 0
  %574 = vmatpush1.bf16.msra.mxu0 0
  %575 = vmatprep.subr.bf16.mxu0 0
  %576 = vmatpush1.bf16.msra.mxu0 0
  %577 = vmatprep.subr.bf16.mxu0 0
  %578 = vmatpush1.bf16.msra.mxu0 0
  %579 = vmatprep.subr.bf16.mxu0 0
  %580 = vmatpush1.bf16.msra.mxu0 0
  %581 = vmatprep.subr.bf16.mxu0 0
  %582 = vmatpush1.bf16.msra.mxu0 0
  %583 = vmatprep.subr.bf16.mxu0 0
  %584 = vmatpush1.bf16.msra.mxu0 0
  %585 = vmatprep.subr.bf16.mxu0 0
  %586 = vmatpush1.bf16.msra.mxu0 0
  %587 = vmatprep.subr.bf16.mxu0 0
  %588 = vmatpush1.bf16.msra.mxu0 0
  %589 = vmatprep.mubr.bf16.mxu0 0
  %590 = vmatmul.mubr.bf16.gmra.mrb[0].mxu0 %v502
  %v591 = vpop.f32.mrb[0].mxu0
  %v592 = vadd.f32 0.0, %v591
  %v593 = vpop.f32.mrb[0].mxu0
  %v594 = vadd.f32 0.0, %v593
  %v595 = vpop.f32.mrb[0].mxu0
  %v596 = vpop.f32.mrb[0].mxu0
  %597 = vdwg.mxu0
  %v600 = vunpack.c.l.b16 %v484
  %v601 = vunpack.c.h.b16 %v484
  %v602 = vunpack.c.l.b16 %v485
  %v603 = vunpack.c.h.b16 %v485
  %v604 = vpack.c.b16 %v600, %v600
  %v605 = vpack.c.b16 %v601, %v601
  %v606 = vpack.c.b16 %v602, %v602
  %v607 = vpack.c.b16 %v603, %v603
  %v609 = vsel %vm30, %v483, 0
  %v612 = vsel %vm34, %v604, 0
  %v615 = vsel %vm34, %v605, 0
  %v618 = vsel %vm34, %v606, 0
  %v621 = vsel %vm34, %v607, 0
  %623 = vmatprep.subr.bf16.mxu0 %v615
  %624 = vmatpush1.bf16.msra.mxu0 %v612
  %625 = vmatprep.subr.bf16.mxu0 0
  %626 = vmatpush1.bf16.msra.mxu0 0
  %627 = vmatprep.subr.bf16.mxu0 0
  %628 = vmatpush1.bf16.msra.mxu0 0
  %629 = vmatprep.subr.bf16.mxu0 0
  %630 = vmatpush1.bf16.msra.mxu0 0
  %631 = vmatprep.subr.bf16.mxu0 0
  %632 = vmatpush1.bf16.msra.mxu0 0
  %633 = vmatprep.subr.bf16.mxu0 0
  %634 = vmatpush1.bf16.msra.mxu0 0
  %635 = vmatprep.subr.bf16.mxu0 0
  %636 = vmatpush1.bf16.msra.mxu0 0
  %637 = vmatprep.subr.bf16.mxu0 0
  %638 = vmatpush1.bf16.msra.mxu0 0
  %639 = vmatprep.subr.bf16.mxu0 0
  %640 = vmatpush1.bf16.msra.mxu0 0
  %641 = vmatprep.subr.bf16.mxu0 0
  %642 = vmatpush1.bf16.msra.mxu0 0
  %643 = vmatprep.subr.bf16.mxu0 0
  %644 = vmatpush1.bf16.msra.mxu0 0
  %645 = vmatprep.subr.bf16.mxu0 0
  %646 = vmatpush1.bf16.msra.mxu0 0
  %647 = vmatprep.subr.bf16.mxu0 0
  %648 = vmatpush1.bf16.msra.mxu0 0
  %649 = vmatprep.subr.bf16.mxu0 0
  %650 = vmatpush1.bf16.msra.mxu0 0
  %651 = vmatprep.subr.bf16.mxu0 0
  %652 = vmatpush1.bf16.msra.mxu0 0
  %653 = vmatprep.subr.bf16.mxu0 0
  %654 = vmatpush1.bf16.msra.mxu0 0
  %655 = vmatprep.mubr.bf16.mxu0 0
  %656 = vmatmul.mubr.bf16.gmra.mrb[0].mxu0 %v609
  %v657 = vpop.f32.mrb[0].mxu0
  %v658 = vadd.f32 %v551, %v657
  %v659 = vpop.f32.mrb[0].mxu0
  %v660 = vadd.f32 %v553, %v659
  %v661 = vpop.f32.mrb[0].mxu0
  %v662 = vpop.f32.mrb[0].mxu0
  %663 = vdwg.mxu0
  %664 = vmatprep.subr.bf16.mxu0 %v621
  %665 = vmatpush1.bf16.msra.mxu0 %v618
  %666 = vmatprep.subr.bf16.mxu0 0
  %667 = vmatpush1.bf16.msra.mxu0 0
  %668 = vmatprep.subr.bf16.mxu0 0
  %669 = vmatpush1.bf16.msra.mxu0 0
  %670 = vmatprep.subr.bf16.mxu0 0
  %671 = vmatpush1.bf16.msra.mxu0 0
  %672 = vmatprep.subr.bf16.mxu0 0
  %673 = vmatpush1.bf16.msra.mxu0 0
  %674 = vmatprep.subr.bf16.mxu0 0
  %675 = vmatpush1.bf16.msra.mxu0 0
  %676 = vmatprep.subr.bf16.mxu0 0
  %677 = vmatpush1.bf16.msra.mxu0 0
  %678 = vmatprep.subr.bf16.mxu0 0
  %679 = vmatpush1.bf16.msra.mxu0 0
  %680 = vmatprep.subr.bf16.mxu0 0
  %681 = vmatpush1.bf16.msra.mxu0 0
  %682 = vmatprep.subr.bf16.mxu0 0
  %683 = vmatpush1.bf16.msra.mxu0 0
  %684 = vmatprep.subr.bf16.mxu0 0
  %685 = vmatpush1.bf16.msra.mxu0 0
  %686 = vmatprep.subr.bf16.mxu0 0
  %687 = vmatpush1.bf16.msra.mxu0 0
  %688 = vmatprep.subr.bf16.mxu0 0
  %689 = vmatpush1.bf16.msra.mxu0 0
  %690 = vmatprep.subr.bf16.mxu0 0
  %691 = vmatpush1.bf16.msra.mxu0 0
  %692 = vmatprep.subr.bf16.mxu0 0
  %693 = vmatpush1.bf16.msra.mxu0 0
  %694 = vmatprep.subr.bf16.mxu0 0
  %695 = vmatpush1.bf16.msra.mxu0 0
  %696 = vmatprep.mubr.bf16.mxu0 0
  %697 = vmatmul.mubr.bf16.gmra.mrb[0].mxu0 %v609
  %v698 = vpop.f32.mrb[0].mxu0
  %v699 = vadd.f32 %v592, %v698
  %v700 = vpop.f32.mrb[0].mxu0
  %v701 = vadd.f32 %v594, %v700
  %v702 = vpop.f32.mrb[0].mxu0
  %v703 = vpop.f32.mrb[0].mxu0
  %704 = vdwg.mxu0
  %s705 = scalar_lea.vmem %s1, 12
  %v706 = vld [vmem:[%s705] sm:$0x3]
  %v707 = vld [vmem:[%s354] sm:$0xff]
  %v708 = vld [vmem:[%s354 + $0x8] sm:$0xff]
  %v711 = vunpack.c.l.b16 %v707
  %v712 = vunpack.c.h.b16 %v707
  %v713 = vunpack.c.l.b16 %v708
  %v714 = vunpack.c.h.b16 %v708
  %v715 = vpack.c.b16 %v711, %v711
  %v716 = vpack.c.b16 %v712, %v712
  %v717 = vpack.c.b16 %v713, %v713
  %v718 = vpack.c.b16 %v714, %v714
  %v720 = vsel %vm30, %v706, 0
  %v723 = vsel %vm34, %v715, 0
  %v726 = vsel %vm34, %v716, 0
  %v729 = vsel %vm34, %v717, 0
  %v732 = vsel %vm34, %v718, 0
  %734 = vmatprep.subr.bf16.mxu0 %v726
  %735 = vmatpush1.bf16.msra.mxu0 %v723
  %736 = vmatprep.subr.bf16.mxu0 0
  %737 = vmatpush1.bf16.msra.mxu0 0
  %738 = vmatprep.subr.bf16.mxu0 0
  %739 = vmatpush1.bf16.msra.mxu0 0
  %740 = vmatprep.subr.bf16.mxu0 0
  %741 = vmatpush1.bf16.msra.mxu0 0
  %742 = vmatprep.subr.bf16.mxu0 0
  %743 = vmatpush1.bf16.msra.mxu0 0
  %744 = vmatprep.subr.bf16.mxu0 0
  %745 = vmatpush1.bf16.msra.mxu0 0
  %746 = vmatprep.subr.bf16.mxu0 0
  %747 = vmatpush1.bf16.msra.mxu0 0
  %748 = vmatprep.subr.bf16.mxu0 0
  %749 = vmatpush1.bf16.msra.mxu0 0
  %750 = vmatprep.subr.bf16.mxu0 0
  %751 = vmatpush1.bf16.msra.mxu0 0
  %752 = vmatprep.subr.bf16.mxu0 0
  %753 = vmatpush1.bf16.msra.mxu0 0
  %754 = vmatprep.subr.bf16.mxu0 0
  %755 = vmatpush1.bf16.msra.mxu0 0
  %756 = vmatprep.subr.bf16.mxu0 0
  %757 = vmatpush1.bf16.msra.mxu0 0
  %758 = vmatprep.subr.bf16.mxu0 0
  %759 = vmatpush1.bf16.msra.mxu0 0
  %760 = vmatprep.subr.bf16.mxu0 0
  %761 = vmatpush1.bf16.msra.mxu0 0
  %762 = vmatprep.subr.bf16.mxu0 0
  %763 = vmatpush1.bf16.msra.mxu0 0
  %764 = vmatprep.subr.bf16.mxu0 0
  %765 = vmatpush1.bf16.msra.mxu0 0
  %766 = vmatprep.mubr.bf16.mxu0 0
  %767 = vmatmul.mubr.bf16.gmra.mrb[0].mxu0 %v720
  %v768 = vpop.f32.mrb[0].mxu0
  %v769 = vadd.f32 0.0, %v768
  %v770 = vpop.f32.mrb[0].mxu0
  %v771 = vadd.f32 0.0, %v770
  %v772 = vpop.f32.mrb[0].mxu0
  %v773 = vpop.f32.mrb[0].mxu0
  %774 = vdwg.mxu0
  %775 = vmatprep.subr.bf16.mxu0 %v732
  %776 = vmatpush1.bf16.msra.mxu0 %v729
  %777 = vmatprep.subr.bf16.mxu0 0
  %778 = vmatpush1.bf16.msra.mxu0 0
  %779 = vmatprep.subr.bf16.mxu0 0
  %780 = vmatpush1.bf16.msra.mxu0 0
  %781 = vmatprep.subr.bf16.mxu0 0
  %782 = vmatpush1.bf16.msra.mxu0 0
  %783 = vmatprep.subr.bf16.mxu0 0
  %784 = vmatpush1.bf16.msra.mxu0 0
  %785 = vmatprep.subr.bf16.mxu0 0
  %786 = vmatpush1.bf16.msra.mxu0 0
  %787 = vmatprep.subr.bf16.mxu0 0
  %788 = vmatpush1.bf16.msra.mxu0 0
  %789 = vmatprep.subr.bf16.mxu0 0
  %790 = vmatpush1.bf16.msra.mxu0 0
  %791 = vmatprep.subr.bf16.mxu0 0
  %792 = vmatpush1.bf16.msra.mxu0 0
  %793 = vmatprep.subr.bf16.mxu0 0
  %794 = vmatpush1.bf16.msra.mxu0 0
  %795 = vmatprep.subr.bf16.mxu0 0
  %796 = vmatpush1.bf16.msra.mxu0 0
  %797 = vmatprep.subr.bf16.mxu0 0
  %798 = vmatpush1.bf16.msra.mxu0 0
  %799 = vmatprep.subr.bf16.mxu0 0
  %800 = vmatpush1.bf16.msra.mxu0 0
  %801 = vmatprep.subr.bf16.mxu0 0
  %802 = vmatpush1.bf16.msra.mxu0 0
  %803 = vmatprep.subr.bf16.mxu0 0
  %804 = vmatpush1.bf16.msra.mxu0 0
  %805 = vmatprep.subr.bf16.mxu0 0
  %806 = vmatpush1.bf16.msra.mxu0 0
  %807 = vmatprep.mubr.bf16.mxu0 0
  %808 = vmatmul.mubr.bf16.gmra.mrb[0].mxu0 %v720
  %v809 = vpop.f32.mrb[0].mxu0
  %v810 = vadd.f32 0.0, %v809
  %v811 = vpop.f32.mrb[0].mxu0
  %v812 = vadd.f32 0.0, %v811
  %v813 = vpop.f32.mrb[0].mxu0
  %v814 = vpop.f32.mrb[0].mxu0
  %815 = vdwg.mxu0
  %v816 = vadd.f32 %v658, %v769
  %v817 = vadd.f32 %v660, %v771
  %v818 = vadd.f32 %v699, %v810
  %v819 = vadd.f32 %v701, %v812
  %s820 = scalar_lea.vmem %s1, 14
  %v821 = vld [vmem:[%s820] sm:$0x3]
  %s822 = scalar_lea.vmem %s0, 80
  %v823 = vld [vmem:[%s822] sm:$0xff]
  %v824 = vld [vmem:[%s822 + $0x8] sm:$0xff]
  %v827 = vunpack.c.l.b16 %v823
  %v828 = vunpack.c.h.b16 %v823
  %v829 = vunpack.c.l.b16 %v824
  %v830 = vunpack.c.h.b16 %v824
  %v831 = vpack.c.b16 %v827, %v827
  %v832 = vpack.c.b16 %v828, %v828
  %v833 = vpack.c.b16 %v829, %v829
  %v834 = vpack.c.b16 %v830, %v830
  %v836 = vsel %vm30, %v821, 0
  %v839 = vsel %vm34, %v831, 0
  %v842 = vsel %vm34, %v832, 0
  %v845 = vsel %vm34, %v833, 0
  %v848 = vsel %vm34, %v834, 0
  %850 = vmatprep.subr.bf16.mxu0 %v842
  %851 = vmatpush1.bf16.msra.mxu0 %v839
  %852 = vmatprep.subr.bf16.mxu0 0
  %853 = vmatpush1.bf16.msra.mxu0 0
  %854 = vmatprep.subr.bf16.mxu0 0
  %855 = vmatpush1.bf16.msra.mxu0 0
  %856 = vmatprep.subr.bf16.mxu0 0
  %857 = vmatpush1.bf16.msra.mxu0 0
  %858 = vmatprep.subr.bf16.mxu0 0
  %859 = vmatpush1.bf16.msra.mxu0 0
  %860 = vmatprep.subr.bf16.mxu0 0
  %861 = vmatpush1.bf16.msra.mxu0 0
  %862 = vmatprep.subr.bf16.mxu0 0
  %863 = vmatpush1.bf16.msra.mxu0 0
  %864 = vmatprep.subr.bf16.mxu0 0
  %865 = vmatpush1.bf16.msra.mxu0 0
  %866 = vmatprep.subr.bf16.mxu0 0
  %867 = vmatpush1.bf16.msra.mxu0 0
  %868 = vmatprep.subr.bf16.mxu0 0
  %869 = vmatpush1.bf16.msra.mxu0 0
  %870 = vmatprep.subr.bf16.mxu0 0
  %871 = vmatpush1.bf16.msra.mxu0 0
  %872 = vmatprep.subr.bf16.mxu0 0
  %873 = vmatpush1.bf16.msra.mxu0 0
  %874 = vmatprep.subr.bf16.mxu0 0
  %875 = vmatpush1.bf16.msra.mxu0 0
  %876 = vmatprep.subr.bf16.mxu0 0
  %877 = vmatpush1.bf16.msra.mxu0 0
  %878 = vmatprep.subr.bf16.mxu0 0
  %879 = vmatpush1.bf16.msra.mxu0 0
  %880 = vmatprep.subr.bf16.mxu0 0
  %881 = vmatpush1.bf16.msra.mxu0 0
  %882 = vmatprep.mubr.bf16.mxu0 0
  %883 = vmatmul.mubr.bf16.gmra.mrb[0].mxu0 %v836
  %v884 = vpop.f32.mrb[0].mxu0
  %v885 = vadd.f32 0.0, %v884
  %v886 = vpop.f32.mrb[0].mxu0
  %v887 = vadd.f32 0.0, %v886
  %v888 = vpop.f32.mrb[0].mxu0
  %v889 = vpop.f32.mrb[0].mxu0
  %890 = vdwg.mxu0
  %891 = vmatprep.subr.bf16.mxu0 %v848
  %892 = vmatpush1.bf16.msra.mxu0 %v845
  %893 = vmatprep.subr.bf16.mxu0 0
  %894 = vmatpush1.bf16.msra.mxu0 0
  %895 = vmatprep.subr.bf16.mxu0 0
  %896 = vmatpush1.bf16.msra.mxu0 0
  %897 = vmatprep.subr.bf16.mxu0 0
  %898 = vmatpush1.bf16.msra.mxu0 0
  %899 = vmatprep.subr.bf16.mxu0 0
  %900 = vmatpush1.bf16.msra.mxu0 0
  %901 = vmatprep.subr.bf16.mxu0 0
  %902 = vmatpush1.bf16.msra.mxu0 0
  %903 = vmatprep.subr.bf16.mxu0 0
  %904 = vmatpush1.bf16.msra.mxu0 0
  %905 = vmatprep.subr.bf16.mxu0 0
  %906 = vmatpush1.bf16.msra.mxu0 0
  %907 = vmatprep.subr.bf16.mxu0 0
  %908 = vmatpush1.bf16.msra.mxu0 0
  %909 = vmatprep.subr.bf16.mxu0 0
  %910 = vmatpush1.bf16.msra.mxu0 0
  %911 = vmatprep.subr.bf16.mxu0 0
  %912 = vmatpush1.bf16.msra.mxu0 0
  %913 = vmatprep.subr.bf16.mxu0 0
  %914 = vmatpush1.bf16.msra.mxu0 0
  %915 = vmatprep.subr.bf16.mxu0 0
  %916 = vmatpush1.bf16.msra.mxu0 0
  %917 = vmatprep.subr.bf16.mxu0 0
  %918 = vmatpush1.bf16.msra.mxu0 0
  %919 = vmatprep.subr.bf16.mxu0 0
  %920 = vmatpush1.bf16.msra.mxu0 0
  %921 = vmatprep.subr.bf16.mxu0 0
  %922 = vmatpush1.bf16.msra.mxu0 0
  %923 = vmatprep.mubr.bf16.mxu0 0
  %924 = vmatmul.mubr.bf16.gmra.mrb[0].mxu0 %v836
  %v925 = vpop.f32.mrb[0].mxu0
  %v926 = vadd.f32 0.0, %v925
  %v927 = vpop.f32.mrb[0].mxu0
  %v928 = vadd.f32 0.0, %v927
  %v929 = vpop.f32.mrb[0].mxu0
  %v930 = vpop.f32.mrb[0].mxu0
  %931 = vdwg.mxu0
  %v932 = vadd.f32 %v816, %v885
  %v933 = vadd.f32 %v817, %v887
  %v934 = vadd.f32 %v818, %v926
  %v935 = vadd.f32 %v819, %v928
  %v936 = vtanh.pop %v932
  %v937 = vtanh.pop %v933
  %v938 = vtanh.pop %v934
  %v939 = vtanh.pop %v935
  %v944 = vcombine.low %v936, %v937
  %v945 = vcombine.low %v938, %v939
  %s948 = scalar_lea.vmem %s2, 16
  %949 = vst [vmem:[%s948] sm:$0x77] %v944
  %950 = vst [vmem:[%s948 + $0x8] sm:$0x77] %v945
  %s951 = scalar_lea.vmem %s1, 16
  %v952 = vld [vmem:[%s951] sm:$0x3]
  %v953 = vld [vmem:[%s238] sm:$0xff]
  %v954 = vld [vmem:[%s238 + $0x8] sm:$0xff]
  %s955 = scalar_lea.vmem %s1, 18
  %v956 = vld [vmem:[%s955] sm:$0x3]
  %v957 = vld [vmem:[%s354] sm:$0xff]
  %v958 = vld [vmem:[%s354 + $0x8] sm:$0xff]
  %v961 = vunpack.c.l.b16 %v957
  %v962 = vunpack.c.h.b16 %v957
  %v963 = vunpack.c.l.b16 %v958
  %v964 = vunpack.c.h.b16 %v958
  %v965 = vpack.c.b16 %v961, %v961
  %v966 = vpack.c.b16 %v962, %v962
  %v967 = vpack.c.b16 %v963, %v963
  %v968 = vpack.c.b16 %v964, %v964
  %v970 = vsel %vm30, %v956, 0
  %v973 = vsel %vm34, %v965, 0
  %v976 = vsel %vm34, %v966, 0
  %v979 = vsel %vm34, %v967, 0
  %v982 = vsel %vm34, %v968, 0
  %984 = vmatprep.subr.bf16.mxu0 %v976
  %985 = vmatpush1.bf16.msra.mxu0 %v973
  %986 = vmatprep.subr.bf16.mxu0 0
  %987 = vmatpush1.bf16.msra.mxu0 0
  %988 = vmatprep.subr.bf16.mxu0 0
  %989 = vmatpush1.bf16.msra.mxu0 0
  %990 = vmatprep.subr.bf16.mxu0 0
  %991 = vmatpush1.bf16.msra.mxu0 0
  %992 = vmatprep.subr.bf16.mxu0 0
  %993 = vmatpush1.bf16.msra.mxu0 0
  %994 = vmatprep.subr.bf16.mxu0 0
  %995 = vmatpush1.bf16.msra.mxu0 0
  %996 = vmatprep.subr.bf16.mxu0 0
  %997 = vmatpush1.bf16.msra.mxu0 0
  %998 = vmatprep.subr.bf16.mxu0 0
  %999 = vmatpush1.bf16.msra.mxu0 0
  %1000 = vmatprep.subr.bf16.mxu0 0
  %1001 = vmatpush1.bf16.msra.mxu0 0
  %1002 = vmatprep.subr.bf16.mxu0 0
  %1003 = vmatpush1.bf16.msra.mxu0 0
  %1004 = vmatprep.subr.bf16.mxu0 0
  %1005 = vmatpush1.bf16.msra.mxu0 0
  %1006 = vmatprep.subr.bf16.mxu0 0
  %1007 = vmatpush1.bf16.msra.mxu0 0
  %1008 = vmatprep.subr.bf16.mxu0 0
  %1009 = vmatpush1.bf16.msra.mxu0 0
  %1010 = vmatprep.subr.bf16.mxu0 0
  %1011 = vmatpush1.bf16.msra.mxu0 0
  %1012 = vmatprep.subr.bf16.mxu0 0
  %1013 = vmatpush1.bf16.msra.mxu0 0
  %1014 = vmatprep.subr.bf16.mxu0 0
  %1015 = vmatpush1.bf16.msra.mxu0 0
  %1016 = vmatprep.mubr.bf16.mxu0 0
  %1017 = vmatmul.mubr.bf16.gmra.mrb[0].mxu0 %v970
  %v1018 = vpop.f32.mrb[0].mxu0
  %v1019 = vadd.f32 0.0, %v1018
  %v1020 = vpop.f32.mrb[0].mxu0
  %v1021 = vadd.f32 0.0, %v1020
  %v1022 = vpop.f32.mrb[0].mxu0
  %v1023 = vpop.f32.mrb[0].mxu0
  %1024 = vdwg.mxu0
  %1025 = vmatprep.subr.bf16.mxu0 %v982
  %1026 = vmatpush1.bf16.msra.mxu0 %v979
  %1027 = vmatprep.subr.bf16.mxu0 0
  %1028 = vmatpush1.bf16.msra.mxu0 0
  %1029 = vmatprep.subr.bf16.mxu0 0
  %1030 = vmatpush1.bf16.msra.mxu0 0
  %1031 = vmatprep.subr.bf16.mxu0 0
  %1032 = vmatpush1.bf16.msra.mxu0 0
  %1033 = vmatprep.subr.bf16.mxu0 0
  %1034 = vmatpush1.bf16.msra.mxu0 0
  %1035 = vmatprep.subr.bf16.mxu0 0
  %1036 = vmatpush1.bf16.msra.mxu0 0
  %1037 = vmatprep.subr.bf16.mxu0 0
  %1038 = vmatpush1.bf16.msra.mxu0 0
  %1039 = vmatprep.subr.bf16.mxu0 0
  %1040 = vmatpush1.bf16.msra.mxu0 0
  %1041 = vmatprep.subr.bf16.mxu0 0
  %1042 = vmatpush1.bf16.msra.mxu0 0
  %1043 = vmatprep.subr.bf16.mxu0 0
  %1044 = vmatpush1.bf16.msra.mxu0 0
  %1045 = vmatprep.subr.bf16.mxu0 0
  %1046 = vmatpush1.bf16.msra.mxu0 0
  %1047 = vmatprep.subr.bf16.mxu0 0
  %1048 = vmatpush1.bf16.msra.mxu0 0
  %1049 = vmatprep.subr.bf16.mxu0 0
  %1050 = vmatpush1.bf16.msra.mxu0 0
  %1051 = vmatprep.subr.bf16.mxu0 0
  %1052 = vmatpush1.bf16.msra.mxu0 0
  %1053 = vmatprep.subr.bf16.mxu0 0
  %1054 = vmatpush1.bf16.msra.mxu0 0
  %1055 = vmatprep.subr.bf16.mxu0 0
  %1056 = vmatpush1.bf16.msra.mxu0 0
  %1057 = vmatprep.mubr.bf16.mxu0 0
  %1058 = vmatmul.mubr.bf16.gmra.mrb[0].mxu0 %v970
  %v1059 = vpop.f32.mrb[0].mxu0
  %v1060 = vadd.f32 0.0, %v1059
  %v1061 = vpop.f32.mrb[0].mxu0
  %v1062 = vadd.f32 0.0, %v1061
  %v1063 = vpop.f32.mrb[0].mxu0
  %v1064 = vpop.f32.mrb[0].mxu0
  %1065 = vdwg.mxu0
  %v1068 = vunpack.c.l.b16 %v953
  %v1069 = vunpack.c.h.b16 %v953
  %v1070 = vunpack.c.l.b16 %v954
  %v1071 = vunpack.c.h.b16 %v954
  %v1072 = vpack.c.b16 %v1068, %v1068
  %v1073 = vpack.c.b16 %v1069, %v1069
  %v1074 = vpack.c.b16 %v1070, %v1070
  %v1075 = vpack.c.b16 %v1071, %v1071
  %v1077 = vsel %vm30, %v952, 0
  %v1080 = vsel %vm34, %v1072, 0
  %v1083 = vsel %vm34, %v1073, 0
  %v1086 = vsel %vm34, %v1074, 0
  %v1089 = vsel %vm34, %v1075, 0
  %1091 = vmatprep.subr.bf16.mxu0 %v1083
  %1092 = vmatpush1.bf16.msra.mxu0 %v1080
  %1093 = vmatprep.subr.bf16.mxu0 0
  %1094 = vmatpush1.bf16.msra.mxu0 0
  %1095 = vmatprep.subr.bf16.mxu0 0
  %1096 = vmatpush1.bf16.msra.mxu0 0
  %1097 = vmatprep.subr.bf16.mxu0 0
  %1098 = vmatpush1.bf16.msra.mxu0 0
  %1099 = vmatprep.subr.bf16.mxu0 0
  %1100 = vmatpush1.bf16.msra.mxu0 0
  %1101 = vmatprep.subr.bf16.mxu0 0
  %1102 = vmatpush1.bf16.msra.mxu0 0
  %1103 = vmatprep.subr.bf16.mxu0 0
  %1104 = vmatpush1.bf16.msra.mxu0 0
  %1105 = vmatprep.subr.bf16.mxu0 0
  %1106 = vmatpush1.bf16.msra.mxu0 0
  %1107 = vmatprep.subr.bf16.mxu0 0
  %1108 = vmatpush1.bf16.msra.mxu0 0
  %1109 = vmatprep.subr.bf16.mxu0 0
  %1110 = vmatpush1.bf16.msra.mxu0 0
  %1111 = vmatprep.subr.bf16.mxu0 0
  %1112 = vmatpush1.bf16.msra.mxu0 0
  %1113 = vmatprep.subr.bf16.mxu0 0
  %1114 = vmatpush1.bf16.msra.mxu0 0
  %1115 = vmatprep.subr.bf16.mxu0 0
  %1116 = vmatpush1.bf16.msra.mxu0 0
  %1117 = vmatprep.subr.bf16.mxu0 0
  %1118 = vmatpush1.bf16.msra.mxu0 0
  %1119 = vmatprep.subr.bf16.mxu0 0
  %1120 = vmatpush1.bf16.msra.mxu0 0
  %1121 = vmatprep.subr.bf16.mxu0 0
  %1122 = vmatpush1.bf16.msra.mxu0 0
  %1123 = vmatprep.mubr.bf16.mxu0 0
  %1124 = vmatmul.mubr.bf16.gmra.mrb[0].mxu0 %v1077
  %v1125 = vpop.f32.mrb[0].mxu0
  %v1126 = vadd.f32 %v1019, %v1125
  %v1127 = vpop.f32.mrb[0].mxu0
  %v1128 = vadd.f32 %v1021, %v1127
  %v1129 = vpop.f32.mrb[0].mxu0
  %v1130 = vpop.f32.mrb[0].mxu0
  %1131 = vdwg.mxu0
  %1132 = vmatprep.subr.bf16.mxu0 %v1089
  %1133 = vmatpush1.bf16.msra.mxu0 %v1086
  %1134 = vmatprep.subr.bf16.mxu0 0
  %1135 = vmatpush1.bf16.msra.mxu0 0
  %1136 = vmatprep.subr.bf16.mxu0 0
  %1137 = vmatpush1.bf16.msra.mxu0 0
  %1138 = vmatprep.subr.bf16.mxu0 0
  %1139 = vmatpush1.bf16.msra.mxu0 0
  %1140 = vmatprep.subr.bf16.mxu0 0
  %1141 = vmatpush1.bf16.msra.mxu0 0
  %1142 = vmatprep.subr.bf16.mxu0 0
  %1143 = vmatpush1.bf16.msra.mxu0 0
  %1144 = vmatprep.subr.bf16.mxu0 0
  %1145 = vmatpush1.bf16.msra.mxu0 0
  %1146 = vmatprep.subr.bf16.mxu0 0
  %1147 = vmatpush1.bf16.msra.mxu0 0
  %1148 = vmatprep.subr.bf16.mxu0 0
  %1149 = vmatpush1.bf16.msra.mxu0 0
  %1150 = vmatprep.subr.bf16.mxu0 0
  %1151 = vmatpush1.bf16.msra.mxu0 0
  %1152 = vmatprep.subr.bf16.mxu0 0
  %1153 = vmatpush1.bf16.msra.mxu0 0
  %1154 = vmatprep.subr.bf16.mxu0 0
  %1155 = vmatpush1.bf16.msra.mxu0 0
  %1156 = vmatprep.subr.bf16.mxu0 0
  %1157 = vmatpush1.bf16.msra.mxu0 0
  %1158 = vmatprep.subr.bf16.mxu0 0
  %1159 = vmatpush1.bf16.msra.mxu0 0
  %1160 = vmatprep.subr.bf16.mxu0 0
  %1161 = vmatpush1.bf16.msra.mxu0 0
  %1162 = vmatprep.subr.bf16.mxu0 0
  %1163 = vmatpush1.bf16.msra.mxu0 0
  %1164 = vmatprep.mubr.bf16.mxu0 0
  %1165 = vmatmul.mubr.bf16.gmra.mrb[0].mxu0 %v1077
  %v1166 = vpop.f32.mrb[0].mxu0
  %v1167 = vadd.f32 %v1060, %v1166
  %v1168 = vpop.f32.mrb[0].mxu0
  %v1169 = vadd.f32 %v1062, %v1168
  %v1170 = vpop.f32.mrb[0].mxu0
  %v1171 = vpop.f32.mrb[0].mxu0
  %1172 = vdwg.mxu0
  %s1173 = scalar_lea.vmem %s1, 20
  %v1174 = vld [vmem:[%s1173] sm:$0x3]
  %s1175 = scalar_lea.vmem %s0, 96
  %v1176 = vld [vmem:[%s1175] sm:$0xff]
  %v1177 = vld [vmem:[%s1175 + $0x8] sm:$0xff]
  %v1180 = vunpack.c.l.b16 %v1176
  %v1181 = vunpack.c.h.b16 %v1176
  %v1182 = vunpack.c.l.b16 %v1177
  %v1183 = vunpack.c.h.b16 %v1177
  %v1184 = vpack.c.b16 %v1180, %v1180
  %v1185 = vpack.c.b16 %v1181, %v1181
  %v1186 = vpack.c.b16 %v1182, %v1182
  %v1187 = vpack.c.b16 %v1183, %v1183
  %v1189 = vsel %vm30, %v1174, 0
  %v1192 = vsel %vm34, %v1184, 0
  %v1195 = vsel %vm34, %v1185, 0
  %v1198 = vsel %vm34, %v1186, 0
  %v1201 = vsel %vm34, %v1187, 0
  %1203 = vmatprep.subr.bf16.mxu0 %v1195
  %1204 = vmatpush1.bf16.msra.mxu0 %v1192
  %1205 = vmatprep.subr.bf16.mxu0 0
  %1206 = vmatpush1.bf16.msra.mxu0 0
  %1207 = vmatprep.subr.bf16.mxu0 0
  %1208 = vmatpush1.bf16.msra.mxu0 0
  %1209 = vmatprep.subr.bf16.mxu0 0
  %1210 = vmatpush1.bf16.msra.mxu0 0
  %1211 = vmatprep.subr.bf16.mxu0 0
  %1212 = vmatpush1.bf16.msra.mxu0 0
  %1213 = vmatprep.subr.bf16.mxu0 0
  %1214 = vmatpush1.bf16.msra.mxu0 0
  %1215 = vmatprep.subr.bf16.mxu0 0
  %1216 = vmatpush1.bf16.msra.mxu0 0
  %1217 = vmatprep.subr.bf16.mxu0 0
  %1218 = vmatpush1.bf16.msra.mxu0 0
  %1219 = vmatprep.subr.bf16.mxu0 0
  %1220 = vmatpush1.bf16.msra.mxu0 0
  %1221 = vmatprep.subr.bf16.mxu0 0
  %1222 = vmatpush1.bf16.msra.mxu0 0
  %1223 = vmatprep.subr.bf16.mxu0 0
  %1224 = vmatpush1.bf16.msra.mxu0 0
  %1225 = vmatprep.subr.bf16.mxu0 0
  %1226 = vmatpush1.bf16.msra.mxu0 0
  %1227 = vmatprep.subr.bf16.mxu0 0
  %1228 = vmatpush1.bf16.msra.mxu0 0
  %1229 = vmatprep.subr.bf16.mxu0 0
  %1230 = vmatpush1.bf16.msra.mxu0 0
  %1231 = vmatprep.subr.bf16.mxu0 0
  %1232 = vmatpush1.bf16.msra.mxu0 0
  %1233 = vmatprep.subr.bf16.mxu0 0
  %1234 = vmatpush1.bf16.msra.mxu0 0
  %1235 = vmatprep.mubr.bf16.mxu0 0
  %1236 = vmatmul.mubr.bf16.gmra.mrb[0].mxu0 %v1189
  %v1237 = vpop.f32.mrb[0].mxu0
  %v1238 = vadd.f32 0.0, %v1237
  %v1239 = vpop.f32.mrb[0].mxu0
  %v1240 = vadd.f32 0.0, %v1239
  %v1241 = vpop.f32.mrb[0].mxu0
  %v1242 = vpop.f32.mrb[0].mxu0
  %1243 = vdwg.mxu0
  %1244 = vmatprep.subr.bf16.mxu0 %v1201
  %1245 = vmatpush1.bf16.msra.mxu0 %v1198
  %1246 = vmatprep.subr.bf16.mxu0 0
  %1247 = vmatpush1.bf16.msra.mxu0 0
  %1248 = vmatprep.subr.bf16.mxu0 0
  %1249 = vmatpush1.bf16.msra.mxu0 0
  %1250 = vmatprep.subr.bf16.mxu0 0
  %1251 = vmatpush1.bf16.msra.mxu0 0
  %1252 = vmatprep.subr.bf16.mxu0 0
  %1253 = vmatpush1.bf16.msra.mxu0 0
  %1254 = vmatprep.subr.bf16.mxu0 0
  %1255 = vmatpush1.bf16.msra.mxu0 0
  %1256 = vmatprep.subr.bf16.mxu0 0
  %1257 = vmatpush1.bf16.msra.mxu0 0
  %1258 = vmatprep.subr.bf16.mxu0 0
  %1259 = vmatpush1.bf16.msra.mxu0 0
  %1260 = vmatprep.subr.bf16.mxu0 0
  %1261 = vmatpush1.bf16.msra.mxu0 0
  %1262 = vmatprep.subr.bf16.mxu0 0
  %1263 = vmatpush1.bf16.msra.mxu0 0
  %1264 = vmatprep.subr.bf16.mxu0 0
  %1265 = vmatpush1.bf16.msra.mxu0 0
  %1266 = vmatprep.subr.bf16.mxu0 0
  %1267 = vmatpush1.bf16.msra.mxu0 0
  %1268 = vmatprep.subr.bf16.mxu0 0
  %1269 = vmatpush1.bf16.msra.mxu0 0
  %1270 = vmatprep.subr.bf16.mxu0 0
  %1271 = vmatpush1.bf16.msra.mxu0 0
  %1272 = vmatprep.subr.bf16.mxu0 0
  %1273 = vmatpush1.bf16.msra.mxu0 0
  %1274 = vmatprep.subr.bf16.mxu0 0
  %1275 = vmatpush1.bf16.msra.mxu0 0
  %1276 = vmatprep.mubr.bf16.mxu0 0
  %1277 = vmatmul.mubr.bf16.gmra.mrb[0].mxu0 %v1189
  %v1278 = vpop.f32.mrb[0].mxu0
  %v1279 = vadd.f32 0.0, %v1278
  %v1280 = vpop.f32.mrb[0].mxu0
  %v1281 = vadd.f32 0.0, %v1280
  %v1282 = vpop.f32.mrb[0].mxu0
  %v1283 = vpop.f32.mrb[0].mxu0
  %1284 = vdwg.mxu0
  %v1285 = vadd.f32 %v1126, %v1238
  %v1286 = vadd.f32 %v1128, %v1240
  %v1287 = vadd.f32 %v1167, %v1279
  %v1288 = vadd.f32 %v1169, %v1281
  %s1289 = scalar_lea.vmem %s1, 22
  %v1290 = vld [vmem:[%s1289] sm:$0x3]
  %s1291 = scalar_lea.vmem %s0, 112
  %v1292 = vld [vmem:[%s1291] sm:$0xff]
  %v1293 = vld [vmem:[%s1291 + $0x8] sm:$0xff]
  %v1296 = vunpack.c.l.b16 %v1292
  %v1297 = vunpack.c.h.b16 %v1292
  %v1298 = vunpack.c.l.b16 %v1293
  %v1299 = vunpack.c.h.b16 %v1293
  %v1300 = vpack.c.b16 %v1296, %v1296
  %v1301 = vpack.c.b16 %v1297, %v1297
  %v1302 = vpack.c.b16 %v1298, %v1298
  %v1303 = vpack.c.b16 %v1299, %v1299
  %v1305 = vsel %vm30, %v1290, 0
  %v1308 = vsel %vm34, %v1300, 0
  %v1311 = vsel %vm34, %v1301, 0
  %v1314 = vsel %vm34, %v1302, 0
  %v1317 = vsel %vm34, %v1303, 0
  %1319 = vmatprep.subr.bf16.mxu0 %v1311
  %1320 = vmatpush1.bf16.msra.mxu0 %v1308
  %1321 = vmatprep.subr.bf16.mxu0 0
  %1322 = vmatpush1.bf16.msra.mxu0 0
  %1323 = vmatprep.subr.bf16.mxu0 0
  %1324 = vmatpush1.bf16.msra.mxu0 0
  %1325 = vmatprep.subr.bf16.mxu0 0
  %1326 = vmatpush1.bf16.msra.mxu0 0
  %1327 = vmatprep.subr.bf16.mxu0 0
  %1328 = vmatpush1.bf16.msra.mxu0 0
  %1329 = vmatprep.subr.bf16.mxu0 0
  %1330 = vmatpush1.bf16.msra.mxu0 0
  %1331 = vmatprep.subr.bf16.mxu0 0
  %1332 = vmatpush1.bf16.msra.mxu0 0
  %1333 = vmatprep.subr.bf16.mxu0 0
  %1334 = vmatpush1.bf16.msra.mxu0 0
  %1335 = vmatprep.subr.bf16.mxu0 0
  %1336 = vmatpush1.bf16.msra.mxu0 0
  %1337 = vmatprep.subr.bf16.mxu0 0
  %1338 = vmatpush1.bf16.msra.mxu0 0
  %1339 = vmatprep.subr.bf16.mxu0 0
  %1340 = vmatpush1.bf16.msra.mxu0 0
  %1341 = vmatprep.subr.bf16.mxu0 0
  %1342 = vmatpush1.bf16.msra.mxu0 0
  %1343 = vmatprep.subr.bf16.mxu0 0
  %1344 = vmatpush1.bf16.msra.mxu0 0
  %1345 = vmatprep.subr.bf16.mxu0 0
  %1346 = vmatpush1.bf16.msra.mxu0 0
  %1347 = vmatprep.subr.bf16.mxu0 0
  %1348 = vmatpush1.bf16.msra.mxu0 0
  %1349 = vmatprep.subr.bf16.mxu0 0
  %1350 = vmatpush1.bf16.msra.mxu0 0
  %1351 = vmatprep.mubr.bf16.mxu0 0
  %1352 = vmatmul.mubr.bf16.gmra.mrb[0].mxu0 %v1305
  %v1353 = vpop.f32.mrb[0].mxu0
  %v1354 = vadd.f32 0.0, %v1353
  %v1355 = vpop.f32.mrb[0].mxu0
  %v1356 = vadd.f32 0.0, %v1355
  %v1357 = vpop.f32.mrb[0].mxu0
  %v1358 = vpop.f32.mrb[0].mxu0
  %1359 = vdwg.mxu0
  %1360 = vmatprep.subr.bf16.mxu0 %v1317
  %1361 = vmatpush1.bf16.msra.mxu0 %v1314
  %1362 = vmatprep.subr.bf16.mxu0 0
  %1363 = vmatpush1.bf16.msra.mxu0 0
  %1364 = vmatprep.subr.bf16.mxu0 0
  %1365 = vmatpush1.bf16.msra.mxu0 0
  %1366 = vmatprep.subr.bf16.mxu0 0
  %1367 = vmatpush1.bf16.msra.mxu0 0
  %1368 = vmatprep.subr.bf16.mxu0 0
  %1369 = vmatpush1.bf16.msra.mxu0 0
  %1370 = vmatprep.subr.bf16.mxu0 0
  %1371 = vmatpush1.bf16.msra.mxu0 0
  %1372 = vmatprep.subr.bf16.mxu0 0
  %1373 = vmatpush1.bf16.msra.mxu0 0
  %1374 = vmatprep.subr.bf16.mxu0 0
  %1375 = vmatpush1.bf16.msra.mxu0 0
  %1376 = vmatprep.subr.bf16.mxu0 0
  %1377 = vmatpush1.bf16.msra.mxu0 0
  %1378 = vmatprep.subr.bf16.mxu0 0
  %1379 = vmatpush1.bf16.msra.mxu0 0
  %1380 = vmatprep.subr.bf16.mxu0 0
  %1381 = vmatpush1.bf16.msra.mxu0 0
  %1382 = vmatprep.subr.bf16.mxu0 0
  %1383 = vmatpush1.bf16.msra.mxu0 0
  %1384 = vmatprep.subr.bf16.mxu0 0
  %1385 = vmatpush1.bf16.msra.mxu0 0
  %1386 = vmatprep.subr.bf16.mxu0 0
  %1387 = vmatpush1.bf16.msra.mxu0 0
  %1388 = vmatprep.subr.bf16.mxu0 0
  %1389 = vmatpush1.bf16.msra.mxu0 0
  %1390 = vmatprep.subr.bf16.mxu0 0
  %1391 = vmatpush1.bf16.msra.mxu0 0
  %1392 = vmatprep.mubr.bf16.mxu0 0
  %1393 = vmatmul.mubr.bf16.gmra.mrb[0].mxu0 %v1305
  %v1394 = vpop.f32.mrb[0].mxu0
  %v1395 = vadd.f32 0.0, %v1394
  %v1396 = vpop.f32.mrb[0].mxu0
  %v1397 = vadd.f32 0.0, %v1396
  %v1398 = vpop.f32.mrb[0].mxu0
  %v1399 = vpop.f32.mrb[0].mxu0
  %1400 = vdwg.mxu0
  %v1401 = vadd.f32 %v1285, %v1354
  %v1402 = vadd.f32 %v1286, %v1356
  %v1403 = vadd.f32 %v1287, %v1395
  %v1404 = vadd.f32 %v1288, %v1397
  %v1405 = vtanh.pop %v1401
  %v1406 = vtanh.pop %v1402
  %v1407 = vtanh.pop %v1403
  %v1408 = vtanh.pop %v1404
  %v1413 = vcombine.low %v1405, %v1406
  %v1414 = vcombine.low %v1407, %v1408
  %s1417 = scalar_lea.vmem %s2, 32
  %1418 = vst [vmem:[%s1417] sm:$0x77] %v1413
  %1419 = vst [vmem:[%s1417 + $0x8] sm:$0x77] %v1414
  %s1420 = scalar_lea.vmem %s1, 24
  %v1421 = vld [vmem:[%s1420] sm:$0x3]
  %v1422 = vld [vmem:[%s354] sm:$0xff]
  %v1423 = vld [vmem:[%s354 + $0x8] sm:$0xff]
  %s1424 = scalar_lea.vmem %s1, 26
  %v1425 = vld [vmem:[%s1424] sm:$0x3]
  %v1426 = vld [vmem:[%s822] sm:$0xff]
  %v1427 = vld [vmem:[%s822 + $0x8] sm:$0xff]
  %v1430 = vunpack.c.l.b16 %v1426
  %v1431 = vunpack.c.h.b16 %v1426
  %v1432 = vunpack.c.l.b16 %v1427
  %v1433 = vunpack.c.h.b16 %v1427
  %v1434 = vpack.c.b16 %v1430, %v1430
  %v1435 = vpack.c.b16 %v1431, %v1431
  %v1436 = vpack.c.b16 %v1432, %v1432
  %v1437 = vpack.c.b16 %v1433, %v1433
  %v1439 = vsel %vm30, %v1425, 0
  %v1442 = vsel %vm34, %v1434, 0
  %v1445 = vsel %vm34, %v1435, 0
  %v1448 = vsel %vm34, %v1436, 0
  %v1451 = vsel %vm34, %v1437, 0
  %1453 = vmatprep.subr.bf16.mxu0 %v1445
  %1454 = vmatpush1.bf16.msra.mxu0 %v1442
  %1455 = vmatprep.subr.bf16.mxu0 0
  %1456 = vmatpush1.bf16.msra.mxu0 0
  %1457 = vmatprep.subr.bf16.mxu0 0
  %1458 = vmatpush1.bf16.msra.mxu0 0
  %1459 = vmatprep.subr.bf16.mxu0 0
  %1460 = vmatpush1.bf16.msra.mxu0 0
  %1461 = vmatprep.subr.bf16.mxu0 0
  %1462 = vmatpush1.bf16.msra.mxu0 0
  %1463 = vmatprep.subr.bf16.mxu0 0
  %1464 = vmatpush1.bf16.msra.mxu0 0
  %1465 = vmatprep.subr.bf16.mxu0 0
  %1466 = vmatpush1.bf16.msra.mxu0 0
  %1467 = vmatprep.subr.bf16.mxu0 0
  %1468 = vmatpush1.bf16.msra.mxu0 0
  %1469 = vmatprep.subr.bf16.mxu0 0
  %1470 = vmatpush1.bf16.msra.mxu0 0
  %1471 = vmatprep.subr.bf16.mxu0 0
  %1472 = vmatpush1.bf16.msra.mxu0 0
  %1473 = vmatprep.subr.bf16.mxu0 0
  %1474 = vmatpush1.bf16.msra.mxu0 0
  %1475 = vmatprep.subr.bf16.mxu0 0
  %1476 = vmatpush1.bf16.msra.mxu0 0
  %1477 = vmatprep.subr.bf16.mxu0 0
  %1478 = vmatpush1.bf16.msra.mxu0 0
  %1479 = vmatprep.subr.bf16.mxu0 0
  %1480 = vmatpush1.bf16.msra.mxu0 0
  %1481 = vmatprep.subr.bf16.mxu0 0
  %1482 = vmatpush1.bf16.msra.mxu0 0
  %1483 = vmatprep.subr.bf16.mxu0 0
  %1484 = vmatpush1.bf16.msra.mxu0 0
  %1485 = vmatprep.mubr.bf16.mxu0 0
  %1486 = vmatmul.mubr.bf16.gmra.mrb[0].mxu0 %v1439
  %v1487 = vpop.f32.mrb[0].mxu0
  %v1488 = vadd.f32 0.0, %v1487
  %v1489 = vpop.f32.mrb[0].mxu0
  %v1490 = vadd.f32 0.0, %v1489
  %v1491 = vpop.f32.mrb[0].mxu0
  %v1492 = vpop.f32.mrb[0].mxu0
  %1493 = vdwg.mxu0
  %1494 = vmatprep.subr.bf16.mxu0 %v1451
  %1495 = vmatpush1.bf16.msra.mxu0 %v1448
  %1496 = vmatprep.subr.bf16.mxu0 0
  %1497 = vmatpush1.bf16.msra.mxu0 0
  %1498 = vmatprep.subr.bf16.mxu0 0
  %1499 = vmatpush1.bf16.msra.mxu0 0
  %1500 = vmatprep.subr.bf16.mxu0 0
  %1501 = vmatpush1.bf16.msra.mxu0 0
  %1502 = vmatprep.subr.bf16.mxu0 0
  %1503 = vmatpush1.bf16.msra.mxu0 0
  %1504 = vmatprep.subr.bf16.mxu0 0
  %1505 = vmatpush1.bf16.msra.mxu0 0
  %1506 = vmatprep.subr.bf16.mxu0 0
  %1507 = vmatpush1.bf16.msra.mxu0 0
  %1508 = vmatprep.subr.bf16.mxu0 0
  %1509 = vmatpush1.bf16.msra.mxu0 0
  %1510 = vmatprep.subr.bf16.mxu0 0
  %1511 = vmatpush1.bf16.msra.mxu0 0
  %1512 = vmatprep.subr.bf16.mxu0 0
  %1513 = vmatpush1.bf16.msra.mxu0 0
  %1514 = vmatprep.subr.bf16.mxu0 0
  %1515 = vmatpush1.bf16.msra.mxu0 0
  %1516 = vmatprep.subr.bf16.mxu0 0
  %1517 = vmatpush1.bf16.msra.mxu0 0
  %1518 = vmatprep.subr.bf16.mxu0 0
  %1519 = vmatpush1.bf16.msra.mxu0 0
  %1520 = vmatprep.subr.bf16.mxu0 0
  %1521 = vmatpush1.bf16.msra.mxu0 0
  %1522 = vmatprep.subr.bf16.mxu0 0
  %1523 = vmatpush1.bf16.msra.mxu0 0
  %1524 = vmatprep.subr.bf16.mxu0 0
  %1525 = vmatpush1.bf16.msra.mxu0 0
  %1526 = vmatprep.mubr.bf16.mxu0 0
  %1527 = vmatmul.mubr.bf16.gmra.mrb[0].mxu0 %v1439
  %v1528 = vpop.f32.mrb[0].mxu0
  %v1529 = vadd.f32 0.0, %v1528
  %v1530 = vpop.f32.mrb[0].mxu0
  %v1531 = vadd.f32 0.0, %v1530
  %v1532 = vpop.f32.mrb[0].mxu0
  %v1533 = vpop.f32.mrb[0].mxu0
  %1534 = vdwg.mxu0
  %v1537 = vunpack.c.l.b16 %v1422
  %v1538 = vunpack.c.h.b16 %v1422
  %v1539 = vunpack.c.l.b16 %v1423
  %v1540 = vunpack.c.h.b16 %v1423
  %v1541 = vpack.c.b16 %v1537, %v1537
  %v1542 = vpack.c.b16 %v1538, %v1538
  %v1543 = vpack.c.b16 %v1539, %v1539
  %v1544 = vpack.c.b16 %v1540, %v1540
  %v1546 = vsel %vm30, %v1421, 0
  %v1549 = vsel %vm34, %v1541, 0
  %v1552 = vsel %vm34, %v1542, 0
  %v1555 = vsel %vm34, %v1543, 0
  %v1558 = vsel %vm34, %v1544, 0
  %1560 = vmatprep.subr.bf16.mxu0 %v1552
  %1561 = vmatpush1.bf16.msra.mxu0 %v1549
  %1562 = vmatprep.subr.bf16.mxu0 0
  %1563 = vmatpush1.bf16.msra.mxu0 0
  %1564 = vmatprep.subr.bf16.mxu0 0
  %1565 = vmatpush1.bf16.msra.mxu0 0
  %1566 = vmatprep.subr.bf16.mxu0 0
  %1567 = vmatpush1.bf16.msra.mxu0 0
  %1568 = vmatprep.subr.bf16.mxu0 0
  %1569 = vmatpush1.bf16.msra.mxu0 0
  %1570 = vmatprep.subr.bf16.mxu0 0
  %1571 = vmatpush1.bf16.msra.mxu0 0
  %1572 = vmatprep.subr.bf16.mxu0 0
  %1573 = vmatpush1.bf16.msra.mxu0 0
  %1574 = vmatprep.subr.bf16.mxu0 0
  %1575 = vmatpush1.bf16.msra.mxu0 0
  %1576 = vmatprep.subr.bf16.mxu0 0
  %1577 = vmatpush1.bf16.msra.mxu0 0
  %1578 = vmatprep.subr.bf16.mxu0 0
  %1579 = vmatpush1.bf16.msra.mxu0 0
  %1580 = vmatprep.subr.bf16.mxu0 0
  %1581 = vmatpush1.bf16.msra.mxu0 0
  %1582 = vmatprep.subr.bf16.mxu0 0
  %1583 = vmatpush1.bf16.msra.mxu0 0
  %1584 = vmatprep.subr.bf16.mxu0 0
  %1585 = vmatpush1.bf16.msra.mxu0 0
  %1586 = vmatprep.subr.bf16.mxu0 0
  %1587 = vmatpush1.bf16.msra.mxu0 0
  %1588 = vmatprep.subr.bf16.mxu0 0
  %1589 = vmatpush1.bf16.msra.mxu0 0
  %1590 = vmatprep.subr.bf16.mxu0 0
  %1591 = vmatpush1.bf16.msra.mxu0 0
  %1592 = vmatprep.mubr.bf16.mxu0 0
  %1593 = vmatmul.mubr.bf16.gmra.mrb[0].mxu0 %v1546
  %v1594 = vpop.f32.mrb[0].mxu0
  %v1595 = vadd.f32 %v1488, %v1594
  %v1596 = vpop.f32.mrb[0].mxu0
  %v1597 = vadd.f32 %v1490, %v1596
  %v1598 = vpop.f32.mrb[0].mxu0
  %v1599 = vpop.f32.mrb[0].mxu0
  %1600 = vdwg.mxu0
  %1601 = vmatprep.subr.bf16.mxu0 %v1558
  %1602 = vmatpush1.bf16.msra.mxu0 %v1555
  %1603 = vmatprep.subr.bf16.mxu0 0
  %1604 = vmatpush1.bf16.msra.mxu0 0
  %1605 = vmatprep.subr.bf16.mxu0 0
  %1606 = vmatpush1.bf16.msra.mxu0 0
  %1607 = vmatprep.subr.bf16.mxu0 0
  %1608 = vmatpush1.bf16.msra.mxu0 0
  %1609 = vmatprep.subr.bf16.mxu0 0
  %1610 = vmatpush1.bf16.msra.mxu0 0
  %1611 = vmatprep.subr.bf16.mxu0 0
  %1612 = vmatpush1.bf16.msra.mxu0 0
  %1613 = vmatprep.subr.bf16.mxu0 0
  %1614 = vmatpush1.bf16.msra.mxu0 0
  %1615 = vmatprep.subr.bf16.mxu0 0
  %1616 = vmatpush1.bf16.msra.mxu0 0
  %1617 = vmatprep.subr.bf16.mxu0 0
  %1618 = vmatpush1.bf16.msra.mxu0 0
  %1619 = vmatprep.subr.bf16.mxu0 0
  %1620 = vmatpush1.bf16.msra.mxu0 0
  %1621 = vmatprep.subr.bf16.mxu0 0
  %1622 = vmatpush1.bf16.msra.mxu0 0
  %1623 = vmatprep.subr.bf16.mxu0 0
  %1624 = vmatpush1.bf16.msra.mxu0 0
  %1625 = vmatprep.subr.bf16.mxu0 0
  %1626 = vmatpush1.bf16.msra.mxu0 0
  %1627 = vmatprep.subr.bf16.mxu0 0
  %1628 = vmatpush1.bf16.msra.mxu0 0
  %1629 = vmatprep.subr.bf16.mxu0 0
  %1630 = vmatpush1.bf16.msra.mxu0 0
  %1631 = vmatprep.subr.bf16.mxu0 0
  %1632 = vmatpush1.bf16.msra.mxu0 0
  %1633 = vmatprep.mubr.bf16.mxu0 0
  %1634 = vmatmul.mubr.bf16.gmra.mrb[0].mxu0 %v1546
  %v1635 = vpop.f32.mrb[0].mxu0
  %v1636 = vadd.f32 %v1529, %v1635
  %v1637 = vpop.f32.mrb[0].mxu0
  %v1638 = vadd.f32 %v1531, %v1637
  %v1639 = vpop.f32.mrb[0].mxu0
  %v1640 = vpop.f32.mrb[0].mxu0
  %1641 = vdwg.mxu0
  %s1642 = scalar_lea.vmem %s1, 28
  %v1643 = vld [vmem:[%s1642] sm:$0x3]
  %v1644 = vld [vmem:[%s1291] sm:$0xff]
  %v1645 = vld [vmem:[%s1291 + $0x8] sm:$0xff]
  %v1648 = vunpack.c.l.b16 %v1644
  %v1649 = vunpack.c.h.b16 %v1644
  %v1650 = vunpack.c.l.b16 %v1645
  %v1651 = vunpack.c.h.b16 %v1645
  %v1652 = vpack.c.b16 %v1648, %v1648
  %v1653 = vpack.c.b16 %v1649, %v1649
  %v1654 = vpack.c.b16 %v1650, %v1650
  %v1655 = vpack.c.b16 %v1651, %v1651
  %v1657 = vsel %vm30, %v1643, 0
  %v1660 = vsel %vm34, %v1652, 0
  %v1663 = vsel %vm34, %v1653, 0
  %v1666 = vsel %vm34, %v1654, 0
  %v1669 = vsel %vm34, %v1655, 0
  %1671 = vmatprep.subr.bf16.mxu0 %v1663
  %1672 = vmatpush1.bf16.msra.mxu0 %v1660
  %1673 = vmatprep.subr.bf16.mxu0 0
  %1674 = vmatpush1.bf16.msra.mxu0 0
  %1675 = vmatprep.subr.bf16.mxu0 0
  %1676 = vmatpush1.bf16.msra.mxu0 0
  %1677 = vmatprep.subr.bf16.mxu0 0
  %1678 = vmatpush1.bf16.msra.mxu0 0
  %1679 = vmatprep.subr.bf16.mxu0 0
  %1680 = vmatpush1.bf16.msra.mxu0 0
  %1681 = vmatprep.subr.bf16.mxu0 0
  %1682 = vmatpush1.bf16.msra.mxu0 0
  %1683 = vmatprep.subr.bf16.mxu0 0
  %1684 = vmatpush1.bf16.msra.mxu0 0
  %1685 = vmatprep.subr.bf16.mxu0 0
  %1686 = vmatpush1.bf16.msra.mxu0 0
  %1687 = vmatprep.subr.bf16.mxu0 0
  %1688 = vmatpush1.bf16.msra.mxu0 0
  %1689 = vmatprep.subr.bf16.mxu0 0
  %1690 = vmatpush1.bf16.msra.mxu0 0
  %1691 = vmatprep.subr.bf16.mxu0 0
  %1692 = vmatpush1.bf16.msra.mxu0 0
  %1693 = vmatprep.subr.bf16.mxu0 0
  %1694 = vmatpush1.bf16.msra.mxu0 0
  %1695 = vmatprep.subr.bf16.mxu0 0
  %1696 = vmatpush1.bf16.msra.mxu0 0
  %1697 = vmatprep.subr.bf16.mxu0 0
  %1698 = vmatpush1.bf16.msra.mxu0 0
  %1699 = vmatprep.subr.bf16.mxu0 0
  %1700 = vmatpush1.bf16.msra.mxu0 0
  %1701 = vmatprep.subr.bf16.mxu0 0
  %1702 = vmatpush1.bf16.msra.mxu0 0
  %1703 = vmatprep.mubr.bf16.mxu0 0
  %1704 = vmatmul.mubr.bf16.gmra.mrb[0].mxu0 %v1657
  %v1705 = vpop.f32.mrb[0].mxu0
  %v1706 = vadd.f32 0.0, %v1705
  %v1707 = vpop.f32.mrb[0].mxu0
  %v1708 = vadd.f32 0.0, %v1707
  %v1709 = vpop.f32.mrb[0].mxu0
  %v1710 = vpop.f32.mrb[0].mxu0
  %1711 = vdwg.mxu0
  %1712 = vmatprep.subr.bf16.mxu0 %v1669
  %1713 = vmatpush1.bf16.msra.mxu0 %v1666
  %1714 = vmatprep.subr.bf16.mxu0 0
  %1715 = vmatpush1.bf16.msra.mxu0 0
  %1716 = vmatprep.subr.bf16.mxu0 0
  %1717 = vmatpush1.bf16.msra.mxu0 0
  %1718 = vmatprep.subr.bf16.mxu0 0
  %1719 = vmatpush1.bf16.msra.mxu0 0
  %1720 = vmatprep.subr.bf16.mxu0 0
  %1721 = vmatpush1.bf16.msra.mxu0 0
  %1722 = vmatprep.subr.bf16.mxu0 0
  %1723 = vmatpush1.bf16.msra.mxu0 0
  %1724 = vmatprep.subr.bf16.mxu0 0
  %1725 = vmatpush1.bf16.msra.mxu0 0
  %1726 = vmatprep.subr.bf16.mxu0 0
  %1727 = vmatpush1.bf16.msra.mxu0 0
  %1728 = vmatprep.subr.bf16.mxu0 0
  %1729 = vmatpush1.bf16.msra.mxu0 0
  %1730 = vmatprep.subr.bf16.mxu0 0
  %1731 = vmatpush1.bf16.msra.mxu0 0
  %1732 = vmatprep.subr.bf16.mxu0 0
  %1733 = vmatpush1.bf16.msra.mxu0 0
  %1734 = vmatprep.subr.bf16.mxu0 0
  %1735 = vmatpush1.bf16.msra.mxu0 0
  %1736 = vmatprep.subr.bf16.mxu0 0
  %1737 = vmatpush1.bf16.msra.mxu0 0
  %1738 = vmatprep.subr.bf16.mxu0 0
  %1739 = vmatpush1.bf16.msra.mxu0 0
  %1740 = vmatprep.subr.bf16.mxu0 0
  %1741 = vmatpush1.bf16.msra.mxu0 0
  %1742 = vmatprep.subr.bf16.mxu0 0
  %1743 = vmatpush1.bf16.msra.mxu0 0
  %1744 = vmatprep.mubr.bf16.mxu0 0
  %1745 = vmatmul.mubr.bf16.gmra.mrb[0].mxu0 %v1657
  %v1746 = vpop.f32.mrb[0].mxu0
  %v1747 = vadd.f32 0.0, %v1746
  %v1748 = vpop.f32.mrb[0].mxu0
  %v1749 = vadd.f32 0.0, %v1748
  %v1750 = vpop.f32.mrb[0].mxu0
  %v1751 = vpop.f32.mrb[0].mxu0
  %1752 = vdwg.mxu0
  %v1753 = vadd.f32 %v1595, %v1706
  %v1754 = vadd.f32 %v1597, %v1708
  %v1755 = vadd.f32 %v1636, %v1747
  %v1756 = vadd.f32 %v1638, %v1749
  %s1757 = scalar_lea.vmem %s1, 30
  %v1758 = vld [vmem:[%s1757] sm:$0x3]
  %s1759 = scalar_lea.vmem %s0, 128
  %v1760 = vld [vmem:[%s1759] sm:$0xff]
  %v1761 = vld [vmem:[%s1759 + $0x8] sm:$0xff]
  %v1764 = vunpack.c.l.b16 %v1760
  %v1765 = vunpack.c.h.b16 %v1760
  %v1766 = vunpack.c.l.b16 %v1761
  %v1767 = vunpack.c.h.b16 %v1761
  %v1768 = vpack.c.b16 %v1764, %v1764
  %v1769 = vpack.c.b16 %v1765, %v1765
  %v1770 = vpack.c.b16 %v1766, %v1766
  %v1771 = vpack.c.b16 %v1767, %v1767
  %v1773 = vsel %vm30, %v1758, 0
  %v1776 = vsel %vm34, %v1768, 0
  %v1779 = vsel %vm34, %v1769, 0
  %v1782 = vsel %vm34, %v1770, 0
  %v1785 = vsel %vm34, %v1771, 0
  %1787 = vmatprep.subr.bf16.mxu0 %v1779
  %1788 = vmatpush1.bf16.msra.mxu0 %v1776
  %1789 = vmatprep.subr.bf16.mxu0 0
  %1790 = vmatpush1.bf16.msra.mxu0 0
  %1791 = vmatprep.subr.bf16.mxu0 0
  %1792 = vmatpush1.bf16.msra.mxu0 0
  %1793 = vmatprep.subr.bf16.mxu0 0
  %1794 = vmatpush1.bf16.msra.mxu0 0
  %1795 = vmatprep.subr.bf16.mxu0 0
  %1796 = vmatpush1.bf16.msra.mxu0 0
  %1797 = vmatprep.subr.bf16.mxu0 0
  %1798 = vmatpush1.bf16.msra.mxu0 0
  %1799 = vmatprep.subr.bf16.mxu0 0
  %1800 = vmatpush1.bf16.msra.mxu0 0
  %1801 = vmatprep.subr.bf16.mxu0 0
  %1802 = vmatpush1.bf16.msra.mxu0 0
  %1803 = vmatprep.subr.bf16.mxu0 0
  %1804 = vmatpush1.bf16.msra.mxu0 0
  %1805 = vmatprep.subr.bf16.mxu0 0
  %1806 = vmatpush1.bf16.msra.mxu0 0
  %1807 = vmatprep.subr.bf16.mxu0 0
  %1808 = vmatpush1.bf16.msra.mxu0 0
  %1809 = vmatprep.subr.bf16.mxu0 0
  %1810 = vmatpush1.bf16.msra.mxu0 0
  %1811 = vmatprep.subr.bf16.mxu0 0
  %1812 = vmatpush1.bf16.msra.mxu0 0
  %1813 = vmatprep.subr.bf16.mxu0 0
  %1814 = vmatpush1.bf16.msra.mxu0 0
  %1815 = vmatprep.subr.bf16.mxu0 0
  %1816 = vmatpush1.bf16.msra.mxu0 0
  %1817 = vmatprep.subr.bf16.mxu0 0
  %1818 = vmatpush1.bf16.msra.mxu0 0
  %1819 = vmatprep.mubr.bf16.mxu0 0
  %1820 = vmatmul.mubr.bf16.gmra.mrb[0].mxu0 %v1773
  %v1821 = vpop.f32.mrb[0].mxu0
  %v1822 = vadd.f32 0.0, %v1821
  %v1823 = vpop.f32.mrb[0].mxu0
  %v1824 = vadd.f32 0.0, %v1823
  %v1825 = vpop.f32.mrb[0].mxu0
  %v1826 = vpop.f32.mrb[0].mxu0
  %1827 = vdwg.mxu0
  %1828 = vmatprep.subr.bf16.mxu0 %v1785
  %1829 = vmatpush1.bf16.msra.mxu0 %v1782
  %1830 = vmatprep.subr.bf16.mxu0 0
  %1831 = vmatpush1.bf16.msra.mxu0 0
  %1832 = vmatprep.subr.bf16.mxu0 0
  %1833 = vmatpush1.bf16.msra.mxu0 0
  %1834 = vmatprep.subr.bf16.mxu0 0
  %1835 = vmatpush1.bf16.msra.mxu0 0
  %1836 = vmatprep.subr.bf16.mxu0 0
  %1837 = vmatpush1.bf16.msra.mxu0 0
  %1838 = vmatprep.subr.bf16.mxu0 0
  %1839 = vmatpush1.bf16.msra.mxu0 0
  %1840 = vmatprep.subr.bf16.mxu0 0
  %1841 = vmatpush1.bf16.msra.mxu0 0
  %1842 = vmatprep.subr.bf16.mxu0 0
  %1843 = vmatpush1.bf16.msra.mxu0 0
  %1844 = vmatprep.subr.bf16.mxu0 0
  %1845 = vmatpush1.bf16.msra.mxu0 0
  %1846 = vmatprep.subr.bf16.mxu0 0
  %1847 = vmatpush1.bf16.msra.mxu0 0
  %1848 = vmatprep.subr.bf16.mxu0 0
  %1849 = vmatpush1.bf16.msra.mxu0 0
  %1850 = vmatprep.subr.bf16.mxu0 0
  %1851 = vmatpush1.bf16.msra.mxu0 0
  %1852 = vmatprep.subr.bf16.mxu0 0
  %1853 = vmatpush1.bf16.msra.mxu0 0
  %1854 = vmatprep.subr.bf16.mxu0 0
  %1855 = vmatpush1.bf16.msra.mxu0 0
  %1856 = vmatprep.subr.bf16.mxu0 0
  %1857 = vmatpush1.bf16.msra.mxu0 0
  %1858 = vmatprep.subr.bf16.mxu0 0
  %1859 = vmatpush1.bf16.msra.mxu0 0
  %1860 = vmatprep.mubr.bf16.mxu0 0
  %1861 = vmatmul.mubr.bf16.gmra.mrb[0].mxu0 %v1773
  %v1862 = vpop.f32.mrb[0].mxu0
  %v1863 = vadd.f32 0.0, %v1862
  %v1864 = vpop.f32.mrb[0].mxu0
  %v1865 = vadd.f32 0.0, %v1864
  %v1866 = vpop.f32.mrb[0].mxu0
  %v1867 = vpop.f32.mrb[0].mxu0
  %1868 = vdwg.mxu0
  %v1869 = vadd.f32 %v1753, %v1822
  %v1870 = vadd.f32 %v1754, %v1824
  %v1871 = vadd.f32 %v1755, %v1863
  %v1872 = vadd.f32 %v1756, %v1865
  %v1873 = vtanh.pop %v1869
  %v1874 = vtanh.pop %v1870
  %v1875 = vtanh.pop %v1871
  %v1876 = vtanh.pop %v1872
  %v1881 = vcombine.low %v1873, %v1874
  %v1882 = vcombine.low %v1875, %v1876
  %s1885 = scalar_lea.vmem %s2, 48
  %1886 = vst [vmem:[%s1885] sm:$0x77] %v1881
  %1887 = vst [vmem:[%s1885 + $0x8] sm:$0x77] %v1882
  // Predicated region
  $region10: #{generator_forward.17} parent=0 // pred_check
    _
  $region11: #{generator_forward.17} parent=0 // pred_check_branch
    %1889 = sbr.rel (0) target = $region13
  $region12: #{generator_forward.17} parent=0 // pred_region
    _
  $region13: #{generator_forward.17} parent=0 // pred_fallthru
    _
  // Predicated region
  $region14: #{generator_forward.17} parent=0 // pred_check
    _
  $region15: #{generator_forward.17} parent=0 // pred_check_branch
    %1891 = sbr.rel (0) target = $region17
  $region16: #{generator_forward.17} parent=0 // pred_region
    _
  $region17: #{generator_forward.17} parent=0 // pred_fallthru
    _

</llo_original>
